<compile_context>
chip_gen: v6e
topology: v6e:2x2x1
jax: 0.10.0
libtpu: 0.0.40
codegen_flags: <defaults>
</compile_context>

<pallas_src>
import functools
import math

import jax
import jax.numpy as jnp
from jax.experimental import pallas as pl
from jax.experimental.pallas import tpu as pltpu

LN_EPS = 1e-5


# ----------------------------------------------------------------------------
# Small helpers
# ----------------------------------------------------------------------------
def _vmem_limit_bytes():
    """Generation-aware scoped VMEM limit (v5e/v6e ~96-100 MiB, v7x ~48 MiB)."""
    try:
        cap = pltpu.get_tpu_info().vmem_capacity_bytes
        return int(min(cap * 3 // 4, 100 * 1024 * 1024))
    except Exception:
        return 48 * 1024 * 1024


def _layer_norm(x, w, b):
    mean = jnp.mean(x, axis=-1, keepdims=True)
    var = jnp.mean((x - mean) ** 2, axis=-1, keepdims=True)
    return (x - mean) * jax.lax.rsqrt(var + LN_EPS) * w + b


def _gelu_exact(x):
    # PyTorch nn.GELU() / F.gelu default (erf form).
    return 0.5 * x * (1.0 + jax.lax.erf(x * (1.0 / math.sqrt(2.0))))


def _pick_tile(total, pref):
    """Largest 8-aligned divisor of `total` that is <= pref (or full extent)."""
    if total <= pref:
        return total
    for t in range(pref, 7, -1):
        if total % t == 0 and t % 8 == 0:
            return t
    # Full extent is always layout-legal.  TODO(synk): pad + mask for huge odd S.
    return total


# ----------------------------------------------------------------------------
# Fused LN + flash attention (+ optional fused GEGLU feed-forward) kernel
# ----------------------------------------------------------------------------
def make_attn_kernel(n_heads, d_head, tq, tk, scale, fuse_ff):
    def kernel(*refs):
        if fuse_ff:
            (xq_ref, xkv_ref, lnw_ref, lnb_ref,
             wq_ref, wk_ref, wv_ref, wo_ref, bo_ref,
             ln3w_ref, ln3b_ref, w1v_ref, b1v_ref, w1g_ref, b1g_ref,
             w2_ref, b2_ref, out_ref,
             hq_scr, hkv_scr, q_scr, m_scr, l_scr, o_scr, acc_scr,
             kcache, vcache) = refs
        else:
            (xq_ref, xkv_ref, lnw_ref, lnb_ref,
             wq_ref, wk_ref, wv_ref, wo_ref, bo_ref, out_ref,
             hq_scr, hkv_scr, q_scr, m_scr, l_scr, o_scr, acc_scr,
             kcache, vcache) = refs

        qi = pl.program_id(1)
        ki = pl.program_id(2)
        h = pl.program_id(3)
        n_kv = pl.num_programs(2)
        n_h = pl.num_programs(3)

        kv_start = pl.multiple_of(ki * tk, tk)

        # Once per (b, q-tile): LN of the query tile + zero the (tq, C) out acc.
        @pl.when((ki == 0) & (h == 0))
        def _():
            xq = xq_ref[0].astype(jnp.float32)
            hq_scr[...] = _layer_norm(
                xq, lnw_ref[...], lnb_ref[...]).astype(jnp.bfloat16)
            acc_scr[...] = jnp.zeros_like(acc_scr)

        # Once per (b, q-tile, head): project scaled Q, reset online state.
        @pl.when(ki == 0)
        def _():
            q = jnp.dot(hq_scr[...], wq_ref[h],
                        preferred_element_type=jnp.float32)
            q_scr[h] = (q * scale).astype(jnp.bfloat16)
            m_scr[h] = jnp.full((tq, 1), -jnp.inf, dtype=jnp.float32)
            l_scr[h] = jnp.zeros((tq, 1), dtype=jnp.float32)
            o_scr[h] = jnp.zeros((tq, d_head), dtype=jnp.float32)

        # K/V: computed only on the first q-tile pass (qi == 0) and cached in
        # persistent VMEM; every later q tile re-uses the cache.
        @pl.when((qi == 0) & (h == 0))
        def _():
            xkv = xkv_ref[0].astype(jnp.float32)
            hkv_scr[...] = _layer_norm(
                xkv, lnw_ref[...], lnb_ref[...]).astype(jnp.bfloat16)

        @pl.when(qi == 0)
        def _():
            hkv = hkv_scr[...]
            k_new = jnp.dot(hkv, wk_ref[h], preferred_element_type=jnp.float32)
            v_new = jnp.dot(hkv, wv_ref[h], preferred_element_type=jnp.float32)
            kcache[h, pl.ds(kv_start, tk), :] = k_new.astype(jnp.bfloat16)
            vcache[h, pl.ds(kv_start, tk), :] = v_new.astype(jnp.bfloat16)

        k = kcache[h, pl.ds(kv_start, tk), :]
        v = vcache[h, pl.ds(kv_start, tk), :]

        # (tq, tk) scores; contract the last dim of both operands (no .T).
        s = jax.lax.dot_general(q_scr[h], k, (((1,), (1,)), ((), ())),
                                preferred_element_type=jnp.float32)

        # Online softmax update for this head.
        m_prev = m_scr[h]
        m_new = jnp.maximum(m_prev, jnp.max(s, axis=-1, keepdims=True))
        alpha = jnp.exp(m_prev - m_new)
        p = jnp.exp(s - m_new)
        l_scr[h] = alpha * l_scr[h] + jnp.sum(p, axis=-1, keepdims=True)
        o_scr[h] = alpha * o_scr[h] + jnp.dot(
            p.astype(jnp.bfloat16), v, preferred_element_type=jnp.float32)
        m_scr[h] = m_new

        # Last kv tile for this head: normalize and fold through Wo[h] into the
        # lane-dense (tq, C) accumulator.
        @pl.when(ki == n_kv - 1)
        def _():
            o = o_scr[h] * pl.reciprocal(l_scr[h], approx=False)
            acc_scr[...] += jnp.dot(o.astype(jnp.bfloat16), wo_ref[h],
                                    preferred_element_type=jnp.float32)

        # Last head & last kv tile: attention bias + residual; optionally run the
        # fused GEGLU feed-forward on the same tile; write the output tile.
        @pl.when((ki == n_kv - 1) & (h == n_h - 1))
        def _():
            y = acc_scr[...] + bo_ref[...] + xq_ref[0].astype(jnp.float32)
            if fuse_ff:
                h3 = _layer_norm(
                    y, ln3w_ref[...], ln3b_ref[...]).astype(jnp.bfloat16)
                a = jnp.dot(h3, w1v_ref[...],
                            preferred_element_type=jnp.float32) + b1v_ref[...]
                g = jnp.dot(h3, w1g_ref[...],
                            preferred_element_type=jnp.float32) + b1g_ref[...]
                hidden = (a * _gelu_exact(g)).astype(jnp.bfloat16)
                y = y + jnp.dot(hidden, w2_ref[...],
                                preferred_element_type=jnp.float32) + b2_ref[...]
            out_ref[0] = y.astype(out_ref.dtype)

    return kernel


def attn_layer(x, lnw, lnb, wq3, wk3, wv3, wo3, bo, *, n_heads, d_head,
               q_tile=512, kv_tile=512, ff=None):
    """LN + multi-head flash self-attention (+ optional fused LN3+GEGLU FF) + residual."""
    B, S, C = x.shape
    inner = n_heads * d_head
    tq = _pick_tile(S, q_tile)
    tk = _pick_tile(S, kv_tile)
    n_q = S // tq
    n_kv = S // tk
    scale = 1.0 / math.sqrt(d_head)
    fuse_ff = ff is not None

    const2 = lambda b, qi, ki, hh: (0, 0)
    const3 = lambda b, qi, ki, hh: (0, 0, 0)

    in_specs = [
        # query-side x tile
        pl.BlockSpec((1, tq, C), lambda b, qi, ki, hh: (b, qi, 0)),
        # kv-side x tile; index freezes to 0 once qi > 0 (K/V come from the VMEM
        # cache, so the tile is not re-streamed from HBM).
        pl.BlockSpec((1, tk, C),
                     lambda b, qi, ki, hh: (b, jnp.where(qi == 0, ki, 0), 0)),
        pl.BlockSpec((1, C), const2),                           # LN weight
        pl.BlockSpec((1, C), const2),                           # LN bias
        pl.BlockSpec((n_heads, C, d_head), const3),             # Wq (resident)
        pl.BlockSpec((n_heads, C, d_head), const3),             # Wk (resident)
        pl.BlockSpec((n_heads, C, d_head), const3),             # Wv (resident)
        pl.BlockSpec((n_heads, d_head, C), const3),             # Wo (resident)
        pl.BlockSpec((1, C), const2),                           # out-proj bias
    ]
    args = [x, x, lnw, lnb, wq3, wk3, wv3, wo3, bo]

    itemsize = jnp.dtype(x.dtype).itemsize
    flops = (6 * B * S * C * inner                     # Q,K,V projections (once)
             + 4 * B * n_heads * S * S * d_head        # QK^T + PV
             + 2 * B * S * inner * C)                  # output projection
    transcendentals = B * n_heads * S * S
    bytes_accessed = 2 * B * S * C * itemsize + 8 * C * inner + 8 * C * itemsize

    if fuse_ff:
        ln3w, ln3b, w1v, b1v, w1g, b1g, w2, b2 = ff
        ff_inner = w2.shape[0]
        in_specs += [
            pl.BlockSpec((1, C), const2),               # LN3 weight
            pl.BlockSpec((1, C), const2),               # LN3 bias
            pl.BlockSpec((C, ff_inner), const2),        # W1 value half (resident)
            pl.BlockSpec((1, ff_inner), const2),        # b1 value half
            pl.BlockSpec((C, ff_inner), const2),        # W1 gate half (resident)
            pl.BlockSpec((1, ff_inner), const2),        # b1 gate half
            pl.BlockSpec((ff_inner, C), const2),        # W2 (resident)
            pl.BlockSpec((1, C), const2),               # b2
        ]
        args += [ln3w, ln3b, w1v, b1v, w1g, b1g, w2, b2]
        flops += 4 * B * S * C * ff_inner + 2 * B * S * ff_inner * C
        transcendentals += B * S * ff_inner
        bytes_accessed += 6 * C * ff_inner

    kernel = make_attn_kernel(n_heads, d_head, tq, tk, scale, fuse_ff)

    return pl.pallas_call(
        kernel,
        out_shape=jax.ShapeDtypeStruct((B, S, C), x.dtype),
        grid=(B, n_q, n_kv, n_heads),
        in_specs=in_specs,
        out_specs=pl.BlockSpec((1, tq, C), lambda b, qi, ki, hh: (b, qi, 0)),
        scratch_shapes=[
            pltpu.VMEM((tq, C), jnp.bfloat16),                 # LN(x_q)
            pltpu.VMEM((tk, C), jnp.bfloat16),                 # LN(x_kv)
            pltpu.VMEM((n_heads, tq, d_head), jnp.bfloat16),   # scaled Q / head
            pltpu.VMEM((n_heads, tq, 1), jnp.float32),         # running max
            pltpu.VMEM((n_heads, tq, 1), jnp.float32),         # running denom
            pltpu.VMEM((n_heads, tq, d_head), jnp.float32),    # running PV acc
            pltpu.VMEM((tq, C), jnp.float32),                  # (tq, C) out acc
            pltpu.VMEM((n_heads, S, d_head), jnp.bfloat16),    # K cache (per batch)
            pltpu.VMEM((n_heads, S, d_head), jnp.bfloat16),    # V cache (per batch)
        ],
        compiler_params=pltpu.CompilerParams(
            # B is the only megacore-parallel axis: each core owns whole batches,
            # so the per-batch K/V cache fill at qi==0 is always seen by the core
            # that later consumes it.
            dimension_semantics=("parallel", "arbitrary", "arbitrary", "arbitrary"),
            vmem_limit_bytes=_vmem_limit_bytes()),
        cost_estimate=pl.CostEstimate(flops=int(flops),
                                      transcendentals=int(transcendentals),
                                      bytes_accessed=int(bytes_accessed)),
    )(*args)


# ----------------------------------------------------------------------------
# Parameter construction (deterministic, synthetic) + one-time repacking
# ----------------------------------------------------------------------------
def init_params(key, dim, n_heads, d_head):
    inner = n_heads * d_head
    ff_inner = 4 * dim
    keys = jax.random.split(key, 16)

    def nrm(k, shape, scale=0.05):
        return (scale * jax.random.normal(k, shape)).astype(jnp.float32)

    p = {}
    p["ln1_w"] = 1.0 + nrm(keys[0], (1, dim))
    p["ln1_b"] = nrm(keys[1], (1, dim))
    p["ln2_w"] = 1.0 + nrm(keys[2], (1, dim))
    p["ln2_b"] = nrm(keys[3], (1, dim))
    p["ln3_w"] = 1.0 + nrm(keys[4], (1, dim))
    p["ln3_b"] = nrm(keys[5], (1, dim))
    # attn1 (weights stored as (in, out) so x @ W matches PyTorch x @ W.T)
    p["a1_wq"] = nrm(keys[6], (dim, inner))
    p["a1_wk"] = nrm(keys[7], (dim, inner))
    p["a1_wv"] = nrm(keys[8], (dim, inner))
    p["a1_wo"] = nrm(keys[9], (inner, dim))
    p["a1_bo"] = nrm(keys[10], (1, dim))
    # attn2 (enhance_multi_view_correspondence=False => NOT zeroed)
    p["a2_wq"] = nrm(keys[11], (dim, inner))
    p["a2_wk"] = nrm(keys[12], (dim, inner))
    p["a2_wv"] = nrm(keys[13], (dim, inner))
    p["a2_wo"] = nrm(keys[14], (inner, dim))
    p["a2_bo"] = nrm(keys[15], (1, dim))
    # FeedForward (GEGLU)
    k2 = jax.random.split(jax.random.fold_in(key, 123), 4)
    p["ff_w1"] = nrm(k2[0], (dim, 2 * ff_inner))
    p["ff_b1"] = nrm(k2[1], (1, 2 * ff_inner))
    p["ff_w2"] = nrm(k2[2], (ff_inner, dim))
    p["ff_b2"] = nrm(k2[3], (1, dim))
    return p


def prepare_params(p, n_heads, d_head):
    """One-time repack: head-major bf16 attention weights, W1 value/gate split."""
    dim = p["ln1_w"].shape[-1]
    ff_inner = p["ff_w2"].shape[0]

    def heads_in(w):   # (C, inner) -> (H, C, d_head)
        return w.reshape(dim, n_heads, d_head).transpose(1, 0, 2).astype(jnp.bfloat16)

    def heads_out(w):  # (inner, C) -> (H, d_head, C)
        return w.reshape(n_heads, d_head, dim).astype(jnp.bfloat16)

    return {
        "ln1_w": p["ln1_w"], "ln1_b": p["ln1_b"],
        "ln2_w": p["ln2_w"], "ln2_b": p["ln2_b"],
        "ln3_w": p["ln3_w"], "ln3_b": p["ln3_b"],
        "a1_wq": heads_in(p["a1_wq"]), "a1_wk": heads_in(p["a1_wk"]),
        "a1_wv": heads_in(p["a1_wv"]), "a1_wo": heads_out(p["a1_wo"]),
        "a1_bo": p["a1_bo"],
        "a2_wq": heads_in(p["a2_wq"]), "a2_wk": heads_in(p["a2_wk"]),
        "a2_wv": heads_in(p["a2_wv"]), "a2_wo": heads_out(p["a2_wo"]),
        "a2_bo": p["a2_bo"],
        "ff_w1v": p["ff_w1"][:, :ff_inner].astype(jnp.bfloat16),
        "ff_w1g": p["ff_w1"][:, ff_inner:].astype(jnp.bfloat16),
        "ff_b1v": p["ff_b1"][:, :ff_inner],
        "ff_b1g": p["ff_b1"][:, ff_inner:],
        "ff_w2": p["ff_w2"].astype(jnp.bfloat16),
        "ff_b2": p["ff_b2"],
    }


# ----------------------------------------------------------------------------
# Block forward (glue in plain JAX, hot path in Pallas kernels)
# ----------------------------------------------------------------------------
@functools.partial(jax.jit, static_argnames=("n_heads", "d_head", "q_tile", "kv_tile"))
def multi_view_block_forward(x, pp, *, n_heads, d_head, q_tile=512, kv_tile=512):
    n, v, hw, c = x.shape

    # attn1 over the full multi-view (v*hw) token sequence
    x1 = x.reshape(n, v * hw, c)
    x1 = attn_layer(x1, pp["ln1_w"], pp["ln1_b"],
                    pp["a1_wq"], pp["a1_wk"], pp["a1_wv"], pp["a1_wo"], pp["a1_bo"],
                    n_heads=n_heads, d_head=d_head, q_tile=q_tile, kv_tile=kv_tile)

    # not full_spatial_temporal_attention -> per-view attention, fused with the
    # GEGLU feed-forward (one HBM round trip of the activation saved).
    x2 = x1.reshape(n * v, hw, c)
    x2 = attn_layer(x2, pp["ln2_w"], pp["ln2_b"],
                    pp["a2_wq"], pp["a2_wk"], pp["a2_wv"], pp["a2_wo"], pp["a2_bo"],
                    n_heads=n_heads, d_head=d_head, q_tile=q_tile, kv_tile=kv_tile,
                    ff=(pp["ln3_w"], pp["ln3_b"],
                        pp["ff_w1v"], pp["ff_b1v"], pp["ff_w1g"], pp["ff_b1g"],
                        pp["ff_w2"], pp["ff_b2"]))

    return x2.reshape(n, v, hw, c)


# ----------------------------------------------------------------------------
# Pure-JAX f32 reference (for numerical validation)
# ----------------------------------------------------------------------------
def _ref_attn(x, lnw, lnb, wq, wk, wv, wo, bo, n_heads, d_head):
    h = _layer_norm(x, lnw, lnb)
    B, S, _ = x.shape
    q = h @ wq
    k = h @ wk
    v = h @ wv

    def split(t):
        return t.reshape(B, S, n_heads, d_head).transpose(0, 2, 1, 3)

    q, k, v = split(q), split(k), split(v)
    s = jnp.einsum("bhqd,bhkd->bhqk", q, k) / math.sqrt(d_head)
    p = jax.nn.softmax(s, axis=-1)
    o = jnp.einsum("bhqk,bhkd->bhqd", p, v)
    o = o.transpose(0, 2, 1, 3).reshape(B, S, n_heads * d_head)
    return o @ wo + bo + x


def _ref_ff(x, lnw, lnb, w1, b1, w2, b2, inner):
    h = _layer_norm(x, lnw, lnb)
    proj = h @ w1 + b1
    a, g = proj[..., :inner], proj[..., inner:]
    return (a * _gelu_exact(g)) @ w2 + b2 + x


def reference_forward(x, p, n_heads, d_head):
    n, v, hw, c = x.shape
    ff_inner = 4 * c
    x1 = x.reshape(n, v * hw, c)
    x1 = _ref_attn(x1, p["ln1_w"], p["ln1_b"], p["a1_wq"], p["a1_wk"],
                   p["a1_wv"], p["a1_wo"], p["a1_bo"], n_heads, d_head)
    x2 = x1.reshape(n * v, hw, c)
    x2 = _ref_attn(x2, p["ln2_w"], p["ln2_b"], p["a2_wq"], p["a2_wk"],
                   p["a2_wv"], p["a2_wo"], p["a2_bo"], n_heads, d_head)
    x3 = _ref_ff(x2, p["ln3_w"], p["ln3_b"], p["ff_w1"], p["ff_b1"],
                 p["ff_w2"], p["ff_b2"], ff_inner)
    return x3.reshape(n, v, hw, c)


# ----------------------------------------------------------------------------
if __name__ == "__main__":
    # n=2 samples, v=2 views, hw=64 tokens/view, dim=128 (lane-dense C),
    # 4 heads x 32.  Tile size 64 is forced so the multi-tile flash path and
    # the K/V-cache reuse across q tiles (n_q=4, n_kv=4 for attn1) are
    # exercised even at these small shapes; production default is 512.
    n, v, hw, dim = 2, 2, 64, 128
    n_heads, d_head = 4, 32

    key = jax.random.PRNGKey(0)
    k_x, k_p = jax.random.split(key)
    x = jax.random.normal(k_x, (n, v, hw, dim), dtype=jnp.float32)
    params = init_params(k_p, dim, n_heads, d_head)
    prepped = prepare_params(params, n_heads, d_head)   # one-time weight repack

    out = multi_view_block_forward(
        x, prepped, n_heads=n_heads, d_head=d_head, q_tile=64, kv_tile=64)
    out = jax.block_until_ready(out)

    ref = reference_forward(x, params, n_heads, d_head)
    assert out.shape == (n, v, hw, dim)
    max_err = float(jnp.max(jnp.abs(out - ref)))
    # bf16 MXU inputs (f32 accumulation) => loosened tolerance vs f32 reference.
    assert max_err < 3e-2, f"max abs err {max_err}"
    print("KERNEL_OK")
</pallas_src>

<mosaic_0001>
module attributes {stable_mosaic.version = 11 : i64} {
  func.func @kernel(%arg0: i32, %arg1: i32, %arg2: i32, %arg3: i32, %arg4: memref<1x64x128xf32, #tpu.memory_space<vmem>>, %arg5: memref<1x64x128xf32, #tpu.memory_space<vmem>>, %arg6: memref<1x128xf32, #tpu.memory_space<vmem>>, %arg7: memref<1x128xf32, #tpu.memory_space<vmem>>, %arg8: memref<4x128x32xbf16, #tpu.memory_space<vmem>>, %arg9: memref<4x128x32xbf16, #tpu.memory_space<vmem>>, %arg10: memref<4x128x32xbf16, #tpu.memory_space<vmem>>, %arg11: memref<4x32x128xbf16, #tpu.memory_space<vmem>>, %arg12: memref<1x128xf32, #tpu.memory_space<vmem>>, %arg13: memref<1x128xf32, #tpu.memory_space<vmem>>, %arg14: memref<1x128xf32, #tpu.memory_space<vmem>>, %arg15: memref<128x512xbf16, #tpu.memory_space<vmem>>, %arg16: memref<1x512xf32, #tpu.memory_space<vmem>>, %arg17: memref<128x512xbf16, #tpu.memory_space<vmem>>, %arg18: memref<1x512xf32, #tpu.memory_space<vmem>>, %arg19: memref<512x128xbf16, #tpu.memory_space<vmem>>, %arg20: memref<1x128xf32, #tpu.memory_space<vmem>>, %arg21: memref<1x64x128xf32, #tpu.memory_space<vmem>>, %arg22: memref<64x128xbf16, #tpu.memory_space<vmem>>, %arg23: memref<64x128xbf16, #tpu.memory_space<vmem>>, %arg24: memref<4x64x32xbf16, #tpu.memory_space<vmem>>, %arg25: memref<4x64x1xf32, #tpu.memory_space<vmem>>, %arg26: memref<4x64x1xf32, #tpu.memory_space<vmem>>, %arg27: memref<4x64x32xf32, #tpu.memory_space<vmem>>, %arg28: memref<64x128xf32, #tpu.memory_space<vmem>>, %arg29: memref<4x64x32xbf16, #tpu.memory_space<vmem>>, %arg30: memref<4x64x32xbf16, #tpu.memory_space<vmem>>) attributes {dimension_semantics = [#tpu.dimension_semantics<parallel>, #tpu.dimension_semantics<arbitrary>, #tpu.dimension_semantics<arbitrary>, #tpu.dimension_semantics<arbitrary>], iteration_bounds = array<i64: 4, 1, 1, 4>, scalar_prefetch = 0 : i64, scratch_operands = 9 : i64, tpu.core_type = #tpu.core_type<tc>, window_params = [{transform_indices = @transform_0, window_bounds = array<i64: 1, 64, 128>}, {transform_indices = @transform_1, window_bounds = array<i64: 1, 64, 128>}, {pipeline_mode = #tpu.pipeline_mode<synchronous>, transform_indices = @transform_2, window_bounds = array<i64: 1, 128>}, {pipeline_mode = #tpu.pipeline_mode<synchronous>, transform_indices = @transform_3, window_bounds = array<i64: 1, 128>}, {pipeline_mode = #tpu.pipeline_mode<synchronous>, transform_indices = @transform_4, window_bounds = array<i64: 4, 128, 32>}, {pipeline_mode = #tpu.pipeline_mode<synchronous>, transform_indices = @transform_5, window_bounds = array<i64: 4, 128, 32>}, {pipeline_mode = #tpu.pipeline_mode<synchronous>, transform_indices = @transform_6, window_bounds = array<i64: 4, 128, 32>}, {pipeline_mode = #tpu.pipeline_mode<synchronous>, transform_indices = @transform_7, window_bounds = array<i64: 4, 32, 128>}, {pipeline_mode = #tpu.pipeline_mode<synchronous>, transform_indices = @transform_8, window_bounds = array<i64: 1, 128>}, {pipeline_mode = #tpu.pipeline_mode<synchronous>, transform_indices = @transform_9, window_bounds = array<i64: 1, 128>}, {pipeline_mode = #tpu.pipeline_mode<synchronous>, transform_indices = @transform_10, window_bounds = array<i64: 1, 128>}, {pipeline_mode = #tpu.pipeline_mode<synchronous>, transform_indices = @transform_11, window_bounds = array<i64: 128, 512>}, {pipeline_mode = #tpu.pipeline_mode<synchronous>, transform_indices = @transform_12, window_bounds = array<i64: 1, 512>}, {pipeline_mode = #tpu.pipeline_mode<synchronous>, transform_indices = @transform_13, window_bounds = array<i64: 128, 512>}, {pipeline_mode = #tpu.pipeline_mode<synchronous>, transform_indices = @transform_14, window_bounds = array<i64: 1, 512>}, {pipeline_mode = #tpu.pipeline_mode<synchronous>, transform_indices = @transform_15, window_bounds = array<i64: 512, 128>}, {pipeline_mode = #tpu.pipeline_mode<synchronous>, transform_indices = @transform_16, window_bounds = array<i64: 1, 128>}, {transform_indices = @transform_17, window_bounds = array<i64: 1, 64, 128>}]} {
    %c64_i32 = arith.constant 64 : i32
    %0 = arith.muli %arg2, %c64_i32 : i32
    %1 = tpu.assume_multiple %0, 64 : i32
    %c0_i32 = arith.constant 0 : i32
    %2 = arith.cmpi eq, %arg2, %c0_i32 : i32
    %c0_i32_0 = arith.constant 0 : i32
    %3 = arith.cmpi eq, %arg3, %c0_i32_0 : i32
    %4 = arith.andi %2, %3 : i1
    %5 = arith.extui %4 : i1 to i32
    %c0_i32_1 = arith.constant 0 : i32
    %6 = arith.cmpi ne, %5, %c0_i32_1 : i32
    scf.if %6 {
      %c0_31 = arith.constant 0 : index
      %c0_32 = arith.constant 0 : index
      %c0_33 = arith.constant 0 : index
      %76 = vector.load %arg4[%c0_31, %c0_32, %c0_33] : memref<1x64x128xf32, #tpu.memory_space<vmem>>, vector<1x64x128xf32>
      %77 = vector.shape_cast %76 : vector<1x64x128xf32> to vector<64x128xf32>
      %c0_34 = arith.constant 0 : index
      %c0_35 = arith.constant 0 : index
      %78 = vector.load %arg6[%c0_34, %c0_35] : memref<1x128xf32, #tpu.memory_space<vmem>>, vector<1x128xf32>
      %c0_36 = arith.constant 0 : index
      %c0_37 = arith.constant 0 : index
      %79 = vector.load %arg7[%c0_36, %c0_37] : memref<1x128xf32, #tpu.memory_space<vmem>>, vector<1x128xf32>
      %cst_38 = arith.constant dense<0.000000e+00> : vector<64xf32>
      %80 = vector.multi_reduction <add>, %77, %cst_38 [1] : vector<64x128xf32> to vector<64xf32>
      %81 = vector.shape_cast %80 : vector<64xf32> to vector<64x1xf32>
      %cst_39 = arith.constant 1.280000e+02 : f32
      %82 = vector.broadcast %cst_39 : f32 to vector<64x1xf32>
      %83 = arith.divf %81, %82 : vector<64x1xf32>
      %84 = vector.broadcast %83 : vector<64x1xf32> to vector<64x128xf32>
      %85 = arith.subf %77, %84 : vector<64x128xf32>
      %86 = arith.mulf %85, %85 : vector<64x128xf32>
      %cst_40 = arith.constant dense<0.000000e+00> : vector<64xf32>
      %87 = vector.multi_reduction <add>, %86, %cst_40 [1] : vector<64x128xf32> to vector<64xf32>
      %88 = vector.shape_cast %87 : vector<64xf32> to vector<64x1xf32>
      %cst_41 = arith.constant 1.280000e+02 : f32
      %89 = vector.broadcast %cst_41 : f32 to vector<64x1xf32>
      %90 = arith.divf %88, %89 : vector<64x1xf32>
      %91 = vector.broadcast %83 : vector<64x1xf32> to vector<64x128xf32>
      %92 = arith.subf %77, %91 : vector<64x128xf32>
      %cst_42 = arith.constant 9.99999974E-6 : f32
      %93 = vector.broadcast %cst_42 : f32 to vector<64x1xf32>
      %94 = arith.addf %90, %93 : vector<64x1xf32>
      %95 = math.rsqrt %94 : vector<64x1xf32>
      %96 = vector.broadcast %95 : vector<64x1xf32> to vector<64x128xf32>
      %97 = arith.mulf %92, %96 : vector<64x128xf32>
      %98 = vector.broadcast %78 : vector<1x128xf32> to vector<64x128xf32>
      %99 = arith.mulf %97, %98 : vector<64x128xf32>
      %100 = vector.broadcast %79 : vector<1x128xf32> to vector<64x128xf32>
      %101 = arith.addf %99, %100 : vector<64x128xf32>
      %102 = arith.truncf %101 : vector<64x128xf32> to vector<64x128xbf16>
      %c0_43 = arith.constant 0 : index
      %c0_44 = arith.constant 0 : index
      %103 = vector.load %arg22[%c0_43, %c0_44] : memref<64x128xbf16, #tpu.memory_space<vmem>>, vector<64x128xbf16>
      tpu.vector_store %arg22[%c0_43, %c0_44], %102 {strides = array<i32>} : memref<64x128xbf16, #tpu.memory_space<vmem>>, vector<64x128xbf16>,
      %cst_45 = arith.constant 0.000000e+00 : f32
      %104 = vector.broadcast %cst_45 : f32 to vector<64x128xf32>
      %c0_46 = arith.constant 0 : index
      %c0_47 = arith.constant 0 : index
      %105 = vector.load %arg28[%c0_46, %c0_47] : memref<64x128xf32, #tpu.memory_space<vmem>>, vector<64x128xf32>
      tpu.vector_store %arg28[%c0_46, %c0_47], %104 {strides = array<i32>} : memref<64x128xf32, #tpu.memory_space<vmem>>, vector<64x128xf32>,
    } else {
    }
    %c0_i32_2 = arith.constant 0 : i32
    %7 = arith.cmpi eq, %arg2, %c0_i32_2 : i32
    %8 = arith.extui %7 : i1 to i32
    %c0_i32_3 = arith.constant 0 : i32
    %9 = arith.cmpi ne, %8, %c0_i32_3 : i32
    scf.if %9 {
      %c0_31 = arith.constant 0 : index
      %c0_32 = arith.constant 0 : index
      %76 = vector.load %arg22[%c0_31, %c0_32] : memref<64x128xbf16, #tpu.memory_space<vmem>>, vector<64x128xbf16>
      %77 = arith.index_cast %arg3 : i32 to index
      %c0_33 = arith.constant 0 : index
      %c0_34 = arith.constant 0 : index
      %78 = vector.load %arg8[%77, %c0_33, %c0_34] : memref<4x128x32xbf16, #tpu.memory_space<vmem>>, vector<1x128x32xbf16>
      %79 = vector.shape_cast %78 : vector<1x128x32xbf16> to vector<128x32xbf16>
      %cst_35 = arith.constant dense<0.000000e+00> : vector<64x32xf32>
      %80 = tpu.matmul %76, %79, %cst_35 {dimension_numbers = #tpu.dot_dimension_numbers<[1], [0], [0], [1], [0, 0, 1, 1], [], []>} : vector<64x128xbf16>, vector<128x32xbf16>, vector<64x32xf32> -> vector<64x32xf32>
      %cst_36 = arith.constant 0.176776692 : f32
      %81 = vector.broadcast %cst_36 : f32 to vector<64x32xf32>
      %82 = arith.mulf %80, %81 : vector<64x32xf32>
      %83 = arith.truncf %82 : vector<64x32xf32> to vector<64x32xbf16>
      %84 = arith.index_cast %arg3 : i32 to index
      %c0_37 = arith.constant 0 : index
      %c0_38 = arith.constant 0 : index
      %85 = vector.load %arg24[%84, %c0_37, %c0_38] : memref<4x64x32xbf16, #tpu.memory_space<vmem>>, vector<1x64x32xbf16>
      %86 = vector.shape_cast %85 : vector<1x64x32xbf16> to vector<64x32xbf16>
      %87 = vector.shape_cast %83 : vector<64x32xbf16> to vector<1x64x32xbf16>
      tpu.vector_store %arg24[%84, %c0_37, %c0_38], %87 {strides = array<i32>} : memref<4x64x32xbf16, #tpu.memory_space<vmem>>, vector<1x64x32xbf16>,
      %cst_39 = arith.constant 0xFF800000 : f32
      %88 = vector.broadcast %cst_39 : f32 to vector<64x1xf32>
      %89 = arith.index_cast %arg3 : i32 to index
      %c0_40 = arith.constant 0 : index
      %c0_41 = arith.constant 0 : index
      %90 = vector.load %arg25[%89, %c0_40, %c0_41] : memref<4x64x1xf32, #tpu.memory_space<vmem>>, vector<1x64x1xf32>
      %91 = vector.shape_cast %90 : vector<1x64x1xf32> to vector<64x1xf32>
      %92 = vector.shape_cast %88 : vector<64x1xf32> to vector<1x64x1xf32>
      tpu.vector_store %arg25[%89, %c0_40, %c0_41], %92 {strides = array<i32>} : memref<4x64x1xf32, #tpu.memory_space<vmem>>, vector<1x64x1xf32>,
      %cst_42 = arith.constant 0.000000e+00 : f32
      %93 = vector.broadcast %cst_42 : f32 to vector<64x1xf32>
      %94 = arith.index_cast %arg3 : i32 to index
      %c0_43 = arith.constant 0 : index
      %c0_44 = arith.constant 0 : index
      %95 = vector.load %arg26[%94, %c0_43, %c0_44] : memref<4x64x1xf32, #tpu.memory_space<vmem>>, vector<1x64x1xf32>
      %96 = vector.shape_cast %95 : vector<1x64x1xf32> to vector<64x1xf32>
      %97 = vector.shape_cast %93 : vector<64x1xf32> to vector<1x64x1xf32>
      tpu.vector_store %arg26[%94, %c0_43, %c0_44], %97 {strides = array<i32>} : memref<4x64x1xf32, #tpu.memory_space<vmem>>, vector<1x64x1xf32>,
      %cst_45 = arith.constant 0.000000e+00 : f32
      %98 = vector.broadcast %cst_45 : f32 to vector<64x32xf32>
      %99 = arith.index_cast %arg3 : i32 to index
      %c0_46 = arith.constant 0 : index
      %c0_47 = arith.constant 0 : index
      %100 = vector.load %arg27[%99, %c0_46, %c0_47] : memref<4x64x32xf32, #tpu.memory_space<vmem>>, vector<1x64x32xf32>
      %101 = vector.shape_cast %100 : vector<1x64x32xf32> to vector<64x32xf32>
      %102 = vector.shape_cast %98 : vector<64x32xf32> to vector<1x64x32xf32>
      tpu.vector_store %arg27[%99, %c0_46, %c0_47], %102 {strides = array<i32>} : memref<4x64x32xf32, #tpu.memory_space<vmem>>, vector<1x64x32xf32>,
    } else {
    }
    %c0_i32_4 = arith.constant 0 : i32
    %10 = arith.cmpi eq, %arg1, %c0_i32_4 : i32
    %c0_i32_5 = arith.constant 0 : i32
    %11 = arith.cmpi eq, %arg3, %c0_i32_5 : i32
    %12 = arith.andi %10, %11 : i1
    %13 = arith.extui %12 : i1 to i32
    %c0_i32_6 = arith.constant 0 : i32
    %14 = arith.cmpi ne, %13, %c0_i32_6 : i32
    scf.if %14 {
      %c0_31 = arith.constant 0 : index
      %c0_32 = arith.constant 0 : index
      %c0_33 = arith.constant 0 : index
      %76 = vector.load %arg5[%c0_31, %c0_32, %c0_33] : memref<1x64x128xf32, #tpu.memory_space<vmem>>, vector<1x64x128xf32>
      %77 = vector.shape_cast %76 : vector<1x64x128xf32> to vector<64x128xf32>
      %c0_34 = arith.constant 0 : index
      %c0_35 = arith.constant 0 : index
      %78 = vector.load %arg6[%c0_34, %c0_35] : memref<1x128xf32, #tpu.memory_space<vmem>>, vector<1x128xf32>
      %c0_36 = arith.constant 0 : index
      %c0_37 = arith.constant 0 : index
      %79 = vector.load %arg7[%c0_36, %c0_37] : memref<1x128xf32, #tpu.memory_space<vmem>>, vector<1x128xf32>
      %cst_38 = arith.constant dense<0.000000e+00> : vector<64xf32>
      %80 = vector.multi_reduction <add>, %77, %cst_38 [1] : vector<64x128xf32> to vector<64xf32>
      %81 = vector.shape_cast %80 : vector<64xf32> to vector<64x1xf32>
      %cst_39 = arith.constant 1.280000e+02 : f32
      %82 = vector.broadcast %cst_39 : f32 to vector<64x1xf32>
      %83 = arith.divf %81, %82 : vector<64x1xf32>
      %84 = vector.broadcast %83 : vector<64x1xf32> to vector<64x128xf32>
      %85 = arith.subf %77, %84 : vector<64x128xf32>
      %86 = arith.mulf %85, %85 : vector<64x128xf32>
      %cst_40 = arith.constant dense<0.000000e+00> : vector<64xf32>
      %87 = vector.multi_reduction <add>, %86, %cst_40 [1] : vector<64x128xf32> to vector<64xf32>
      %88 = vector.shape_cast %87 : vector<64xf32> to vector<64x1xf32>
      %cst_41 = arith.constant 1.280000e+02 : f32
      %89 = vector.broadcast %cst_41 : f32 to vector<64x1xf32>
      %90 = arith.divf %88, %89 : vector<64x1xf32>
      %91 = vector.broadcast %83 : vector<64x1xf32> to vector<64x128xf32>
      %92 = arith.subf %77, %91 : vector<64x128xf32>
      %cst_42 = arith.constant 9.99999974E-6 : f32
      %93 = vector.broadcast %cst_42 : f32 to vector<64x1xf32>
      %94 = arith.addf %90, %93 : vector<64x1xf32>
      %95 = math.rsqrt %94 : vector<64x1xf32>
      %96 = vector.broadcast %95 : vector<64x1xf32> to vector<64x128xf32>
      %97 = arith.mulf %92, %96 : vector<64x128xf32>
      %98 = vector.broadcast %78 : vector<1x128xf32> to vector<64x128xf32>
      %99 = arith.mulf %97, %98 : vector<64x128xf32>
      %100 = vector.broadcast %79 : vector<1x128xf32> to vector<64x128xf32>
      %101 = arith.addf %99, %100 : vector<64x128xf32>
      %102 = arith.truncf %101 : vector<64x128xf32> to vector<64x128xbf16>
      %c0_43 = arith.constant 0 : index
      %c0_44 = arith.constant 0 : index
      %103 = vector.load %arg23[%c0_43, %c0_44] : memref<64x128xbf16, #tpu.memory_space<vmem>>, vector<64x128xbf16>
      tpu.vector_store %arg23[%c0_43, %c0_44], %102 {strides = array<i32>} : memref<64x128xbf16, #tpu.memory_space<vmem>>, vector<64x128xbf16>,
    } else {
    }
    %c0_i32_7 = arith.constant 0 : i32
    %15 = arith.cmpi eq, %arg1, %c0_i32_7 : i32
    %16 = arith.extui %15 : i1 to i32
    %c0_i32_8 = arith.constant 0 : i32
    %17 = arith.cmpi ne, %16, %c0_i32_8 : i32
    scf.if %17 {
      %c0_31 = arith.constant 0 : index
      %c0_32 = arith.constant 0 : index
      %76 = vector.load %arg23[%c0_31, %c0_32] : memref<64x128xbf16, #tpu.memory_space<vmem>>, vector<64x128xbf16>
      %77 = arith.index_cast %arg3 : i32 to index
      %c0_33 = arith.constant 0 : index
      %c0_34 = arith.constant 0 : index
      %78 = vector.load %arg9[%77, %c0_33, %c0_34] : memref<4x128x32xbf16, #tpu.memory_space<vmem>>, vector<1x128x32xbf16>
      %79 = vector.shape_cast %78 : vector<1x128x32xbf16> to vector<128x32xbf16>
      %cst_35 = arith.constant dense<0.000000e+00> : vector<64x32xf32>
      %80 = tpu.matmul %76, %79, %cst_35 {dimension_numbers = #tpu.dot_dimension_numbers<[1], [0], [0], [1], [0, 0, 1, 1], [], []>} : vector<64x128xbf16>, vector<128x32xbf16>, vector<64x32xf32> -> vector<64x32xf32>
      %81 = arith.index_cast %arg3 : i32 to index
      %c0_36 = arith.constant 0 : index
      %c0_37 = arith.constant 0 : index
      %82 = vector.load %arg10[%81, %c0_36, %c0_37] : memref<4x128x32xbf16, #tpu.memory_space<vmem>>, vector<1x128x32xbf16>
      %83 = vector.shape_cast %82 : vector<1x128x32xbf16> to vector<128x32xbf16>
      %cst_38 = arith.constant dense<0.000000e+00> : vector<64x32xf32>
      %84 = tpu.matmul %76, %83, %cst_38 {dimension_numbers = #tpu.dot_dimension_numbers<[1], [0], [0], [1], [0, 0, 1, 1], [], []>} : vector<64x128xbf16>, vector<128x32xbf16>, vector<64x32xf32> -> vector<64x32xf32>
      %85 = arith.truncf %80 : vector<64x32xf32> to vector<64x32xbf16>
      %86 = arith.index_cast %arg3 : i32 to index
      %87 = arith.index_cast %1 : i32 to index
      %c0_39 = arith.constant 0 : index
      %88 = vector.load %arg29[%86, %87, %c0_39] : memref<4x64x32xbf16, #tpu.memory_space<vmem>>, vector<1x64x32xbf16>
      %89 = vector.shape_cast %88 : vector<1x64x32xbf16> to vector<64x32xbf16>
      %90 = vector.shape_cast %85 : vector<64x32xbf16> to vector<1x64x32xbf16>
      tpu.vector_store %arg29[%86, %87, %c0_39], %90 {strides = array<i32>} : memref<4x64x32xbf16, #tpu.memory_space<vmem>>, vector<1x64x32xbf16>,
      %91 = arith.truncf %84 : vector<64x32xf32> to vector<64x32xbf16>
      %92 = arith.index_cast %arg3 : i32 to index
      %93 = arith.index_cast %1 : i32 to index
      %c0_40 = arith.constant 0 : index
      %94 = vector.load %arg30[%92, %93, %c0_40] : memref<4x64x32xbf16, #tpu.memory_space<vmem>>, vector<1x64x32xbf16>
      %95 = vector.shape_cast %94 : vector<1x64x32xbf16> to vector<64x32xbf16>
      %96 = vector.shape_cast %91 : vector<64x32xbf16> to vector<1x64x32xbf16>
      tpu.vector_store %arg30[%92, %93, %c0_40], %96 {strides = array<i32>} : memref<4x64x32xbf16, #tpu.memory_space<vmem>>, vector<1x64x32xbf16>,
    } else {
    }
    %18 = arith.index_cast %arg3 : i32 to index
    %19 = arith.index_cast %1 : i32 to index
    %c0 = arith.constant 0 : index
    %20 = vector.load %arg29[%18, %19, %c0] : memref<4x64x32xbf16, #tpu.memory_space<vmem>>, vector<1x64x32xbf16>
    %21 = vector.shape_cast %20 : vector<1x64x32xbf16> to vector<64x32xbf16>
    %22 = arith.index_cast %arg3 : i32 to index
    %23 = arith.index_cast %1 : i32 to index
    %c0_9 = arith.constant 0 : index
    %24 = vector.load %arg30[%22, %23, %c0_9] : memref<4x64x32xbf16, #tpu.memory_space<vmem>>, vector<1x64x32xbf16>
    %25 = vector.shape_cast %24 : vector<1x64x32xbf16> to vector<64x32xbf16>
    %26 = arith.index_cast %arg3 : i32 to index
    %c0_10 = arith.constant 0 : index
    %c0_11 = arith.constant 0 : index
    %27 = vector.load %arg24[%26, %c0_10, %c0_11] : memref<4x64x32xbf16, #tpu.memory_space<vmem>>, vector<1x64x32xbf16>
    %28 = vector.shape_cast %27 : vector<1x64x32xbf16> to vector<64x32xbf16>
    %cst = arith.constant dense<0.000000e+00> : vector<64x64xf32>
    %29 = tpu.matmul %28, %21, %cst {dimension_numbers = #tpu.dot_dimension_numbers<[1], [1], [0], [0], [0, 0, 1, 0], [], []>} : vector<64x32xbf16>, vector<64x32xbf16>, vector<64x64xf32> -> vector<64x64xf32>
    %30 = arith.index_cast %arg3 : i32 to index
    %c0_12 = arith.constant 0 : index
    %c0_13 = arith.constant 0 : index
    %31 = vector.load %arg25[%30, %c0_12, %c0_13] : memref<4x64x1xf32, #tpu.memory_space<vmem>>, vector<1x64x1xf32>
    %32 = vector.shape_cast %31 : vector<1x64x1xf32> to vector<64x1xf32>
    %cst_14 = arith.constant dense<0xFF800000> : vector<64xf32>
    %33 = vector.multi_reduction <maximumf>, %29, %cst_14 [1] : vector<64x64xf32> to vector<64xf32>
    %34 = vector.shape_cast %33 : vector<64xf32> to vector<64x1xf32>
    %35 = arith.maximumf %32, %34 : vector<64x1xf32>
    %36 = arith.subf %32, %35 : vector<64x1xf32>
    %37 = math.exp %36 : vector<64x1xf32>
    %38 = vector.broadcast %35 : vector<64x1xf32> to vector<64x64xf32>
    %39 = arith.subf %29, %38 : vector<64x64xf32>
    %40 = math.exp %39 : vector<64x64xf32>
    %41 = arith.index_cast %arg3 : i32 to index
    %c0_15 = arith.constant 0 : index
    %c0_16 = arith.constant 0 : index
    %42 = vector.load %arg26[%41, %c0_15, %c0_16] : memref<4x64x1xf32, #tpu.memory_space<vmem>>, vector<1x64x1xf32>
    %43 = vector.shape_cast %42 : vector<1x64x1xf32> to vector<64x1xf32>
    %44 = arith.mulf %37, %43 : vector<64x1xf32>
    %cst_17 = arith.constant dense<0.000000e+00> : vector<64xf32>
    %45 = vector.multi_reduction <add>, %40, %cst_17 [1] : vector<64x64xf32> to vector<64xf32>
    %46 = vector.shape_cast %45 : vector<64xf32> to vector<64x1xf32>
    %47 = arith.addf %44, %46 : vector<64x1xf32>
    %48 = arith.index_cast %arg3 : i32 to index
    %c0_18 = arith.constant 0 : index
    %c0_19 = arith.constant 0 : index
    %49 = vector.load %arg26[%48, %c0_18, %c0_19] : memref<4x64x1xf32, #tpu.memory_space<vmem>>, vector<1x64x1xf32>
    %50 = vector.shape_cast %49 : vector<1x64x1xf32> to vector<64x1xf32>
    %51 = vector.shape_cast %47 : vector<64x1xf32> to vector<1x64x1xf32>
    tpu.vector_store %arg26[%48, %c0_18, %c0_19], %51 {strides = array<i32>} : memref<4x64x1xf32, #tpu.memory_space<vmem>>, vector<1x64x1xf32>,
    %52 = arith.index_cast %arg3 : i32 to index
    %c0_20 = arith.constant 0 : index
    %c0_21 = arith.constant 0 : index
    %53 = vector.load %arg27[%52, %c0_20, %c0_21] : memref<4x64x32xf32, #tpu.memory_space<vmem>>, vector<1x64x32xf32>
    %54 = vector.shape_cast %53 : vector<1x64x32xf32> to vector<64x32xf32>
    %55 = vector.broadcast %37 : vector<64x1xf32> to vector<64x32xf32>
    %56 = arith.mulf %55, %54 : vector<64x32xf32>
    %57 = arith.truncf %40 : vector<64x64xf32> to vector<64x64xbf16>
    %cst_22 = arith.constant dense<0.000000e+00> : vector<64x32xf32>
    %58 = tpu.matmul %57, %25, %cst_22 {dimension_numbers = #tpu.dot_dimension_numbers<[1], [0], [0], [1], [0, 0, 1, 1], [], []>} : vector<64x64xbf16>, vector<64x32xbf16>, vector<64x32xf32> -> vector<64x32xf32>
    %59 = arith.addf %56, %58 : vector<64x32xf32>
    %60 = arith.index_cast %arg3 : i32 to index
    %c0_23 = arith.constant 0 : index
    %c0_24 = arith.constant 0 : index
    %61 = vector.load %arg27[%60, %c0_23, %c0_24] : memref<4x64x32xf32, #tpu.memory_space<vmem>>, vector<1x64x32xf32>
    %62 = vector.shape_cast %61 : vector<1x64x32xf32> to vector<64x32xf32>
    %63 = vector.shape_cast %59 : vector<64x32xf32> to vector<1x64x32xf32>
    tpu.vector_store %arg27[%60, %c0_23, %c0_24], %63 {strides = array<i32>} : memref<4x64x32xf32, #tpu.memory_space<vmem>>, vector<1x64x32xf32>,
    %64 = arith.index_cast %arg3 : i32 to index
    %c0_25 = arith.constant 0 : index
    %c0_26 = arith.constant 0 : index
    %65 = vector.load %arg25[%64, %c0_25, %c0_26] : memref<4x64x1xf32, #tpu.memory_space<vmem>>, vector<1x64x1xf32>
    %66 = vector.shape_cast %65 : vector<1x64x1xf32> to vector<64x1xf32>
    %67 = vector.shape_cast %35 : vector<64x1xf32> to vector<1x64x1xf32>
    tpu.vector_store %arg25[%64, %c0_25, %c0_26], %67 {strides = array<i32>} : memref<4x64x1xf32, #tpu.memory_space<vmem>>, vector<1x64x1xf32>,
    %c0_i32_27 = arith.constant 0 : i32
    %68 = arith.cmpi eq, %arg2, %c0_i32_27 : i32
    %69 = arith.extui %68 : i1 to i32
    %c0_i32_28 = arith.constant 0 : i32
    %70 = arith.cmpi ne, %69, %c0_i32_28 : i32
    scf.if %70 {
      %76 = arith.index_cast %arg3 : i32 to index
      %c0_31 = arith.constant 0 : index
      %c0_32 = arith.constant 0 : index
      %77 = vector.load %arg27[%76, %c0_31, %c0_32] : memref<4x64x32xf32, #tpu.memory_space<vmem>>, vector<1x64x32xf32>
      %78 = vector.shape_cast %77 : vector<1x64x32xf32> to vector<64x32xf32>
      %79 = arith.index_cast %arg3 : i32 to index
      %c0_33 = arith.constant 0 : index
      %c0_34 = arith.constant 0 : index
      %80 = vector.load %arg26[%79, %c0_33, %c0_34] : memref<4x64x1xf32, #tpu.memory_space<vmem>>, vector<1x64x1xf32>
      %81 = vector.shape_cast %80 : vector<1x64x1xf32> to vector<64x1xf32>
      %82 = tpu.reciprocal %81 : vector<64x1xf32> -> vector<64x1xf32>
      %83 = vector.broadcast %82 : vector<64x1xf32> to vector<64x32xf32>
      %84 = arith.mulf %78, %83 : vector<64x32xf32>
      %c0_35 = arith.constant 0 : index
      %c0_36 = arith.constant 0 : index
      %85 = vector.load %arg28[%c0_35, %c0_36] : memref<64x128xf32, #tpu.memory_space<vmem>>, vector<64x128xf32>
      %86 = arith.truncf %84 : vector<64x32xf32> to vector<64x32xbf16>
      %87 = arith.index_cast %arg3 : i32 to index
      %c0_37 = arith.constant 0 : index
      %c0_38 = arith.constant 0 : index
      %88 = vector.load %arg11[%87, %c0_37, %c0_38] : memref<4x32x128xbf16, #tpu.memory_space<vmem>>, vector<1x32x128xbf16>
      %89 = vector.shape_cast %88 : vector<1x32x128xbf16> to vector<32x128xbf16>
      %cst_39 = arith.constant dense<0.000000e+00> : vector<64x128xf32>
      %90 = tpu.matmul %86, %89, %cst_39 {dimension_numbers = #tpu.dot_dimension_numbers<[1], [0], [0], [1], [0, 0, 1, 1], [], []>} : vector<64x32xbf16>, vector<32x128xbf16>, vector<64x128xf32> -> vector<64x128xf32>
      %91 = arith.addf %85, %90 : vector<64x128xf32>
      %c0_40 = arith.constant 0 : index
      %c0_41 = arith.constant 0 : index
      %92 = vector.load %arg28[%c0_40, %c0_41] : memref<64x128xf32, #tpu.memory_space<vmem>>, vector<64x128xf32>
      tpu.vector_store %arg28[%c0_40, %c0_41], %91 {strides = array<i32>} : memref<64x128xf32, #tpu.memory_space<vmem>>, vector<64x128xf32>,
    } else {
    }
    %c0_i32_29 = arith.constant 0 : i32
    %71 = arith.cmpi eq, %arg2, %c0_i32_29 : i32
    %c3_i32 = arith.constant 3 : i32
    %72 = arith.cmpi eq, %arg3, %c3_i32 : i32
    %73 = arith.andi %71, %72 : i1
    %74 = arith.extui %73 : i1 to i32
    %c0_i32_30 = arith.constant 0 : i32
    %75 = arith.cmpi ne, %74, %c0_i32_30 : i32
    scf.if %75 {
      %c0_31 = arith.constant 0 : index
      %c0_32 = arith.constant 0 : index
      %76 = vector.load %arg28[%c0_31, %c0_32] : memref<64x128xf32, #tpu.memory_space<vmem>>, vector<64x128xf32>
      %c0_33 = arith.constant 0 : index
      %c0_34 = arith.constant 0 : index
      %77 = vector.load %arg12[%c0_33, %c0_34] : memref<1x128xf32, #tpu.memory_space<vmem>>, vector<1x128xf32>
      %78 = vector.broadcast %77 : vector<1x128xf32> to vector<64x128xf32>
      %79 = arith.addf %76, %78 : vector<64x128xf32>
      %c0_35 = arith.constant 0 : index
      %c0_36 = arith.constant 0 : index
      %c0_37 = arith.constant 0 : index
      %80 = vector.load %arg4[%c0_35, %c0_36, %c0_37] : memref<1x64x128xf32, #tpu.memory_space<vmem>>, vector<1x64x128xf32>
      %81 = vector.shape_cast %80 : vector<1x64x128xf32> to vector<64x128xf32>
      %82 = arith.addf %79, %81 : vector<64x128xf32>
      %c0_38 = arith.constant 0 : index
      %c0_39 = arith.constant 0 : index
      %83 = vector.load %arg13[%c0_38, %c0_39] : memref<1x128xf32, #tpu.memory_space<vmem>>, vector<1x128xf32>
      %c0_40 = arith.constant 0 : index
      %c0_41 = arith.constant 0 : index
      %84 = vector.load %arg14[%c0_40, %c0_41] : memref<1x128xf32, #tpu.memory_space<vmem>>, vector<1x128xf32>
      %cst_42 = arith.constant dense<0.000000e+00> : vector<64xf32>
      %85 = vector.multi_reduction <add>, %82, %cst_42 [1] : vector<64x128xf32> to vector<64xf32>
      %86 = vector.shape_cast %85 : vector<64xf32> to vector<64x1xf32>
      %cst_43 = arith.constant 1.280000e+02 : f32
      %87 = vector.broadcast %cst_43 : f32 to vector<64x1xf32>
      %88 = arith.divf %86, %87 : vector<64x1xf32>
      %89 = vector.broadcast %88 : vector<64x1xf32> to vector<64x128xf32>
      %90 = arith.subf %82, %89 : vector<64x128xf32>
      %91 = arith.mulf %90, %90 : vector<64x128xf32>
      %cst_44 = arith.constant dense<0.000000e+00> : vector<64xf32>
      %92 = vector.multi_reduction <add>, %91, %cst_44 [1] : vector<64x128xf32> to vector<64xf32>
      %93 = vector.shape_cast %92 : vector<64xf32> to vector<64x1xf32>
      %cst_45 = arith.constant 1.280000e+02 : f32
      %94 = vector.broadcast %cst_45 : f32 to vector<64x1xf32>
      %95 = arith.divf %93, %94 : vector<64x1xf32>
      %96 = vector.broadcast %88 : vector<64x1xf32> to vector<64x128xf32>
      %97 = arith.subf %82, %96 : vector<64x128xf32>
      %cst_46 = arith.constant 9.99999974E-6 : f32
      %98 = vector.broadcast %cst_46 : f32 to vector<64x1xf32>
      %99 = arith.addf %95, %98 : vector<64x1xf32>
      %100 = math.rsqrt %99 : vector<64x1xf32>
      %101 = vector.broadcast %100 : vector<64x1xf32> to vector<64x128xf32>
      %102 = arith.mulf %97, %101 : vector<64x128xf32>
      %103 = vector.broadcast %83 : vector<1x128xf32> to vector<64x128xf32>
      %104 = arith.mulf %102, %103 : vector<64x128xf32>
      %105 = vector.broadcast %84 : vector<1x128xf32> to vector<64x128xf32>
      %106 = arith.addf %104, %105 : vector<64x128xf32>
      %107 = arith.truncf %106 : vector<64x128xf32> to vector<64x128xbf16>
      %c0_47 = arith.constant 0 : index
      %c0_48 = arith.constant 0 : index
      %108 = vector.load %arg15[%c0_47, %c0_48] : memref<128x512xbf16, #tpu.memory_space<vmem>>, vector<128x512xbf16>
      %cst_49 = arith.constant dense<0.000000e+00> : vector<64x512xf32>
      %109 = tpu.matmul %107, %108, %cst_49 {dimension_numbers = #tpu.dot_dimension_numbers<[1], [0], [0], [1], [0, 0, 1, 1], [], []>} : vector<64x128xbf16>, vector<128x512xbf16>, vector<64x512xf32> -> vector<64x512xf32>
      %c0_50 = arith.constant 0 : index
      %c0_51 = arith.constant 0 : index
      %110 = vector.load %arg16[%c0_50, %c0_51] : memref<1x512xf32, #tpu.memory_space<vmem>>, vector<1x512xf32>
      %111 = vector.broadcast %110 : vector<1x512xf32> to vector<64x512xf32>
      %112 = arith.addf %109, %111 : vector<64x512xf32>
      %c0_52 = arith.constant 0 : index
      %c0_53 = arith.constant 0 : index
      %113 = vector.load %arg17[%c0_52, %c0_53] : memref<128x512xbf16, #tpu.memory_space<vmem>>, vector<128x512xbf16>
      %cst_54 = arith.constant dense<0.000000e+00> : vector<64x512xf32>
      %114 = tpu.matmul %107, %113, %cst_54 {dimension_numbers = #tpu.dot_dimension_numbers<[1], [0], [0], [1], [0, 0, 1, 1], [], []>} : vector<64x128xbf16>, vector<128x512xbf16>, vector<64x512xf32> -> vector<64x512xf32>
      %c0_55 = arith.constant 0 : index
      %c0_56 = arith.constant 0 : index
      %115 = vector.load %arg18[%c0_55, %c0_56] : memref<1x512xf32, #tpu.memory_space<vmem>>, vector<1x512xf32>
      %116 = vector.broadcast %115 : vector<1x512xf32> to vector<64x512xf32>
      %117 = arith.addf %114, %116 : vector<64x512xf32>
      %cst_57 = arith.constant 5.000000e-01 : f32
      %118 = vector.broadcast %cst_57 : f32 to vector<64x512xf32>
      %119 = arith.mulf %118, %117 : vector<64x512xf32>
      %cst_58 = arith.constant 0.707106769 : f32
      %120 = vector.broadcast %cst_58 : f32 to vector<64x512xf32>
      %121 = arith.mulf %117, %120 : vector<64x512xf32>
      %122 = math.erf %121 : vector<64x512xf32>
      %cst_59 = arith.constant 1.000000e+00 : f32
      %123 = vector.broadcast %cst_59 : f32 to vector<64x512xf32>
      %124 = arith.addf %123, %122 : vector<64x512xf32>
      %125 = arith.mulf %119, %124 : vector<64x512xf32>
      %126 = arith.mulf %112, %125 : vector<64x512xf32>
      %127 = arith.truncf %126 : vector<64x512xf32> to vector<64x512xbf16>
      %c0_60 = arith.constant 0 : index
      %c0_61 = arith.constant 0 : index
      %128 = vector.load %arg19[%c0_60, %c0_61] : memref<512x128xbf16, #tpu.memory_space<vmem>>, vector<512x128xbf16>
      %cst_62 = arith.constant dense<0.000000e+00> : vector<64x128xf32>
      %129 = tpu.matmul %127, %128, %cst_62 {dimension_numbers = #tpu.dot_dimension_numbers<[1], [0], [0], [1], [0, 0, 1, 1], [], []>} : vector<64x512xbf16>, vector<512x128xbf16>, vector<64x128xf32> -> vector<64x128xf32>
      %130 = arith.addf %82, %129 : vector<64x128xf32>
      %c0_63 = arith.constant 0 : index
      %c0_64 = arith.constant 0 : index
      %131 = vector.load %arg20[%c0_63, %c0_64] : memref<1x128xf32, #tpu.memory_space<vmem>>, vector<1x128xf32>
      %132 = vector.broadcast %131 : vector<1x128xf32> to vector<64x128xf32>
      %133 = arith.addf %130, %132 : vector<64x128xf32>
      %c0_65 = arith.constant 0 : index
      %c0_66 = arith.constant 0 : index
      %c0_67 = arith.constant 0 : index
      %134 = vector.load %arg21[%c0_65, %c0_66, %c0_67] : memref<1x64x128xf32, #tpu.memory_space<vmem>>, vector<1x64x128xf32>
      %135 = vector.shape_cast %134 : vector<1x64x128xf32> to vector<64x128xf32>
      %136 = vector.shape_cast %133 : vector<64x128xf32> to vector<1x64x128xf32>
      tpu.vector_store %arg21[%c0_65, %c0_66, %c0_67], %136 {strides = array<i32>} : memref<1x64x128xf32, #tpu.memory_space<vmem>>, vector<1x64x128xf32>,
    } else {
    }
    return
  }
  func.func @transform_0(%arg0: i32, %arg1: i32, %arg2: i32, %arg3: i32) -> (i32, i32, i32) {
    %c0_i32 = arith.constant 0 : i32
    %c0_i32_0 = arith.constant 0 : i32
    return %arg0, %arg1, %c0_i32 : i32, i32, i32
  }
  func.func @transform_1(%arg0: i32, %arg1: i32, %arg2: i32, %arg3: i32) -> (i32, i32, i32) {
    %c0_i32 = arith.constant 0 : i32
    %0 = arith.cmpi eq, %arg1, %c0_i32 : i32
    %c0_i32_0 = arith.constant 0 : i32
    %1 = arith.select %0, %arg2, %c0_i32_0 : i32
    %c0_i32_1 = arith.constant 0 : i32
    %c0_i32_2 = arith.constant 0 : i32
    return %arg0, %1, %c0_i32_1 : i32, i32, i32
  }
  func.func @transform_2(%arg0: i32, %arg1: i32, %arg2: i32, %arg3: i32) -> (i32, i32) {
    %c0_i32 = arith.constant 0 : i32
    %c0_i32_0 = arith.constant 0 : i32
    %c0_i32_1 = arith.constant 0 : i32
    return %c0_i32, %c0_i32_0 : i32, i32
  }
  func.func @transform_3(%arg0: i32, %arg1: i32, %arg2: i32, %arg3: i32) -> (i32, i32) {
    %c0_i32 = arith.constant 0 : i32
    %c0_i32_0 = arith.constant 0 : i32
    %c0_i32_1 = arith.constant 0 : i32
    return %c0_i32, %c0_i32_0 : i32, i32
  }
  func.func @transform_4(%arg0: i32, %arg1: i32, %arg2: i32, %arg3: i32) -> (i32, i32, i32) {
    %c0_i32 = arith.constant 0 : i32
    %c0_i32_0 = arith.constant 0 : i32
    %c0_i32_1 = arith.constant 0 : i32
    %c0_i32_2 = arith.constant 0 : i32
    return %c0_i32, %c0_i32_0, %c0_i32_1 : i32, i32, i32
  }
  func.func @transform_5(%arg0: i32, %arg1: i32, %arg2: i32, %arg3: i32) -> (i32, i32, i32) {
    %c0_i32 = arith.constant 0 : i32
    %c0_i32_0 = arith.constant 0 : i32
    %c0_i32_1 = arith.constant 0 : i32
    %c0_i32_2 = arith.constant 0 : i32
    return %c0_i32, %c0_i32_0, %c0_i32_1 : i32, i32, i32
  }
  func.func @transform_6(%arg0: i32, %arg1: i32, %arg2: i32, %arg3: i32) -> (i32, i32, i32) {
    %c0_i32 = arith.constant 0 : i32
    %c0_i32_0 = arith.constant 0 : i32
    %c0_i32_1 = arith.constant 0 : i32
    %c0_i32_2 = arith.constant 0 : i32
    return %c0_i32, %c0_i32_0, %c0_i32_1 : i32, i32, i32
  }
  func.func @transform_7(%arg0: i32, %arg1: i32, %arg2: i32, %arg3: i32) -> (i32, i32, i32) {
    %c0_i32 = arith.constant 0 : i32
    %c0_i32_0 = arith.constant 0 : i32
    %c0_i32_1 = arith.constant 0 : i32
    %c0_i32_2 = arith.constant 0 : i32
    return %c0_i32, %c0_i32_0, %c0_i32_1 : i32, i32, i32
  }
  func.func @transform_8(%arg0: i32, %arg1: i32, %arg2: i32, %arg3: i32) -> (i32, i32) {
    %c0_i32 = arith.constant 0 : i32
    %c0_i32_0 = arith.constant 0 : i32
    %c0_i32_1 = arith.constant 0 : i32
    return %c0_i32, %c0_i32_0 : i32, i32
  }
  func.func @transform_9(%arg0: i32, %arg1: i32, %arg2: i32, %arg3: i32) -> (i32, i32) {
    %c0_i32 = arith.constant 0 : i32
    %c0_i32_0 = arith.constant 0 : i32
    %c0_i32_1 = arith.constant 0 : i32
    return %c0_i32, %c0_i32_0 : i32, i32
  }
  func.func @transform_10(%arg0: i32, %arg1: i32, %arg2: i32, %arg3: i32) -> (i32, i32) {
    %c0_i32 = arith.constant 0 : i32
    %c0_i32_0 = arith.constant 0 : i32
    %c0_i32_1 = arith.constant 0 : i32
    return %c0_i32, %c0_i32_0 : i32, i32
  }
  func.func @transform_11(%arg0: i32, %arg1: i32, %arg2: i32, %arg3: i32) -> (i32, i32) {
    %c0_i32 = arith.constant 0 : i32
    %c0_i32_0 = arith.constant 0 : i32
    %c0_i32_1 = arith.constant 0 : i32
    return %c0_i32, %c0_i32_0 : i32, i32
  }
  func.func @transform_12(%arg0: i32, %arg1: i32, %arg2: i32, %arg3: i32) -> (i32, i32) {
    %c0_i32 = arith.constant 0 : i32
    %c0_i32_0 = arith.constant 0 : i32
    %c0_i32_1 = arith.constant 0 : i32
    return %c0_i32, %c0_i32_0 : i32, i32
  }
  func.func @transform_13(%arg0: i32, %arg1: i32, %arg2: i32, %arg3: i32) -> (i32, i32) {
    %c0_i32 = arith.constant 0 : i32
    %c0_i32_0 = arith.constant 0 : i32
    %c0_i32_1 = arith.constant 0 : i32
    return %c0_i32, %c0_i32_0 : i32, i32
  }
  func.func @transform_14(%arg0: i32, %arg1: i32, %arg2: i32, %arg3: i32) -> (i32, i32) {
    %c0_i32 = arith.constant 0 : i32
    %c0_i32_0 = arith.constant 0 : i32
    %c0_i32_1 = arith.constant 0 : i32
    return %c0_i32, %c0_i32_0 : i32, i32
  }
  func.func @transform_15(%arg0: i32, %arg1: i32, %arg2: i32, %arg3: i32) -> (i32, i32) {
    %c0_i32 = arith.constant 0 : i32
    %c0_i32_0 = arith.constant 0 : i32
    %c0_i32_1 = arith.constant 0 : i32
    return %c0_i32, %c0_i32_0 : i32, i32
  }
  func.func @transform_16(%arg0: i32, %arg1: i32, %arg2: i32, %arg3: i32) -> (i32, i32) {
    %c0_i32 = arith.constant 0 : i32
    %c0_i32_0 = arith.constant 0 : i32
    %c0_i32_1 = arith.constant 0 : i32
    return %c0_i32, %c0_i32_0 : i32, i32
  }
  func.func @transform_17(%arg0: i32, %arg1: i32, %arg2: i32, %arg3: i32) -> (i32, i32, i32) {
    %c0_i32 = arith.constant 0 : i32
    %c0_i32_0 = arith.constant 0 : i32
    return %arg0, %arg1, %c0_i32 : i32, i32, i32
  }
}

module attributes {stable_mosaic.version = 11 : i64} {
  func.func @kernel(%arg0: i32, %arg1: i32, %arg2: i32, %arg3: i32, %arg4: memref<1x64x128xf32, #tpu.memory_space<vmem>>, %arg5: memref<1x64x128xf32, #tpu.memory_space<vmem>>, %arg6: memref<1x128xf32, #tpu.memory_space<vmem>>, %arg7: memref<1x128xf32, #tpu.memory_space<vmem>>, %arg8: memref<4x128x32xbf16, #tpu.memory_space<vmem>>, %arg9: memref<4x128x32xbf16, #tpu.memory_space<vmem>>, %arg10: memref<4x128x32xbf16, #tpu.memory_space<vmem>>, %arg11: memref<4x32x128xbf16, #tpu.memory_space<vmem>>, %arg12: memref<1x128xf32, #tpu.memory_space<vmem>>, %arg13: memref<1x64x128xf32, #tpu.memory_space<vmem>>, %arg14: memref<64x128xbf16, #tpu.memory_space<vmem>>, %arg15: memref<64x128xbf16, #tpu.memory_space<vmem>>, %arg16: memref<4x64x32xbf16, #tpu.memory_space<vmem>>, %arg17: memref<4x64x1xf32, #tpu.memory_space<vmem>>, %arg18: memref<4x64x1xf32, #tpu.memory_space<vmem>>, %arg19: memref<4x64x32xf32, #tpu.memory_space<vmem>>, %arg20: memref<64x128xf32, #tpu.memory_space<vmem>>, %arg21: memref<4x128x32xbf16, #tpu.memory_space<vmem>>, %arg22: memref<4x128x32xbf16, #tpu.memory_space<vmem>>) attributes {dimension_semantics = [#tpu.dimension_semantics<parallel>, #tpu.dimension_semantics<arbitrary>, #tpu.dimension_semantics<arbitrary>, #tpu.dimension_semantics<arbitrary>], iteration_bounds = array<i64: 2, 2, 2, 4>, scalar_prefetch = 0 : i64, scratch_operands = 9 : i64, tpu.core_type = #tpu.core_type<tc>, window_params = [{transform_indices = @transform_0, window_bounds = array<i64: 1, 64, 128>}, {transform_indices = @transform_1, window_bounds = array<i64: 1, 64, 128>}, {pipeline_mode = #tpu.pipeline_mode<synchronous>, transform_indices = @transform_2, window_bounds = array<i64: 1, 128>}, {pipeline_mode = #tpu.pipeline_mode<synchronous>, transform_indices = @transform_3, window_bounds = array<i64: 1, 128>}, {pipeline_mode = #tpu.pipeline_mode<synchronous>, transform_indices = @transform_4, window_bounds = array<i64: 4, 128, 32>}, {pipeline_mode = #tpu.pipeline_mode<synchronous>, transform_indices = @transform_5, window_bounds = array<i64: 4, 128, 32>}, {pipeline_mode = #tpu.pipeline_mode<synchronous>, transform_indices = @transform_6, window_bounds = array<i64: 4, 128, 32>}, {pipeline_mode = #tpu.pipeline_mode<synchronous>, transform_indices = @transform_7, window_bounds = array<i64: 4, 32, 128>}, {pipeline_mode = #tpu.pipeline_mode<synchronous>, transform_indices = @transform_8, window_bounds = array<i64: 1, 128>}, {transform_indices = @transform_9, window_bounds = array<i64: 1, 64, 128>}]} {
    %c64_i32 = arith.constant 64 : i32
    %0 = arith.muli %arg2, %c64_i32 : i32
    %1 = tpu.assume_multiple %0, 64 : i32
    %c0_i32 = arith.constant 0 : i32
    %2 = arith.cmpi eq, %arg2, %c0_i32 : i32
    %c0_i32_0 = arith.constant 0 : i32
    %3 = arith.cmpi eq, %arg3, %c0_i32_0 : i32
    %4 = arith.andi %2, %3 : i1
    %5 = arith.extui %4 : i1 to i32
    %c0_i32_1 = arith.constant 0 : i32
    %6 = arith.cmpi ne, %5, %c0_i32_1 : i32
    scf.if %6 {
      %c0_30 = arith.constant 0 : index
      %c0_31 = arith.constant 0 : index
      %c0_32 = arith.constant 0 : index
      %76 = vector.load %arg4[%c0_30, %c0_31, %c0_32] : memref<1x64x128xf32, #tpu.memory_space<vmem>>, vector<1x64x128xf32>
      %77 = vector.shape_cast %76 : vector<1x64x128xf32> to vector<64x128xf32>
      %c0_33 = arith.constant 0 : index
      %c0_34 = arith.constant 0 : index
      %78 = vector.load %arg6[%c0_33, %c0_34] : memref<1x128xf32, #tpu.memory_space<vmem>>, vector<1x128xf32>
      %c0_35 = arith.constant 0 : index
      %c0_36 = arith.constant 0 : index
      %79 = vector.load %arg7[%c0_35, %c0_36] : memref<1x128xf32, #tpu.memory_space<vmem>>, vector<1x128xf32>
      %cst_37 = arith.constant dense<0.000000e+00> : vector<64xf32>
      %80 = vector.multi_reduction <add>, %77, %cst_37 [1] : vector<64x128xf32> to vector<64xf32>
      %81 = vector.shape_cast %80 : vector<64xf32> to vector<64x1xf32>
      %cst_38 = arith.constant 1.280000e+02 : f32
      %82 = vector.broadcast %cst_38 : f32 to vector<64x1xf32>
      %83 = arith.divf %81, %82 : vector<64x1xf32>
      %84 = vector.broadcast %83 : vector<64x1xf32> to vector<64x128xf32>
      %85 = arith.subf %77, %84 : vector<64x128xf32>
      %86 = arith.mulf %85, %85 : vector<64x128xf32>
      %cst_39 = arith.constant dense<0.000000e+00> : vector<64xf32>
      %87 = vector.multi_reduction <add>, %86, %cst_39 [1] : vector<64x128xf32> to vector<64xf32>
      %88 = vector.shape_cast %87 : vector<64xf32> to vector<64x1xf32>
      %cst_40 = arith.constant 1.280000e+02 : f32
      %89 = vector.broadcast %cst_40 : f32 to vector<64x1xf32>
      %90 = arith.divf %88, %89 : vector<64x1xf32>
      %91 = vector.broadcast %83 : vector<64x1xf32> to vector<64x128xf32>
      %92 = arith.subf %77, %91 : vector<64x128xf32>
      %cst_41 = arith.constant 9.99999974E-6 : f32
      %93 = vector.broadcast %cst_41 : f32 to vector<64x1xf32>
      %94 = arith.addf %90, %93 : vector<64x1xf32>
      %95 = math.rsqrt %94 : vector<64x1xf32>
      %96 = vector.broadcast %95 : vector<64x1xf32> to vector<64x128xf32>
      %97 = arith.mulf %92, %96 : vector<64x128xf32>
      %98 = vector.broadcast %78 : vector<1x128xf32> to vector<64x128xf32>
      %99 = arith.mulf %97, %98 : vector<64x128xf32>
      %100 = vector.broadcast %79 : vector<1x128xf32> to vector<64x128xf32>
      %101 = arith.addf %99, %100 : vector<64x128xf32>
      %102 = arith.truncf %101 : vector<64x128xf32> to vector<64x128xbf16>
      %c0_42 = arith.constant 0 : index
      %c0_43 = arith.constant 0 : index
      %103 = vector.load %arg14[%c0_42, %c0_43] : memref<64x128xbf16, #tpu.memory_space<vmem>>, vector<64x128xbf16>
      tpu.vector_store %arg14[%c0_42, %c0_43], %102 {strides = array<i32>} : memref<64x128xbf16, #tpu.memory_space<vmem>>, vector<64x128xbf16>,
      %cst_44 = arith.constant 0.000000e+00 : f32
      %104 = vector.broadcast %cst_44 : f32 to vector<64x128xf32>
      %c0_45 = arith.constant 0 : index
      %c0_46 = arith.constant 0 : index
      %105 = vector.load %arg20[%c0_45, %c0_46] : memref<64x128xf32, #tpu.memory_space<vmem>>, vector<64x128xf32>
      tpu.vector_store %arg20[%c0_45, %c0_46], %104 {strides = array<i32>} : memref<64x128xf32, #tpu.memory_space<vmem>>, vector<64x128xf32>,
    } else {
    }
    %c0_i32_2 = arith.constant 0 : i32
    %7 = arith.cmpi eq, %arg2, %c0_i32_2 : i32
    %8 = arith.extui %7 : i1 to i32
    %c0_i32_3 = arith.constant 0 : i32
    %9 = arith.cmpi ne, %8, %c0_i32_3 : i32
    scf.if %9 {
      %c0_30 = arith.constant 0 : index
      %c0_31 = arith.constant 0 : index
      %76 = vector.load %arg14[%c0_30, %c0_31] : memref<64x128xbf16, #tpu.memory_space<vmem>>, vector<64x128xbf16>
      %77 = arith.index_cast %arg3 : i32 to index
      %c0_32 = arith.constant 0 : index
      %c0_33 = arith.constant 0 : index
      %78 = vector.load %arg8[%77, %c0_32, %c0_33] : memref<4x128x32xbf16, #tpu.memory_space<vmem>>, vector<1x128x32xbf16>
      %79 = vector.shape_cast %78 : vector<1x128x32xbf16> to vector<128x32xbf16>
      %cst_34 = arith.constant dense<0.000000e+00> : vector<64x32xf32>
      %80 = tpu.matmul %76, %79, %cst_34 {dimension_numbers = #tpu.dot_dimension_numbers<[1], [0], [0], [1], [0, 0, 1, 1], [], []>} : vector<64x128xbf16>, vector<128x32xbf16>, vector<64x32xf32> -> vector<64x32xf32>
      %cst_35 = arith.constant 0.176776692 : f32
      %81 = vector.broadcast %cst_35 : f32 to vector<64x32xf32>
      %82 = arith.mulf %80, %81 : vector<64x32xf32>
      %83 = arith.truncf %82 : vector<64x32xf32> to vector<64x32xbf16>
      %84 = arith.index_cast %arg3 : i32 to index
      %c0_36 = arith.constant 0 : index
      %c0_37 = arith.constant 0 : index
      %85 = vector.load %arg16[%84, %c0_36, %c0_37] : memref<4x64x32xbf16, #tpu.memory_space<vmem>>, vector<1x64x32xbf16>
      %86 = vector.shape_cast %85 : vector<1x64x32xbf16> to vector<64x32xbf16>
      %87 = vector.shape_cast %83 : vector<64x32xbf16> to vector<1x64x32xbf16>
      tpu.vector_store %arg16[%84, %c0_36, %c0_37], %87 {strides = array<i32>} : memref<4x64x32xbf16, #tpu.memory_space<vmem>>, vector<1x64x32xbf16>,
      %cst_38 = arith.constant 0xFF800000 : f32
      %88 = vector.broadcast %cst_38 : f32 to vector<64x1xf32>
      %89 = arith.index_cast %arg3 : i32 to index
      %c0_39 = arith.constant 0 : index
      %c0_40 = arith.constant 0 : index
      %90 = vector.load %arg17[%89, %c0_39, %c0_40] : memref<4x64x1xf32, #tpu.memory_space<vmem>>, vector<1x64x1xf32>
      %91 = vector.shape_cast %90 : vector<1x64x1xf32> to vector<64x1xf32>
      %92 = vector.shape_cast %88 : vector<64x1xf32> to vector<1x64x1xf32>
      tpu.vector_store %arg17[%89, %c0_39, %c0_40], %92 {strides = array<i32>} : memref<4x64x1xf32, #tpu.memory_space<vmem>>, vector<1x64x1xf32>,
      %cst_41 = arith.constant 0.000000e+00 : f32
      %93 = vector.broadcast %cst_41 : f32 to vector<64x1xf32>
      %94 = arith.index_cast %arg3 : i32 to index
      %c0_42 = arith.constant 0 : index
      %c0_43 = arith.constant 0 : index
      %95 = vector.load %arg18[%94, %c0_42, %c0_43] : memref<4x64x1xf32, #tpu.memory_space<vmem>>, vector<1x64x1xf32>
      %96 = vector.shape_cast %95 : vector<1x64x1xf32> to vector<64x1xf32>
      %97 = vector.shape_cast %93 : vector<64x1xf32> to vector<1x64x1xf32>
      tpu.vector_store %arg18[%94, %c0_42, %c0_43], %97 {strides = array<i32>} : memref<4x64x1xf32, #tpu.memory_space<vmem>>, vector<1x64x1xf32>,
      %cst_44 = arith.constant 0.000000e+00 : f32
      %98 = vector.broadcast %cst_44 : f32 to vector<64x32xf32>
      %99 = arith.index_cast %arg3 : i32 to index
      %c0_45 = arith.constant 0 : index
      %c0_46 = arith.constant 0 : index
      %100 = vector.load %arg19[%99, %c0_45, %c0_46] : memref<4x64x32xf32, #tpu.memory_space<vmem>>, vector<1x64x32xf32>
      %101 = vector.shape_cast %100 : vector<1x64x32xf32> to vector<64x32xf32>
      %102 = vector.shape_cast %98 : vector<64x32xf32> to vector<1x64x32xf32>
      tpu.vector_store %arg19[%99, %c0_45, %c0_46], %102 {strides = array<i32>} : memref<4x64x32xf32, #tpu.memory_space<vmem>>, vector<1x64x32xf32>,
    } else {
    }
    %c0_i32_4 = arith.constant 0 : i32
    %10 = arith.cmpi eq, %arg1, %c0_i32_4 : i32
    %c0_i32_5 = arith.constant 0 : i32
    %11 = arith.cmpi eq, %arg3, %c0_i32_5 : i32
    %12 = arith.andi %10, %11 : i1
    %13 = arith.extui %12 : i1 to i32
    %c0_i32_6 = arith.constant 0 : i32
    %14 = arith.cmpi ne, %13, %c0_i32_6 : i32
    scf.if %14 {
      %c0_30 = arith.constant 0 : index
      %c0_31 = arith.constant 0 : index
      %c0_32 = arith.constant 0 : index
      %76 = vector.load %arg5[%c0_30, %c0_31, %c0_32] : memref<1x64x128xf32, #tpu.memory_space<vmem>>, vector<1x64x128xf32>
      %77 = vector.shape_cast %76 : vector<1x64x128xf32> to vector<64x128xf32>
      %c0_33 = arith.constant 0 : index
      %c0_34 = arith.constant 0 : index
      %78 = vector.load %arg6[%c0_33, %c0_34] : memref<1x128xf32, #tpu.memory_space<vmem>>, vector<1x128xf32>
      %c0_35 = arith.constant 0 : index
      %c0_36 = arith.constant 0 : index
      %79 = vector.load %arg7[%c0_35, %c0_36] : memref<1x128xf32, #tpu.memory_space<vmem>>, vector<1x128xf32>
      %cst_37 = arith.constant dense<0.000000e+00> : vector<64xf32>
      %80 = vector.multi_reduction <add>, %77, %cst_37 [1] : vector<64x128xf32> to vector<64xf32>
      %81 = vector.shape_cast %80 : vector<64xf32> to vector<64x1xf32>
      %cst_38 = arith.constant 1.280000e+02 : f32
      %82 = vector.broadcast %cst_38 : f32 to vector<64x1xf32>
      %83 = arith.divf %81, %82 : vector<64x1xf32>
      %84 = vector.broadcast %83 : vector<64x1xf32> to vector<64x128xf32>
      %85 = arith.subf %77, %84 : vector<64x128xf32>
      %86 = arith.mulf %85, %85 : vector<64x128xf32>
      %cst_39 = arith.constant dense<0.000000e+00> : vector<64xf32>
      %87 = vector.multi_reduction <add>, %86, %cst_39 [1] : vector<64x128xf32> to vector<64xf32>
      %88 = vector.shape_cast %87 : vector<64xf32> to vector<64x1xf32>
      %cst_40 = arith.constant 1.280000e+02 : f32
      %89 = vector.broadcast %cst_40 : f32 to vector<64x1xf32>
      %90 = arith.divf %88, %89 : vector<64x1xf32>
      %91 = vector.broadcast %83 : vector<64x1xf32> to vector<64x128xf32>
      %92 = arith.subf %77, %91 : vector<64x128xf32>
      %cst_41 = arith.constant 9.99999974E-6 : f32
      %93 = vector.broadcast %cst_41 : f32 to vector<64x1xf32>
      %94 = arith.addf %90, %93 : vector<64x1xf32>
      %95 = math.rsqrt %94 : vector<64x1xf32>
      %96 = vector.broadcast %95 : vector<64x1xf32> to vector<64x128xf32>
      %97 = arith.mulf %92, %96 : vector<64x128xf32>
      %98 = vector.broadcast %78 : vector<1x128xf32> to vector<64x128xf32>
      %99 = arith.mulf %97, %98 : vector<64x128xf32>
      %100 = vector.broadcast %79 : vector<1x128xf32> to vector<64x128xf32>
      %101 = arith.addf %99, %100 : vector<64x128xf32>
      %102 = arith.truncf %101 : vector<64x128xf32> to vector<64x128xbf16>
      %c0_42 = arith.constant 0 : index
      %c0_43 = arith.constant 0 : index
      %103 = vector.load %arg15[%c0_42, %c0_43] : memref<64x128xbf16, #tpu.memory_space<vmem>>, vector<64x128xbf16>
      tpu.vector_store %arg15[%c0_42, %c0_43], %102 {strides = array<i32>} : memref<64x128xbf16, #tpu.memory_space<vmem>>, vector<64x128xbf16>,
    } else {
    }
    %c0_i32_7 = arith.constant 0 : i32
    %15 = arith.cmpi eq, %arg1, %c0_i32_7 : i32
    %16 = arith.extui %15 : i1 to i32
    %c0_i32_8 = arith.constant 0 : i32
    %17 = arith.cmpi ne, %16, %c0_i32_8 : i32
    scf.if %17 {
      %c0_30 = arith.constant 0 : index
      %c0_31 = arith.constant 0 : index
      %76 = vector.load %arg15[%c0_30, %c0_31] : memref<64x128xbf16, #tpu.memory_space<vmem>>, vector<64x128xbf16>
      %77 = arith.index_cast %arg3 : i32 to index
      %c0_32 = arith.constant 0 : index
      %c0_33 = arith.constant 0 : index
      %78 = vector.load %arg9[%77, %c0_32, %c0_33] : memref<4x128x32xbf16, #tpu.memory_space<vmem>>, vector<1x128x32xbf16>
      %79 = vector.shape_cast %78 : vector<1x128x32xbf16> to vector<128x32xbf16>
      %cst_34 = arith.constant dense<0.000000e+00> : vector<64x32xf32>
      %80 = tpu.matmul %76, %79, %cst_34 {dimension_numbers = #tpu.dot_dimension_numbers<[1], [0], [0], [1], [0, 0, 1, 1], [], []>} : vector<64x128xbf16>, vector<128x32xbf16>, vector<64x32xf32> -> vector<64x32xf32>
      %81 = arith.index_cast %arg3 : i32 to index
      %c0_35 = arith.constant 0 : index
      %c0_36 = arith.constant 0 : index
      %82 = vector.load %arg10[%81, %c0_35, %c0_36] : memref<4x128x32xbf16, #tpu.memory_space<vmem>>, vector<1x128x32xbf16>
      %83 = vector.shape_cast %82 : vector<1x128x32xbf16> to vector<128x32xbf16>
      %cst_37 = arith.constant dense<0.000000e+00> : vector<64x32xf32>
      %84 = tpu.matmul %76, %83, %cst_37 {dimension_numbers = #tpu.dot_dimension_numbers<[1], [0], [0], [1], [0, 0, 1, 1], [], []>} : vector<64x128xbf16>, vector<128x32xbf16>, vector<64x32xf32> -> vector<64x32xf32>
      %85 = arith.truncf %80 : vector<64x32xf32> to vector<64x32xbf16>
      %86 = arith.index_cast %arg3 : i32 to index
      %87 = arith.index_cast %1 : i32 to index
      %c0_38 = arith.constant 0 : index
      %88 = vector.load %arg21[%86, %87, %c0_38] : memref<4x128x32xbf16, #tpu.memory_space<vmem>>, vector<1x64x32xbf16>
      %89 = vector.shape_cast %88 : vector<1x64x32xbf16> to vector<64x32xbf16>
      %90 = vector.shape_cast %85 : vector<64x32xbf16> to vector<1x64x32xbf16>
      tpu.vector_store %arg21[%86, %87, %c0_38], %90 {strides = array<i32>} : memref<4x128x32xbf16, #tpu.memory_space<vmem>>, vector<1x64x32xbf16>,
      %91 = arith.truncf %84 : vector<64x32xf32> to vector<64x32xbf16>
      %92 = arith.index_cast %arg3 : i32 to index
      %93 = arith.index_cast %1 : i32 to index
      %c0_39 = arith.constant 0 : index
      %94 = vector.load %arg22[%92, %93, %c0_39] : memref<4x128x32xbf16, #tpu.memory_space<vmem>>, vector<1x64x32xbf16>
      %95 = vector.shape_cast %94 : vector<1x64x32xbf16> to vector<64x32xbf16>
      %96 = vector.shape_cast %91 : vector<64x32xbf16> to vector<1x64x32xbf16>
      tpu.vector_store %arg22[%92, %93, %c0_39], %96 {strides = array<i32>} : memref<4x128x32xbf16, #tpu.memory_space<vmem>>, vector<1x64x32xbf16>,
    } else {
    }
    %18 = arith.index_cast %arg3 : i32 to index
    %19 = arith.index_cast %1 : i32 to index
    %c0 = arith.constant 0 : index
    %20 = vector.load %arg21[%18, %19, %c0] : memref<4x128x32xbf16, #tpu.memory_space<vmem>>, vector<1x64x32xbf16>
    %21 = vector.shape_cast %20 : vector<1x64x32xbf16> to vector<64x32xbf16>
    %22 = arith.index_cast %arg3 : i32 to index
    %23 = arith.index_cast %1 : i32 to index
    %c0_9 = arith.constant 0 : index
    %24 = vector.load %arg22[%22, %23, %c0_9] : memref<4x128x32xbf16, #tpu.memory_space<vmem>>, vector<1x64x32xbf16>
    %25 = vector.shape_cast %24 : vector<1x64x32xbf16> to vector<64x32xbf16>
    %26 = arith.index_cast %arg3 : i32 to index
    %c0_10 = arith.constant 0 : index
    %c0_11 = arith.constant 0 : index
    %27 = vector.load %arg16[%26, %c0_10, %c0_11] : memref<4x64x32xbf16, #tpu.memory_space<vmem>>, vector<1x64x32xbf16>
    %28 = vector.shape_cast %27 : vector<1x64x32xbf16> to vector<64x32xbf16>
    %cst = arith.constant dense<0.000000e+00> : vector<64x64xf32>
    %29 = tpu.matmul %28, %21, %cst {dimension_numbers = #tpu.dot_dimension_numbers<[1], [1], [0], [0], [0, 0, 1, 0], [], []>} : vector<64x32xbf16>, vector<64x32xbf16>, vector<64x64xf32> -> vector<64x64xf32>
    %30 = arith.index_cast %arg3 : i32 to index
    %c0_12 = arith.constant 0 : index
    %c0_13 = arith.constant 0 : index
    %31 = vector.load %arg17[%30, %c0_12, %c0_13] : memref<4x64x1xf32, #tpu.memory_space<vmem>>, vector<1x64x1xf32>
    %32 = vector.shape_cast %31 : vector<1x64x1xf32> to vector<64x1xf32>
    %cst_14 = arith.constant dense<0xFF800000> : vector<64xf32>
    %33 = vector.multi_reduction <maximumf>, %29, %cst_14 [1] : vector<64x64xf32> to vector<64xf32>
    %34 = vector.shape_cast %33 : vector<64xf32> to vector<64x1xf32>
    %35 = arith.maximumf %32, %34 : vector<64x1xf32>
    %36 = arith.subf %32, %35 : vector<64x1xf32>
    %37 = math.exp %36 : vector<64x1xf32>
    %38 = vector.broadcast %35 : vector<64x1xf32> to vector<64x64xf32>
    %39 = arith.subf %29, %38 : vector<64x64xf32>
    %40 = math.exp %39 : vector<64x64xf32>
    %41 = arith.index_cast %arg3 : i32 to index
    %c0_15 = arith.constant 0 : index
    %c0_16 = arith.constant 0 : index
    %42 = vector.load %arg18[%41, %c0_15, %c0_16] : memref<4x64x1xf32, #tpu.memory_space<vmem>>, vector<1x64x1xf32>
    %43 = vector.shape_cast %42 : vector<1x64x1xf32> to vector<64x1xf32>
    %44 = arith.mulf %37, %43 : vector<64x1xf32>
    %cst_17 = arith.constant dense<0.000000e+00> : vector<64xf32>
    %45 = vector.multi_reduction <add>, %40, %cst_17 [1] : vector<64x64xf32> to vector<64xf32>
    %46 = vector.shape_cast %45 : vector<64xf32> to vector<64x1xf32>
    %47 = arith.addf %44, %46 : vector<64x1xf32>
    %48 = arith.index_cast %arg3 : i32 to index
    %c0_18 = arith.constant 0 : index
    %c0_19 = arith.constant 0 : index
    %49 = vector.load %arg18[%48, %c0_18, %c0_19] : memref<4x64x1xf32, #tpu.memory_space<vmem>>, vector<1x64x1xf32>
    %50 = vector.shape_cast %49 : vector<1x64x1xf32> to vector<64x1xf32>
    %51 = vector.shape_cast %47 : vector<64x1xf32> to vector<1x64x1xf32>
    tpu.vector_store %arg18[%48, %c0_18, %c0_19], %51 {strides = array<i32>} : memref<4x64x1xf32, #tpu.memory_space<vmem>>, vector<1x64x1xf32>,
    %52 = arith.index_cast %arg3 : i32 to index
    %c0_20 = arith.constant 0 : index
    %c0_21 = arith.constant 0 : index
    %53 = vector.load %arg19[%52, %c0_20, %c0_21] : memref<4x64x32xf32, #tpu.memory_space<vmem>>, vector<1x64x32xf32>
    %54 = vector.shape_cast %53 : vector<1x64x32xf32> to vector<64x32xf32>
    %55 = vector.broadcast %37 : vector<64x1xf32> to vector<64x32xf32>
    %56 = arith.mulf %55, %54 : vector<64x32xf32>
    %57 = arith.truncf %40 : vector<64x64xf32> to vector<64x64xbf16>
    %cst_22 = arith.constant dense<0.000000e+00> : vector<64x32xf32>
    %58 = tpu.matmul %57, %25, %cst_22 {dimension_numbers = #tpu.dot_dimension_numbers<[1], [0], [0], [1], [0, 0, 1, 1], [], []>} : vector<64x64xbf16>, vector<64x32xbf16>, vector<64x32xf32> -> vector<64x32xf32>
    %59 = arith.addf %56, %58 : vector<64x32xf32>
    %60 = arith.index_cast %arg3 : i32 to index
    %c0_23 = arith.constant 0 : index
    %c0_24 = arith.constant 0 : index
    %61 = vector.load %arg19[%60, %c0_23, %c0_24] : memref<4x64x32xf32, #tpu.memory_space<vmem>>, vector<1x64x32xf32>
    %62 = vector.shape_cast %61 : vector<1x64x32xf32> to vector<64x32xf32>
    %63 = vector.shape_cast %59 : vector<64x32xf32> to vector<1x64x32xf32>
    tpu.vector_store %arg19[%60, %c0_23, %c0_24], %63 {strides = array<i32>} : memref<4x64x32xf32, #tpu.memory_space<vmem>>, vector<1x64x32xf32>,
    %64 = arith.index_cast %arg3 : i32 to index
    %c0_25 = arith.constant 0 : index
    %c0_26 = arith.constant 0 : index
    %65 = vector.load %arg17[%64, %c0_25, %c0_26] : memref<4x64x1xf32, #tpu.memory_space<vmem>>, vector<1x64x1xf32>
    %66 = vector.shape_cast %65 : vector<1x64x1xf32> to vector<64x1xf32>
    %67 = vector.shape_cast %35 : vector<64x1xf32> to vector<1x64x1xf32>
    tpu.vector_store %arg17[%64, %c0_25, %c0_26], %67 {strides = array<i32>} : memref<4x64x1xf32, #tpu.memory_space<vmem>>, vector<1x64x1xf32>,
    %c1_i32 = arith.constant 1 : i32
    %68 = arith.cmpi eq, %arg2, %c1_i32 : i32
    %69 = arith.extui %68 : i1 to i32
    %c0_i32_27 = arith.constant 0 : i32
    %70 = arith.cmpi ne, %69, %c0_i32_27 : i32
    scf.if %70 {
      %76 = arith.index_cast %arg3 : i32 to index
      %c0_30 = arith.constant 0 : index
      %c0_31 = arith.constant 0 : index
      %77 = vector.load %arg19[%76, %c0_30, %c0_31] : memref<4x64x32xf32, #tpu.memory_space<vmem>>, vector<1x64x32xf32>
      %78 = vector.shape_cast %77 : vector<1x64x32xf32> to vector<64x32xf32>
      %79 = arith.index_cast %arg3 : i32 to index
      %c0_32 = arith.constant 0 : index
      %c0_33 = arith.constant 0 : index
      %80 = vector.load %arg18[%79, %c0_32, %c0_33] : memref<4x64x1xf32, #tpu.memory_space<vmem>>, vector<1x64x1xf32>
      %81 = vector.shape_cast %80 : vector<1x64x1xf32> to vector<64x1xf32>
      %82 = tpu.reciprocal %81 : vector<64x1xf32> -> vector<64x1xf32>
      %83 = vector.broadcast %82 : vector<64x1xf32> to vector<64x32xf32>
      %84 = arith.mulf %78, %83 : vector<64x32xf32>
      %c0_34 = arith.constant 0 : index
      %c0_35 = arith.constant 0 : index
      %85 = vector.load %arg20[%c0_34, %c0_35] : memref<64x128xf32, #tpu.memory_space<vmem>>, vector<64x128xf32>
      %86 = arith.truncf %84 : vector<64x32xf32> to vector<64x32xbf16>
      %87 = arith.index_cast %arg3 : i32 to index
      %c0_36 = arith.constant 0 : index
      %c0_37 = arith.constant 0 : index
      %88 = vector.load %arg11[%87, %c0_36, %c0_37] : memref<4x32x128xbf16, #tpu.memory_space<vmem>>, vector<1x32x128xbf16>
      %89 = vector.shape_cast %88 : vector<1x32x128xbf16> to vector<32x128xbf16>
      %cst_38 = arith.constant dense<0.000000e+00> : vector<64x128xf32>
      %90 = tpu.matmul %86, %89, %cst_38 {dimension_numbers = #tpu.dot_dimension_numbers<[1], [0], [0], [1], [0, 0, 1, 1], [], []>} : vector<64x32xbf16>, vector<32x128xbf16>, vector<64x128xf32> -> vector<64x128xf32>
      %91 = arith.addf %85, %90 : vector<64x128xf32>
      %c0_39 = arith.constant 0 : index
      %c0_40 = arith.constant 0 : index
      %92 = vector.load %arg20[%c0_39, %c0_40] : memref<64x128xf32, #tpu.memory_space<vmem>>, vector<64x128xf32>
      tpu.vector_store %arg20[%c0_39, %c0_40], %91 {strides = array<i32>} : memref<64x128xf32, #tpu.memory_space<vmem>>, vector<64x128xf32>,
    } else {
    }
    %c1_i32_28 = arith.constant 1 : i32
    %71 = arith.cmpi eq, %arg2, %c1_i32_28 : i32
    %c3_i32 = arith.constant 3 : i32
    %72 = arith.cmpi eq, %arg3, %c3_i32 : i32
    %73 = arith.andi %71, %72 : i1
    %74 = arith.extui %73 : i1 to i32
    %c0_i32_29 = arith.constant 0 : i32
    %75 = arith.cmpi ne, %74, %c0_i32_29 : i32
    scf.if %75 {
      %c0_30 = arith.constant 0 : index
      %c0_31 = arith.constant 0 : index
      %76 = vector.load %arg20[%c0_30, %c0_31] : memref<64x128xf32, #tpu.memory_space<vmem>>, vector<64x128xf32>
      %c0_32 = arith.constant 0 : index
      %c0_33 = arith.constant 0 : index
      %77 = vector.load %arg12[%c0_32, %c0_33] : memref<1x128xf32, #tpu.memory_space<vmem>>, vector<1x128xf32>
      %78 = vector.broadcast %77 : vector<1x128xf32> to vector<64x128xf32>
      %79 = arith.addf %76, %78 : vector<64x128xf32>
      %c0_34 = arith.constant 0 : index
      %c0_35 = arith.constant 0 : index
      %c0_36 = arith.constant 0 : index
      %80 = vector.load %arg4[%c0_34, %c0_35, %c0_36] : memref<1x64x128xf32, #tpu.memory_space<vmem>>, vector<1x64x128xf32>
      %81 = vector.shape_cast %80 : vector<1x64x128xf32> to vector<64x128xf32>
      %82 = arith.addf %79, %81 : vector<64x128xf32>
      %c0_37 = arith.constant 0 : index
      %c0_38 = arith.constant 0 : index
      %c0_39 = arith.constant 0 : index
      %83 = vector.load %arg13[%c0_37, %c0_38, %c0_39] : memref<1x64x128xf32, #tpu.memory_space<vmem>>, vector<1x64x128xf32>
      %84 = vector.shape_cast %83 : vector<1x64x128xf32> to vector<64x128xf32>
      %85 = vector.shape_cast %82 : vector<64x128xf32> to vector<1x64x128xf32>
      tpu.vector_store %arg13[%c0_37, %c0_38, %c0_39], %85 {strides = array<i32>} : memref<1x64x128xf32, #tpu.memory_space<vmem>>, vector<1x64x128xf32>,
    } else {
    }
    return
  }
  func.func @transform_0(%arg0: i32, %arg1: i32, %arg2: i32, %arg3: i32) -> (i32, i32, i32) {
    %c0_i32 = arith.constant 0 : i32
    %c0_i32_0 = arith.constant 0 : i32
    return %arg0, %arg1, %c0_i32 : i32, i32, i32
  }
  func.func @transform_1(%arg0: i32, %arg1: i32, %arg2: i32, %arg3: i32) -> (i32, i32, i32) {
    %c0_i32 = arith.constant 0 : i32
    %0 = arith.cmpi eq, %arg1, %c0_i32 : i32
    %c0_i32_0 = arith.constant 0 : i32
    %1 = arith.select %0, %arg2, %c0_i32_0 : i32
    %c0_i32_1 = arith.constant 0 : i32
    %c0_i32_2 = arith.constant 0 : i32
    return %arg0, %1, %c0_i32_1 : i32, i32, i32
  }
  func.func @transform_2(%arg0: i32, %arg1: i32, %arg2: i32, %arg3: i32) -> (i32, i32) {
    %c0_i32 = arith.constant 0 : i32
    %c0_i32_0 = arith.constant 0 : i32
    %c0_i32_1 = arith.constant 0 : i32
    return %c0_i32, %c0_i32_0 : i32, i32
  }
  func.func @transform_3(%arg0: i32, %arg1: i32, %arg2: i32, %arg3: i32) -> (i32, i32) {
    %c0_i32 = arith.constant 0 : i32
    %c0_i32_0 = arith.constant 0 : i32
    %c0_i32_1 = arith.constant 0 : i32
    return %c0_i32, %c0_i32_0 : i32, i32
  }
  func.func @transform_4(%arg0: i32, %arg1: i32, %arg2: i32, %arg3: i32) -> (i32, i32, i32) {
    %c0_i32 = arith.constant 0 : i32
    %c0_i32_0 = arith.constant 0 : i32
    %c0_i32_1 = arith.constant 0 : i32
    %c0_i32_2 = arith.constant 0 : i32
    return %c0_i32, %c0_i32_0, %c0_i32_1 : i32, i32, i32
  }
  func.func @transform_5(%arg0: i32, %arg1: i32, %arg2: i32, %arg3: i32) -> (i32, i32, i32) {
    %c0_i32 = arith.constant 0 : i32
    %c0_i32_0 = arith.constant 0 : i32
    %c0_i32_1 = arith.constant 0 : i32
    %c0_i32_2 = arith.constant 0 : i32
    return %c0_i32, %c0_i32_0, %c0_i32_1 : i32, i32, i32
  }
  func.func @transform_6(%arg0: i32, %arg1: i32, %arg2: i32, %arg3: i32) -> (i32, i32, i32) {
    %c0_i32 = arith.constant 0 : i32
    %c0_i32_0 = arith.constant 0 : i32
    %c0_i32_1 = arith.constant 0 : i32
    %c0_i32_2 = arith.constant 0 : i32
    return %c0_i32, %c0_i32_0, %c0_i32_1 : i32, i32, i32
  }
  func.func @transform_7(%arg0: i32, %arg1: i32, %arg2: i32, %arg3: i32) -> (i32, i32, i32) {
    %c0_i32 = arith.constant 0 : i32
    %c0_i32_0 = arith.constant 0 : i32
    %c0_i32_1 = arith.constant 0 : i32
    %c0_i32_2 = arith.constant 0 : i32
    return %c0_i32, %c0_i32_0, %c0_i32_1 : i32, i32, i32
  }
  func.func @transform_8(%arg0: i32, %arg1: i32, %arg2: i32, %arg3: i32) -> (i32, i32) {
    %c0_i32 = arith.constant 0 : i32
    %c0_i32_0 = arith.constant 0 : i32
    %c0_i32_1 = arith.constant 0 : i32
    return %c0_i32, %c0_i32_0 : i32, i32
  }
  func.func @transform_9(%arg0: i32, %arg1: i32, %arg2: i32, %arg3: i32) -> (i32, i32, i32) {
    %c0_i32 = arith.constant 0 : i32
    %c0_i32_0 = arith.constant 0 : i32
    return %arg0, %arg1, %c0_i32 : i32, i32, i32
  }
}

</mosaic_0001>

<llo_original>
// kernel: multi_view_block_forward.2
$region0: #{multi_view_block_forward.2}
  #allocation0 [shape = 'u32[]', space=smem, size = 0x4, offset = 0x4, fixed_abs, tag = 'smem constant byte address 0x4 - core index']
  #allocation1 [shape = 'u32[144,128]{1,0:T(1,128)}', space=vmem, size = 0x12000, scoped, tag = 'internal scratch']
  #allocation2 [shape = 'bf16[64,128]{1,0:T(8,128)(2,1)}', space=vmem, size = 0x4000, scoped, tag = 'scratch operand']
  #allocation3 [shape = 'bf16[64,128]{1,0:T(8,128)(2,1)}', space=vmem, size = 0x4000, scoped, tag = 'scratch operand']
  #allocation4 [shape = 'bf16[4,64,32]{2,1,0:T(8,128)(2,1)}', space=vmem, size = 0x10000, scoped, tag = 'scratch operand']
  #allocation5 [shape = 'f32[4,64,1]{2,1,0:T(8,128)}', space=vmem, size = 0x20000, scoped, tag = 'scratch operand']
  #allocation6 [shape = 'f32[4,64,1]{2,1,0:T(8,128)}', space=vmem, size = 0x20000, scoped, tag = 'scratch operand']
  #allocation7 [shape = 'f32[4,64,32]{2,1,0:T(8,128)}', space=vmem, size = 0x20000, scoped, tag = 'scratch operand']
  #allocation8 [shape = 'f32[64,128]{1,0:T(8,128)}', space=vmem, size = 0x8000, scoped, tag = 'scratch operand']
  #allocation9 [shape = 'bf16[4,128,32]{2,1,0:T(8,128)(2,1)}', space=vmem, size = 0x20000, scoped, tag = 'scratch operand']
  #allocation10 [shape = 'bf16[4,128,32]{2,1,0:T(8,128)(2,1)}', space=vmem, size = 0x20000, scoped, tag = 'scratch operand']
  %s0 = inlined_call_operand.vmem [shape: f32[2,128,128], index: 0, kind: input, shape index: {}, may-alias: {0,1}]
  %s1 = inlined_call_operand.vmem [shape: f32[2,128,128], index: 1, kind: input, shape index: {}, may-alias: {0,1}]
  %s2 = inlined_call_operand.vmem [shape: f32[1,128], index: 2, kind: input, shape index: {}]
  %s3 = inlined_call_operand.vmem [shape: f32[1,128], index: 3, kind: input, shape index: {}]
  %s4 = inlined_call_operand.vmem [shape: bf16[4,128,32], index: 4, kind: input, shape index: {}]
  %s5 = inlined_call_operand.vmem [shape: bf16[4,128,32], index: 5, kind: input, shape index: {}]
  %s6 = inlined_call_operand.vmem [shape: bf16[4,128,32], index: 6, kind: input, shape index: {}]
  %s7 = inlined_call_operand.vmem [shape: bf16[4,32,128], index: 7, kind: input, shape index: {}]
  %s8 = inlined_call_operand.vmem [shape: f32[1,128], index: 8, kind: input, shape index: {}]
  %s9 = inlined_call_operand.vmem [shape: f32[2,128,128], index: 9, kind: output, shape index: {}]
  %s10 = sld [smem:[#allocation0]]
  $region93: #{multi_view_block_forward.2} parent=0
    _
  %s12 = ssub.s32 1, %s10
  %s13 = scalar_select 0, %s12, %s10
  loop: start=0, step=1, limit=34
  $region2: #{multi_view_block_forward.2} parent=0 // loop_pre_header
    _
  $region3: #{multi_view_block_forward.2} parent=0 // loop_header
    %s15 = sphi 0, %s19
    %p16 = scmp.ge.s32.totalorder %s15, 34
    %s22 = sphi 0, %s48
    %s23 = sphi 0, %s44
    %s24 = sphi 0, %s40
    %s25 = sphi 0, %s36
    %s26 = sphi 0, %s22
    %s27 = sphi 0, %s23
    %s28 = sphi 0, %s24
    %s29 = sphi 0, %s25
    %s30 = sphi 0, %s26
    %s31 = sphi 0, %s27
    %s32 = sphi 0, %s28
    %s33 = sphi 0, %s29
    %s53 = sphi 0, %s55
    %s56 = sphi 0, %s53
    %s57 = sphi 0, %s56
    %s73 = sphi 0, %s57
    %s85 = sphi 0, %s87
    %s88 = sphi 0, %s85
    %s89 = sphi 0, %s88
    %s105 = sphi 0, %s89
    %s109 = sphi 0, %s109
    %s111 = sphi 0, %s109
    %s112 = sphi 0, %s111
    %s126 = sphi 0, %s112
    %s130 = sphi 0, %s130
    %s132 = sphi 0, %s130
    %s133 = sphi 0, %s132
    %s147 = sphi 0, %s133
    %s151 = sphi 0, %s151
    %s153 = sphi 0, %s151
    %s154 = sphi 0, %s153
    %s168 = sphi 0, %s154
    %s172 = sphi 0, %s172
    %s174 = sphi 0, %s172
    %s175 = sphi 0, %s174
    %s189 = sphi 0, %s175
    %s193 = sphi 0, %s193
    %s195 = sphi 0, %s193
    %s196 = sphi 0, %s195
    %s210 = sphi 0, %s196
    %s214 = sphi 0, %s214
    %s216 = sphi 0, %s214
    %s217 = sphi 0, %s216
    %s231 = sphi 0, %s217
    %s235 = sphi 0, %s235
    %s237 = sphi 0, %s235
    %s238 = sphi 0, %s237
    %s252 = sphi 0, %s238
    %s260 = sphi 0, %s262
    %s263 = sphi 0, %s260
    %s264 = sphi 0, %s263
    %s280 = sphi 0, %s264
  $region4: #{multi_view_block_forward.2} parent=0 // loop_header_branch
    %18 = sbr.rel (%p16) target = $region8
  $region5: #{multi_view_block_forward.2} parent=0 // loop_body
    %s20 = ssub.s32 %s15, 1
    %s21 = ssub.s32 %s15, 2
    %s34 = sadd.s32 1, %s25
    %p35 = scmp.ge.s32.totalorder %s34, 4
    %s36 = scalar_select %p35, 0, %s34
    %s37 = sadd.s32 1, %s24
    %s38 = scalar_select %p35, %s37, %s24
    %p39 = scmp.ge.s32.totalorder %s38, 2
    %s40 = scalar_select %p39, 0, %s38
    %s41 = sadd.s32 1, %s23
    %s42 = scalar_select %p39, %s41, %s23
    %p43 = scmp.ge.s32.totalorder %s42, 2
    %s44 = scalar_select %p43, 0, %s42
    %s45 = sadd.s32 1, %s22
    %s46 = scalar_select %p43, %s45, %s22
    %p47 = scmp.ge.s32.totalorder %s46, 2
    %s48 = scalar_select %p47, 0, %s46
    %s49 = ssub.s32 %s22, %s48
    %s50 = ssub.s32 %s23, %s44
    %s51 = sor.u32 %s49, %s50
    %p52 = scmp.eq.s32.totalorder %s51, 0
    %s54 = sadd.s32 %s53, 1
    %s55 = scalar_select %p52, %s53, %s54
    %p58 = pneg %p52
    %p59 = scmp.eq.s32.totalorder %s15, 31
    %p60 = por %p58, %p59
    %p61 = scmp.ne.s32.totalorder %s53, %s56
    %p62 = scmp.eq.s32.totalorder %s15, 0
    %p63 = por %p61, %p62
    %p64 = scmp.ne.s32.totalorder %s53, %s56
    %p65 = scmp.eq.s32.totalorder %s20, 31
    %p66 = por %p64, %p65
    %p67 = scmp.ne.s32.totalorder %s56, %s57
    %p68 = scmp.eq.s32.totalorder %s20, 0
    %p69 = por %p67, %p68
    %p70 = scmp.ne.s32.totalorder %s56, %s57
    %p71 = scmp.eq.s32.totalorder %s21, 31
    %p72 = por %p70, %p71
    %p74 = scmp.ne.s32.totalorder %s57, %s73
    %p75 = scmp.eq.s32.totalorder %s21, 0
    %p76 = por %p74, %p75
    %p77 = scmp.eq.s32.totalorder %s23, 0
    %s78 = scalar_select %p77, %s24, 0
    %p79 = scmp.eq.s32.totalorder %s44, 0
    %s80 = scalar_select %p79, %s40, 0
    %s81 = ssub.s32 %s22, %s48
    %s82 = ssub.s32 %s78, %s80
    %s83 = sor.u32 %s81, %s82
    %p84 = scmp.eq.s32.totalorder %s83, 0
    %s86 = sadd.s32 %s85, 1
    %s87 = scalar_select %p84, %s85, %s86
    %p90 = pneg %p84
    %p91 = scmp.eq.s32.totalorder %s15, 31
    %p92 = por %p90, %p91
    %p93 = scmp.ne.s32.totalorder %s85, %s88
    %p94 = scmp.eq.s32.totalorder %s15, 0
    %p95 = por %p93, %p94
    %p96 = scmp.ne.s32.totalorder %s85, %s88
    %p97 = scmp.eq.s32.totalorder %s20, 31
    %p98 = por %p96, %p97
    %p99 = scmp.ne.s32.totalorder %s88, %s89
    %p100 = scmp.eq.s32.totalorder %s20, 0
    %p101 = por %p99, %p100
    %p102 = scmp.ne.s32.totalorder %s88, %s89
    %p103 = scmp.eq.s32.totalorder %s21, 31
    %p104 = por %p102, %p103
    %p106 = scmp.ne.s32.totalorder %s89, %s105
    %p107 = scmp.eq.s32.totalorder %s21, 0
    %p108 = por %p106, %p107
    %s110 = sadd.s32 %s109, 1
    %p113 = scmp.eq.s32.totalorder %s15, 31
    %p114 = scmp.ne.s32.totalorder %s109, %s111
    %p115 = scmp.eq.s32.totalorder %s15, 0
    %p116 = por %p114, %p115
    %p117 = scmp.ne.s32.totalorder %s109, %s111
    %p118 = scmp.eq.s32.totalorder %s20, 31
    %p119 = por %p117, %p118
    %p120 = scmp.ne.s32.totalorder %s111, %s112
    %p121 = scmp.eq.s32.totalorder %s20, 0
    %p122 = por %p120, %p121
    %p123 = scmp.ne.s32.totalorder %s111, %s112
    %p124 = scmp.eq.s32.totalorder %s21, 31
    %p125 = por %p123, %p124
    %p127 = scmp.ne.s32.totalorder %s112, %s126
    %p128 = scmp.eq.s32.totalorder %s21, 0
    %p129 = por %p127, %p128
    %s131 = sadd.s32 %s130, 1
    %p134 = scmp.eq.s32.totalorder %s15, 31
    %p135 = scmp.ne.s32.totalorder %s130, %s132
    %p136 = scmp.eq.s32.totalorder %s15, 0
    %p137 = por %p135, %p136
    %p138 = scmp.ne.s32.totalorder %s130, %s132
    %p139 = scmp.eq.s32.totalorder %s20, 31
    %p140 = por %p138, %p139
    %p141 = scmp.ne.s32.totalorder %s132, %s133
    %p142 = scmp.eq.s32.totalorder %s20, 0
    %p143 = por %p141, %p142
    %p144 = scmp.ne.s32.totalorder %s132, %s133
    %p145 = scmp.eq.s32.totalorder %s21, 31
    %p146 = por %p144, %p145
    %p148 = scmp.ne.s32.totalorder %s133, %s147
    %p149 = scmp.eq.s32.totalorder %s21, 0
    %p150 = por %p148, %p149
    %s152 = sadd.s32 %s151, 1
    %p155 = scmp.eq.s32.totalorder %s15, 31
    %p156 = scmp.ne.s32.totalorder %s151, %s153
    %p157 = scmp.eq.s32.totalorder %s15, 0
    %p158 = por %p156, %p157
    %p159 = scmp.ne.s32.totalorder %s151, %s153
    %p160 = scmp.eq.s32.totalorder %s20, 31
    %p161 = por %p159, %p160
    %p162 = scmp.ne.s32.totalorder %s153, %s154
    %p163 = scmp.eq.s32.totalorder %s20, 0
    %p164 = por %p162, %p163
    %p165 = scmp.ne.s32.totalorder %s153, %s154
    %p166 = scmp.eq.s32.totalorder %s21, 31
    %p167 = por %p165, %p166
    %p169 = scmp.ne.s32.totalorder %s154, %s168
    %p170 = scmp.eq.s32.totalorder %s21, 0
    %p171 = por %p169, %p170
    %s173 = sadd.s32 %s172, 1
    %p176 = scmp.eq.s32.totalorder %s15, 31
    %p177 = scmp.ne.s32.totalorder %s172, %s174
    %p178 = scmp.eq.s32.totalorder %s15, 0
    %p179 = por %p177, %p178
    %p180 = scmp.ne.s32.totalorder %s172, %s174
    %p181 = scmp.eq.s32.totalorder %s20, 31
    %p182 = por %p180, %p181
    %p183 = scmp.ne.s32.totalorder %s174, %s175
    %p184 = scmp.eq.s32.totalorder %s20, 0
    %p185 = por %p183, %p184
    %p186 = scmp.ne.s32.totalorder %s174, %s175
    %p187 = scmp.eq.s32.totalorder %s21, 31
    %p188 = por %p186, %p187
    %p190 = scmp.ne.s32.totalorder %s175, %s189
    %p191 = scmp.eq.s32.totalorder %s21, 0
    %p192 = por %p190, %p191
    %s194 = sadd.s32 %s193, 1
    %p197 = scmp.eq.s32.totalorder %s15, 31
    %p198 = scmp.ne.s32.totalorder %s193, %s195
    %p199 = scmp.eq.s32.totalorder %s15, 0
    %p200 = por %p198, %p199
    %p201 = scmp.ne.s32.totalorder %s193, %s195
    %p202 = scmp.eq.s32.totalorder %s20, 31
    %p203 = por %p201, %p202
    %p204 = scmp.ne.s32.totalorder %s195, %s196
    %p205 = scmp.eq.s32.totalorder %s20, 0
    %p206 = por %p204, %p205
    %p207 = scmp.ne.s32.totalorder %s195, %s196
    %p208 = scmp.eq.s32.totalorder %s21, 31
    %p209 = por %p207, %p208
    %p211 = scmp.ne.s32.totalorder %s196, %s210
    %p212 = scmp.eq.s32.totalorder %s21, 0
    %p213 = por %p211, %p212
    %s215 = sadd.s32 %s214, 1
    %p218 = scmp.eq.s32.totalorder %s15, 31
    %p219 = scmp.ne.s32.totalorder %s214, %s216
    %p220 = scmp.eq.s32.totalorder %s15, 0
    %p221 = por %p219, %p220
    %p222 = scmp.ne.s32.totalorder %s214, %s216
    %p223 = scmp.eq.s32.totalorder %s20, 31
    %p224 = por %p222, %p223
    %p225 = scmp.ne.s32.totalorder %s216, %s217
    %p226 = scmp.eq.s32.totalorder %s20, 0
    %p227 = por %p225, %p226
    %p228 = scmp.ne.s32.totalorder %s216, %s217
    %p229 = scmp.eq.s32.totalorder %s21, 31
    %p230 = por %p228, %p229
    %p232 = scmp.ne.s32.totalorder %s217, %s231
    %p233 = scmp.eq.s32.totalorder %s21, 0
    %p234 = por %p232, %p233
    %s236 = sadd.s32 %s235, 1
    %p239 = scmp.eq.s32.totalorder %s15, 31
    %p240 = scmp.ne.s32.totalorder %s235, %s237
    %p241 = scmp.eq.s32.totalorder %s15, 0
    %p242 = por %p240, %p241
    %p243 = scmp.ne.s32.totalorder %s235, %s237
    %p244 = scmp.eq.s32.totalorder %s20, 31
    %p245 = por %p243, %p244
    %p246 = scmp.ne.s32.totalorder %s237, %s238
    %p247 = scmp.eq.s32.totalorder %s20, 0
    %p248 = por %p246, %p247
    %p249 = scmp.ne.s32.totalorder %s237, %s238
    %p250 = scmp.eq.s32.totalorder %s21, 31
    %p251 = por %p249, %p250
    %p253 = scmp.ne.s32.totalorder %s238, %s252
    %p254 = scmp.eq.s32.totalorder %s21, 0
    %p255 = por %p253, %p254
    %s256 = ssub.s32 %s22, %s48
    %s257 = ssub.s32 %s23, %s44
    %s258 = sor.u32 %s256, %s257
    %p259 = scmp.eq.s32.totalorder %s258, 0
    %s261 = sadd.s32 %s260, 1
    %s262 = scalar_select %p259, %s260, %s261
    %p265 = pneg %p259
    %p266 = scmp.eq.s32.totalorder %s15, 31
    %p267 = por %p265, %p266
    %p268 = scmp.ne.s32.totalorder %s260, %s263
    %p269 = scmp.eq.s32.totalorder %s15, 0
    %p270 = por %p268, %p269
    %p271 = scmp.ne.s32.totalorder %s260, %s263
    %p272 = scmp.eq.s32.totalorder %s20, 31
    %p273 = por %p271, %p272
    %p274 = scmp.ne.s32.totalorder %s263, %s264
    %p275 = scmp.eq.s32.totalorder %s20, 0
    %p276 = por %p274, %p275
    %p277 = scmp.ne.s32.totalorder %s263, %s264
    %p278 = scmp.eq.s32.totalorder %s21, 31
    %p279 = por %p277, %p278
    %p281 = scmp.ne.s32.totalorder %s264, %s280
    %p282 = scmp.eq.s32.totalorder %s21, 0
    %p283 = por %p281, %p282
    %p284 = scmp.le.s32.totalorder 1, %s15
    %p285 = scmp.lt.s32.totalorder %s15, 33
    %p286 = pnand %p284, %p285
    %p287 = pneg %p286
    // Predicated region
    $region9: #{multi_view_block_forward.2} parent=5 // pred_check
      _
    $region10: #{multi_view_block_forward.2} parent=5 // pred_check_branch
      %289 = sbr.rel (%p286) target = $region12
    $region11: #{multi_view_block_forward.2} parent=5 // pred_region
      %s290 = ssub.s32 %s15, 1
      // Predicated region
      $region13: #{multi_view_block_forward.2} parent=11 // pred_check
        %p291 = pneg %p122
      $region14: #{multi_view_block_forward.2} parent=11 // pred_check_branch
        %293 = sbr.rel (%p291) target = $region16
      $region15: #{multi_view_block_forward.2} parent=11 // pred_region
        _
      $region16: #{multi_view_block_forward.2} parent=11 // pred_fallthru
        _
      // Predicated region
      $region17: #{multi_view_block_forward.2} parent=11 // pred_check
        %p294 = pneg %p143
      $region18: #{multi_view_block_forward.2} parent=11 // pred_check_branch
        %296 = sbr.rel (%p294) target = $region20
      $region19: #{multi_view_block_forward.2} parent=11 // pred_region
        _
      $region20: #{multi_view_block_forward.2} parent=11 // pred_fallthru
        _
      // Predicated region
      $region21: #{multi_view_block_forward.2} parent=11 // pred_check
        %p297 = pneg %p164
      $region22: #{multi_view_block_forward.2} parent=11 // pred_check_branch
        %299 = sbr.rel (%p297) target = $region24
      $region23: #{multi_view_block_forward.2} parent=11 // pred_region
        _
      $region24: #{multi_view_block_forward.2} parent=11 // pred_fallthru
        _
      // Predicated region
      $region25: #{multi_view_block_forward.2} parent=11 // pred_check
        %p300 = pneg %p185
      $region26: #{multi_view_block_forward.2} parent=11 // pred_check_branch
        %302 = sbr.rel (%p300) target = $region28
      $region27: #{multi_view_block_forward.2} parent=11 // pred_region
        _
      $region28: #{multi_view_block_forward.2} parent=11 // pred_fallthru
        _
      // Predicated region
      $region29: #{multi_view_block_forward.2} parent=11 // pred_check
        %p303 = pneg %p206
      $region30: #{multi_view_block_forward.2} parent=11 // pred_check_branch
        %305 = sbr.rel (%p303) target = $region32
      $region31: #{multi_view_block_forward.2} parent=11 // pred_region
        _
      $region32: #{multi_view_block_forward.2} parent=11 // pred_fallthru
        _
      // Predicated region
      $region33: #{multi_view_block_forward.2} parent=11 // pred_check
        %p306 = pneg %p227
      $region34: #{multi_view_block_forward.2} parent=11 // pred_check_branch
        %308 = sbr.rel (%p306) target = $region36
      $region35: #{multi_view_block_forward.2} parent=11 // pred_region
        _
      $region36: #{multi_view_block_forward.2} parent=11 // pred_fallthru
        _
      // Predicated region
      $region37: #{multi_view_block_forward.2} parent=11 // pred_check
        %p309 = pneg %p248
      $region38: #{multi_view_block_forward.2} parent=11 // pred_check_branch
        %311 = sbr.rel (%p309) target = $region40
      $region39: #{multi_view_block_forward.2} parent=11 // pred_region
        _
      $region40: #{multi_view_block_forward.2} parent=11 // pred_fallthru
        _
    $region12: #{multi_view_block_forward.2} parent=5 // pred_fallthru
      _
    %p312 = scmp.lt.s32.totalorder %s15, 32
    // Predicated region
    $region41: #{multi_view_block_forward.2} parent=5 // pred_check
      %p313 = pneg %p312
    $region42: #{multi_view_block_forward.2} parent=5 // pred_check_branch
      %315 = sbr.rel (%p313) target = $region44
    $region43: #{multi_view_block_forward.2} parent=5 // pred_region
      // Predicated region
      $region45: #{multi_view_block_forward.2} parent=43 // pred_check
        %p316 = pneg %p63
      $region46: #{multi_view_block_forward.2} parent=43 // pred_check_branch
        %318 = sbr.rel (%p316) target = $region48
      $region47: #{multi_view_block_forward.2} parent=43 // pred_region
        %s319 = smul.u32 8, %s23
        %p320 = scmp.lt.s32.totalorder %s22, 1
        %s321 = scalar_select %p320, %s22, 1
        %p322 = scmp.lt.s32.totalorder %s319, 15
        %s323 = scalar_select %p322, %s319, 15
        %s324 = smul.addr %s321, 16
        %s325 = sadd.s32 %s323, %s324
        %s326 = smul.addr %s325, 8
        %s327 = scalar_lea.vmem %s0, %s326
        %s328 = smul.u32 8, %s23
      $region48: #{multi_view_block_forward.2} parent=43 // pred_fallthru
        _
      // Predicated region
      $region49: #{multi_view_block_forward.2} parent=43 // pred_check
        %p329 = pneg %p95
      $region50: #{multi_view_block_forward.2} parent=43 // pred_check_branch
        %331 = sbr.rel (%p329) target = $region52
      $region51: #{multi_view_block_forward.2} parent=43 // pred_region
        %p332 = scmp.eq.s32.totalorder %s23, 0
        %s333 = scalar_select %p332, %s24, 0
        %s334 = smul.u32 8, %s333
        %p335 = scmp.lt.s32.totalorder %s22, 1
        %s336 = scalar_select %p335, %s22, 1
        %p337 = scmp.lt.s32.totalorder %s334, 15
        %s338 = scalar_select %p337, %s334, 15
        %s339 = smul.addr %s336, 16
        %s340 = sadd.s32 %s338, %s339
        %s341 = smul.addr %s340, 8
        %s342 = scalar_lea.vmem %s1, %s341
        %p343 = scmp.eq.s32.totalorder %s23, 0
        %s344 = scalar_select %p343, %s24, 0
        %s345 = smul.u32 8, %s344
      $region52: #{multi_view_block_forward.2} parent=43 // pred_fallthru
        _
    $region44: #{multi_view_block_forward.2} parent=5 // pred_fallthru
      _
    %p346 = scmp.le.s32.totalorder 1, %s15
    %p347 = scmp.lt.s32.totalorder %s15, 33
    %p348 = pnand %p346, %p347
    %p349 = pneg %p348
    // Predicated region
    $region53: #{multi_view_block_forward.2} parent=5 // pred_check
      _
    $region54: #{multi_view_block_forward.2} parent=5 // pred_check_branch
      %351 = sbr.rel (%p348) target = $region56
    $region55: #{multi_view_block_forward.2} parent=5 // pred_region
      %s352 = ssub.s32 %s15, 1
      %s353 = smul.u32 8, %s27
      %p354 = scmp.lt.s32.totalorder %s26, 1
      %s355 = scalar_select %p354, %s26, 1
      %p356 = scmp.lt.s32.totalorder %s353, 15
      %s357 = scalar_select %p356, %s353, 15
      %s358 = smul.addr %s355, 16
      %s359 = sadd.s32 %s357, %s358
      %s360 = smul.addr %s359, 8
      %s361 = scalar_lea.vmem %s0, %s360
      %p362 = pneg %p69
      %p363 = pneg %p66
      %p364 = scmp.eq.s32.totalorder %s27, 0
      %s365 = scalar_select %p364, %s28, 0
      %s366 = smul.u32 8, %s365
      %p367 = scmp.lt.s32.totalorder %s26, 1
      %s368 = scalar_select %p367, %s26, 1
      %p369 = scmp.lt.s32.totalorder %s366, 15
      %s370 = scalar_select %p369, %s366, 15
      %s371 = smul.addr %s368, 16
      %s372 = sadd.s32 %s370, %s371
      %s373 = smul.addr %s372, 8
      %s374 = scalar_lea.vmem %s1, %s373
      %p375 = pneg %p101
      %p376 = pneg %p98
      %p377 = pneg %p122
      %p378 = pneg %p119
      %p379 = pneg %p143
      %p380 = pneg %p140
      %p381 = pneg %p164
      %p382 = pneg %p161
      %p383 = pneg %p185
      %p384 = pneg %p182
      %p385 = pneg %p206
      %p386 = pneg %p203
      %p387 = pneg %p227
      %p388 = pneg %p224
      %p389 = pneg %p248
      %p390 = pneg %p245
      %p391 = pneg %p276
      %p392 = pneg %p273
      %s393 = smul.u32 8, %s27
      %p394 = scmp.lt.s32.totalorder %s26, 1
      %s395 = scalar_select %p394, %s26, 1
      %p396 = scmp.lt.s32.totalorder %s393, 15
      %s397 = scalar_select %p396, %s393, 15
      %s398 = smul.addr %s395, 16
      %s399 = sadd.s32 %s397, %s398
      %s400 = smul.addr %s399, 8
      %s401 = scalar_lea.vmem %s9, %s400
      %s402 = smul.u32 8, %s27
      %p403 = scmp.lt.s32.totalorder %s26, 1
      %s404 = scalar_select %p403, %s26, 1
      %p405 = scmp.lt.s32.totalorder %s402, 15
      %s406 = scalar_select %p405, %s402, 15
      %s407 = smul.addr %s404, 16
      %s408 = sadd.s32 %s406, %s407
      %s409 = smul.addr %s408, 8
      %s410 = scalar_lea.vmem %s0, %s409
      %s411 = smul.u32 8, %s27
      %p412 = scmp.eq.s32.totalorder %s27, 0
      %s413 = scalar_select %p412, %s28, 0
      %s414 = smul.u32 8, %s413
      %p415 = scmp.lt.s32.totalorder %s26, 1
      %s416 = scalar_select %p415, %s26, 1
      %p417 = scmp.lt.s32.totalorder %s414, 15
      %s418 = scalar_select %p417, %s414, 15
      %s419 = smul.addr %s416, 16
      %s420 = sadd.s32 %s418, %s419
      %s421 = smul.addr %s420, 8
      %s422 = scalar_lea.vmem %s1, %s421
      %p423 = scmp.eq.s32.totalorder %s27, 0
      %s424 = scalar_select %p423, %s28, 0
      %s425 = smul.u32 8, %s424
      %s426 = smul.u32 8, %s27
      %p427 = scmp.lt.s32.totalorder %s26, 1
      %s428 = scalar_select %p427, %s26, 1
      %p429 = scmp.lt.s32.totalorder %s426, 15
      %s430 = scalar_select %p429, %s426, 15
      %s431 = smul.addr %s428, 16
      %s432 = sadd.s32 %s430, %s431
      %s433 = smul.addr %s432, 8
      %s434 = scalar_lea.vmem %s9, %s433
      %s435 = smul.u32 8, %s27
      %s437 = smul.u32 %s28, 64
      %p438 = scmp.eq.s32.totalorder %s28, 0
      %p439 = scmp.eq.s32.totalorder %s29, 0
      %p440 = pnand %p438, %p439
      %p441 = pneg %p440
      // Predicated region
      $region57: #{multi_view_block_forward.2} parent=55 // pred_check
        _
      $region58: #{multi_view_block_forward.2} parent=55 // pred_check_branch
        %443 = sbr.rel (%p440) target = $region60
      $region59: #{multi_view_block_forward.2} parent=55 // pred_region
        %v444 = vld [vmem:[%s410] sm:$0xff]
        %v445 = vld [vmem:[%s410 + $0x8] sm:$0xff]
        %v446 = vld [vmem:[%s410 + $0x10] sm:$0xff]
        %v447 = vld [vmem:[%s410 + $0x18] sm:$0xff]
        %v448 = vld [vmem:[%s410 + $0x20] sm:$0xff]
        %v449 = vld [vmem:[%s410 + $0x28] sm:$0xff]
        %v450 = vld [vmem:[%s410 + $0x30] sm:$0xff]
        %v451 = vld [vmem:[%s410 + $0x38] sm:$0xff]
        %v452 = vld [vmem:[%s2] sm:$0x1]
        %v453 = vld [vmem:[%s3] sm:$0x1]
        %454 = vadd.xlane.f32.xlu0 %v444
        %v455 = vpop.xlane.xlu0 %454
        %456 = vadd.xlane.f32.xlu0 %v445
        %v457 = vpop.xlane.xlu0 %456
        %458 = vadd.xlane.f32.xlu0 %v446
        %v459 = vpop.xlane.xlu0 %458
        %460 = vadd.xlane.f32.xlu0 %v447
        %v461 = vpop.xlane.xlu0 %460
        %462 = vadd.xlane.f32.xlu0 %v448
        %v463 = vpop.xlane.xlu0 %462
        %464 = vadd.xlane.f32.xlu0 %v449
        %v465 = vpop.xlane.xlu0 %464
        %466 = vadd.xlane.f32.xlu0 %v450
        %v467 = vpop.xlane.xlu0 %466
        %468 = vadd.xlane.f32.xlu0 %v451
        %v469 = vpop.xlane.xlu0 %468
        %v470 = vrcp.pop 128.0
        %v471 = vmul.f32 %v455, %v470
        %v472 = vmul.f32 %v457, %v470
        %v473 = vmul.f32 %v459, %v470
        %v474 = vmul.f32 %v461, %v470
        %v475 = vmul.f32 %v463, %v470
        %v476 = vmul.f32 %v465, %v470
        %v477 = vmul.f32 %v467, %v470
        %v478 = vmul.f32 %v469, %v470
        %v479 = vsub.f32 %v444, %v471
        %v480 = vsub.f32 %v445, %v472
        %v481 = vsub.f32 %v446, %v473
        %v482 = vsub.f32 %v447, %v474
        %v483 = vsub.f32 %v448, %v475
        %v484 = vsub.f32 %v449, %v476
        %v485 = vsub.f32 %v450, %v477
        %v486 = vsub.f32 %v451, %v478
        %v487 = vmul.f32 %v479, %v479
        %v488 = vmul.f32 %v480, %v480
        %v489 = vmul.f32 %v481, %v481
        %v490 = vmul.f32 %v482, %v482
        %v491 = vmul.f32 %v483, %v483
        %v492 = vmul.f32 %v484, %v484
        %v493 = vmul.f32 %v485, %v485
        %v494 = vmul.f32 %v486, %v486
        %495 = vadd.xlane.f32.xlu0 %v487
        %v496 = vpop.xlane.xlu0 %495
        %497 = vadd.xlane.f32.xlu0 %v488
        %v498 = vpop.xlane.xlu0 %497
        %499 = vadd.xlane.f32.xlu0 %v489
        %v500 = vpop.xlane.xlu0 %499
        %501 = vadd.xlane.f32.xlu0 %v490
        %v502 = vpop.xlane.xlu0 %501
        %503 = vadd.xlane.f32.xlu0 %v491
        %v504 = vpop.xlane.xlu0 %503
        %505 = vadd.xlane.f32.xlu0 %v492
        %v506 = vpop.xlane.xlu0 %505
        %507 = vadd.xlane.f32.xlu0 %v493
        %v508 = vpop.xlane.xlu0 %507
        %509 = vadd.xlane.f32.xlu0 %v494
        %v510 = vpop.xlane.xlu0 %509
        %v511 = vmul.f32 %v496, %v470
        %v512 = vmul.f32 %v498, %v470
        %v513 = vmul.f32 %v500, %v470
        %v514 = vmul.f32 %v502, %v470
        %v515 = vmul.f32 %v504, %v470
        %v516 = vmul.f32 %v506, %v470
        %v517 = vmul.f32 %v508, %v470
        %v518 = vmul.f32 %v510, %v470
        %v519 = vadd.f32 %v511, 1e-05
        %v520 = vadd.f32 %v512, 1e-05
        %v521 = vadd.f32 %v513, 1e-05
        %v522 = vadd.f32 %v514, 1e-05
        %v523 = vadd.f32 %v515, 1e-05
        %v524 = vadd.f32 %v516, 1e-05
        %v525 = vadd.f32 %v517, 1e-05
        %v526 = vadd.f32 %v518, 1e-05
        %v527 = vrsqrt.pop %v519
        %v528 = vrsqrt.pop %v520
        %v529 = vrsqrt.pop %v521
        %v530 = vrsqrt.pop %v522
        %v531 = vrsqrt.pop %v523
        %v532 = vrsqrt.pop %v524
        %v533 = vrsqrt.pop %v525
        %v534 = vrsqrt.pop %v526
        %v535 = vmul.f32 %v479, %v527
        %v536 = vmul.f32 %v480, %v528
        %v537 = vmul.f32 %v481, %v529
        %v538 = vmul.f32 %v482, %v530
        %v539 = vmul.f32 %v483, %v531
        %v540 = vmul.f32 %v484, %v532
        %v541 = vmul.f32 %v485, %v533
        %v542 = vmul.f32 %v486, %v534
        %v544 = vlaneseq
        %v545 = vshrl.u32 %v544, 7
        %v546 = vsub.s32 0, %v545
        %v547 = vrot.slane %v452, %v546
        %v549 = vmul.f32 %v535, %v547
        %v550 = vmul.f32 %v536, %v547
        %v551 = vmul.f32 %v537, %v547
        %v552 = vmul.f32 %v538, %v547
        %v553 = vmul.f32 %v539, %v547
        %v554 = vmul.f32 %v540, %v547
        %v555 = vmul.f32 %v541, %v547
        %v556 = vmul.f32 %v542, %v547
        %v558 = vlaneseq
        %v559 = vshrl.u32 %v558, 7
        %v560 = vsub.s32 0, %v559
        %v561 = vrot.slane %v453, %v560
        %v563 = vadd.f32 %v549, %v561
        %v564 = vadd.f32 %v550, %v561
        %v565 = vadd.f32 %v551, %v561
        %v566 = vadd.f32 %v552, %v561
        %v567 = vadd.f32 %v553, %v561
        %v568 = vadd.f32 %v554, %v561
        %v569 = vadd.f32 %v555, %v561
        %v570 = vadd.f32 %v556, %v561
        %v571 = vpack.c.bf16 %v564, %v563
        %v572 = vpack.c.bf16 %v566, %v565
        %v573 = vpack.c.bf16 %v568, %v567
        %v574 = vpack.c.bf16 %v570, %v569
        %v579 = vunpack.c.l.b16 %v571
        %v580 = vunpack.c.h.b16 %v571
        %v581 = vunpack.c.l.b16 %v572
        %v582 = vunpack.c.h.b16 %v572
        %v583 = vunpack.c.l.b16 %v573
        %v584 = vunpack.c.h.b16 %v573
        %v585 = vunpack.c.l.b16 %v574
        %v586 = vunpack.c.h.b16 %v574
        %v587 = vpack.c.b16 %v579, %v579
        %v588 = vpack.c.b16 %v580, %v580
        %v589 = vpack.c.b16 %v581, %v581
        %v590 = vpack.c.b16 %v582, %v582
        %v591 = vpack.c.b16 %v583, %v583
        %v592 = vpack.c.b16 %v584, %v584
        %v593 = vpack.c.b16 %v585, %v585
        %v594 = vpack.c.b16 %v586, %v586
        %603 = vst [vmem:[#allocation2] sm:$0xf] %v587
        %604 = vst [vmem:[#allocation2 + $0x4] sm:$0xf] %v588
        %605 = vst [vmem:[#allocation2 + $0x8] sm:$0xf] %v589
        %606 = vst [vmem:[#allocation2 + $0xc] sm:$0xf] %v590
        %607 = vst [vmem:[#allocation2 + $0x10] sm:$0xf] %v591
        %608 = vst [vmem:[#allocation2 + $0x14] sm:$0xf] %v592
        %609 = vst [vmem:[#allocation2 + $0x18] sm:$0xf] %v593
        %610 = vst [vmem:[#allocation2 + $0x1c] sm:$0xf] %v594
        %611 = vst [vmem:[#allocation8] sm:$0xff] 0.0
        %612 = vst [vmem:[#allocation8 + $0x8] sm:$0xff] 0.0
        %613 = vst [vmem:[#allocation8 + $0x10] sm:$0xff] 0.0
        %614 = vst [vmem:[#allocation8 + $0x18] sm:$0xff] 0.0
        %615 = vst [vmem:[#allocation8 + $0x20] sm:$0xff] 0.0
        %616 = vst [vmem:[#allocation8 + $0x28] sm:$0xff] 0.0
        %617 = vst [vmem:[#allocation8 + $0x30] sm:$0xff] 0.0
        %618 = vst [vmem:[#allocation8 + $0x38] sm:$0xff] 0.0
      $region60: #{multi_view_block_forward.2} parent=55 // pred_fallthru
        _
      // Predicated region
      $region61: #{multi_view_block_forward.2} parent=55 // pred_check
        %p619 = pneg %p438
      $region62: #{multi_view_block_forward.2} parent=55 // pred_check_branch
        %621 = sbr.rel (%p619) target = $region64
      $region63: #{multi_view_block_forward.2} parent=55 // pred_region
        %v622 = vld [vmem:[#allocation2] sm:$0xf]
        %v623 = vld [vmem:[#allocation2 + $0x4] sm:$0xf]
        %v624 = vld [vmem:[#allocation2 + $0x8] sm:$0xf]
        %v625 = vld [vmem:[#allocation2 + $0xc] sm:$0xf]
        %v626 = vld [vmem:[#allocation2 + $0x10] sm:$0xf]
        %v627 = vld [vmem:[#allocation2 + $0x14] sm:$0xf]
        %v628 = vld [vmem:[#allocation2 + $0x18] sm:$0xf]
        %v629 = vld [vmem:[#allocation2 + $0x1c] sm:$0xf]
        %s630 = smul.u32 %s29, 16
        %s631 = smul.addr %s630, 4
        %s632 = scalar_lea.vmem %s4, %s631
        %v633 = vld [vmem:[%s632] sm:$0xf]
        %v634 = vld [vmem:[%s632 + $0x4] sm:$0xf]
        %v635 = vld [vmem:[%s632 + $0x8] sm:$0xf]
        %v636 = vld [vmem:[%s632 + $0xc] sm:$0xf]
        %v637 = vld [vmem:[%s632 + $0x10] sm:$0xf]
        %v638 = vld [vmem:[%s632 + $0x14] sm:$0xf]
        %v639 = vld [vmem:[%s632 + $0x18] sm:$0xf]
        %v640 = vld [vmem:[%s632 + $0x1c] sm:$0xf]
        %v641 = vld [vmem:[%s632 + $0x20] sm:$0xf]
        %v642 = vld [vmem:[%s632 + $0x24] sm:$0xf]
        %v643 = vld [vmem:[%s632 + $0x28] sm:$0xf]
        %v644 = vld [vmem:[%s632 + $0x2c] sm:$0xf]
        %v645 = vld [vmem:[%s632 + $0x30] sm:$0xf]
        %v646 = vld [vmem:[%s632 + $0x34] sm:$0xf]
        %v647 = vld [vmem:[%s632 + $0x38] sm:$0xf]
        %v648 = vld [vmem:[%s632 + $0x3c] sm:$0xf]
        %v657 = vunpack.c.l.b16 %v622
        %v658 = vunpack.c.l.b16 %v623
        %v659 = vunpack.c.l.b16 %v624
        %v660 = vunpack.c.l.b16 %v625
        %v661 = vunpack.c.l.b16 %v626
        %v662 = vunpack.c.l.b16 %v627
        %v663 = vunpack.c.l.b16 %v628
        %v664 = vunpack.c.l.b16 %v629
        %v665 = vpack.c.b16 %v658, %v657
        %v666 = vpack.c.b16 %v660, %v659
        %v667 = vpack.c.b16 %v662, %v661
        %v668 = vpack.c.b16 %v664, %v663
        %v689 = vunpack.c.l.b16 %v633
        %v690 = vunpack.c.l.b16 %v634
        %v691 = vunpack.c.l.b16 %v635
        %v692 = vunpack.c.l.b16 %v636
        %v693 = vunpack.c.l.b16 %v637
        %v694 = vunpack.c.l.b16 %v638
        %v695 = vunpack.c.l.b16 %v639
        %v696 = vunpack.c.l.b16 %v640
        %v697 = vunpack.c.l.b16 %v641
        %v698 = vunpack.c.l.b16 %v642
        %v699 = vunpack.c.l.b16 %v643
        %v700 = vunpack.c.l.b16 %v644
        %v701 = vunpack.c.l.b16 %v645
        %v702 = vunpack.c.l.b16 %v646
        %v703 = vunpack.c.l.b16 %v647
        %v704 = vunpack.c.l.b16 %v648
        %v705 = vpack.c.b16 %v690, %v689
        %v706 = vpack.c.b16 %v692, %v691
        %v707 = vpack.c.b16 %v694, %v693
        %v708 = vpack.c.b16 %v696, %v695
        %v709 = vpack.c.b16 %v698, %v697
        %v710 = vpack.c.b16 %v700, %v699
        %v711 = vpack.c.b16 %v702, %v701
        %v712 = vpack.c.b16 %v704, %v703
        %721 = vmatprep.subr.bf16.mxu0 0
        %722 = vmatpush1.bf16.msra.mxu0 %v712
        %723 = vmatprep.subr.bf16.mxu0 0
        %724 = vmatpush1.bf16.msra.mxu0 %v711
        %725 = vmatprep.subr.bf16.mxu0 0
        %726 = vmatpush1.bf16.msra.mxu0 %v710
        %727 = vmatprep.subr.bf16.mxu0 0
        %728 = vmatpush1.bf16.msra.mxu0 %v709
        %729 = vmatprep.subr.bf16.mxu0 0
        %730 = vmatpush1.bf16.msra.mxu0 %v708
        %731 = vmatprep.subr.bf16.mxu0 0
        %732 = vmatpush1.bf16.msra.mxu0 %v707
        %733 = vmatprep.subr.bf16.mxu0 0
        %734 = vmatpush1.bf16.msra.mxu0 %v706
        %735 = vmatprep.subr.bf16.mxu0 0
        %736 = vmatpush1.bf16.msra.mxu0 %v705
        %737 = vmatprep.subr.bf16.mxu0 0
        %738 = vmatpush2.bf16.msra.mxu0 0
        %739 = vmatprep.subr.bf16.mxu0 0
        %740 = vmatpush2.bf16.msra.mxu0 0
        %741 = vmatprep.subr.bf16.mxu0 0
        %742 = vmatpush2.bf16.msra.mxu0 0
        %743 = vmatprep.subr.bf16.mxu0 0
        %744 = vmatpush2.bf16.msra.mxu0 0
        %745 = vmatprep.subr.bf16.mxu0 0
        %746 = vmatpush2.bf16.msra.mxu0 0
        %747 = vmatprep.subr.bf16.mxu0 0
        %748 = vmatpush2.bf16.msra.mxu0 0
        %749 = vmatprep.subr.bf16.mxu0 0
        %750 = vmatpush2.bf16.msra.mxu0 0
        %751 = vmatprep.subr.bf16.mxu0 0
        %752 = vmatpush2.bf16.msra.mxu0 0
        %753 = vmatprep.mubr.bf16.mxu0 0
        %754 = vmatmul.mubr.bf16.gmra.mxu0 %v665
        %v755 = vpop.f32.mrf.mxu0
        %v756 = vadd.f32 0.0, %v755
        %v757 = vpop.f32.mrf.mxu0
        %v758 = vpop.f32.mrf.mxu0
        %v759 = vadd.f32 0.0, %v758
        %v760 = vpop.f32.mrf.mxu0
        %761 = vmatprep.mubr.bf16.mxu0 0
        %762 = vmatmul.mubr.bf16.gmra.mxu0 %v666
        %v763 = vpop.f32.mrf.mxu0
        %v764 = vadd.f32 0.0, %v763
        %v765 = vpop.f32.mrf.mxu0
        %v766 = vpop.f32.mrf.mxu0
        %v767 = vadd.f32 0.0, %v766
        %v768 = vpop.f32.mrf.mxu0
        %769 = vmatprep.mubr.bf16.mxu0 0
        %770 = vmatmul.mubr.bf16.gmra.mxu0 %v667
        %v771 = vpop.f32.mrf.mxu0
        %v772 = vadd.f32 0.0, %v771
        %v773 = vpop.f32.mrf.mxu0
        %v774 = vpop.f32.mrf.mxu0
        %v775 = vadd.f32 0.0, %v774
        %v776 = vpop.f32.mrf.mxu0
        %777 = vmatprep.mubr.bf16.mxu0 0
        %778 = vmatmul.mubr.bf16.gmra.mxu0 %v668
        %v779 = vpop.f32.mrf.mxu0
        %v780 = vadd.f32 0.0, %v779
        %v781 = vpop.f32.mrf.mxu0
        %v782 = vpop.f32.mrf.mxu0
        %v783 = vadd.f32 0.0, %v782
        %v784 = vpop.f32.mrf.mxu0
        %785 = vdwg.mxu0
        %v786 = vmul.f32 %v756, 0.17677669
        %v787 = vmul.f32 %v759, 0.17677669
        %v788 = vmul.f32 %v764, 0.17677669
        %v789 = vmul.f32 %v767, 0.17677669
        %v790 = vmul.f32 %v772, 0.17677669
        %v791 = vmul.f32 %v775, 0.17677669
        %v792 = vmul.f32 %v780, 0.17677669
        %v793 = vmul.f32 %v783, 0.17677669
        %v794 = vpack.c.bf16 %v787, %v786
        %v795 = vpack.c.bf16 %v789, %v788
        %v796 = vpack.c.bf16 %v791, %v790
        %v797 = vpack.c.bf16 %v793, %v792
        %v802 = vunpack.c.l.b16 %v794
        %v803 = vunpack.c.h.b16 %v794
        %v804 = vunpack.c.l.b16 %v795
        %v805 = vunpack.c.h.b16 %v795
        %v806 = vunpack.c.l.b16 %v796
        %v807 = vunpack.c.h.b16 %v796
        %v808 = vunpack.c.l.b16 %v797
        %v809 = vunpack.c.h.b16 %v797
        %v810 = vpack.c.b16 %v802, %v802
        %v811 = vpack.c.b16 %v803, %v803
        %v812 = vpack.c.b16 %v804, %v804
        %v813 = vpack.c.b16 %v805, %v805
        %v814 = vpack.c.b16 %v806, %v806
        %v815 = vpack.c.b16 %v807, %v807
        %v816 = vpack.c.b16 %v808, %v808
        %v817 = vpack.c.b16 %v809, %v809
        %s826 = smul.u32 %s29, 8
        %s827 = smul.addr %s826, 4
        %s828 = scalar_lea.vmem [#allocation4], %s827
        %vm829 = vcmask 257024
        %830 = vst.msk [vmem:[%s828] sm:$0xf] %vm829, %v810
        %831 = vst.msk [vmem:[%s828 + $0x4] sm:$0xf] %vm829, %v811
        %832 = vst.msk [vmem:[%s828 + $0x8] sm:$0xf] %vm829, %v812
        %833 = vst.msk [vmem:[%s828 + $0xc] sm:$0xf] %vm829, %v813
        %834 = vst.msk [vmem:[%s828 + $0x10] sm:$0xf] %vm829, %v814
        %835 = vst.msk [vmem:[%s828 + $0x14] sm:$0xf] %vm829, %v815
        %836 = vst.msk [vmem:[%s828 + $0x18] sm:$0xf] %vm829, %v816
        %837 = vst.msk [vmem:[%s828 + $0x1c] sm:$0xf] %vm829, %v817
        %s838 = smul.u32 %s29, 64
        %s839 = scalar_lea.vmem [#allocation5], %s838
        %vm840 = vcmask 7168
        %841 = vst.msk [vmem:[%s839] sm:$0xff] %vm840, -inf
        %842 = vst.msk [vmem:[%s839 + $0x8] sm:$0xff] %vm840, -inf
        %843 = vst.msk [vmem:[%s839 + $0x10] sm:$0xff] %vm840, -inf
        %844 = vst.msk [vmem:[%s839 + $0x18] sm:$0xff] %vm840, -inf
        %845 = vst.msk [vmem:[%s839 + $0x20] sm:$0xff] %vm840, -inf
        %846 = vst.msk [vmem:[%s839 + $0x28] sm:$0xff] %vm840, -inf
        %847 = vst.msk [vmem:[%s839 + $0x30] sm:$0xff] %vm840, -inf
        %848 = vst.msk [vmem:[%s839 + $0x38] sm:$0xff] %vm840, -inf
        %s849 = scalar_lea.vmem [#allocation6], %s838
        %850 = vst.msk [vmem:[%s849] sm:$0xff] %vm840, 0.0
        %851 = vst.msk [vmem:[%s849 + $0x8] sm:$0xff] %vm840, 0.0
        %852 = vst.msk [vmem:[%s849 + $0x10] sm:$0xff] %vm840, 0.0
        %853 = vst.msk [vmem:[%s849 + $0x18] sm:$0xff] %vm840, 0.0
        %854 = vst.msk [vmem:[%s849 + $0x20] sm:$0xff] %vm840, 0.0
        %855 = vst.msk [vmem:[%s849 + $0x28] sm:$0xff] %vm840, 0.0
        %856 = vst.msk [vmem:[%s849 + $0x30] sm:$0xff] %vm840, 0.0
        %857 = vst.msk [vmem:[%s849 + $0x38] sm:$0xff] %vm840, 0.0
        %s858 = scalar_lea.vmem [#allocation7], %s838
        %vm859 = vcmask 261120
        %860 = vst.msk [vmem:[%s858] sm:$0xff] %vm859, 0.0
        %861 = vst.msk [vmem:[%s858 + $0x8] sm:$0xff] %vm859, 0.0
        %862 = vst.msk [vmem:[%s858 + $0x10] sm:$0xff] %vm859, 0.0
        %863 = vst.msk [vmem:[%s858 + $0x18] sm:$0xff] %vm859, 0.0
        %864 = vst.msk [vmem:[%s858 + $0x20] sm:$0xff] %vm859, 0.0
        %865 = vst.msk [vmem:[%s858 + $0x28] sm:$0xff] %vm859, 0.0
        %866 = vst.msk [vmem:[%s858 + $0x30] sm:$0xff] %vm859, 0.0
        %867 = vst.msk [vmem:[%s858 + $0x38] sm:$0xff] %vm859, 0.0
      $region64: #{multi_view_block_forward.2} parent=55 // pred_fallthru
        _
      %p868 = scmp.eq.s32.totalorder %s27, 0
      %p869 = pnand %p868, %p439
      %p870 = pneg %p869
      // Predicated region
      $region65: #{multi_view_block_forward.2} parent=55 // pred_check
        _
      $region66: #{multi_view_block_forward.2} parent=55 // pred_check_branch
        %872 = sbr.rel (%p869) target = $region68
      $region67: #{multi_view_block_forward.2} parent=55 // pred_region
        %v873 = vld [vmem:[%s422] sm:$0xff]
        %v874 = vld [vmem:[%s422 + $0x8] sm:$0xff]
        %v875 = vld [vmem:[%s422 + $0x10] sm:$0xff]
        %v876 = vld [vmem:[%s422 + $0x18] sm:$0xff]
        %v877 = vld [vmem:[%s422 + $0x20] sm:$0xff]
        %v878 = vld [vmem:[%s422 + $0x28] sm:$0xff]
        %v879 = vld [vmem:[%s422 + $0x30] sm:$0xff]
        %v880 = vld [vmem:[%s422 + $0x38] sm:$0xff]
        %v881 = vld [vmem:[%s2] sm:$0x1]
        %v882 = vld [vmem:[%s3] sm:$0x1]
        %883 = vadd.xlane.f32.xlu0 %v873
        %v884 = vpop.xlane.xlu0 %883
        %885 = vadd.xlane.f32.xlu0 %v874
        %v886 = vpop.xlane.xlu0 %885
        %887 = vadd.xlane.f32.xlu0 %v875
        %v888 = vpop.xlane.xlu0 %887
        %889 = vadd.xlane.f32.xlu0 %v876
        %v890 = vpop.xlane.xlu0 %889
        %891 = vadd.xlane.f32.xlu0 %v877
        %v892 = vpop.xlane.xlu0 %891
        %893 = vadd.xlane.f32.xlu0 %v878
        %v894 = vpop.xlane.xlu0 %893
        %895 = vadd.xlane.f32.xlu0 %v879
        %v896 = vpop.xlane.xlu0 %895
        %897 = vadd.xlane.f32.xlu0 %v880
        %v898 = vpop.xlane.xlu0 %897
        %v899 = vrcp.pop 128.0
        %v900 = vmul.f32 %v884, %v899
        %v901 = vmul.f32 %v886, %v899
        %v902 = vmul.f32 %v888, %v899
        %v903 = vmul.f32 %v890, %v899
        %v904 = vmul.f32 %v892, %v899
        %v905 = vmul.f32 %v894, %v899
        %v906 = vmul.f32 %v896, %v899
        %v907 = vmul.f32 %v898, %v899
        %v908 = vsub.f32 %v873, %v900
        %v909 = vsub.f32 %v874, %v901
        %v910 = vsub.f32 %v875, %v902
        %v911 = vsub.f32 %v876, %v903
        %v912 = vsub.f32 %v877, %v904
        %v913 = vsub.f32 %v878, %v905
        %v914 = vsub.f32 %v879, %v906
        %v915 = vsub.f32 %v880, %v907
        %v916 = vmul.f32 %v908, %v908
        %v917 = vmul.f32 %v909, %v909
        %v918 = vmul.f32 %v910, %v910
        %v919 = vmul.f32 %v911, %v911
        %v920 = vmul.f32 %v912, %v912
        %v921 = vmul.f32 %v913, %v913
        %v922 = vmul.f32 %v914, %v914
        %v923 = vmul.f32 %v915, %v915
        %924 = vadd.xlane.f32.xlu0 %v916
        %v925 = vpop.xlane.xlu0 %924
        %926 = vadd.xlane.f32.xlu0 %v917
        %v927 = vpop.xlane.xlu0 %926
        %928 = vadd.xlane.f32.xlu0 %v918
        %v929 = vpop.xlane.xlu0 %928
        %930 = vadd.xlane.f32.xlu0 %v919
        %v931 = vpop.xlane.xlu0 %930
        %932 = vadd.xlane.f32.xlu0 %v920
        %v933 = vpop.xlane.xlu0 %932
        %934 = vadd.xlane.f32.xlu0 %v921
        %v935 = vpop.xlane.xlu0 %934
        %936 = vadd.xlane.f32.xlu0 %v922
        %v937 = vpop.xlane.xlu0 %936
        %938 = vadd.xlane.f32.xlu0 %v923
        %v939 = vpop.xlane.xlu0 %938
        %v940 = vmul.f32 %v925, %v899
        %v941 = vmul.f32 %v927, %v899
        %v942 = vmul.f32 %v929, %v899
        %v943 = vmul.f32 %v931, %v899
        %v944 = vmul.f32 %v933, %v899
        %v945 = vmul.f32 %v935, %v899
        %v946 = vmul.f32 %v937, %v899
        %v947 = vmul.f32 %v939, %v899
        %v948 = vadd.f32 %v940, 1e-05
        %v949 = vadd.f32 %v941, 1e-05
        %v950 = vadd.f32 %v942, 1e-05
        %v951 = vadd.f32 %v943, 1e-05
        %v952 = vadd.f32 %v944, 1e-05
        %v953 = vadd.f32 %v945, 1e-05
        %v954 = vadd.f32 %v946, 1e-05
        %v955 = vadd.f32 %v947, 1e-05
        %v956 = vrsqrt.pop %v948
        %v957 = vrsqrt.pop %v949
        %v958 = vrsqrt.pop %v950
        %v959 = vrsqrt.pop %v951
        %v960 = vrsqrt.pop %v952
        %v961 = vrsqrt.pop %v953
        %v962 = vrsqrt.pop %v954
        %v963 = vrsqrt.pop %v955
        %v964 = vmul.f32 %v908, %v956
        %v965 = vmul.f32 %v909, %v957
        %v966 = vmul.f32 %v910, %v958
        %v967 = vmul.f32 %v911, %v959
        %v968 = vmul.f32 %v912, %v960
        %v969 = vmul.f32 %v913, %v961
        %v970 = vmul.f32 %v914, %v962
        %v971 = vmul.f32 %v915, %v963
        %v973 = vlaneseq
        %v974 = vshrl.u32 %v973, 7
        %v975 = vsub.s32 0, %v974
        %v976 = vrot.slane %v881, %v975
        %v978 = vmul.f32 %v964, %v976
        %v979 = vmul.f32 %v965, %v976
        %v980 = vmul.f32 %v966, %v976
        %v981 = vmul.f32 %v967, %v976
        %v982 = vmul.f32 %v968, %v976
        %v983 = vmul.f32 %v969, %v976
        %v984 = vmul.f32 %v970, %v976
        %v985 = vmul.f32 %v971, %v976
        %v987 = vlaneseq
        %v988 = vshrl.u32 %v987, 7
        %v989 = vsub.s32 0, %v988
        %v990 = vrot.slane %v882, %v989
        %v992 = vadd.f32 %v978, %v990
        %v993 = vadd.f32 %v979, %v990
        %v994 = vadd.f32 %v980, %v990
        %v995 = vadd.f32 %v981, %v990
        %v996 = vadd.f32 %v982, %v990
        %v997 = vadd.f32 %v983, %v990
        %v998 = vadd.f32 %v984, %v990
        %v999 = vadd.f32 %v985, %v990
        %v1000 = vpack.c.bf16 %v993, %v992
        %v1001 = vpack.c.bf16 %v995, %v994
        %v1002 = vpack.c.bf16 %v997, %v996
        %v1003 = vpack.c.bf16 %v999, %v998
        %v1008 = vunpack.c.l.b16 %v1000
        %v1009 = vunpack.c.h.b16 %v1000
        %v1010 = vunpack.c.l.b16 %v1001
        %v1011 = vunpack.c.h.b16 %v1001
        %v1012 = vunpack.c.l.b16 %v1002
        %v1013 = vunpack.c.h.b16 %v1002
        %v1014 = vunpack.c.l.b16 %v1003
        %v1015 = vunpack.c.h.b16 %v1003
        %v1016 = vpack.c.b16 %v1008, %v1008
        %v1017 = vpack.c.b16 %v1009, %v1009
        %v1018 = vpack.c.b16 %v1010, %v1010
        %v1019 = vpack.c.b16 %v1011, %v1011
        %v1020 = vpack.c.b16 %v1012, %v1012
        %v1021 = vpack.c.b16 %v1013, %v1013
        %v1022 = vpack.c.b16 %v1014, %v1014
        %v1023 = vpack.c.b16 %v1015, %v1015
        %1032 = vst [vmem:[#allocation3] sm:$0xf] %v1016
        %1033 = vst [vmem:[#allocation3 + $0x4] sm:$0xf] %v1017
        %1034 = vst [vmem:[#allocation3 + $0x8] sm:$0xf] %v1018
        %1035 = vst [vmem:[#allocation3 + $0xc] sm:$0xf] %v1019
        %1036 = vst [vmem:[#allocation3 + $0x10] sm:$0xf] %v1020
        %1037 = vst [vmem:[#allocation3 + $0x14] sm:$0xf] %v1021
        %1038 = vst [vmem:[#allocation3 + $0x18] sm:$0xf] %v1022
        %1039 = vst [vmem:[#allocation3 + $0x1c] sm:$0xf] %v1023
      $region68: #{multi_view_block_forward.2} parent=55 // pred_fallthru
        _
      // Predicated region
      $region69: #{multi_view_block_forward.2} parent=55 // pred_check
        %p1040 = pneg %p868
      $region70: #{multi_view_block_forward.2} parent=55 // pred_check_branch
        %1042 = sbr.rel (%p1040) target = $region72
      $region71: #{multi_view_block_forward.2} parent=55 // pred_region
        %v1043 = vld [vmem:[#allocation3] sm:$0xf]
        %v1044 = vld [vmem:[#allocation3 + $0x4] sm:$0xf]
        %v1045 = vld [vmem:[#allocation3 + $0x8] sm:$0xf]
        %v1046 = vld [vmem:[#allocation3 + $0xc] sm:$0xf]
        %v1047 = vld [vmem:[#allocation3 + $0x10] sm:$0xf]
        %v1048 = vld [vmem:[#allocation3 + $0x14] sm:$0xf]
        %v1049 = vld [vmem:[#allocation3 + $0x18] sm:$0xf]
        %v1050 = vld [vmem:[#allocation3 + $0x1c] sm:$0xf]
        %s1051 = smul.u32 %s29, 16
        %s1052 = smul.addr %s1051, 4
        %s1053 = scalar_lea.vmem %s5, %s1052
        %v1054 = vld [vmem:[%s1053] sm:$0xf]
        %v1055 = vld [vmem:[%s1053 + $0x4] sm:$0xf]
        %v1056 = vld [vmem:[%s1053 + $0x8] sm:$0xf]
        %v1057 = vld [vmem:[%s1053 + $0xc] sm:$0xf]
        %v1058 = vld [vmem:[%s1053 + $0x10] sm:$0xf]
        %v1059 = vld [vmem:[%s1053 + $0x14] sm:$0xf]
        %v1060 = vld [vmem:[%s1053 + $0x18] sm:$0xf]
        %v1061 = vld [vmem:[%s1053 + $0x1c] sm:$0xf]
        %v1062 = vld [vmem:[%s1053 + $0x20] sm:$0xf]
        %v1063 = vld [vmem:[%s1053 + $0x24] sm:$0xf]
        %v1064 = vld [vmem:[%s1053 + $0x28] sm:$0xf]
        %v1065 = vld [vmem:[%s1053 + $0x2c] sm:$0xf]
        %v1066 = vld [vmem:[%s1053 + $0x30] sm:$0xf]
        %v1067 = vld [vmem:[%s1053 + $0x34] sm:$0xf]
        %v1068 = vld [vmem:[%s1053 + $0x38] sm:$0xf]
        %v1069 = vld [vmem:[%s1053 + $0x3c] sm:$0xf]
        %v1078 = vunpack.c.l.b16 %v1043
        %v1079 = vunpack.c.l.b16 %v1044
        %v1080 = vunpack.c.l.b16 %v1045
        %v1081 = vunpack.c.l.b16 %v1046
        %v1082 = vunpack.c.l.b16 %v1047
        %v1083 = vunpack.c.l.b16 %v1048
        %v1084 = vunpack.c.l.b16 %v1049
        %v1085 = vunpack.c.l.b16 %v1050
        %v1086 = vpack.c.b16 %v1079, %v1078
        %v1087 = vpack.c.b16 %v1081, %v1080
        %v1088 = vpack.c.b16 %v1083, %v1082
        %v1089 = vpack.c.b16 %v1085, %v1084
        %v1110 = vunpack.c.l.b16 %v1054
        %v1111 = vunpack.c.l.b16 %v1055
        %v1112 = vunpack.c.l.b16 %v1056
        %v1113 = vunpack.c.l.b16 %v1057
        %v1114 = vunpack.c.l.b16 %v1058
        %v1115 = vunpack.c.l.b16 %v1059
        %v1116 = vunpack.c.l.b16 %v1060
        %v1117 = vunpack.c.l.b16 %v1061
        %v1118 = vunpack.c.l.b16 %v1062
        %v1119 = vunpack.c.l.b16 %v1063
        %v1120 = vunpack.c.l.b16 %v1064
        %v1121 = vunpack.c.l.b16 %v1065
        %v1122 = vunpack.c.l.b16 %v1066
        %v1123 = vunpack.c.l.b16 %v1067
        %v1124 = vunpack.c.l.b16 %v1068
        %v1125 = vunpack.c.l.b16 %v1069
        %v1126 = vpack.c.b16 %v1111, %v1110
        %v1127 = vpack.c.b16 %v1113, %v1112
        %v1128 = vpack.c.b16 %v1115, %v1114
        %v1129 = vpack.c.b16 %v1117, %v1116
        %v1130 = vpack.c.b16 %v1119, %v1118
        %v1131 = vpack.c.b16 %v1121, %v1120
        %v1132 = vpack.c.b16 %v1123, %v1122
        %v1133 = vpack.c.b16 %v1125, %v1124
        %1142 = vmatprep.subr.bf16.mxu0 0
        %1143 = vmatpush1.bf16.msra.mxu0 %v1133
        %1144 = vmatprep.subr.bf16.mxu0 0
        %1145 = vmatpush1.bf16.msra.mxu0 %v1132
        %1146 = vmatprep.subr.bf16.mxu0 0
        %1147 = vmatpush1.bf16.msra.mxu0 %v1131
        %1148 = vmatprep.subr.bf16.mxu0 0
        %1149 = vmatpush1.bf16.msra.mxu0 %v1130
        %1150 = vmatprep.subr.bf16.mxu0 0
        %1151 = vmatpush1.bf16.msra.mxu0 %v1129
        %1152 = vmatprep.subr.bf16.mxu0 0
        %1153 = vmatpush1.bf16.msra.mxu0 %v1128
        %1154 = vmatprep.subr.bf16.mxu0 0
        %1155 = vmatpush1.bf16.msra.mxu0 %v1127
        %1156 = vmatprep.subr.bf16.mxu0 0
        %1157 = vmatpush1.bf16.msra.mxu0 %v1126
        %1158 = vmatprep.subr.bf16.mxu0 0
        %1159 = vmatpush2.bf16.msra.mxu0 0
        %1160 = vmatprep.subr.bf16.mxu0 0
        %1161 = vmatpush2.bf16.msra.mxu0 0
        %1162 = vmatprep.subr.bf16.mxu0 0
        %1163 = vmatpush2.bf16.msra.mxu0 0
        %1164 = vmatprep.subr.bf16.mxu0 0
        %1165 = vmatpush2.bf16.msra.mxu0 0
        %1166 = vmatprep.subr.bf16.mxu0 0
        %1167 = vmatpush2.bf16.msra.mxu0 0
        %1168 = vmatprep.subr.bf16.mxu0 0
        %1169 = vmatpush2.bf16.msra.mxu0 0
        %1170 = vmatprep.subr.bf16.mxu0 0
        %1171 = vmatpush2.bf16.msra.mxu0 0
        %1172 = vmatprep.subr.bf16.mxu0 0
        %1173 = vmatpush2.bf16.msra.mxu0 0
        %1174 = vmatprep.mubr.bf16.mxu0 0
        %1175 = vmatmul.mubr.bf16.gmra.mxu0 %v1086
        %v1176 = vpop.f32.mrf.mxu0
        %v1177 = vadd.f32 0.0, %v1176
        %v1178 = vpop.f32.mrf.mxu0
        %v1179 = vpop.f32.mrf.mxu0
        %v1180 = vadd.f32 0.0, %v1179
        %v1181 = vpop.f32.mrf.mxu0
        %1182 = vmatprep.mubr.bf16.mxu0 0
        %1183 = vmatmul.mubr.bf16.gmra.mxu0 %v1087
        %v1184 = vpop.f32.mrf.mxu0
        %v1185 = vadd.f32 0.0, %v1184
        %v1186 = vpop.f32.mrf.mxu0
        %v1187 = vpop.f32.mrf.mxu0
        %v1188 = vadd.f32 0.0, %v1187
        %v1189 = vpop.f32.mrf.mxu0
        %1190 = vmatprep.mubr.bf16.mxu0 0
        %1191 = vmatmul.mubr.bf16.gmra.mxu0 %v1088
        %v1192 = vpop.f32.mrf.mxu0
        %v1193 = vadd.f32 0.0, %v1192
        %v1194 = vpop.f32.mrf.mxu0
        %v1195 = vpop.f32.mrf.mxu0
        %v1196 = vadd.f32 0.0, %v1195
        %v1197 = vpop.f32.mrf.mxu0
        %1198 = vmatprep.mubr.bf16.mxu0 0
        %1199 = vmatmul.mubr.bf16.gmra.mxu0 %v1089
        %v1200 = vpop.f32.mrf.mxu0
        %v1201 = vadd.f32 0.0, %v1200
        %v1202 = vpop.f32.mrf.mxu0
        %v1203 = vpop.f32.mrf.mxu0
        %v1204 = vadd.f32 0.0, %v1203
        %v1205 = vpop.f32.mrf.mxu0
        %1206 = vdwg.mxu0
        %s1207 = smul.addr %s1051, 4
        %s1208 = scalar_lea.vmem %s6, %s1207
        %v1209 = vld [vmem:[%s1208] sm:$0xf]
        %v1210 = vld [vmem:[%s1208 + $0x4] sm:$0xf]
        %v1211 = vld [vmem:[%s1208 + $0x8] sm:$0xf]
        %v1212 = vld [vmem:[%s1208 + $0xc] sm:$0xf]
        %v1213 = vld [vmem:[%s1208 + $0x10] sm:$0xf]
        %v1214 = vld [vmem:[%s1208 + $0x14] sm:$0xf]
        %v1215 = vld [vmem:[%s1208 + $0x18] sm:$0xf]
        %v1216 = vld [vmem:[%s1208 + $0x1c] sm:$0xf]
        %v1217 = vld [vmem:[%s1208 + $0x20] sm:$0xf]
        %v1218 = vld [vmem:[%s1208 + $0x24] sm:$0xf]
        %v1219 = vld [vmem:[%s1208 + $0x28] sm:$0xf]
        %v1220 = vld [vmem:[%s1208 + $0x2c] sm:$0xf]
        %v1221 = vld [vmem:[%s1208 + $0x30] sm:$0xf]
        %v1222 = vld [vmem:[%s1208 + $0x34] sm:$0xf]
        %v1223 = vld [vmem:[%s1208 + $0x38] sm:$0xf]
        %v1224 = vld [vmem:[%s1208 + $0x3c] sm:$0xf]
        %v1241 = vunpack.c.l.b16 %v1209
        %v1242 = vunpack.c.l.b16 %v1210
        %v1243 = vunpack.c.l.b16 %v1211
        %v1244 = vunpack.c.l.b16 %v1212
        %v1245 = vunpack.c.l.b16 %v1213
        %v1246 = vunpack.c.l.b16 %v1214
        %v1247 = vunpack.c.l.b16 %v1215
        %v1248 = vunpack.c.l.b16 %v1216
        %v1249 = vunpack.c.l.b16 %v1217
        %v1250 = vunpack.c.l.b16 %v1218
        %v1251 = vunpack.c.l.b16 %v1219
        %v1252 = vunpack.c.l.b16 %v1220
        %v1253 = vunpack.c.l.b16 %v1221
        %v1254 = vunpack.c.l.b16 %v1222
        %v1255 = vunpack.c.l.b16 %v1223
        %v1256 = vunpack.c.l.b16 %v1224
        %v1257 = vpack.c.b16 %v1242, %v1241
        %v1258 = vpack.c.b16 %v1244, %v1243
        %v1259 = vpack.c.b16 %v1246, %v1245
        %v1260 = vpack.c.b16 %v1248, %v1247
        %v1261 = vpack.c.b16 %v1250, %v1249
        %v1262 = vpack.c.b16 %v1252, %v1251
        %v1263 = vpack.c.b16 %v1254, %v1253
        %v1264 = vpack.c.b16 %v1256, %v1255
        %1273 = vmatprep.subr.bf16.mxu0 0
        %1274 = vmatpush1.bf16.msra.mxu0 %v1264
        %1275 = vmatprep.subr.bf16.mxu0 0
        %1276 = vmatpush1.bf16.msra.mxu0 %v1263
        %1277 = vmatprep.subr.bf16.mxu0 0
        %1278 = vmatpush1.bf16.msra.mxu0 %v1262
        %1279 = vmatprep.subr.bf16.mxu0 0
        %1280 = vmatpush1.bf16.msra.mxu0 %v1261
        %1281 = vmatprep.subr.bf16.mxu0 0
        %1282 = vmatpush1.bf16.msra.mxu0 %v1260
        %1283 = vmatprep.subr.bf16.mxu0 0
        %1284 = vmatpush1.bf16.msra.mxu0 %v1259
        %1285 = vmatprep.subr.bf16.mxu0 0
        %1286 = vmatpush1.bf16.msra.mxu0 %v1258
        %1287 = vmatprep.subr.bf16.mxu0 0
        %1288 = vmatpush1.bf16.msra.mxu0 %v1257
        %1289 = vmatprep.subr.bf16.mxu0 0
        %1290 = vmatpush2.bf16.msra.mxu0 0
        %1291 = vmatprep.subr.bf16.mxu0 0
        %1292 = vmatpush2.bf16.msra.mxu0 0
        %1293 = vmatprep.subr.bf16.mxu0 0
        %1294 = vmatpush2.bf16.msra.mxu0 0
        %1295 = vmatprep.subr.bf16.mxu0 0
        %1296 = vmatpush2.bf16.msra.mxu0 0
        %1297 = vmatprep.subr.bf16.mxu0 0
        %1298 = vmatpush2.bf16.msra.mxu0 0
        %1299 = vmatprep.subr.bf16.mxu0 0
        %1300 = vmatpush2.bf16.msra.mxu0 0
        %1301 = vmatprep.subr.bf16.mxu0 0
        %1302 = vmatpush2.bf16.msra.mxu0 0
        %1303 = vmatprep.subr.bf16.mxu0 0
        %1304 = vmatpush2.bf16.msra.mxu0 0
        %1305 = vmatprep.mubr.bf16.mxu0 0
        %1306 = vmatmul.mubr.bf16.gmra.mxu0 %v1086
        %v1307 = vpop.f32.mrf.mxu0
        %v1308 = vadd.f32 0.0, %v1307
        %v1309 = vpop.f32.mrf.mxu0
        %v1310 = vpop.f32.mrf.mxu0
        %v1311 = vadd.f32 0.0, %v1310
        %v1312 = vpop.f32.mrf.mxu0
        %1313 = vmatprep.mubr.bf16.mxu0 0
        %1314 = vmatmul.mubr.bf16.gmra.mxu0 %v1087
        %v1315 = vpop.f32.mrf.mxu0
        %v1316 = vadd.f32 0.0, %v1315
        %v1317 = vpop.f32.mrf.mxu0
        %v1318 = vpop.f32.mrf.mxu0
        %v1319 = vadd.f32 0.0, %v1318
        %v1320 = vpop.f32.mrf.mxu0
        %1321 = vmatprep.mubr.bf16.mxu0 0
        %1322 = vmatmul.mubr.bf16.gmra.mxu0 %v1088
        %v1323 = vpop.f32.mrf.mxu0
        %v1324 = vadd.f32 0.0, %v1323
        %v1325 = vpop.f32.mrf.mxu0
        %v1326 = vpop.f32.mrf.mxu0
        %v1327 = vadd.f32 0.0, %v1326
        %v1328 = vpop.f32.mrf.mxu0
        %1329 = vmatprep.mubr.bf16.mxu0 0
        %1330 = vmatmul.mubr.bf16.gmra.mxu0 %v1089
        %v1331 = vpop.f32.mrf.mxu0
        %v1332 = vadd.f32 0.0, %v1331
        %v1333 = vpop.f32.mrf.mxu0
        %v1334 = vpop.f32.mrf.mxu0
        %v1335 = vadd.f32 0.0, %v1334
        %v1336 = vpop.f32.mrf.mxu0
        %1337 = vdwg.mxu0
        %v1338 = vpack.c.bf16 %v1180, %v1177
        %v1339 = vpack.c.bf16 %v1188, %v1185
        %v1340 = vpack.c.bf16 %v1196, %v1193
        %v1341 = vpack.c.bf16 %v1204, %v1201
        %v1346 = vunpack.c.l.b16 %v1338
        %v1347 = vunpack.c.h.b16 %v1338
        %v1348 = vunpack.c.l.b16 %v1339
        %v1349 = vunpack.c.h.b16 %v1339
        %v1350 = vunpack.c.l.b16 %v1340
        %v1351 = vunpack.c.h.b16 %v1340
        %v1352 = vunpack.c.l.b16 %v1341
        %v1353 = vunpack.c.h.b16 %v1341
        %v1354 = vpack.c.b16 %v1346, %v1346
        %v1355 = vpack.c.b16 %v1347, %v1347
        %v1356 = vpack.c.b16 %v1348, %v1348
        %v1357 = vpack.c.b16 %v1349, %v1349
        %v1358 = vpack.c.b16 %v1350, %v1350
        %v1359 = vpack.c.b16 %v1351, %v1351
        %v1360 = vpack.c.b16 %v1352, %v1352
        %v1361 = vpack.c.b16 %v1353, %v1353
        %s1370 = sshra.s32 %s437, 3
        %s1371 = sand.u32 %s437, 7
        %s1372 = sadd.s32 %s1370, %s1051
        %s1373 = smul.addr %s1372, 4
        %s1374 = scalar_lea.vmem [#allocation9], %s1373
        %vm1375 = vcmask 257024
        %1376 = vst.msk [vmem:[%s1374] sm:$0xf] %vm1375, %v1354
        %1377 = vst.msk [vmem:[%s1374 + $0x4] sm:$0xf] %vm1375, %v1355
        %1378 = vst.msk [vmem:[%s1374 + $0x8] sm:$0xf] %vm1375, %v1356
        %1379 = vst.msk [vmem:[%s1374 + $0xc] sm:$0xf] %vm1375, %v1357
        %1380 = vst.msk [vmem:[%s1374 + $0x10] sm:$0xf] %vm1375, %v1358
        %1381 = vst.msk [vmem:[%s1374 + $0x14] sm:$0xf] %vm1375, %v1359
        %1382 = vst.msk [vmem:[%s1374 + $0x18] sm:$0xf] %vm1375, %v1360
        %1383 = vst.msk [vmem:[%s1374 + $0x1c] sm:$0xf] %vm1375, %v1361
        %v1384 = vpack.c.bf16 %v1311, %v1308
        %v1385 = vpack.c.bf16 %v1319, %v1316
        %v1386 = vpack.c.bf16 %v1327, %v1324
        %v1387 = vpack.c.bf16 %v1335, %v1332
        %v1392 = vunpack.c.l.b16 %v1384
        %v1393 = vunpack.c.h.b16 %v1384
        %v1394 = vunpack.c.l.b16 %v1385
        %v1395 = vunpack.c.h.b16 %v1385
        %v1396 = vunpack.c.l.b16 %v1386
        %v1397 = vunpack.c.h.b16 %v1386
        %v1398 = vunpack.c.l.b16 %v1387
        %v1399 = vunpack.c.h.b16 %v1387
        %v1400 = vpack.c.b16 %v1392, %v1392
        %v1401 = vpack.c.b16 %v1393, %v1393
        %v1402 = vpack.c.b16 %v1394, %v1394
        %v1403 = vpack.c.b16 %v1395, %v1395
        %v1404 = vpack.c.b16 %v1396, %v1396
        %v1405 = vpack.c.b16 %v1397, %v1397
        %v1406 = vpack.c.b16 %v1398, %v1398
        %v1407 = vpack.c.b16 %v1399, %v1399
        %s1416 = smul.addr %s1372, 4
        %s1417 = scalar_lea.vmem [#allocation10], %s1416
        %1418 = vst.msk [vmem:[%s1417] sm:$0xf] %vm1375, %v1400
        %1419 = vst.msk [vmem:[%s1417 + $0x4] sm:$0xf] %vm1375, %v1401
        %1420 = vst.msk [vmem:[%s1417 + $0x8] sm:$0xf] %vm1375, %v1402
        %1421 = vst.msk [vmem:[%s1417 + $0xc] sm:$0xf] %vm1375, %v1403
        %1422 = vst.msk [vmem:[%s1417 + $0x10] sm:$0xf] %vm1375, %v1404
        %1423 = vst.msk [vmem:[%s1417 + $0x14] sm:$0xf] %vm1375, %v1405
        %1424 = vst.msk [vmem:[%s1417 + $0x18] sm:$0xf] %vm1375, %v1406
        %1425 = vst.msk [vmem:[%s1417 + $0x1c] sm:$0xf] %vm1375, %v1407
      $region72: #{multi_view_block_forward.2} parent=55 // pred_fallthru
        _
      %s1426 = sshra.s32 %s437, 3
      %s1427 = sand.u32 %s437, 7
      %s1428 = smul.u32 %s29, 16
      %s1429 = sadd.s32 %s1426, %s1428
      %s1430 = smul.addr %s1429, 4
      %s1431 = scalar_lea.vmem [#allocation9], %s1430
      %v1432 = vld [vmem:[%s1431] sm:$0xf]
      %v1433 = vld [vmem:[%s1431 + $0x4] sm:$0xf]
      %v1434 = vld [vmem:[%s1431 + $0x8] sm:$0xf]
      %v1435 = vld [vmem:[%s1431 + $0xc] sm:$0xf]
      %v1436 = vld [vmem:[%s1431 + $0x10] sm:$0xf]
      %v1437 = vld [vmem:[%s1431 + $0x14] sm:$0xf]
      %v1438 = vld [vmem:[%s1431 + $0x18] sm:$0xf]
      %v1439 = vld [vmem:[%s1431 + $0x1c] sm:$0xf]
      %s1440 = smul.addr %s1429, 4
      %s1441 = scalar_lea.vmem [#allocation10], %s1440
      %v1442 = vld [vmem:[%s1441] sm:$0xf]
      %v1443 = vld [vmem:[%s1441 + $0x4] sm:$0xf]
      %v1444 = vld [vmem:[%s1441 + $0x8] sm:$0xf]
      %v1445 = vld [vmem:[%s1441 + $0xc] sm:$0xf]
      %v1446 = vld [vmem:[%s1441 + $0x10] sm:$0xf]
      %v1447 = vld [vmem:[%s1441 + $0x14] sm:$0xf]
      %v1448 = vld [vmem:[%s1441 + $0x18] sm:$0xf]
      %v1449 = vld [vmem:[%s1441 + $0x1c] sm:$0xf]
      %s1450 = smul.u32 %s29, 8
      %s1451 = smul.addr %s1450, 4
      %s1452 = scalar_lea.vmem [#allocation4], %s1451
      %v1453 = vld [vmem:[%s1452] sm:$0xf]
      %v1454 = vld [vmem:[%s1452 + $0x4] sm:$0xf]
      %v1455 = vld [vmem:[%s1452 + $0x8] sm:$0xf]
      %v1456 = vld [vmem:[%s1452 + $0xc] sm:$0xf]
      %v1457 = vld [vmem:[%s1452 + $0x10] sm:$0xf]
      %v1458 = vld [vmem:[%s1452 + $0x14] sm:$0xf]
      %v1459 = vld [vmem:[%s1452 + $0x18] sm:$0xf]
      %v1460 = vld [vmem:[%s1452 + $0x1c] sm:$0xf]
      %v1469 = vunpack.c.l.b16 %v1453
      %v1470 = vunpack.c.l.b16 %v1454
      %v1471 = vunpack.c.l.b16 %v1455
      %v1472 = vunpack.c.l.b16 %v1456
      %v1473 = vunpack.c.l.b16 %v1457
      %v1474 = vunpack.c.l.b16 %v1458
      %v1475 = vunpack.c.l.b16 %v1459
      %v1476 = vunpack.c.l.b16 %v1460
      %v1477 = vpack.c.b16 %v1470, %v1469
      %v1478 = vpack.c.b16 %v1472, %v1471
      %v1479 = vpack.c.b16 %v1474, %v1473
      %v1480 = vpack.c.b16 %v1476, %v1475
      %v1489 = vunpack.c.l.b16 %v1432
      %v1490 = vunpack.c.l.b16 %v1433
      %v1491 = vunpack.c.l.b16 %v1434
      %v1492 = vunpack.c.l.b16 %v1435
      %v1493 = vunpack.c.l.b16 %v1436
      %v1494 = vunpack.c.l.b16 %v1437
      %v1495 = vunpack.c.l.b16 %v1438
      %v1496 = vunpack.c.l.b16 %v1439
      %v1497 = vpack.c.b16 %v1490, %v1489
      %v1498 = vpack.c.b16 %v1492, %v1491
      %v1499 = vpack.c.b16 %v1494, %v1493
      %v1500 = vpack.c.b16 %v1496, %v1495
      %vm1501 = vcmask 261120
      %v1503 = vsel %vm1501, %v1477, 0
      %v1506 = vsel %vm1501, %v1478, 0
      %v1509 = vsel %vm1501, %v1479, 0
      %v1512 = vsel %vm1501, %v1480, 0
      %v1515 = vsel %vm1501, %v1497, 0
      %v1518 = vsel %vm1501, %v1498, 0
      %v1521 = vsel %vm1501, %v1499, 0
      %v1524 = vsel %vm1501, %v1500, 0
      %1526 = vmatprep.subr.bf16.mxu0 0
      %1527 = vmatpush1.bf16.xpose.msra.mxu0 0
      %1528 = vmatprep.subr.bf16.mxu0 0
      %1529 = vmatpush1.bf16.xpose.msra.mxu0 0
      %1530 = vmatprep.subr.bf16.mxu0 0
      %1531 = vmatpush1.bf16.xpose.msra.mxu0 0
      %1532 = vmatprep.subr.bf16.mxu0 0
      %1533 = vmatpush1.bf16.xpose.msra.mxu0 0
      %1534 = vmatprep.subr.bf16.mxu0 0
      %1535 = vmatpush1.bf16.xpose.msra.mxu0 %v1524
      %1536 = vmatprep.subr.bf16.mxu0 0
      %1537 = vmatpush1.bf16.xpose.msra.mxu0 %v1521
      %1538 = vmatprep.subr.bf16.mxu0 0
      %1539 = vmatpush1.bf16.xpose.msra.mxu0 %v1518
      %1540 = vmatprep.subr.bf16.mxu0 0
      %1541 = vmatpush1.bf16.xpose.msra.mxu0 %v1515
      %1542 = vmatprep.subr.bf16.mxu0 0
      %1543 = vmatpush2.bf16.xpose.msra.mxu0 0
      %1544 = vmatprep.subr.bf16.mxu0 0
      %1545 = vmatpush2.bf16.xpose.msra.mxu0 0
      %1546 = vmatprep.subr.bf16.mxu0 0
      %1547 = vmatpush2.bf16.xpose.msra.mxu0 0
      %1548 = vmatprep.subr.bf16.mxu0 0
      %1549 = vmatpush2.bf16.xpose.msra.mxu0 0
      %1550 = vmatprep.subr.bf16.mxu0 0
      %1551 = vmatpush2.bf16.xpose.msra.mxu0 0
      %1552 = vmatprep.subr.bf16.mxu0 0
      %1553 = vmatpush2.bf16.xpose.msra.mxu0 0
      %1554 = vmatprep.subr.bf16.mxu0 0
      %1555 = vmatpush2.bf16.xpose.msra.mxu0 0
      %1556 = vmatprep.subr.bf16.mxu0 0
      %1557 = vmatpush2.bf16.xpose.msra.mxu0 0
      %1558 = vmatprep.mubr.bf16.mxu0 0
      %1559 = vmatmul.mubr.bf16.gmra.mxu0 %v1503
      %v1560 = vpop.f32.mrf.mxu0
      %v1561 = vadd.f32 0.0, %v1560
      %v1562 = vpop.f32.mrf.mxu0
      %v1563 = vpop.f32.mrf.mxu0
      %v1564 = vadd.f32 0.0, %v1563
      %v1565 = vpop.f32.mrf.mxu0
      %1566 = vmatprep.mubr.bf16.mxu0 0
      %1567 = vmatmul.mubr.bf16.gmra.mxu0 %v1506
      %v1568 = vpop.f32.mrf.mxu0
      %v1569 = vadd.f32 0.0, %v1568
      %v1570 = vpop.f32.mrf.mxu0
      %v1571 = vpop.f32.mrf.mxu0
      %v1572 = vadd.f32 0.0, %v1571
      %v1573 = vpop.f32.mrf.mxu0
      %1574 = vmatprep.mubr.bf16.mxu0 0
      %1575 = vmatmul.mubr.bf16.gmra.mxu0 %v1509
      %v1576 = vpop.f32.mrf.mxu0
      %v1577 = vadd.f32 0.0, %v1576
      %v1578 = vpop.f32.mrf.mxu0
      %v1579 = vpop.f32.mrf.mxu0
      %v1580 = vadd.f32 0.0, %v1579
      %v1581 = vpop.f32.mrf.mxu0
      %1582 = vmatprep.mubr.bf16.mxu0 0
      %1583 = vmatmul.mubr.bf16.gmra.mxu0 %v1512
      %v1584 = vpop.f32.mrf.mxu0
      %v1585 = vadd.f32 0.0, %v1584
      %v1586 = vpop.f32.mrf.mxu0
      %v1587 = vpop.f32.mrf.mxu0
      %v1588 = vadd.f32 0.0, %v1587
      %v1589 = vpop.f32.mrf.mxu0
      %1590 = vdwg.mxu0
      %s1591 = smul.u32 %s29, 64
      %s1592 = scalar_lea.vmem [#allocation5], %s1591
      %v1593 = vld [vmem:[%s1592] sm:$0xff]
      %v1594 = vld [vmem:[%s1592 + $0x8] sm:$0xff]
      %v1595 = vld [vmem:[%s1592 + $0x10] sm:$0xff]
      %v1596 = vld [vmem:[%s1592 + $0x18] sm:$0xff]
      %v1597 = vld [vmem:[%s1592 + $0x20] sm:$0xff]
      %v1598 = vld [vmem:[%s1592 + $0x28] sm:$0xff]
      %v1599 = vld [vmem:[%s1592 + $0x30] sm:$0xff]
      %v1600 = vld [vmem:[%s1592 + $0x38] sm:$0xff]
      %vm1601 = vcmask 523264
      %v1602 = vsel %vm1601, %v1561, -inf
      %1603 = vmax.xlane.f32.xlu0 %v1602
      %v1604 = vpop.xlane.xlu0 %1603
      %v1605 = vsel %vm1601, %v1564, -inf
      %1606 = vmax.xlane.f32.xlu0 %v1605
      %v1607 = vpop.xlane.xlu0 %1606
      %v1608 = vsel %vm1601, %v1569, -inf
      %1609 = vmax.xlane.f32.xlu0 %v1608
      %v1610 = vpop.xlane.xlu0 %1609
      %v1611 = vsel %vm1601, %v1572, -inf
      %1612 = vmax.xlane.f32.xlu0 %v1611
      %v1613 = vpop.xlane.xlu0 %1612
      %v1614 = vsel %vm1601, %v1577, -inf
      %1615 = vmax.xlane.f32.xlu0 %v1614
      %v1616 = vpop.xlane.xlu0 %1615
      %v1617 = vsel %vm1601, %v1580, -inf
      %1618 = vmax.xlane.f32.xlu0 %v1617
      %v1619 = vpop.xlane.xlu0 %1618
      %v1620 = vsel %vm1601, %v1585, -inf
      %1621 = vmax.xlane.f32.xlu0 %v1620
      %v1622 = vpop.xlane.xlu0 %1621
      %v1623 = vsel %vm1601, %v1588, -inf
      %1624 = vmax.xlane.f32.xlu0 %v1623
      %v1625 = vpop.xlane.xlu0 %1624
      %v1626 = vmax.f32 %v1593, %v1604
      %v1627 = vmax.f32 %v1594, %v1607
      %v1628 = vmax.f32 %v1595, %v1610
      %v1629 = vmax.f32 %v1596, %v1613
      %v1630 = vmax.f32 %v1597, %v1616
      %v1631 = vmax.f32 %v1598, %v1619
      %v1632 = vmax.f32 %v1599, %v1622
      %v1633 = vmax.f32 %v1600, %v1625
      %v1634 = vsub.f32 %v1593, %v1626
      %v1635 = vsub.f32 %v1594, %v1627
      %v1636 = vsub.f32 %v1595, %v1628
      %v1637 = vsub.f32 %v1596, %v1629
      %v1638 = vsub.f32 %v1597, %v1630
      %v1639 = vsub.f32 %v1598, %v1631
      %v1640 = vsub.f32 %v1599, %v1632
      %v1641 = vsub.f32 %v1600, %v1633
      %v1642 = vmul.f32 %v1634, 1.442695
      %v1643 = vpow.pop %v1642
      %v1644 = vmul.f32 %v1635, 1.442695
      %v1645 = vpow.pop %v1644
      %v1646 = vmul.f32 %v1636, 1.442695
      %v1647 = vpow.pop %v1646
      %v1648 = vmul.f32 %v1637, 1.442695
      %v1649 = vpow.pop %v1648
      %v1650 = vmul.f32 %v1638, 1.442695
      %v1651 = vpow.pop %v1650
      %v1652 = vmul.f32 %v1639, 1.442695
      %v1653 = vpow.pop %v1652
      %v1654 = vmul.f32 %v1640, 1.442695
      %v1655 = vpow.pop %v1654
      %v1656 = vmul.f32 %v1641, 1.442695
      %v1657 = vpow.pop %v1656
      %1659 = vset.pattern.permute.xlu0 0
      %1660 = vperm.xlu0 %1659, %v1626
      %v1661 = vpop.permute.xlu0 %1660
      %1664 = vset.pattern.permute.xlu0 0
      %1665 = vperm.xlu0 %1664, %v1627
      %v1666 = vpop.permute.xlu0 %1665
      %1669 = vset.pattern.permute.xlu0 0
      %1670 = vperm.xlu0 %1669, %v1628
      %v1671 = vpop.permute.xlu0 %1670
      %1674 = vset.pattern.permute.xlu0 0
      %1675 = vperm.xlu0 %1674, %v1629
      %v1676 = vpop.permute.xlu0 %1675
      %1679 = vset.pattern.permute.xlu0 0
      %1680 = vperm.xlu0 %1679, %v1630
      %v1681 = vpop.permute.xlu0 %1680
      %1684 = vset.pattern.permute.xlu0 0
      %1685 = vperm.xlu0 %1684, %v1631
      %v1686 = vpop.permute.xlu0 %1685
      %1689 = vset.pattern.permute.xlu0 0
      %1690 = vperm.xlu0 %1689, %v1632
      %v1691 = vpop.permute.xlu0 %1690
      %1694 = vset.pattern.permute.xlu0 0
      %1695 = vperm.xlu0 %1694, %v1633
      %v1696 = vpop.permute.xlu0 %1695
      %v1698 = vsub.f32 %v1561, %v1661
      %v1699 = vsub.f32 %v1564, %v1666
      %v1700 = vsub.f32 %v1569, %v1671
      %v1701 = vsub.f32 %v1572, %v1676
      %v1702 = vsub.f32 %v1577, %v1681
      %v1703 = vsub.f32 %v1580, %v1686
      %v1704 = vsub.f32 %v1585, %v1691
      %v1705 = vsub.f32 %v1588, %v1696
      %v1706 = vmul.f32 %v1698, 1.442695
      %v1707 = vpow.pop %v1706
      %v1708 = vmul.f32 %v1699, 1.442695
      %v1709 = vpow.pop %v1708
      %v1710 = vmul.f32 %v1700, 1.442695
      %v1711 = vpow.pop %v1710
      %v1712 = vmul.f32 %v1701, 1.442695
      %v1713 = vpow.pop %v1712
      %v1714 = vmul.f32 %v1702, 1.442695
      %v1715 = vpow.pop %v1714
      %v1716 = vmul.f32 %v1703, 1.442695
      %v1717 = vpow.pop %v1716
      %v1718 = vmul.f32 %v1704, 1.442695
      %v1719 = vpow.pop %v1718
      %v1720 = vmul.f32 %v1705, 1.442695
      %v1721 = vpow.pop %v1720
      %s1722 = scalar_lea.vmem [#allocation6], %s1591
      %v1723 = vld [vmem:[%s1722] sm:$0xff]
      %v1724 = vld [vmem:[%s1722 + $0x8] sm:$0xff]
      %v1725 = vld [vmem:[%s1722 + $0x10] sm:$0xff]
      %v1726 = vld [vmem:[%s1722 + $0x18] sm:$0xff]
      %v1727 = vld [vmem:[%s1722 + $0x20] sm:$0xff]
      %v1728 = vld [vmem:[%s1722 + $0x28] sm:$0xff]
      %v1729 = vld [vmem:[%s1722 + $0x30] sm:$0xff]
      %v1730 = vld [vmem:[%s1722 + $0x38] sm:$0xff]
      %v1731 = vmul.f32 %v1643, %v1723
      %v1732 = vmul.f32 %v1645, %v1724
      %v1733 = vmul.f32 %v1647, %v1725
      %v1734 = vmul.f32 %v1649, %v1726
      %v1735 = vmul.f32 %v1651, %v1727
      %v1736 = vmul.f32 %v1653, %v1728
      %v1737 = vmul.f32 %v1655, %v1729
      %v1738 = vmul.f32 %v1657, %v1730
      %v1739 = vsel %vm1601, %v1707, 0.0
      %1740 = vadd.xlane.f32.xlu0 %v1739
      %v1741 = vpop.xlane.xlu0 %1740
      %v1742 = vsel %vm1601, %v1709, 0.0
      %1743 = vadd.xlane.f32.xlu0 %v1742
      %v1744 = vpop.xlane.xlu0 %1743
      %v1745 = vsel %vm1601, %v1711, 0.0
      %1746 = vadd.xlane.f32.xlu0 %v1745
      %v1747 = vpop.xlane.xlu0 %1746
      %v1748 = vsel %vm1601, %v1713, 0.0
      %1749 = vadd.xlane.f32.xlu0 %v1748
      %v1750 = vpop.xlane.xlu0 %1749
      %v1751 = vsel %vm1601, %v1715, 0.0
      %1752 = vadd.xlane.f32.xlu0 %v1751
      %v1753 = vpop.xlane.xlu0 %1752
      %v1754 = vsel %vm1601, %v1717, 0.0
      %1755 = vadd.xlane.f32.xlu0 %v1754
      %v1756 = vpop.xlane.xlu0 %1755
      %v1757 = vsel %vm1601, %v1719, 0.0
      %1758 = vadd.xlane.f32.xlu0 %v1757
      %v1759 = vpop.xlane.xlu0 %1758
      %v1760 = vsel %vm1601, %v1721, 0.0
      %1761 = vadd.xlane.f32.xlu0 %v1760
      %v1762 = vpop.xlane.xlu0 %1761
      %v1763 = vadd.f32 %v1731, %v1741
      %v1764 = vadd.f32 %v1732, %v1744
      %v1765 = vadd.f32 %v1733, %v1747
      %v1766 = vadd.f32 %v1734, %v1750
      %v1767 = vadd.f32 %v1735, %v1753
      %v1768 = vadd.f32 %v1736, %v1756
      %v1769 = vadd.f32 %v1737, %v1759
      %v1770 = vadd.f32 %v1738, %v1762
      %vm1771 = vcmask 7168
      %1772 = vst.msk [vmem:[%s1722] sm:$0xff] %vm1771, %v1763
      %1773 = vst.msk [vmem:[%s1722 + $0x8] sm:$0xff] %vm1771, %v1764
      %1774 = vst.msk [vmem:[%s1722 + $0x10] sm:$0xff] %vm1771, %v1765
      %1775 = vst.msk [vmem:[%s1722 + $0x18] sm:$0xff] %vm1771, %v1766
      %1776 = vst.msk [vmem:[%s1722 + $0x20] sm:$0xff] %vm1771, %v1767
      %1777 = vst.msk [vmem:[%s1722 + $0x28] sm:$0xff] %vm1771, %v1768
      %1778 = vst.msk [vmem:[%s1722 + $0x30] sm:$0xff] %vm1771, %v1769
      %1779 = vst.msk [vmem:[%s1722 + $0x38] sm:$0xff] %vm1771, %v1770
      %s1780 = scalar_lea.vmem [#allocation7], %s1591
      %v1781 = vld [vmem:[%s1780] sm:$0xff]
      %v1782 = vld [vmem:[%s1780 + $0x8] sm:$0xff]
      %v1783 = vld [vmem:[%s1780 + $0x10] sm:$0xff]
      %v1784 = vld [vmem:[%s1780 + $0x18] sm:$0xff]
      %v1785 = vld [vmem:[%s1780 + $0x20] sm:$0xff]
      %v1786 = vld [vmem:[%s1780 + $0x28] sm:$0xff]
      %v1787 = vld [vmem:[%s1780 + $0x30] sm:$0xff]
      %v1788 = vld [vmem:[%s1780 + $0x38] sm:$0xff]
      %1790 = vset.pattern.permute.xlu0 0
      %1791 = vperm.xlu0 %1790, %v1643
      %v1792 = vpop.permute.xlu0 %1791
      %1795 = vset.pattern.permute.xlu0 0
      %1796 = vperm.xlu0 %1795, %v1645
      %v1797 = vpop.permute.xlu0 %1796
      %1800 = vset.pattern.permute.xlu0 0
      %1801 = vperm.xlu0 %1800, %v1647
      %v1802 = vpop.permute.xlu0 %1801
      %1805 = vset.pattern.permute.xlu0 0
      %1806 = vperm.xlu0 %1805, %v1649
      %v1807 = vpop.permute.xlu0 %1806
      %1810 = vset.pattern.permute.xlu0 0
      %1811 = vperm.xlu0 %1810, %v1651
      %v1812 = vpop.permute.xlu0 %1811
      %1815 = vset.pattern.permute.xlu0 0
      %1816 = vperm.xlu0 %1815, %v1653
      %v1817 = vpop.permute.xlu0 %1816
      %1820 = vset.pattern.permute.xlu0 0
      %1821 = vperm.xlu0 %1820, %v1655
      %v1822 = vpop.permute.xlu0 %1821
      %1825 = vset.pattern.permute.xlu0 0
      %1826 = vperm.xlu0 %1825, %v1657
      %v1827 = vpop.permute.xlu0 %1826
      %v1829 = vmul.f32 %v1792, %v1781
      %v1830 = vmul.f32 %v1797, %v1782
      %v1831 = vmul.f32 %v1802, %v1783
      %v1832 = vmul.f32 %v1807, %v1784
      %v1833 = vmul.f32 %v1812, %v1785
      %v1834 = vmul.f32 %v1817, %v1786
      %v1835 = vmul.f32 %v1822, %v1787
      %v1836 = vmul.f32 %v1827, %v1788
      %v1837 = vpack.c.bf16 %v1709, %v1707
      %v1838 = vpack.c.bf16 %v1713, %v1711
      %v1839 = vpack.c.bf16 %v1717, %v1715
      %v1840 = vpack.c.bf16 %v1721, %v1719
      %v1849 = vunpack.c.l.b16 %v1442
      %v1850 = vunpack.c.l.b16 %v1443
      %v1851 = vunpack.c.l.b16 %v1444
      %v1852 = vunpack.c.l.b16 %v1445
      %v1853 = vunpack.c.l.b16 %v1446
      %v1854 = vunpack.c.l.b16 %v1447
      %v1855 = vunpack.c.l.b16 %v1448
      %v1856 = vunpack.c.l.b16 %v1449
      %v1857 = vpack.c.b16 %v1850, %v1849
      %v1858 = vpack.c.b16 %v1852, %v1851
      %v1859 = vpack.c.b16 %v1854, %v1853
      %v1860 = vpack.c.b16 %v1856, %v1855
      %v1866 = vsel %vm1601, %v1837, 0
      %v1869 = vsel %vm1601, %v1838, 0
      %v1872 = vsel %vm1601, %v1839, 0
      %v1875 = vsel %vm1601, %v1840, 0
      %1877 = vmatprep.subr.bf16.mxu0 0
      %1878 = vmatpush1.bf16.msra.mxu0 0
      %1879 = vmatprep.subr.bf16.mxu0 0
      %1880 = vmatpush1.bf16.msra.mxu0 0
      %1881 = vmatprep.subr.bf16.mxu0 0
      %1882 = vmatpush1.bf16.msra.mxu0 0
      %1883 = vmatprep.subr.bf16.mxu0 0
      %1884 = vmatpush1.bf16.msra.mxu0 0
      %1885 = vmatprep.subr.bf16.mxu0 0
      %1886 = vmatpush1.bf16.msra.mxu0 %v1860
      %1887 = vmatprep.subr.bf16.mxu0 0
      %1888 = vmatpush1.bf16.msra.mxu0 %v1859
      %1889 = vmatprep.subr.bf16.mxu0 0
      %1890 = vmatpush1.bf16.msra.mxu0 %v1858
      %1891 = vmatprep.subr.bf16.mxu0 0
      %1892 = vmatpush1.bf16.msra.mxu0 %v1857
      %1893 = vmatprep.subr.bf16.mxu0 0
      %1894 = vmatpush2.bf16.msra.mxu0 0
      %1895 = vmatprep.subr.bf16.mxu0 0
      %1896 = vmatpush2.bf16.msra.mxu0 0
      %1897 = vmatprep.subr.bf16.mxu0 0
      %1898 = vmatpush2.bf16.msra.mxu0 0
      %1899 = vmatprep.subr.bf16.mxu0 0
      %1900 = vmatpush2.bf16.msra.mxu0 0
      %1901 = vmatprep.subr.bf16.mxu0 0
      %1902 = vmatpush2.bf16.msra.mxu0 0
      %1903 = vmatprep.subr.bf16.mxu0 0
      %1904 = vmatpush2.bf16.msra.mxu0 0
      %1905 = vmatprep.subr.bf16.mxu0 0
      %1906 = vmatpush2.bf16.msra.mxu0 0
      %1907 = vmatprep.subr.bf16.mxu0 0
      %1908 = vmatpush2.bf16.msra.mxu0 0
      %1909 = vmatprep.mubr.bf16.mxu0 0
      %1910 = vmatmul.mubr.bf16.gmra.mxu0 %v1866
      %v1911 = vpop.f32.mrf.mxu0
      %v1912 = vadd.f32 0.0, %v1911
      %v1913 = vpop.f32.mrf.mxu0
      %v1914 = vpop.f32.mrf.mxu0
      %v1915 = vadd.f32 0.0, %v1914
      %v1916 = vpop.f32.mrf.mxu0
      %1917 = vmatprep.mubr.bf16.mxu0 0
      %1918 = vmatmul.mubr.bf16.gmra.mxu0 %v1869
      %v1919 = vpop.f32.mrf.mxu0
      %v1920 = vadd.f32 0.0, %v1919
      %v1921 = vpop.f32.mrf.mxu0
      %v1922 = vpop.f32.mrf.mxu0
      %v1923 = vadd.f32 0.0, %v1922
      %v1924 = vpop.f32.mrf.mxu0
      %1925 = vmatprep.mubr.bf16.mxu0 0
      %1926 = vmatmul.mubr.bf16.gmra.mxu0 %v1872
      %v1927 = vpop.f32.mrf.mxu0
      %v1928 = vadd.f32 0.0, %v1927
      %v1929 = vpop.f32.mrf.mxu0
      %v1930 = vpop.f32.mrf.mxu0
      %v1931 = vadd.f32 0.0, %v1930
      %v1932 = vpop.f32.mrf.mxu0
      %1933 = vmatprep.mubr.bf16.mxu0 0
      %1934 = vmatmul.mubr.bf16.gmra.mxu0 %v1875
      %v1935 = vpop.f32.mrf.mxu0
      %v1936 = vadd.f32 0.0, %v1935
      %v1937 = vpop.f32.mrf.mxu0
      %v1938 = vpop.f32.mrf.mxu0
      %v1939 = vadd.f32 0.0, %v1938
      %v1940 = vpop.f32.mrf.mxu0
      %1941 = vdwg.mxu0
      %v1942 = vadd.f32 %v1829, %v1912
      %v1943 = vadd.f32 %v1830, %v1915
      %v1944 = vadd.f32 %v1831, %v1920
      %v1945 = vadd.f32 %v1832, %v1923
      %v1946 = vadd.f32 %v1833, %v1928
      %v1947 = vadd.f32 %v1834, %v1931
      %v1948 = vadd.f32 %v1835, %v1936
      %v1949 = vadd.f32 %v1836, %v1939
      %1950 = vst.msk [vmem:[%s1780] sm:$0xff] %vm1501, %v1942
      %1951 = vst.msk [vmem:[%s1780 + $0x8] sm:$0xff] %vm1501, %v1943
      %1952 = vst.msk [vmem:[%s1780 + $0x10] sm:$0xff] %vm1501, %v1944
      %1953 = vst.msk [vmem:[%s1780 + $0x18] sm:$0xff] %vm1501, %v1945
      %1954 = vst.msk [vmem:[%s1780 + $0x20] sm:$0xff] %vm1501, %v1946
      %1955 = vst.msk [vmem:[%s1780 + $0x28] sm:$0xff] %vm1501, %v1947
      %1956 = vst.msk [vmem:[%s1780 + $0x30] sm:$0xff] %vm1501, %v1948
      %1957 = vst.msk [vmem:[%s1780 + $0x38] sm:$0xff] %vm1501, %v1949
      %1958 = vst.msk [vmem:[%s1592] sm:$0xff] %vm1771, %v1626
      %1959 = vst.msk [vmem:[%s1592 + $0x8] sm:$0xff] %vm1771, %v1627
      %1960 = vst.msk [vmem:[%s1592 + $0x10] sm:$0xff] %vm1771, %v1628
      %1961 = vst.msk [vmem:[%s1592 + $0x18] sm:$0xff] %vm1771, %v1629
      %1962 = vst.msk [vmem:[%s1592 + $0x20] sm:$0xff] %vm1771, %v1630
      %1963 = vst.msk [vmem:[%s1592 + $0x28] sm:$0xff] %vm1771, %v1631
      %1964 = vst.msk [vmem:[%s1592 + $0x30] sm:$0xff] %vm1771, %v1632
      %1965 = vst.msk [vmem:[%s1592 + $0x38] sm:$0xff] %vm1771, %v1633
      %p1966 = scmp.eq.s32.totalorder %s28, 1
      // Predicated region
      $region73: #{multi_view_block_forward.2} parent=55 // pred_check
        %p1967 = pneg %p1966
      $region74: #{multi_view_block_forward.2} parent=55 // pred_check_branch
        %1969 = sbr.rel (%p1967) target = $region76
      $region75: #{multi_view_block_forward.2} parent=55 // pred_region
        %v1970 = vld [vmem:[%s1780] sm:$0xff]
        %v1971 = vld [vmem:[%s1780 + $0x8] sm:$0xff]
        %v1972 = vld [vmem:[%s1780 + $0x10] sm:$0xff]
        %v1973 = vld [vmem:[%s1780 + $0x18] sm:$0xff]
        %v1974 = vld [vmem:[%s1780 + $0x20] sm:$0xff]
        %v1975 = vld [vmem:[%s1780 + $0x28] sm:$0xff]
        %v1976 = vld [vmem:[%s1780 + $0x30] sm:$0xff]
        %v1977 = vld [vmem:[%s1780 + $0x38] sm:$0xff]
        %v1978 = vld [vmem:[%s1722] sm:$0xff]
        %v1979 = vld [vmem:[%s1722 + $0x8] sm:$0xff]
        %v1980 = vld [vmem:[%s1722 + $0x10] sm:$0xff]
        %v1981 = vld [vmem:[%s1722 + $0x18] sm:$0xff]
        %v1982 = vld [vmem:[%s1722 + $0x20] sm:$0xff]
        %v1983 = vld [vmem:[%s1722 + $0x28] sm:$0xff]
        %v1984 = vld [vmem:[%s1722 + $0x30] sm:$0xff]
        %v1985 = vld [vmem:[%s1722 + $0x38] sm:$0xff]
        %v1986 = vrcp.pop %v1978
        %v1987 = vrcp.pop %v1979
        %v1988 = vrcp.pop %v1980
        %v1989 = vrcp.pop %v1981
        %v1990 = vrcp.pop %v1982
        %v1991 = vrcp.pop %v1983
        %v1992 = vrcp.pop %v1984
        %v1993 = vrcp.pop %v1985
        %1995 = vset.pattern.permute.xlu0 0
        %1996 = vperm.xlu0 %1995, %v1986
        %v1997 = vpop.permute.xlu0 %1996
        %2000 = vset.pattern.permute.xlu0 0
        %2001 = vperm.xlu0 %2000, %v1987
        %v2002 = vpop.permute.xlu0 %2001
        %2005 = vset.pattern.permute.xlu0 0
        %2006 = vperm.xlu0 %2005, %v1988
        %v2007 = vpop.permute.xlu0 %2006
        %2010 = vset.pattern.permute.xlu0 0
        %2011 = vperm.xlu0 %2010, %v1989
        %v2012 = vpop.permute.xlu0 %2011
        %2015 = vset.pattern.permute.xlu0 0
        %2016 = vperm.xlu0 %2015, %v1990
        %v2017 = vpop.permute.xlu0 %2016
        %2020 = vset.pattern.permute.xlu0 0
        %2021 = vperm.xlu0 %2020, %v1991
        %v2022 = vpop.permute.xlu0 %2021
        %2025 = vset.pattern.permute.xlu0 0
        %2026 = vperm.xlu0 %2025, %v1992
        %v2027 = vpop.permute.xlu0 %2026
        %2030 = vset.pattern.permute.xlu0 0
        %2031 = vperm.xlu0 %2030, %v1993
        %v2032 = vpop.permute.xlu0 %2031
        %v2034 = vmul.f32 %v1970, %v1997
        %v2035 = vmul.f32 %v1971, %v2002
        %v2036 = vmul.f32 %v1972, %v2007
        %v2037 = vmul.f32 %v1973, %v2012
        %v2038 = vmul.f32 %v1974, %v2017
        %v2039 = vmul.f32 %v1975, %v2022
        %v2040 = vmul.f32 %v1976, %v2027
        %v2041 = vmul.f32 %v1977, %v2032
        %v2042 = vld [vmem:[#allocation8] sm:$0xff]
        %v2043 = vld [vmem:[#allocation8 + $0x8] sm:$0xff]
        %v2044 = vld [vmem:[#allocation8 + $0x10] sm:$0xff]
        %v2045 = vld [vmem:[#allocation8 + $0x18] sm:$0xff]
        %v2046 = vld [vmem:[#allocation8 + $0x20] sm:$0xff]
        %v2047 = vld [vmem:[#allocation8 + $0x28] sm:$0xff]
        %v2048 = vld [vmem:[#allocation8 + $0x30] sm:$0xff]
        %v2049 = vld [vmem:[#allocation8 + $0x38] sm:$0xff]
        %v2050 = vpack.c.bf16 %v2035, %v2034
        %v2051 = vpack.c.bf16 %v2037, %v2036
        %v2052 = vpack.c.bf16 %v2039, %v2038
        %v2053 = vpack.c.bf16 %v2041, %v2040
        %s2054 = smul.u32 %s29, 4
        %s2055 = smul.addr %s2054, 4
        %s2056 = scalar_lea.vmem %s7, %s2055
        %v2057 = vld [vmem:[%s2056] sm:$0xf]
        %v2058 = vld [vmem:[%s2056 + $0x4] sm:$0xf]
        %v2059 = vld [vmem:[%s2056 + $0x8] sm:$0xf]
        %v2060 = vld [vmem:[%s2056 + $0xc] sm:$0xf]
        %v2065 = vunpack.c.l.b16 %v2057
        %v2066 = vunpack.c.l.b16 %v2058
        %v2067 = vunpack.c.l.b16 %v2059
        %v2068 = vunpack.c.l.b16 %v2060
        %v2069 = vpack.c.b16 %v2066, %v2065
        %v2070 = vpack.c.b16 %v2068, %v2067
        %v2074 = vsel %vm1501, %v2050, 0
        %v2077 = vsel %vm1501, %v2051, 0
        %v2080 = vsel %vm1501, %v2052, 0
        %v2083 = vsel %vm1501, %v2053, 0
        %2085 = vmatprep.subr.bf16.mxu0 0
        %2086 = vmatpush1.bf16.msra.mxu0 0
        %2087 = vmatprep.subr.bf16.mxu0 0
        %2088 = vmatpush1.bf16.msra.mxu0 0
        %2089 = vmatprep.subr.bf16.mxu0 0
        %2090 = vmatpush1.bf16.msra.mxu0 0
        %2091 = vmatprep.subr.bf16.mxu0 0
        %2092 = vmatpush1.bf16.msra.mxu0 0
        %2093 = vmatprep.subr.bf16.mxu0 0
        %2094 = vmatpush1.bf16.msra.mxu0 0
        %2095 = vmatprep.subr.bf16.mxu0 0
        %2096 = vmatpush1.bf16.msra.mxu0 0
        %2097 = vmatprep.subr.bf16.mxu0 0
        %2098 = vmatpush1.bf16.msra.mxu0 %v2070
        %2099 = vmatprep.subr.bf16.mxu0 0
        %2100 = vmatpush1.bf16.msra.mxu0 %v2069
        %2101 = vmatprep.subr.bf16.mxu0 0
        %2102 = vmatpush2.bf16.msra.mxu0 0
        %2103 = vmatprep.subr.bf16.mxu0 0
        %2104 = vmatpush2.bf16.msra.mxu0 0
        %2105 = vmatprep.subr.bf16.mxu0 0
        %2106 = vmatpush2.bf16.msra.mxu0 0
        %2107 = vmatprep.subr.bf16.mxu0 0
        %2108 = vmatpush2.bf16.msra.mxu0 0
        %2109 = vmatprep.subr.bf16.mxu0 0
        %2110 = vmatpush2.bf16.msra.mxu0 0
        %2111 = vmatprep.subr.bf16.mxu0 0
        %2112 = vmatpush2.bf16.msra.mxu0 0
        %2113 = vmatprep.subr.bf16.mxu0 0
        %2114 = vmatpush2.bf16.msra.mxu0 0
        %2115 = vmatprep.subr.bf16.mxu0 0
        %2116 = vmatpush2.bf16.msra.mxu0 0
        %2117 = vmatprep.mubr.bf16.mxu0 0
        %2118 = vmatmul.mubr.bf16.gmra.mxu0 %v2074
        %v2119 = vpop.f32.mrf.mxu0
        %v2120 = vadd.f32 0.0, %v2119
        %v2121 = vpop.f32.mrf.mxu0
        %v2122 = vpop.f32.mrf.mxu0
        %v2123 = vadd.f32 0.0, %v2122
        %v2124 = vpop.f32.mrf.mxu0
        %2125 = vmatprep.mubr.bf16.mxu0 0
        %2126 = vmatmul.mubr.bf16.gmra.mxu0 %v2077
        %v2127 = vpop.f32.mrf.mxu0
        %v2128 = vadd.f32 0.0, %v2127
        %v2129 = vpop.f32.mrf.mxu0
        %v2130 = vpop.f32.mrf.mxu0
        %v2131 = vadd.f32 0.0, %v2130
        %v2132 = vpop.f32.mrf.mxu0
        %2133 = vmatprep.mubr.bf16.mxu0 0
        %2134 = vmatmul.mubr.bf16.gmra.mxu0 %v2080
        %v2135 = vpop.f32.mrf.mxu0
        %v2136 = vadd.f32 0.0, %v2135
        %v2137 = vpop.f32.mrf.mxu0
        %v2138 = vpop.f32.mrf.mxu0
        %v2139 = vadd.f32 0.0, %v2138
        %v2140 = vpop.f32.mrf.mxu0
        %2141 = vmatprep.mubr.bf16.mxu0 0
        %2142 = vmatmul.mubr.bf16.gmra.mxu0 %v2083
        %v2143 = vpop.f32.mrf.mxu0
        %v2144 = vadd.f32 0.0, %v2143
        %v2145 = vpop.f32.mrf.mxu0
        %v2146 = vpop.f32.mrf.mxu0
        %v2147 = vadd.f32 0.0, %v2146
        %v2148 = vpop.f32.mrf.mxu0
        %2149 = vdwg.mxu0
        %v2150 = vadd.f32 %v2042, %v2120
        %v2151 = vadd.f32 %v2043, %v2123
        %v2152 = vadd.f32 %v2044, %v2128
        %v2153 = vadd.f32 %v2045, %v2131
        %v2154 = vadd.f32 %v2046, %v2136
        %v2155 = vadd.f32 %v2047, %v2139
        %v2156 = vadd.f32 %v2048, %v2144
        %v2157 = vadd.f32 %v2049, %v2147
        %2158 = vst [vmem:[#allocation8] sm:$0xff] %v2150
        %2159 = vst [vmem:[#allocation8 + $0x8] sm:$0xff] %v2151
        %2160 = vst [vmem:[#allocation8 + $0x10] sm:$0xff] %v2152
        %2161 = vst [vmem:[#allocation8 + $0x18] sm:$0xff] %v2153
        %2162 = vst [vmem:[#allocation8 + $0x20] sm:$0xff] %v2154
        %2163 = vst [vmem:[#allocation8 + $0x28] sm:$0xff] %v2155
        %2164 = vst [vmem:[#allocation8 + $0x30] sm:$0xff] %v2156
        %2165 = vst [vmem:[#allocation8 + $0x38] sm:$0xff] %v2157
      $region76: #{multi_view_block_forward.2} parent=55 // pred_fallthru
        _
      %p2166 = scmp.eq.s32.totalorder %s29, 3
      %p2167 = pnand %p1966, %p2166
      %p2168 = pneg %p2167
      // Predicated region
      $region77: #{multi_view_block_forward.2} parent=55 // pred_check
        _
      $region78: #{multi_view_block_forward.2} parent=55 // pred_check_branch
        %2170 = sbr.rel (%p2167) target = $region80
      $region79: #{multi_view_block_forward.2} parent=55 // pred_region
        %v2171 = vld [vmem:[#allocation8] sm:$0xff]
        %v2172 = vld [vmem:[#allocation8 + $0x8] sm:$0xff]
        %v2173 = vld [vmem:[#allocation8 + $0x10] sm:$0xff]
        %v2174 = vld [vmem:[#allocation8 + $0x18] sm:$0xff]
        %v2175 = vld [vmem:[#allocation8 + $0x20] sm:$0xff]
        %v2176 = vld [vmem:[#allocation8 + $0x28] sm:$0xff]
        %v2177 = vld [vmem:[#allocation8 + $0x30] sm:$0xff]
        %v2178 = vld [vmem:[#allocation8 + $0x38] sm:$0xff]
        %v2179 = vld [vmem:[%s8] sm:$0x1]
        %v2181 = vlaneseq
        %v2182 = vshrl.u32 %v2181, 7
        %v2183 = vsub.s32 0, %v2182
        %v2184 = vrot.slane %v2179, %v2183
        %v2186 = vadd.f32 %v2171, %v2184
        %v2187 = vadd.f32 %v2172, %v2184
        %v2188 = vadd.f32 %v2173, %v2184
        %v2189 = vadd.f32 %v2174, %v2184
        %v2190 = vadd.f32 %v2175, %v2184
        %v2191 = vadd.f32 %v2176, %v2184
        %v2192 = vadd.f32 %v2177, %v2184
        %v2193 = vadd.f32 %v2178, %v2184
        %v2194 = vld [vmem:[%s410] sm:$0xff]
        %v2195 = vld [vmem:[%s410 + $0x8] sm:$0xff]
        %v2196 = vld [vmem:[%s410 + $0x10] sm:$0xff]
        %v2197 = vld [vmem:[%s410 + $0x18] sm:$0xff]
        %v2198 = vld [vmem:[%s410 + $0x20] sm:$0xff]
        %v2199 = vld [vmem:[%s410 + $0x28] sm:$0xff]
        %v2200 = vld [vmem:[%s410 + $0x30] sm:$0xff]
        %v2201 = vld [vmem:[%s410 + $0x38] sm:$0xff]
        %v2202 = vadd.f32 %v2186, %v2194
        %v2203 = vadd.f32 %v2187, %v2195
        %v2204 = vadd.f32 %v2188, %v2196
        %v2205 = vadd.f32 %v2189, %v2197
        %v2206 = vadd.f32 %v2190, %v2198
        %v2207 = vadd.f32 %v2191, %v2199
        %v2208 = vadd.f32 %v2192, %v2200
        %v2209 = vadd.f32 %v2193, %v2201
        %2210 = vst [vmem:[%s434] sm:$0xff] %v2202
        %2211 = vst [vmem:[%s434 + $0x8] sm:$0xff] %v2203
        %2212 = vst [vmem:[%s434 + $0x10] sm:$0xff] %v2204
        %2213 = vst [vmem:[%s434 + $0x18] sm:$0xff] %v2205
        %2214 = vst [vmem:[%s434 + $0x20] sm:$0xff] %v2206
        %2215 = vst [vmem:[%s434 + $0x28] sm:$0xff] %v2207
        %2216 = vst [vmem:[%s434 + $0x30] sm:$0xff] %v2208
        %2217 = vst [vmem:[%s434 + $0x38] sm:$0xff] %v2209
      $region80: #{multi_view_block_forward.2} parent=55 // pred_fallthru
        _
      %s2218 = smul.u32 8, %s27
      %p2219 = scmp.lt.s32.totalorder %s26, 1
      %s2220 = scalar_select %p2219, %s26, 1
      %p2221 = scmp.lt.s32.totalorder %s2218, 15
      %s2222 = scalar_select %p2221, %s2218, 15
      %s2223 = smul.addr %s2220, 16
      %s2224 = sadd.s32 %s2222, %s2223
      %s2225 = smul.addr %s2224, 8
      %s2226 = scalar_lea.vmem %s9, %s2225
      // Predicated region
      $region81: #{multi_view_block_forward.2} parent=55 // pred_check
        %p2227 = pneg %p273
      $region82: #{multi_view_block_forward.2} parent=55 // pred_check_branch
        %2229 = sbr.rel (%p2227) target = $region84
      $region83: #{multi_view_block_forward.2} parent=55 // pred_region
        %s2230 = smul.u32 8, %s27
      $region84: #{multi_view_block_forward.2} parent=55 // pred_fallthru
        _
    $region56: #{multi_view_block_forward.2} parent=5 // pred_fallthru
      _
    %p2231 = scmp.le.s32.totalorder 2, %s15
    // Predicated region
    $region85: #{multi_view_block_forward.2} parent=5 // pred_check
      %p2232 = pneg %p2231
    $region86: #{multi_view_block_forward.2} parent=5 // pred_check_branch
      %2234 = sbr.rel (%p2232) target = $region88
    $region87: #{multi_view_block_forward.2} parent=5 // pred_region
      %s2235 = ssub.s32 %s15, 2
      // Predicated region
      $region89: #{multi_view_block_forward.2} parent=87 // pred_check
        %p2236 = pneg %p279
      $region90: #{multi_view_block_forward.2} parent=87 // pred_check_branch
        %2238 = sbr.rel (%p2236) target = $region92
      $region91: #{multi_view_block_forward.2} parent=87 // pred_region
        %s2239 = smul.u32 8, %s31
        %p2240 = scmp.lt.s32.totalorder %s30, 1
        %s2241 = scalar_select %p2240, %s30, 1
        %p2242 = scmp.lt.s32.totalorder %s2239, 15
        %s2243 = scalar_select %p2242, %s2239, 15
        %s2244 = smul.addr %s2241, 16
        %s2245 = sadd.s32 %s2243, %s2244
        %s2246 = smul.addr %s2245, 8
        %s2247 = scalar_lea.vmem %s9, %s2246
      $region92: #{multi_view_block_forward.2} parent=87 // pred_fallthru
        _
    $region88: #{multi_view_block_forward.2} parent=5 // pred_fallthru
      _
  $region6: #{multi_view_block_forward.2} parent=0 // loop_footer
    %s19 = sadd.s32 1, %s15
  $region7: #{multi_view_block_forward.2} parent=0 // loop_footer_branch
    %14 = sbr.rel target = $region3
  $region8: #{multi_view_block_forward.2} parent=0 // loop_exit
    _

// kernel: multi_view_block_forward.3
$region0: #{multi_view_block_forward.3}
  #allocation0 [shape = 'u32[]', space=smem, size = 0x4, offset = 0x4, fixed_abs, tag = 'smem constant byte address 0x4 - core index']
  #allocation1 [shape = 'u32[144,128]{1,0:T(1,128)}', space=vmem, size = 0x12000, scoped, tag = 'internal scratch']
  #allocation2 [shape = 'bf16[64,128]{1,0:T(8,128)(2,1)}', space=vmem, size = 0x4000, scoped, tag = 'scratch operand']
  #allocation3 [shape = 'bf16[64,128]{1,0:T(8,128)(2,1)}', space=vmem, size = 0x4000, scoped, tag = 'scratch operand']
  #allocation4 [shape = 'bf16[4,64,32]{2,1,0:T(8,128)(2,1)}', space=vmem, size = 0x10000, scoped, tag = 'scratch operand']
  #allocation5 [shape = 'f32[4,64,1]{2,1,0:T(8,128)}', space=vmem, size = 0x20000, scoped, tag = 'scratch operand']
  #allocation6 [shape = 'f32[4,64,1]{2,1,0:T(8,128)}', space=vmem, size = 0x20000, scoped, tag = 'scratch operand']
  #allocation7 [shape = 'f32[4,64,32]{2,1,0:T(8,128)}', space=vmem, size = 0x20000, scoped, tag = 'scratch operand']
  #allocation8 [shape = 'f32[64,128]{1,0:T(8,128)}', space=vmem, size = 0x8000, scoped, tag = 'scratch operand']
  #allocation9 [shape = 'bf16[4,64,32]{2,1,0:T(8,128)(2,1)}', space=vmem, size = 0x10000, scoped, tag = 'scratch operand']
  #allocation10 [shape = 'bf16[4,64,32]{2,1,0:T(8,128)(2,1)}', space=vmem, size = 0x10000, scoped, tag = 'scratch operand']
  %s0 = inlined_call_operand.vmem [shape: f32[4,64,128], index: 0, kind: input, shape index: {}, may-alias: {0,1}]
  %s1 = inlined_call_operand.vmem [shape: f32[4,64,128], index: 1, kind: input, shape index: {}, may-alias: {0,1}]
  %s2 = inlined_call_operand.vmem [shape: f32[1,128], index: 2, kind: input, shape index: {}]
  %s3 = inlined_call_operand.vmem [shape: f32[1,128], index: 3, kind: input, shape index: {}]
  %s4 = inlined_call_operand.vmem [shape: bf16[4,128,32], index: 4, kind: input, shape index: {}]
  %s5 = inlined_call_operand.vmem [shape: bf16[4,128,32], index: 5, kind: input, shape index: {}]
  %s6 = inlined_call_operand.vmem [shape: bf16[4,128,32], index: 6, kind: input, shape index: {}]
  %s7 = inlined_call_operand.vmem [shape: bf16[4,32,128], index: 7, kind: input, shape index: {}]
  %s8 = inlined_call_operand.vmem [shape: f32[1,128], index: 8, kind: input, shape index: {}]
  %s9 = inlined_call_operand.vmem [shape: f32[1,128], index: 9, kind: input, shape index: {}]
  %s10 = inlined_call_operand.vmem [shape: f32[1,128], index: 10, kind: input, shape index: {}]
  %s11 = inlined_call_operand.vmem [shape: bf16[128,512], index: 11, kind: input, shape index: {}]
  %s12 = inlined_call_operand.vmem [shape: f32[1,512], index: 12, kind: input, shape index: {}]
  %s13 = inlined_call_operand.vmem [shape: bf16[128,512], index: 13, kind: input, shape index: {}]
  %s14 = inlined_call_operand.vmem [shape: f32[1,512], index: 14, kind: input, shape index: {}]
  %s15 = inlined_call_operand.vmem [shape: bf16[512,128], index: 15, kind: input, shape index: {}]
  %s16 = inlined_call_operand.vmem [shape: f32[1,128], index: 16, kind: input, shape index: {}]
  %s17 = inlined_call_operand.hbm [shape: f32[4,64,128], index: 17, kind: output, shape index: {}]
  %s18 = sld [smem:[#allocation0]]
  $region125: #{multi_view_block_forward.3} parent=0
    _
  %s20 = ssub.s32 1, %s18
  %s21 = scalar_select 0, %s20, %s18
  $region1: #{multi_view_block_forward.3} parent=0
    #allocation11 [shape = 'u8[65536]{0}', space=vmem, size = 0x10000, scoped, tag = 'output window, operand 0']
    #allocation12 [shape = 's32[2]{0}', space=sflag, size = 0x8, scoped, tag = 'scoped memory for multi_view_block_forward.3']
    %22 = vsyncpa [#allocation12], 0
    %s23 = scalar_lea.sflag [#allocation12], 1
    %24 = vsyncpa %s23, 0
    loop: start=0, step=1, limit=18
    $region2: #{multi_view_block_forward.3} parent=1 // loop_pre_header
      _
    $region3: #{multi_view_block_forward.3} parent=1 // loop_header
      %s26 = sphi 0, %s30
      %p27 = scmp.ge.s32.totalorder %s26, 18
      %s33 = sphi 0, %s59
      %s34 = sphi 0, %s55
      %s35 = sphi 0, %s51
      %s36 = sphi 0, %s47
      %s37 = sphi 0, %s33
      %s38 = sphi 0, %s34
      %s39 = sphi 0, %s35
      %s40 = sphi 0, %s36
      %s41 = sphi 0, %s37
      %s42 = sphi 0, %s38
      %s43 = sphi 0, %s39
      %s44 = sphi 0, %s40
      %s64 = sphi 0, %s66
      %s67 = sphi 0, %s64
      %s68 = sphi 0, %s67
      %s84 = sphi 0, %s68
      %s96 = sphi 0, %s98
      %s99 = sphi 0, %s96
      %s100 = sphi 0, %s99
      %s116 = sphi 0, %s100
      %s120 = sphi 0, %s120
      %s122 = sphi 0, %s120
      %s123 = sphi 0, %s122
      %s137 = sphi 0, %s123
      %s141 = sphi 0, %s141
      %s143 = sphi 0, %s141
      %s144 = sphi 0, %s143
      %s158 = sphi 0, %s144
      %s162 = sphi 0, %s162
      %s164 = sphi 0, %s162
      %s165 = sphi 0, %s164
      %s179 = sphi 0, %s165
      %s183 = sphi 0, %s183
      %s185 = sphi 0, %s183
      %s186 = sphi 0, %s185
      %s200 = sphi 0, %s186
      %s204 = sphi 0, %s204
      %s206 = sphi 0, %s204
      %s207 = sphi 0, %s206
      %s221 = sphi 0, %s207
      %s225 = sphi 0, %s225
      %s227 = sphi 0, %s225
      %s228 = sphi 0, %s227
      %s242 = sphi 0, %s228
      %s246 = sphi 0, %s246
      %s248 = sphi 0, %s246
      %s249 = sphi 0, %s248
      %s263 = sphi 0, %s249
      %s267 = sphi 0, %s267
      %s269 = sphi 0, %s267
      %s270 = sphi 0, %s269
      %s284 = sphi 0, %s270
      %s288 = sphi 0, %s288
      %s290 = sphi 0, %s288
      %s291 = sphi 0, %s290
      %s305 = sphi 0, %s291
      %s309 = sphi 0, %s309
      %s311 = sphi 0, %s309
      %s312 = sphi 0, %s311
      %s326 = sphi 0, %s312
      %s330 = sphi 0, %s330
      %s332 = sphi 0, %s330
      %s333 = sphi 0, %s332
      %s347 = sphi 0, %s333
      %s351 = sphi 0, %s351
      %s353 = sphi 0, %s351
      %s354 = sphi 0, %s353
      %s368 = sphi 0, %s354
      %s372 = sphi 0, %s372
      %s374 = sphi 0, %s372
      %s375 = sphi 0, %s374
      %s389 = sphi 0, %s375
      %s393 = sphi 0, %s393
      %s395 = sphi 0, %s393
      %s396 = sphi 0, %s395
      %s410 = sphi 0, %s396
      %s414 = sphi 0, %s414
      %s416 = sphi 0, %s414
      %s417 = sphi 0, %s416
      %s431 = sphi 0, %s417
      %s439 = sphi 0, %s441
      %s442 = sphi 0, %s439
      %s443 = sphi 0, %s442
      %s459 = sphi 0, %s443
    $region4: #{multi_view_block_forward.3} parent=1 // loop_header_branch
      %29 = sbr.rel (%p27) target = $region8
    $region5: #{multi_view_block_forward.3} parent=1 // loop_body
      %s31 = ssub.s32 %s26, 1
      %s32 = ssub.s32 %s26, 2
      %s45 = sadd.s32 1, %s36
      %p46 = scmp.ge.s32.totalorder %s45, 4
      %s47 = scalar_select %p46, 0, %s45
      %s48 = sadd.s32 1, %s35
      %s49 = scalar_select %p46, %s48, %s35
      %p50 = scmp.ge.s32.totalorder %s49, 1
      %s51 = scalar_select %p50, 0, %s49
      %s52 = sadd.s32 1, %s34
      %s53 = scalar_select %p50, %s52, %s34
      %p54 = scmp.ge.s32.totalorder %s53, 1
      %s55 = scalar_select %p54, 0, %s53
      %s56 = sadd.s32 1, %s33
      %s57 = scalar_select %p54, %s56, %s33
      %p58 = scmp.ge.s32.totalorder %s57, 4
      %s59 = scalar_select %p58, 0, %s57
      %s60 = ssub.s32 %s33, %s59
      %s61 = ssub.s32 %s34, %s55
      %s62 = sor.u32 %s60, %s61
      %p63 = scmp.eq.s32.totalorder %s62, 0
      %s65 = sadd.s32 %s64, 1
      %s66 = scalar_select %p63, %s64, %s65
      %p69 = pneg %p63
      %p70 = scmp.eq.s32.totalorder %s26, 15
      %p71 = por %p69, %p70
      %p72 = scmp.ne.s32.totalorder %s64, %s67
      %p73 = scmp.eq.s32.totalorder %s26, 0
      %p74 = por %p72, %p73
      %p75 = scmp.ne.s32.totalorder %s64, %s67
      %p76 = scmp.eq.s32.totalorder %s31, 15
      %p77 = por %p75, %p76
      %p78 = scmp.ne.s32.totalorder %s67, %s68
      %p79 = scmp.eq.s32.totalorder %s31, 0
      %p80 = por %p78, %p79
      %p81 = scmp.ne.s32.totalorder %s67, %s68
      %p82 = scmp.eq.s32.totalorder %s32, 15
      %p83 = por %p81, %p82
      %p85 = scmp.ne.s32.totalorder %s68, %s84
      %p86 = scmp.eq.s32.totalorder %s32, 0
      %p87 = por %p85, %p86
      %p88 = scmp.eq.s32.totalorder %s34, 0
      %s89 = scalar_select %p88, %s35, 0
      %p90 = scmp.eq.s32.totalorder %s55, 0
      %s91 = scalar_select %p90, %s51, 0
      %s92 = ssub.s32 %s33, %s59
      %s93 = ssub.s32 %s89, %s91
      %s94 = sor.u32 %s92, %s93
      %p95 = scmp.eq.s32.totalorder %s94, 0
      %s97 = sadd.s32 %s96, 1
      %s98 = scalar_select %p95, %s96, %s97
      %p101 = pneg %p95
      %p102 = scmp.eq.s32.totalorder %s26, 15
      %p103 = por %p101, %p102
      %p104 = scmp.ne.s32.totalorder %s96, %s99
      %p105 = scmp.eq.s32.totalorder %s26, 0
      %p106 = por %p104, %p105
      %p107 = scmp.ne.s32.totalorder %s96, %s99
      %p108 = scmp.eq.s32.totalorder %s31, 15
      %p109 = por %p107, %p108
      %p110 = scmp.ne.s32.totalorder %s99, %s100
      %p111 = scmp.eq.s32.totalorder %s31, 0
      %p112 = por %p110, %p111
      %p113 = scmp.ne.s32.totalorder %s99, %s100
      %p114 = scmp.eq.s32.totalorder %s32, 15
      %p115 = por %p113, %p114
      %p117 = scmp.ne.s32.totalorder %s100, %s116
      %p118 = scmp.eq.s32.totalorder %s32, 0
      %p119 = por %p117, %p118
      %s121 = sadd.s32 %s120, 1
      %p124 = scmp.eq.s32.totalorder %s26, 15
      %p125 = scmp.ne.s32.totalorder %s120, %s122
      %p126 = scmp.eq.s32.totalorder %s26, 0
      %p127 = por %p125, %p126
      %p128 = scmp.ne.s32.totalorder %s120, %s122
      %p129 = scmp.eq.s32.totalorder %s31, 15
      %p130 = por %p128, %p129
      %p131 = scmp.ne.s32.totalorder %s122, %s123
      %p132 = scmp.eq.s32.totalorder %s31, 0
      %p133 = por %p131, %p132
      %p134 = scmp.ne.s32.totalorder %s122, %s123
      %p135 = scmp.eq.s32.totalorder %s32, 15
      %p136 = por %p134, %p135
      %p138 = scmp.ne.s32.totalorder %s123, %s137
      %p139 = scmp.eq.s32.totalorder %s32, 0
      %p140 = por %p138, %p139
      %s142 = sadd.s32 %s141, 1
      %p145 = scmp.eq.s32.totalorder %s26, 15
      %p146 = scmp.ne.s32.totalorder %s141, %s143
      %p147 = scmp.eq.s32.totalorder %s26, 0
      %p148 = por %p146, %p147
      %p149 = scmp.ne.s32.totalorder %s141, %s143
      %p150 = scmp.eq.s32.totalorder %s31, 15
      %p151 = por %p149, %p150
      %p152 = scmp.ne.s32.totalorder %s143, %s144
      %p153 = scmp.eq.s32.totalorder %s31, 0
      %p154 = por %p152, %p153
      %p155 = scmp.ne.s32.totalorder %s143, %s144
      %p156 = scmp.eq.s32.totalorder %s32, 15
      %p157 = por %p155, %p156
      %p159 = scmp.ne.s32.totalorder %s144, %s158
      %p160 = scmp.eq.s32.totalorder %s32, 0
      %p161 = por %p159, %p160
      %s163 = sadd.s32 %s162, 1
      %p166 = scmp.eq.s32.totalorder %s26, 15
      %p167 = scmp.ne.s32.totalorder %s162, %s164
      %p168 = scmp.eq.s32.totalorder %s26, 0
      %p169 = por %p167, %p168
      %p170 = scmp.ne.s32.totalorder %s162, %s164
      %p171 = scmp.eq.s32.totalorder %s31, 15
      %p172 = por %p170, %p171
      %p173 = scmp.ne.s32.totalorder %s164, %s165
      %p174 = scmp.eq.s32.totalorder %s31, 0
      %p175 = por %p173, %p174
      %p176 = scmp.ne.s32.totalorder %s164, %s165
      %p177 = scmp.eq.s32.totalorder %s32, 15
      %p178 = por %p176, %p177
      %p180 = scmp.ne.s32.totalorder %s165, %s179
      %p181 = scmp.eq.s32.totalorder %s32, 0
      %p182 = por %p180, %p181
      %s184 = sadd.s32 %s183, 1
      %p187 = scmp.eq.s32.totalorder %s26, 15
      %p188 = scmp.ne.s32.totalorder %s183, %s185
      %p189 = scmp.eq.s32.totalorder %s26, 0
      %p190 = por %p188, %p189
      %p191 = scmp.ne.s32.totalorder %s183, %s185
      %p192 = scmp.eq.s32.totalorder %s31, 15
      %p193 = por %p191, %p192
      %p194 = scmp.ne.s32.totalorder %s185, %s186
      %p195 = scmp.eq.s32.totalorder %s31, 0
      %p196 = por %p194, %p195
      %p197 = scmp.ne.s32.totalorder %s185, %s186
      %p198 = scmp.eq.s32.totalorder %s32, 15
      %p199 = por %p197, %p198
      %p201 = scmp.ne.s32.totalorder %s186, %s200
      %p202 = scmp.eq.s32.totalorder %s32, 0
      %p203 = por %p201, %p202
      %s205 = sadd.s32 %s204, 1
      %p208 = scmp.eq.s32.totalorder %s26, 15
      %p209 = scmp.ne.s32.totalorder %s204, %s206
      %p210 = scmp.eq.s32.totalorder %s26, 0
      %p211 = por %p209, %p210
      %p212 = scmp.ne.s32.totalorder %s204, %s206
      %p213 = scmp.eq.s32.totalorder %s31, 15
      %p214 = por %p212, %p213
      %p215 = scmp.ne.s32.totalorder %s206, %s207
      %p216 = scmp.eq.s32.totalorder %s31, 0
      %p217 = por %p215, %p216
      %p218 = scmp.ne.s32.totalorder %s206, %s207
      %p219 = scmp.eq.s32.totalorder %s32, 15
      %p220 = por %p218, %p219
      %p222 = scmp.ne.s32.totalorder %s207, %s221
      %p223 = scmp.eq.s32.totalorder %s32, 0
      %p224 = por %p222, %p223
      %s226 = sadd.s32 %s225, 1
      %p229 = scmp.eq.s32.totalorder %s26, 15
      %p230 = scmp.ne.s32.totalorder %s225, %s227
      %p231 = scmp.eq.s32.totalorder %s26, 0
      %p232 = por %p230, %p231
      %p233 = scmp.ne.s32.totalorder %s225, %s227
      %p234 = scmp.eq.s32.totalorder %s31, 15
      %p235 = por %p233, %p234
      %p236 = scmp.ne.s32.totalorder %s227, %s228
      %p237 = scmp.eq.s32.totalorder %s31, 0
      %p238 = por %p236, %p237
      %p239 = scmp.ne.s32.totalorder %s227, %s228
      %p240 = scmp.eq.s32.totalorder %s32, 15
      %p241 = por %p239, %p240
      %p243 = scmp.ne.s32.totalorder %s228, %s242
      %p244 = scmp.eq.s32.totalorder %s32, 0
      %p245 = por %p243, %p244
      %s247 = sadd.s32 %s246, 1
      %p250 = scmp.eq.s32.totalorder %s26, 15
      %p251 = scmp.ne.s32.totalorder %s246, %s248
      %p252 = scmp.eq.s32.totalorder %s26, 0
      %p253 = por %p251, %p252
      %p254 = scmp.ne.s32.totalorder %s246, %s248
      %p255 = scmp.eq.s32.totalorder %s31, 15
      %p256 = por %p254, %p255
      %p257 = scmp.ne.s32.totalorder %s248, %s249
      %p258 = scmp.eq.s32.totalorder %s31, 0
      %p259 = por %p257, %p258
      %p260 = scmp.ne.s32.totalorder %s248, %s249
      %p261 = scmp.eq.s32.totalorder %s32, 15
      %p262 = por %p260, %p261
      %p264 = scmp.ne.s32.totalorder %s249, %s263
      %p265 = scmp.eq.s32.totalorder %s32, 0
      %p266 = por %p264, %p265
      %s268 = sadd.s32 %s267, 1
      %p271 = scmp.eq.s32.totalorder %s26, 15
      %p272 = scmp.ne.s32.totalorder %s267, %s269
      %p273 = scmp.eq.s32.totalorder %s26, 0
      %p274 = por %p272, %p273
      %p275 = scmp.ne.s32.totalorder %s267, %s269
      %p276 = scmp.eq.s32.totalorder %s31, 15
      %p277 = por %p275, %p276
      %p278 = scmp.ne.s32.totalorder %s269, %s270
      %p279 = scmp.eq.s32.totalorder %s31, 0
      %p280 = por %p278, %p279
      %p281 = scmp.ne.s32.totalorder %s269, %s270
      %p282 = scmp.eq.s32.totalorder %s32, 15
      %p283 = por %p281, %p282
      %p285 = scmp.ne.s32.totalorder %s270, %s284
      %p286 = scmp.eq.s32.totalorder %s32, 0
      %p287 = por %p285, %p286
      %s289 = sadd.s32 %s288, 1
      %p292 = scmp.eq.s32.totalorder %s26, 15
      %p293 = scmp.ne.s32.totalorder %s288, %s290
      %p294 = scmp.eq.s32.totalorder %s26, 0
      %p295 = por %p293, %p294
      %p296 = scmp.ne.s32.totalorder %s288, %s290
      %p297 = scmp.eq.s32.totalorder %s31, 15
      %p298 = por %p296, %p297
      %p299 = scmp.ne.s32.totalorder %s290, %s291
      %p300 = scmp.eq.s32.totalorder %s31, 0
      %p301 = por %p299, %p300
      %p302 = scmp.ne.s32.totalorder %s290, %s291
      %p303 = scmp.eq.s32.totalorder %s32, 15
      %p304 = por %p302, %p303
      %p306 = scmp.ne.s32.totalorder %s291, %s305
      %p307 = scmp.eq.s32.totalorder %s32, 0
      %p308 = por %p306, %p307
      %s310 = sadd.s32 %s309, 1
      %p313 = scmp.eq.s32.totalorder %s26, 15
      %p314 = scmp.ne.s32.totalorder %s309, %s311
      %p315 = scmp.eq.s32.totalorder %s26, 0
      %p316 = por %p314, %p315
      %p317 = scmp.ne.s32.totalorder %s309, %s311
      %p318 = scmp.eq.s32.totalorder %s31, 15
      %p319 = por %p317, %p318
      %p320 = scmp.ne.s32.totalorder %s311, %s312
      %p321 = scmp.eq.s32.totalorder %s31, 0
      %p322 = por %p320, %p321
      %p323 = scmp.ne.s32.totalorder %s311, %s312
      %p324 = scmp.eq.s32.totalorder %s32, 15
      %p325 = por %p323, %p324
      %p327 = scmp.ne.s32.totalorder %s312, %s326
      %p328 = scmp.eq.s32.totalorder %s32, 0
      %p329 = por %p327, %p328
      %s331 = sadd.s32 %s330, 1
      %p334 = scmp.eq.s32.totalorder %s26, 15
      %p335 = scmp.ne.s32.totalorder %s330, %s332
      %p336 = scmp.eq.s32.totalorder %s26, 0
      %p337 = por %p335, %p336
      %p338 = scmp.ne.s32.totalorder %s330, %s332
      %p339 = scmp.eq.s32.totalorder %s31, 15
      %p340 = por %p338, %p339
      %p341 = scmp.ne.s32.totalorder %s332, %s333
      %p342 = scmp.eq.s32.totalorder %s31, 0
      %p343 = por %p341, %p342
      %p344 = scmp.ne.s32.totalorder %s332, %s333
      %p345 = scmp.eq.s32.totalorder %s32, 15
      %p346 = por %p344, %p345
      %p348 = scmp.ne.s32.totalorder %s333, %s347
      %p349 = scmp.eq.s32.totalorder %s32, 0
      %p350 = por %p348, %p349
      %s352 = sadd.s32 %s351, 1
      %p355 = scmp.eq.s32.totalorder %s26, 15
      %p356 = scmp.ne.s32.totalorder %s351, %s353
      %p357 = scmp.eq.s32.totalorder %s26, 0
      %p358 = por %p356, %p357
      %p359 = scmp.ne.s32.totalorder %s351, %s353
      %p360 = scmp.eq.s32.totalorder %s31, 15
      %p361 = por %p359, %p360
      %p362 = scmp.ne.s32.totalorder %s353, %s354
      %p363 = scmp.eq.s32.totalorder %s31, 0
      %p364 = por %p362, %p363
      %p365 = scmp.ne.s32.totalorder %s353, %s354
      %p366 = scmp.eq.s32.totalorder %s32, 15
      %p367 = por %p365, %p366
      %p369 = scmp.ne.s32.totalorder %s354, %s368
      %p370 = scmp.eq.s32.totalorder %s32, 0
      %p371 = por %p369, %p370
      %s373 = sadd.s32 %s372, 1
      %p376 = scmp.eq.s32.totalorder %s26, 15
      %p377 = scmp.ne.s32.totalorder %s372, %s374
      %p378 = scmp.eq.s32.totalorder %s26, 0
      %p379 = por %p377, %p378
      %p380 = scmp.ne.s32.totalorder %s372, %s374
      %p381 = scmp.eq.s32.totalorder %s31, 15
      %p382 = por %p380, %p381
      %p383 = scmp.ne.s32.totalorder %s374, %s375
      %p384 = scmp.eq.s32.totalorder %s31, 0
      %p385 = por %p383, %p384
      %p386 = scmp.ne.s32.totalorder %s374, %s375
      %p387 = scmp.eq.s32.totalorder %s32, 15
      %p388 = por %p386, %p387
      %p390 = scmp.ne.s32.totalorder %s375, %s389
      %p391 = scmp.eq.s32.totalorder %s32, 0
      %p392 = por %p390, %p391
      %s394 = sadd.s32 %s393, 1
      %p397 = scmp.eq.s32.totalorder %s26, 15
      %p398 = scmp.ne.s32.totalorder %s393, %s395
      %p399 = scmp.eq.s32.totalorder %s26, 0
      %p400 = por %p398, %p399
      %p401 = scmp.ne.s32.totalorder %s393, %s395
      %p402 = scmp.eq.s32.totalorder %s31, 15
      %p403 = por %p401, %p402
      %p404 = scmp.ne.s32.totalorder %s395, %s396
      %p405 = scmp.eq.s32.totalorder %s31, 0
      %p406 = por %p404, %p405
      %p407 = scmp.ne.s32.totalorder %s395, %s396
      %p408 = scmp.eq.s32.totalorder %s32, 15
      %p409 = por %p407, %p408
      %p411 = scmp.ne.s32.totalorder %s396, %s410
      %p412 = scmp.eq.s32.totalorder %s32, 0
      %p413 = por %p411, %p412
      %s415 = sadd.s32 %s414, 1
      %p418 = scmp.eq.s32.totalorder %s26, 15
      %p419 = scmp.ne.s32.totalorder %s414, %s416
      %p420 = scmp.eq.s32.totalorder %s26, 0
      %p421 = por %p419, %p420
      %p422 = scmp.ne.s32.totalorder %s414, %s416
      %p423 = scmp.eq.s32.totalorder %s31, 15
      %p424 = por %p422, %p423
      %p425 = scmp.ne.s32.totalorder %s416, %s417
      %p426 = scmp.eq.s32.totalorder %s31, 0
      %p427 = por %p425, %p426
      %p428 = scmp.ne.s32.totalorder %s416, %s417
      %p429 = scmp.eq.s32.totalorder %s32, 15
      %p430 = por %p428, %p429
      %p432 = scmp.ne.s32.totalorder %s417, %s431
      %p433 = scmp.eq.s32.totalorder %s32, 0
      %p434 = por %p432, %p433
      %s435 = ssub.s32 %s33, %s59
      %s436 = ssub.s32 %s34, %s55
      %s437 = sor.u32 %s435, %s436
      %p438 = scmp.eq.s32.totalorder %s437, 0
      %s440 = sadd.s32 %s439, 1
      %s441 = scalar_select %p438, %s439, %s440
      %p444 = pneg %p438
      %p445 = scmp.eq.s32.totalorder %s26, 15
      %p446 = por %p444, %p445
      %p447 = scmp.ne.s32.totalorder %s439, %s442
      %p448 = scmp.eq.s32.totalorder %s26, 0
      %p449 = por %p447, %p448
      %p450 = scmp.ne.s32.totalorder %s439, %s442
      %p451 = scmp.eq.s32.totalorder %s31, 15
      %p452 = por %p450, %p451
      %p453 = scmp.ne.s32.totalorder %s442, %s443
      %p454 = scmp.eq.s32.totalorder %s31, 0
      %p455 = por %p453, %p454
      %p456 = scmp.ne.s32.totalorder %s442, %s443
      %p457 = scmp.eq.s32.totalorder %s32, 15
      %p458 = por %p456, %p457
      %p460 = scmp.ne.s32.totalorder %s443, %s459
      %p461 = scmp.eq.s32.totalorder %s32, 0
      %p462 = por %p460, %p461
      %p463 = scmp.le.s32.totalorder 1, %s26
      %p464 = scmp.lt.s32.totalorder %s26, 17
      %p465 = pnand %p463, %p464
      %p466 = pneg %p465
      // Predicated region
      $region9: #{multi_view_block_forward.3} parent=5 // pred_check
        _
      $region10: #{multi_view_block_forward.3} parent=5 // pred_check_branch
        %468 = sbr.rel (%p465) target = $region12
      $region11: #{multi_view_block_forward.3} parent=5 // pred_region
        %s469 = ssub.s32 %s26, 1
        // Predicated region
        $region13: #{multi_view_block_forward.3} parent=11 // pred_check
          %p470 = pneg %p133
        $region14: #{multi_view_block_forward.3} parent=11 // pred_check_branch
          %472 = sbr.rel (%p470) target = $region16
        $region15: #{multi_view_block_forward.3} parent=11 // pred_region
          _
        $region16: #{multi_view_block_forward.3} parent=11 // pred_fallthru
          _
        // Predicated region
        $region17: #{multi_view_block_forward.3} parent=11 // pred_check
          %p473 = pneg %p154
        $region18: #{multi_view_block_forward.3} parent=11 // pred_check_branch
          %475 = sbr.rel (%p473) target = $region20
        $region19: #{multi_view_block_forward.3} parent=11 // pred_region
          _
        $region20: #{multi_view_block_forward.3} parent=11 // pred_fallthru
          _
        // Predicated region
        $region21: #{multi_view_block_forward.3} parent=11 // pred_check
          %p476 = pneg %p175
        $region22: #{multi_view_block_forward.3} parent=11 // pred_check_branch
          %478 = sbr.rel (%p476) target = $region24
        $region23: #{multi_view_block_forward.3} parent=11 // pred_region
          _
        $region24: #{multi_view_block_forward.3} parent=11 // pred_fallthru
          _
        // Predicated region
        $region25: #{multi_view_block_forward.3} parent=11 // pred_check
          %p479 = pneg %p196
        $region26: #{multi_view_block_forward.3} parent=11 // pred_check_branch
          %481 = sbr.rel (%p479) target = $region28
        $region27: #{multi_view_block_forward.3} parent=11 // pred_region
          _
        $region28: #{multi_view_block_forward.3} parent=11 // pred_fallthru
          _
        // Predicated region
        $region29: #{multi_view_block_forward.3} parent=11 // pred_check
          %p482 = pneg %p217
        $region30: #{multi_view_block_forward.3} parent=11 // pred_check_branch
          %484 = sbr.rel (%p482) target = $region32
        $region31: #{multi_view_block_forward.3} parent=11 // pred_region
          _
        $region32: #{multi_view_block_forward.3} parent=11 // pred_fallthru
          _
        // Predicated region
        $region33: #{multi_view_block_forward.3} parent=11 // pred_check
          %p485 = pneg %p238
        $region34: #{multi_view_block_forward.3} parent=11 // pred_check_branch
          %487 = sbr.rel (%p485) target = $region36
        $region35: #{multi_view_block_forward.3} parent=11 // pred_region
          _
        $region36: #{multi_view_block_forward.3} parent=11 // pred_fallthru
          _
        // Predicated region
        $region37: #{multi_view_block_forward.3} parent=11 // pred_check
          %p488 = pneg %p259
        $region38: #{multi_view_block_forward.3} parent=11 // pred_check_branch
          %490 = sbr.rel (%p488) target = $region40
        $region39: #{multi_view_block_forward.3} parent=11 // pred_region
          _
        $region40: #{multi_view_block_forward.3} parent=11 // pred_fallthru
          _
        // Predicated region
        $region41: #{multi_view_block_forward.3} parent=11 // pred_check
          %p491 = pneg %p280
        $region42: #{multi_view_block_forward.3} parent=11 // pred_check_branch
          %493 = sbr.rel (%p491) target = $region44
        $region43: #{multi_view_block_forward.3} parent=11 // pred_region
          _
        $region44: #{multi_view_block_forward.3} parent=11 // pred_fallthru
          _
        // Predicated region
        $region45: #{multi_view_block_forward.3} parent=11 // pred_check
          %p494 = pneg %p301
        $region46: #{multi_view_block_forward.3} parent=11 // pred_check_branch
          %496 = sbr.rel (%p494) target = $region48
        $region47: #{multi_view_block_forward.3} parent=11 // pred_region
          _
        $region48: #{multi_view_block_forward.3} parent=11 // pred_fallthru
          _
        // Predicated region
        $region49: #{multi_view_block_forward.3} parent=11 // pred_check
          %p497 = pneg %p322
        $region50: #{multi_view_block_forward.3} parent=11 // pred_check_branch
          %499 = sbr.rel (%p497) target = $region52
        $region51: #{multi_view_block_forward.3} parent=11 // pred_region
          _
        $region52: #{multi_view_block_forward.3} parent=11 // pred_fallthru
          _
        // Predicated region
        $region53: #{multi_view_block_forward.3} parent=11 // pred_check
          %p500 = pneg %p343
        $region54: #{multi_view_block_forward.3} parent=11 // pred_check_branch
          %502 = sbr.rel (%p500) target = $region56
        $region55: #{multi_view_block_forward.3} parent=11 // pred_region
          _
        $region56: #{multi_view_block_forward.3} parent=11 // pred_fallthru
          _
        // Predicated region
        $region57: #{multi_view_block_forward.3} parent=11 // pred_check
          %p503 = pneg %p364
        $region58: #{multi_view_block_forward.3} parent=11 // pred_check_branch
          %505 = sbr.rel (%p503) target = $region60
        $region59: #{multi_view_block_forward.3} parent=11 // pred_region
          _
        $region60: #{multi_view_block_forward.3} parent=11 // pred_fallthru
          _
        // Predicated region
        $region61: #{multi_view_block_forward.3} parent=11 // pred_check
          %p506 = pneg %p385
        $region62: #{multi_view_block_forward.3} parent=11 // pred_check_branch
          %508 = sbr.rel (%p506) target = $region64
        $region63: #{multi_view_block_forward.3} parent=11 // pred_region
          _
        $region64: #{multi_view_block_forward.3} parent=11 // pred_fallthru
          _
        // Predicated region
        $region65: #{multi_view_block_forward.3} parent=11 // pred_check
          %p509 = pneg %p406
        $region66: #{multi_view_block_forward.3} parent=11 // pred_check_branch
          %511 = sbr.rel (%p509) target = $region68
        $region67: #{multi_view_block_forward.3} parent=11 // pred_region
          _
        $region68: #{multi_view_block_forward.3} parent=11 // pred_fallthru
          _
        // Predicated region
        $region69: #{multi_view_block_forward.3} parent=11 // pred_check
          %p512 = pneg %p427
        $region70: #{multi_view_block_forward.3} parent=11 // pred_check_branch
          %514 = sbr.rel (%p512) target = $region72
        $region71: #{multi_view_block_forward.3} parent=11 // pred_region
          _
        $region72: #{multi_view_block_forward.3} parent=11 // pred_fallthru
          _
      $region12: #{multi_view_block_forward.3} parent=5 // pred_fallthru
        _
      %p515 = scmp.lt.s32.totalorder %s26, 16
      // Predicated region
      $region73: #{multi_view_block_forward.3} parent=5 // pred_check
        %p516 = pneg %p515
      $region74: #{multi_view_block_forward.3} parent=5 // pred_check_branch
        %518 = sbr.rel (%p516) target = $region76
      $region75: #{multi_view_block_forward.3} parent=5 // pred_region
        // Predicated region
        $region77: #{multi_view_block_forward.3} parent=75 // pred_check
          %p519 = pneg %p74
        $region78: #{multi_view_block_forward.3} parent=75 // pred_check_branch
          %521 = sbr.rel (%p519) target = $region80
        $region79: #{multi_view_block_forward.3} parent=75 // pred_region
          %s522 = smul.u32 8, %s34
          %p523 = scmp.lt.s32.totalorder %s33, 3
          %s524 = scalar_select %p523, %s33, 3
          %p525 = scmp.lt.s32.totalorder %s522, 7
          %s526 = scalar_select %p525, %s522, 7
          %s527 = smul.addr %s524, 8
          %s528 = sadd.s32 %s526, %s527
          %s529 = smul.addr %s528, 8
          %s530 = scalar_lea.vmem %s0, %s529
          %s531 = smul.u32 8, %s34
        $region80: #{multi_view_block_forward.3} parent=75 // pred_fallthru
          _
        // Predicated region
        $region81: #{multi_view_block_forward.3} parent=75 // pred_check
          %p532 = pneg %p106
        $region82: #{multi_view_block_forward.3} parent=75 // pred_check_branch
          %534 = sbr.rel (%p532) target = $region84
        $region83: #{multi_view_block_forward.3} parent=75 // pred_region
          %p535 = scmp.eq.s32.totalorder %s34, 0
          %s536 = scalar_select %p535, %s35, 0
          %s537 = smul.u32 8, %s536
          %p538 = scmp.lt.s32.totalorder %s33, 3
          %s539 = scalar_select %p538, %s33, 3
          %p540 = scmp.lt.s32.totalorder %s537, 7
          %s541 = scalar_select %p540, %s537, 7
          %s542 = smul.addr %s539, 8
          %s543 = sadd.s32 %s541, %s542
          %s544 = smul.addr %s543, 8
          %s545 = scalar_lea.vmem %s1, %s544
          %p546 = scmp.eq.s32.totalorder %s34, 0
          %s547 = scalar_select %p546, %s35, 0
          %s548 = smul.u32 8, %s547
        $region84: #{multi_view_block_forward.3} parent=75 // pred_fallthru
          _
      $region76: #{multi_view_block_forward.3} parent=5 // pred_fallthru
        _
      %p549 = scmp.le.s32.totalorder 1, %s26
      %p550 = scmp.lt.s32.totalorder %s26, 17
      %p551 = pnand %p549, %p550
      %p552 = pneg %p551
      // Predicated region
      $region85: #{multi_view_block_forward.3} parent=5 // pred_check
        _
      $region86: #{multi_view_block_forward.3} parent=5 // pred_check_branch
        %554 = sbr.rel (%p551) target = $region88
      $region87: #{multi_view_block_forward.3} parent=5 // pred_region
        %s555 = ssub.s32 %s26, 1
        %s556 = smul.u32 8, %s38
        %p557 = scmp.lt.s32.totalorder %s37, 3
        %s558 = scalar_select %p557, %s37, 3
        %p559 = scmp.lt.s32.totalorder %s556, 7
        %s560 = scalar_select %p559, %s556, 7
        %s561 = smul.addr %s558, 8
        %s562 = sadd.s32 %s560, %s561
        %s563 = smul.addr %s562, 8
        %s564 = scalar_lea.vmem %s0, %s563
        %p565 = pneg %p80
        %p566 = pneg %p77
        %p567 = scmp.eq.s32.totalorder %s38, 0
        %s568 = scalar_select %p567, %s39, 0
        %s569 = smul.u32 8, %s568
        %p570 = scmp.lt.s32.totalorder %s37, 3
        %s571 = scalar_select %p570, %s37, 3
        %p572 = scmp.lt.s32.totalorder %s569, 7
        %s573 = scalar_select %p572, %s569, 7
        %s574 = smul.addr %s571, 8
        %s575 = sadd.s32 %s573, %s574
        %s576 = smul.addr %s575, 8
        %s577 = scalar_lea.vmem %s1, %s576
        %p578 = pneg %p112
        %p579 = pneg %p109
        %p580 = pneg %p133
        %p581 = pneg %p130
        %p582 = pneg %p154
        %p583 = pneg %p151
        %p584 = pneg %p175
        %p585 = pneg %p172
        %p586 = pneg %p196
        %p587 = pneg %p193
        %p588 = pneg %p217
        %p589 = pneg %p214
        %p590 = pneg %p238
        %p591 = pneg %p235
        %p592 = pneg %p259
        %p593 = pneg %p256
        %p594 = pneg %p280
        %p595 = pneg %p277
        %p596 = pneg %p301
        %p597 = pneg %p298
        %p598 = pneg %p322
        %p599 = pneg %p319
        %p600 = pneg %p343
        %p601 = pneg %p340
        %p602 = pneg %p364
        %p603 = pneg %p361
        %p604 = pneg %p385
        %p605 = pneg %p382
        %p606 = pneg %p406
        %p607 = pneg %p403
        %p608 = pneg %p427
        %p609 = pneg %p424
        %p610 = pneg %p455
        %p611 = pneg %p452
        %s612 = sand.u32 %s442, 1
        %s613 = scalar_lea.sflag [#allocation12], %s612
        %s614 = sand.u32 %s442, 1
        %s615 = smul.addr %s614, 64
        %s616 = scalar_lea.vmem [#allocation11], %s615
        %s617 = smul.u32 8, %s38
        %p618 = scmp.lt.s32.totalorder %s37, 3
        %s619 = scalar_select %p618, %s37, 3
        %p620 = scmp.lt.s32.totalorder %s617, 7
        %s621 = scalar_select %p620, %s617, 7
        %s622 = smul.addr %s619, 8
        %s623 = sadd.s32 %s621, %s622
        %s624 = smul.addr %s623, 8
        %s625 = scalar_lea.vmem %s0, %s624
        %s626 = smul.u32 8, %s38
        %p627 = scmp.eq.s32.totalorder %s38, 0
        %s628 = scalar_select %p627, %s39, 0
        %s629 = smul.u32 8, %s628
        %p630 = scmp.lt.s32.totalorder %s37, 3
        %s631 = scalar_select %p630, %s37, 3
        %p632 = scmp.lt.s32.totalorder %s629, 7
        %s633 = scalar_select %p632, %s629, 7
        %s634 = smul.addr %s631, 8
        %s635 = sadd.s32 %s633, %s634
        %s636 = smul.addr %s635, 8
        %s637 = scalar_lea.vmem %s1, %s636
        %p638 = scmp.eq.s32.totalorder %s38, 0
        %s639 = scalar_select %p638, %s39, 0
        %s640 = smul.u32 8, %s639
        %s641 = smul.u32 8, %s38
        %s643 = smul.u32 %s39, 64
        %p644 = scmp.eq.s32.totalorder %s39, 0
        %p645 = scmp.eq.s32.totalorder %s40, 0
        %p646 = pnand %p644, %p645
        %p647 = pneg %p646
        // Predicated region
        $region89: #{multi_view_block_forward.3} parent=87 // pred_check
          _
        $region90: #{multi_view_block_forward.3} parent=87 // pred_check_branch
          %649 = sbr.rel (%p646) target = $region92
        $region91: #{multi_view_block_forward.3} parent=87 // pred_region
          %v650 = vld [vmem:[%s625] sm:$0xff]
          %v651 = vld [vmem:[%s625 + $0x8] sm:$0xff]
          %v652 = vld [vmem:[%s625 + $0x10] sm:$0xff]
          %v653 = vld [vmem:[%s625 + $0x18] sm:$0xff]
          %v654 = vld [vmem:[%s625 + $0x20] sm:$0xff]
          %v655 = vld [vmem:[%s625 + $0x28] sm:$0xff]
          %v656 = vld [vmem:[%s625 + $0x30] sm:$0xff]
          %v657 = vld [vmem:[%s625 + $0x38] sm:$0xff]
          %v658 = vld [vmem:[%s2] sm:$0x1]
          %v659 = vld [vmem:[%s3] sm:$0x1]
          %660 = vadd.xlane.f32.xlu0 %v650
          %v661 = vpop.xlane.xlu0 %660
          %662 = vadd.xlane.f32.xlu0 %v651
          %v663 = vpop.xlane.xlu0 %662
          %664 = vadd.xlane.f32.xlu0 %v652
          %v665 = vpop.xlane.xlu0 %664
          %666 = vadd.xlane.f32.xlu0 %v653
          %v667 = vpop.xlane.xlu0 %666
          %668 = vadd.xlane.f32.xlu0 %v654
          %v669 = vpop.xlane.xlu0 %668
          %670 = vadd.xlane.f32.xlu0 %v655
          %v671 = vpop.xlane.xlu0 %670
          %672 = vadd.xlane.f32.xlu0 %v656
          %v673 = vpop.xlane.xlu0 %672
          %674 = vadd.xlane.f32.xlu0 %v657
          %v675 = vpop.xlane.xlu0 %674
          %v676 = vrcp.pop 128.0
          %v677 = vmul.f32 %v661, %v676
          %v678 = vmul.f32 %v663, %v676
          %v679 = vmul.f32 %v665, %v676
          %v680 = vmul.f32 %v667, %v676
          %v681 = vmul.f32 %v669, %v676
          %v682 = vmul.f32 %v671, %v676
          %v683 = vmul.f32 %v673, %v676
          %v684 = vmul.f32 %v675, %v676
          %v685 = vsub.f32 %v650, %v677
          %v686 = vsub.f32 %v651, %v678
          %v687 = vsub.f32 %v652, %v679
          %v688 = vsub.f32 %v653, %v680
          %v689 = vsub.f32 %v654, %v681
          %v690 = vsub.f32 %v655, %v682
          %v691 = vsub.f32 %v656, %v683
          %v692 = vsub.f32 %v657, %v684
          %v693 = vmul.f32 %v685, %v685
          %v694 = vmul.f32 %v686, %v686
          %v695 = vmul.f32 %v687, %v687
          %v696 = vmul.f32 %v688, %v688
          %v697 = vmul.f32 %v689, %v689
          %v698 = vmul.f32 %v690, %v690
          %v699 = vmul.f32 %v691, %v691
          %v700 = vmul.f32 %v692, %v692
          %701 = vadd.xlane.f32.xlu0 %v693
          %v702 = vpop.xlane.xlu0 %701
          %703 = vadd.xlane.f32.xlu0 %v694
          %v704 = vpop.xlane.xlu0 %703
          %705 = vadd.xlane.f32.xlu0 %v695
          %v706 = vpop.xlane.xlu0 %705
          %707 = vadd.xlane.f32.xlu0 %v696
          %v708 = vpop.xlane.xlu0 %707
          %709 = vadd.xlane.f32.xlu0 %v697
          %v710 = vpop.xlane.xlu0 %709
          %711 = vadd.xlane.f32.xlu0 %v698
          %v712 = vpop.xlane.xlu0 %711
          %713 = vadd.xlane.f32.xlu0 %v699
          %v714 = vpop.xlane.xlu0 %713
          %715 = vadd.xlane.f32.xlu0 %v700
          %v716 = vpop.xlane.xlu0 %715
          %v717 = vmul.f32 %v702, %v676
          %v718 = vmul.f32 %v704, %v676
          %v719 = vmul.f32 %v706, %v676
          %v720 = vmul.f32 %v708, %v676
          %v721 = vmul.f32 %v710, %v676
          %v722 = vmul.f32 %v712, %v676
          %v723 = vmul.f32 %v714, %v676
          %v724 = vmul.f32 %v716, %v676
          %v725 = vadd.f32 %v717, 1e-05
          %v726 = vadd.f32 %v718, 1e-05
          %v727 = vadd.f32 %v719, 1e-05
          %v728 = vadd.f32 %v720, 1e-05
          %v729 = vadd.f32 %v721, 1e-05
          %v730 = vadd.f32 %v722, 1e-05
          %v731 = vadd.f32 %v723, 1e-05
          %v732 = vadd.f32 %v724, 1e-05
          %v733 = vrsqrt.pop %v725
          %v734 = vrsqrt.pop %v726
          %v735 = vrsqrt.pop %v727
          %v736 = vrsqrt.pop %v728
          %v737 = vrsqrt.pop %v729
          %v738 = vrsqrt.pop %v730
          %v739 = vrsqrt.pop %v731
          %v740 = vrsqrt.pop %v732
          %v741 = vmul.f32 %v685, %v733
          %v742 = vmul.f32 %v686, %v734
          %v743 = vmul.f32 %v687, %v735
          %v744 = vmul.f32 %v688, %v736
          %v745 = vmul.f32 %v689, %v737
          %v746 = vmul.f32 %v690, %v738
          %v747 = vmul.f32 %v691, %v739
          %v748 = vmul.f32 %v692, %v740
          %v750 = vlaneseq
          %v751 = vshrl.u32 %v750, 7
          %v752 = vsub.s32 0, %v751
          %v753 = vrot.slane %v658, %v752
          %v755 = vmul.f32 %v741, %v753
          %v756 = vmul.f32 %v742, %v753
          %v757 = vmul.f32 %v743, %v753
          %v758 = vmul.f32 %v744, %v753
          %v759 = vmul.f32 %v745, %v753
          %v760 = vmul.f32 %v746, %v753
          %v761 = vmul.f32 %v747, %v753
          %v762 = vmul.f32 %v748, %v753
          %v764 = vlaneseq
          %v765 = vshrl.u32 %v764, 7
          %v766 = vsub.s32 0, %v765
          %v767 = vrot.slane %v659, %v766
          %v769 = vadd.f32 %v755, %v767
          %v770 = vadd.f32 %v756, %v767
          %v771 = vadd.f32 %v757, %v767
          %v772 = vadd.f32 %v758, %v767
          %v773 = vadd.f32 %v759, %v767
          %v774 = vadd.f32 %v760, %v767
          %v775 = vadd.f32 %v761, %v767
          %v776 = vadd.f32 %v762, %v767
          %v777 = vpack.c.bf16 %v770, %v769
          %v778 = vpack.c.bf16 %v772, %v771
          %v779 = vpack.c.bf16 %v774, %v773
          %v780 = vpack.c.bf16 %v776, %v775
          %v785 = vunpack.c.l.b16 %v777
          %v786 = vunpack.c.h.b16 %v777
          %v787 = vunpack.c.l.b16 %v778
          %v788 = vunpack.c.h.b16 %v778
          %v789 = vunpack.c.l.b16 %v779
          %v790 = vunpack.c.h.b16 %v779
          %v791 = vunpack.c.l.b16 %v780
          %v792 = vunpack.c.h.b16 %v780
          %v793 = vpack.c.b16 %v785, %v785
          %v794 = vpack.c.b16 %v786, %v786
          %v795 = vpack.c.b16 %v787, %v787
          %v796 = vpack.c.b16 %v788, %v788
          %v797 = vpack.c.b16 %v789, %v789
          %v798 = vpack.c.b16 %v790, %v790
          %v799 = vpack.c.b16 %v791, %v791
          %v800 = vpack.c.b16 %v792, %v792
          %809 = vst [vmem:[#allocation2] sm:$0xf] %v793
          %810 = vst [vmem:[#allocation2 + $0x4] sm:$0xf] %v794
          %811 = vst [vmem:[#allocation2 + $0x8] sm:$0xf] %v795
          %812 = vst [vmem:[#allocation2 + $0xc] sm:$0xf] %v796
          %813 = vst [vmem:[#allocation2 + $0x10] sm:$0xf] %v797
          %814 = vst [vmem:[#allocation2 + $0x14] sm:$0xf] %v798
          %815 = vst [vmem:[#allocation2 + $0x18] sm:$0xf] %v799
          %816 = vst [vmem:[#allocation2 + $0x1c] sm:$0xf] %v800
          %817 = vst [vmem:[#allocation8] sm:$0xff] 0.0
          %818 = vst [vmem:[#allocation8 + $0x8] sm:$0xff] 0.0
          %819 = vst [vmem:[#allocation8 + $0x10] sm:$0xff] 0.0
          %820 = vst [vmem:[#allocation8 + $0x18] sm:$0xff] 0.0
          %821 = vst [vmem:[#allocation8 + $0x20] sm:$0xff] 0.0
          %822 = vst [vmem:[#allocation8 + $0x28] sm:$0xff] 0.0
          %823 = vst [vmem:[#allocation8 + $0x30] sm:$0xff] 0.0
          %824 = vst [vmem:[#allocation8 + $0x38] sm:$0xff] 0.0
        $region92: #{multi_view_block_forward.3} parent=87 // pred_fallthru
          _
        // Predicated region
        $region93: #{multi_view_block_forward.3} parent=87 // pred_check
          %p825 = pneg %p644
        $region94: #{multi_view_block_forward.3} parent=87 // pred_check_branch
          %827 = sbr.rel (%p825) target = $region96
        $region95: #{multi_view_block_forward.3} parent=87 // pred_region
          %v828 = vld [vmem:[#allocation2] sm:$0xf]
          %v829 = vld [vmem:[#allocation2 + $0x4] sm:$0xf]
          %v830 = vld [vmem:[#allocation2 + $0x8] sm:$0xf]
          %v831 = vld [vmem:[#allocation2 + $0xc] sm:$0xf]
          %v832 = vld [vmem:[#allocation2 + $0x10] sm:$0xf]
          %v833 = vld [vmem:[#allocation2 + $0x14] sm:$0xf]
          %v834 = vld [vmem:[#allocation2 + $0x18] sm:$0xf]
          %v835 = vld [vmem:[#allocation2 + $0x1c] sm:$0xf]
          %s836 = smul.u32 %s40, 16
          %s837 = smul.addr %s836, 4
          %s838 = scalar_lea.vmem %s4, %s837
          %v839 = vld [vmem:[%s838] sm:$0xf]
          %v840 = vld [vmem:[%s838 + $0x4] sm:$0xf]
          %v841 = vld [vmem:[%s838 + $0x8] sm:$0xf]
          %v842 = vld [vmem:[%s838 + $0xc] sm:$0xf]
          %v843 = vld [vmem:[%s838 + $0x10] sm:$0xf]
          %v844 = vld [vmem:[%s838 + $0x14] sm:$0xf]
          %v845 = vld [vmem:[%s838 + $0x18] sm:$0xf]
          %v846 = vld [vmem:[%s838 + $0x1c] sm:$0xf]
          %v847 = vld [vmem:[%s838 + $0x20] sm:$0xf]
          %v848 = vld [vmem:[%s838 + $0x24] sm:$0xf]
          %v849 = vld [vmem:[%s838 + $0x28] sm:$0xf]
          %v850 = vld [vmem:[%s838 + $0x2c] sm:$0xf]
          %v851 = vld [vmem:[%s838 + $0x30] sm:$0xf]
          %v852 = vld [vmem:[%s838 + $0x34] sm:$0xf]
          %v853 = vld [vmem:[%s838 + $0x38] sm:$0xf]
          %v854 = vld [vmem:[%s838 + $0x3c] sm:$0xf]
          %v863 = vunpack.c.l.b16 %v828
          %v864 = vunpack.c.l.b16 %v829
          %v865 = vunpack.c.l.b16 %v830
          %v866 = vunpack.c.l.b16 %v831
          %v867 = vunpack.c.l.b16 %v832
          %v868 = vunpack.c.l.b16 %v833
          %v869 = vunpack.c.l.b16 %v834
          %v870 = vunpack.c.l.b16 %v835
          %v871 = vpack.c.b16 %v864, %v863
          %v872 = vpack.c.b16 %v866, %v865
          %v873 = vpack.c.b16 %v868, %v867
          %v874 = vpack.c.b16 %v870, %v869
          %v895 = vunpack.c.l.b16 %v839
          %v896 = vunpack.c.l.b16 %v840
          %v897 = vunpack.c.l.b16 %v841
          %v898 = vunpack.c.l.b16 %v842
          %v899 = vunpack.c.l.b16 %v843
          %v900 = vunpack.c.l.b16 %v844
          %v901 = vunpack.c.l.b16 %v845
          %v902 = vunpack.c.l.b16 %v846
          %v903 = vunpack.c.l.b16 %v847
          %v904 = vunpack.c.l.b16 %v848
          %v905 = vunpack.c.l.b16 %v849
          %v906 = vunpack.c.l.b16 %v850
          %v907 = vunpack.c.l.b16 %v851
          %v908 = vunpack.c.l.b16 %v852
          %v909 = vunpack.c.l.b16 %v853
          %v910 = vunpack.c.l.b16 %v854
          %v911 = vpack.c.b16 %v896, %v895
          %v912 = vpack.c.b16 %v898, %v897
          %v913 = vpack.c.b16 %v900, %v899
          %v914 = vpack.c.b16 %v902, %v901
          %v915 = vpack.c.b16 %v904, %v903
          %v916 = vpack.c.b16 %v906, %v905
          %v917 = vpack.c.b16 %v908, %v907
          %v918 = vpack.c.b16 %v910, %v909
          %927 = vmatprep.subr.bf16.mxu0 0
          %928 = vmatpush1.bf16.msra.mxu0 %v918
          %929 = vmatprep.subr.bf16.mxu0 0
          %930 = vmatpush1.bf16.msra.mxu0 %v917
          %931 = vmatprep.subr.bf16.mxu0 0
          %932 = vmatpush1.bf16.msra.mxu0 %v916
          %933 = vmatprep.subr.bf16.mxu0 0
          %934 = vmatpush1.bf16.msra.mxu0 %v915
          %935 = vmatprep.subr.bf16.mxu0 0
          %936 = vmatpush1.bf16.msra.mxu0 %v914
          %937 = vmatprep.subr.bf16.mxu0 0
          %938 = vmatpush1.bf16.msra.mxu0 %v913
          %939 = vmatprep.subr.bf16.mxu0 0
          %940 = vmatpush1.bf16.msra.mxu0 %v912
          %941 = vmatprep.subr.bf16.mxu0 0
          %942 = vmatpush1.bf16.msra.mxu0 %v911
          %943 = vmatprep.subr.bf16.mxu0 0
          %944 = vmatpush2.bf16.msra.mxu0 0
          %945 = vmatprep.subr.bf16.mxu0 0
          %946 = vmatpush2.bf16.msra.mxu0 0
          %947 = vmatprep.subr.bf16.mxu0 0
          %948 = vmatpush2.bf16.msra.mxu0 0
          %949 = vmatprep.subr.bf16.mxu0 0
          %950 = vmatpush2.bf16.msra.mxu0 0
          %951 = vmatprep.subr.bf16.mxu0 0
          %952 = vmatpush2.bf16.msra.mxu0 0
          %953 = vmatprep.subr.bf16.mxu0 0
          %954 = vmatpush2.bf16.msra.mxu0 0
          %955 = vmatprep.subr.bf16.mxu0 0
          %956 = vmatpush2.bf16.msra.mxu0 0
          %957 = vmatprep.subr.bf16.mxu0 0
          %958 = vmatpush2.bf16.msra.mxu0 0
          %959 = vmatprep.mubr.bf16.mxu0 0
          %960 = vmatmul.mubr.bf16.gmra.mxu0 %v871
          %v961 = vpop.f32.mrf.mxu0
          %v962 = vadd.f32 0.0, %v961
          %v963 = vpop.f32.mrf.mxu0
          %v964 = vpop.f32.mrf.mxu0
          %v965 = vadd.f32 0.0, %v964
          %v966 = vpop.f32.mrf.mxu0
          %967 = vmatprep.mubr.bf16.mxu0 0
          %968 = vmatmul.mubr.bf16.gmra.mxu0 %v872
          %v969 = vpop.f32.mrf.mxu0
          %v970 = vadd.f32 0.0, %v969
          %v971 = vpop.f32.mrf.mxu0
          %v972 = vpop.f32.mrf.mxu0
          %v973 = vadd.f32 0.0, %v972
          %v974 = vpop.f32.mrf.mxu0
          %975 = vmatprep.mubr.bf16.mxu0 0
          %976 = vmatmul.mubr.bf16.gmra.mxu0 %v873
          %v977 = vpop.f32.mrf.mxu0
          %v978 = vadd.f32 0.0, %v977
          %v979 = vpop.f32.mrf.mxu0
          %v980 = vpop.f32.mrf.mxu0
          %v981 = vadd.f32 0.0, %v980
          %v982 = vpop.f32.mrf.mxu0
          %983 = vmatprep.mubr.bf16.mxu0 0
          %984 = vmatmul.mubr.bf16.gmra.mxu0 %v874
          %v985 = vpop.f32.mrf.mxu0
          %v986 = vadd.f32 0.0, %v985
          %v987 = vpop.f32.mrf.mxu0
          %v988 = vpop.f32.mrf.mxu0
          %v989 = vadd.f32 0.0, %v988
          %v990 = vpop.f32.mrf.mxu0
          %991 = vdwg.mxu0
          %v992 = vmul.f32 %v962, 0.17677669
          %v993 = vmul.f32 %v965, 0.17677669
          %v994 = vmul.f32 %v970, 0.17677669
          %v995 = vmul.f32 %v973, 0.17677669
          %v996 = vmul.f32 %v978, 0.17677669
          %v997 = vmul.f32 %v981, 0.17677669
          %v998 = vmul.f32 %v986, 0.17677669
          %v999 = vmul.f32 %v989, 0.17677669
          %v1000 = vpack.c.bf16 %v993, %v992
          %v1001 = vpack.c.bf16 %v995, %v994
          %v1002 = vpack.c.bf16 %v997, %v996
          %v1003 = vpack.c.bf16 %v999, %v998
          %v1008 = vunpack.c.l.b16 %v1000
          %v1009 = vunpack.c.h.b16 %v1000
          %v1010 = vunpack.c.l.b16 %v1001
          %v1011 = vunpack.c.h.b16 %v1001
          %v1012 = vunpack.c.l.b16 %v1002
          %v1013 = vunpack.c.h.b16 %v1002
          %v1014 = vunpack.c.l.b16 %v1003
          %v1015 = vunpack.c.h.b16 %v1003
          %v1016 = vpack.c.b16 %v1008, %v1008
          %v1017 = vpack.c.b16 %v1009, %v1009
          %v1018 = vpack.c.b16 %v1010, %v1010
          %v1019 = vpack.c.b16 %v1011, %v1011
          %v1020 = vpack.c.b16 %v1012, %v1012
          %v1021 = vpack.c.b16 %v1013, %v1013
          %v1022 = vpack.c.b16 %v1014, %v1014
          %v1023 = vpack.c.b16 %v1015, %v1015
          %s1032 = smul.u32 %s40, 8
          %s1033 = smul.addr %s1032, 4
          %s1034 = scalar_lea.vmem [#allocation4], %s1033
          %vm1035 = vcmask 257024
          %1036 = vst.msk [vmem:[%s1034] sm:$0xf] %vm1035, %v1016
          %1037 = vst.msk [vmem:[%s1034 + $0x4] sm:$0xf] %vm1035, %v1017
          %1038 = vst.msk [vmem:[%s1034 + $0x8] sm:$0xf] %vm1035, %v1018
          %1039 = vst.msk [vmem:[%s1034 + $0xc] sm:$0xf] %vm1035, %v1019
          %1040 = vst.msk [vmem:[%s1034 + $0x10] sm:$0xf] %vm1035, %v1020
          %1041 = vst.msk [vmem:[%s1034 + $0x14] sm:$0xf] %vm1035, %v1021
          %1042 = vst.msk [vmem:[%s1034 + $0x18] sm:$0xf] %vm1035, %v1022
          %1043 = vst.msk [vmem:[%s1034 + $0x1c] sm:$0xf] %vm1035, %v1023
          %s1044 = smul.u32 %s40, 64
          %s1045 = scalar_lea.vmem [#allocation5], %s1044
          %vm1046 = vcmask 7168
          %1047 = vst.msk [vmem:[%s1045] sm:$0xff] %vm1046, -inf
          %1048 = vst.msk [vmem:[%s1045 + $0x8] sm:$0xff] %vm1046, -inf
          %1049 = vst.msk [vmem:[%s1045 + $0x10] sm:$0xff] %vm1046, -inf
          %1050 = vst.msk [vmem:[%s1045 + $0x18] sm:$0xff] %vm1046, -inf
          %1051 = vst.msk [vmem:[%s1045 + $0x20] sm:$0xff] %vm1046, -inf
          %1052 = vst.msk [vmem:[%s1045 + $0x28] sm:$0xff] %vm1046, -inf
          %1053 = vst.msk [vmem:[%s1045 + $0x30] sm:$0xff] %vm1046, -inf
          %1054 = vst.msk [vmem:[%s1045 + $0x38] sm:$0xff] %vm1046, -inf
          %s1055 = scalar_lea.vmem [#allocation6], %s1044
          %1056 = vst.msk [vmem:[%s1055] sm:$0xff] %vm1046, 0.0
          %1057 = vst.msk [vmem:[%s1055 + $0x8] sm:$0xff] %vm1046, 0.0
          %1058 = vst.msk [vmem:[%s1055 + $0x10] sm:$0xff] %vm1046, 0.0
          %1059 = vst.msk [vmem:[%s1055 + $0x18] sm:$0xff] %vm1046, 0.0
          %1060 = vst.msk [vmem:[%s1055 + $0x20] sm:$0xff] %vm1046, 0.0
          %1061 = vst.msk [vmem:[%s1055 + $0x28] sm:$0xff] %vm1046, 0.0
          %1062 = vst.msk [vmem:[%s1055 + $0x30] sm:$0xff] %vm1046, 0.0
          %1063 = vst.msk [vmem:[%s1055 + $0x38] sm:$0xff] %vm1046, 0.0
          %s1064 = scalar_lea.vmem [#allocation7], %s1044
          %vm1065 = vcmask 261120
          %1066 = vst.msk [vmem:[%s1064] sm:$0xff] %vm1065, 0.0
          %1067 = vst.msk [vmem:[%s1064 + $0x8] sm:$0xff] %vm1065, 0.0
          %1068 = vst.msk [vmem:[%s1064 + $0x10] sm:$0xff] %vm1065, 0.0
          %1069 = vst.msk [vmem:[%s1064 + $0x18] sm:$0xff] %vm1065, 0.0
          %1070 = vst.msk [vmem:[%s1064 + $0x20] sm:$0xff] %vm1065, 0.0
          %1071 = vst.msk [vmem:[%s1064 + $0x28] sm:$0xff] %vm1065, 0.0
          %1072 = vst.msk [vmem:[%s1064 + $0x30] sm:$0xff] %vm1065, 0.0
          %1073 = vst.msk [vmem:[%s1064 + $0x38] sm:$0xff] %vm1065, 0.0
        $region96: #{multi_view_block_forward.3} parent=87 // pred_fallthru
          _
        %p1074 = scmp.eq.s32.totalorder %s38, 0
        %p1075 = pnand %p1074, %p645
        %p1076 = pneg %p1075
        // Predicated region
        $region97: #{multi_view_block_forward.3} parent=87 // pred_check
          _
        $region98: #{multi_view_block_forward.3} parent=87 // pred_check_branch
          %1078 = sbr.rel (%p1075) target = $region100
        $region99: #{multi_view_block_forward.3} parent=87 // pred_region
          %v1079 = vld [vmem:[%s637] sm:$0xff]
          %v1080 = vld [vmem:[%s637 + $0x8] sm:$0xff]
          %v1081 = vld [vmem:[%s637 + $0x10] sm:$0xff]
          %v1082 = vld [vmem:[%s637 + $0x18] sm:$0xff]
          %v1083 = vld [vmem:[%s637 + $0x20] sm:$0xff]
          %v1084 = vld [vmem:[%s637 + $0x28] sm:$0xff]
          %v1085 = vld [vmem:[%s637 + $0x30] sm:$0xff]
          %v1086 = vld [vmem:[%s637 + $0x38] sm:$0xff]
          %v1087 = vld [vmem:[%s2] sm:$0x1]
          %v1088 = vld [vmem:[%s3] sm:$0x1]
          %1089 = vadd.xlane.f32.xlu0 %v1079
          %v1090 = vpop.xlane.xlu0 %1089
          %1091 = vadd.xlane.f32.xlu0 %v1080
          %v1092 = vpop.xlane.xlu0 %1091
          %1093 = vadd.xlane.f32.xlu0 %v1081
          %v1094 = vpop.xlane.xlu0 %1093
          %1095 = vadd.xlane.f32.xlu0 %v1082
          %v1096 = vpop.xlane.xlu0 %1095
          %1097 = vadd.xlane.f32.xlu0 %v1083
          %v1098 = vpop.xlane.xlu0 %1097
          %1099 = vadd.xlane.f32.xlu0 %v1084
          %v1100 = vpop.xlane.xlu0 %1099
          %1101 = vadd.xlane.f32.xlu0 %v1085
          %v1102 = vpop.xlane.xlu0 %1101
          %1103 = vadd.xlane.f32.xlu0 %v1086
          %v1104 = vpop.xlane.xlu0 %1103
          %v1105 = vrcp.pop 128.0
          %v1106 = vmul.f32 %v1090, %v1105
          %v1107 = vmul.f32 %v1092, %v1105
          %v1108 = vmul.f32 %v1094, %v1105
          %v1109 = vmul.f32 %v1096, %v1105
          %v1110 = vmul.f32 %v1098, %v1105
          %v1111 = vmul.f32 %v1100, %v1105
          %v1112 = vmul.f32 %v1102, %v1105
          %v1113 = vmul.f32 %v1104, %v1105
          %v1114 = vsub.f32 %v1079, %v1106
          %v1115 = vsub.f32 %v1080, %v1107
          %v1116 = vsub.f32 %v1081, %v1108
          %v1117 = vsub.f32 %v1082, %v1109
          %v1118 = vsub.f32 %v1083, %v1110
          %v1119 = vsub.f32 %v1084, %v1111
          %v1120 = vsub.f32 %v1085, %v1112
          %v1121 = vsub.f32 %v1086, %v1113
          %v1122 = vmul.f32 %v1114, %v1114
          %v1123 = vmul.f32 %v1115, %v1115
          %v1124 = vmul.f32 %v1116, %v1116
          %v1125 = vmul.f32 %v1117, %v1117
          %v1126 = vmul.f32 %v1118, %v1118
          %v1127 = vmul.f32 %v1119, %v1119
          %v1128 = vmul.f32 %v1120, %v1120
          %v1129 = vmul.f32 %v1121, %v1121
          %1130 = vadd.xlane.f32.xlu0 %v1122
          %v1131 = vpop.xlane.xlu0 %1130
          %1132 = vadd.xlane.f32.xlu0 %v1123
          %v1133 = vpop.xlane.xlu0 %1132
          %1134 = vadd.xlane.f32.xlu0 %v1124
          %v1135 = vpop.xlane.xlu0 %1134
          %1136 = vadd.xlane.f32.xlu0 %v1125
          %v1137 = vpop.xlane.xlu0 %1136
          %1138 = vadd.xlane.f32.xlu0 %v1126
          %v1139 = vpop.xlane.xlu0 %1138
          %1140 = vadd.xlane.f32.xlu0 %v1127
          %v1141 = vpop.xlane.xlu0 %1140
          %1142 = vadd.xlane.f32.xlu0 %v1128
          %v1143 = vpop.xlane.xlu0 %1142
          %1144 = vadd.xlane.f32.xlu0 %v1129
          %v1145 = vpop.xlane.xlu0 %1144
          %v1146 = vmul.f32 %v1131, %v1105
          %v1147 = vmul.f32 %v1133, %v1105
          %v1148 = vmul.f32 %v1135, %v1105
          %v1149 = vmul.f32 %v1137, %v1105
          %v1150 = vmul.f32 %v1139, %v1105
          %v1151 = vmul.f32 %v1141, %v1105
          %v1152 = vmul.f32 %v1143, %v1105
          %v1153 = vmul.f32 %v1145, %v1105
          %v1154 = vadd.f32 %v1146, 1e-05
          %v1155 = vadd.f32 %v1147, 1e-05
          %v1156 = vadd.f32 %v1148, 1e-05
          %v1157 = vadd.f32 %v1149, 1e-05
          %v1158 = vadd.f32 %v1150, 1e-05
          %v1159 = vadd.f32 %v1151, 1e-05
          %v1160 = vadd.f32 %v1152, 1e-05
          %v1161 = vadd.f32 %v1153, 1e-05
          %v1162 = vrsqrt.pop %v1154
          %v1163 = vrsqrt.pop %v1155
          %v1164 = vrsqrt.pop %v1156
          %v1165 = vrsqrt.pop %v1157
          %v1166 = vrsqrt.pop %v1158
          %v1167 = vrsqrt.pop %v1159
          %v1168 = vrsqrt.pop %v1160
          %v1169 = vrsqrt.pop %v1161
          %v1170 = vmul.f32 %v1114, %v1162
          %v1171 = vmul.f32 %v1115, %v1163
          %v1172 = vmul.f32 %v1116, %v1164
          %v1173 = vmul.f32 %v1117, %v1165
          %v1174 = vmul.f32 %v1118, %v1166
          %v1175 = vmul.f32 %v1119, %v1167
          %v1176 = vmul.f32 %v1120, %v1168
          %v1177 = vmul.f32 %v1121, %v1169
          %v1179 = vlaneseq
          %v1180 = vshrl.u32 %v1179, 7
          %v1181 = vsub.s32 0, %v1180
          %v1182 = vrot.slane %v1087, %v1181
          %v1184 = vmul.f32 %v1170, %v1182
          %v1185 = vmul.f32 %v1171, %v1182
          %v1186 = vmul.f32 %v1172, %v1182
          %v1187 = vmul.f32 %v1173, %v1182
          %v1188 = vmul.f32 %v1174, %v1182
          %v1189 = vmul.f32 %v1175, %v1182
          %v1190 = vmul.f32 %v1176, %v1182
          %v1191 = vmul.f32 %v1177, %v1182
          %v1193 = vlaneseq
          %v1194 = vshrl.u32 %v1193, 7
          %v1195 = vsub.s32 0, %v1194
          %v1196 = vrot.slane %v1088, %v1195
          %v1198 = vadd.f32 %v1184, %v1196
          %v1199 = vadd.f32 %v1185, %v1196
          %v1200 = vadd.f32 %v1186, %v1196
          %v1201 = vadd.f32 %v1187, %v1196
          %v1202 = vadd.f32 %v1188, %v1196
          %v1203 = vadd.f32 %v1189, %v1196
          %v1204 = vadd.f32 %v1190, %v1196
          %v1205 = vadd.f32 %v1191, %v1196
          %v1206 = vpack.c.bf16 %v1199, %v1198
          %v1207 = vpack.c.bf16 %v1201, %v1200
          %v1208 = vpack.c.bf16 %v1203, %v1202
          %v1209 = vpack.c.bf16 %v1205, %v1204
          %v1214 = vunpack.c.l.b16 %v1206
          %v1215 = vunpack.c.h.b16 %v1206
          %v1216 = vunpack.c.l.b16 %v1207
          %v1217 = vunpack.c.h.b16 %v1207
          %v1218 = vunpack.c.l.b16 %v1208
          %v1219 = vunpack.c.h.b16 %v1208
          %v1220 = vunpack.c.l.b16 %v1209
          %v1221 = vunpack.c.h.b16 %v1209
          %v1222 = vpack.c.b16 %v1214, %v1214
          %v1223 = vpack.c.b16 %v1215, %v1215
          %v1224 = vpack.c.b16 %v1216, %v1216
          %v1225 = vpack.c.b16 %v1217, %v1217
          %v1226 = vpack.c.b16 %v1218, %v1218
          %v1227 = vpack.c.b16 %v1219, %v1219
          %v1228 = vpack.c.b16 %v1220, %v1220
          %v1229 = vpack.c.b16 %v1221, %v1221
          %1238 = vst [vmem:[#allocation3] sm:$0xf] %v1222
          %1239 = vst [vmem:[#allocation3 + $0x4] sm:$0xf] %v1223
          %1240 = vst [vmem:[#allocation3 + $0x8] sm:$0xf] %v1224
          %1241 = vst [vmem:[#allocation3 + $0xc] sm:$0xf] %v1225
          %1242 = vst [vmem:[#allocation3 + $0x10] sm:$0xf] %v1226
          %1243 = vst [vmem:[#allocation3 + $0x14] sm:$0xf] %v1227
          %1244 = vst [vmem:[#allocation3 + $0x18] sm:$0xf] %v1228
          %1245 = vst [vmem:[#allocation3 + $0x1c] sm:$0xf] %v1229
        $region100: #{multi_view_block_forward.3} parent=87 // pred_fallthru
          _
        // Predicated region
        $region101: #{multi_view_block_forward.3} parent=87 // pred_check
          %p1246 = pneg %p1074
        $region102: #{multi_view_block_forward.3} parent=87 // pred_check_branch
          %1248 = sbr.rel (%p1246) target = $region104
        $region103: #{multi_view_block_forward.3} parent=87 // pred_region
          %v1249 = vld [vmem:[#allocation3] sm:$0xf]
          %v1250 = vld [vmem:[#allocation3 + $0x4] sm:$0xf]
          %v1251 = vld [vmem:[#allocation3 + $0x8] sm:$0xf]
          %v1252 = vld [vmem:[#allocation3 + $0xc] sm:$0xf]
          %v1253 = vld [vmem:[#allocation3 + $0x10] sm:$0xf]
          %v1254 = vld [vmem:[#allocation3 + $0x14] sm:$0xf]
          %v1255 = vld [vmem:[#allocation3 + $0x18] sm:$0xf]
          %v1256 = vld [vmem:[#allocation3 + $0x1c] sm:$0xf]
          %s1257 = smul.u32 %s40, 16
          %s1258 = smul.addr %s1257, 4
          %s1259 = scalar_lea.vmem %s5, %s1258
          %v1260 = vld [vmem:[%s1259] sm:$0xf]
          %v1261 = vld [vmem:[%s1259 + $0x4] sm:$0xf]
          %v1262 = vld [vmem:[%s1259 + $0x8] sm:$0xf]
          %v1263 = vld [vmem:[%s1259 + $0xc] sm:$0xf]
          %v1264 = vld [vmem:[%s1259 + $0x10] sm:$0xf]
          %v1265 = vld [vmem:[%s1259 + $0x14] sm:$0xf]
          %v1266 = vld [vmem:[%s1259 + $0x18] sm:$0xf]
          %v1267 = vld [vmem:[%s1259 + $0x1c] sm:$0xf]
          %v1268 = vld [vmem:[%s1259 + $0x20] sm:$0xf]
          %v1269 = vld [vmem:[%s1259 + $0x24] sm:$0xf]
          %v1270 = vld [vmem:[%s1259 + $0x28] sm:$0xf]
          %v1271 = vld [vmem:[%s1259 + $0x2c] sm:$0xf]
          %v1272 = vld [vmem:[%s1259 + $0x30] sm:$0xf]
          %v1273 = vld [vmem:[%s1259 + $0x34] sm:$0xf]
          %v1274 = vld [vmem:[%s1259 + $0x38] sm:$0xf]
          %v1275 = vld [vmem:[%s1259 + $0x3c] sm:$0xf]
          %v1284 = vunpack.c.l.b16 %v1249
          %v1285 = vunpack.c.l.b16 %v1250
          %v1286 = vunpack.c.l.b16 %v1251
          %v1287 = vunpack.c.l.b16 %v1252
          %v1288 = vunpack.c.l.b16 %v1253
          %v1289 = vunpack.c.l.b16 %v1254
          %v1290 = vunpack.c.l.b16 %v1255
          %v1291 = vunpack.c.l.b16 %v1256
          %v1292 = vpack.c.b16 %v1285, %v1284
          %v1293 = vpack.c.b16 %v1287, %v1286
          %v1294 = vpack.c.b16 %v1289, %v1288
          %v1295 = vpack.c.b16 %v1291, %v1290
          %v1316 = vunpack.c.l.b16 %v1260
          %v1317 = vunpack.c.l.b16 %v1261
          %v1318 = vunpack.c.l.b16 %v1262
          %v1319 = vunpack.c.l.b16 %v1263
          %v1320 = vunpack.c.l.b16 %v1264
          %v1321 = vunpack.c.l.b16 %v1265
          %v1322 = vunpack.c.l.b16 %v1266
          %v1323 = vunpack.c.l.b16 %v1267
          %v1324 = vunpack.c.l.b16 %v1268
          %v1325 = vunpack.c.l.b16 %v1269
          %v1326 = vunpack.c.l.b16 %v1270
          %v1327 = vunpack.c.l.b16 %v1271
          %v1328 = vunpack.c.l.b16 %v1272
          %v1329 = vunpack.c.l.b16 %v1273
          %v1330 = vunpack.c.l.b16 %v1274
          %v1331 = vunpack.c.l.b16 %v1275
          %v1332 = vpack.c.b16 %v1317, %v1316
          %v1333 = vpack.c.b16 %v1319, %v1318
          %v1334 = vpack.c.b16 %v1321, %v1320
          %v1335 = vpack.c.b16 %v1323, %v1322
          %v1336 = vpack.c.b16 %v1325, %v1324
          %v1337 = vpack.c.b16 %v1327, %v1326
          %v1338 = vpack.c.b16 %v1329, %v1328
          %v1339 = vpack.c.b16 %v1331, %v1330
          %1348 = vmatprep.subr.bf16.mxu0 0
          %1349 = vmatpush1.bf16.msra.mxu0 %v1339
          %1350 = vmatprep.subr.bf16.mxu0 0
          %1351 = vmatpush1.bf16.msra.mxu0 %v1338
          %1352 = vmatprep.subr.bf16.mxu0 0
          %1353 = vmatpush1.bf16.msra.mxu0 %v1337
          %1354 = vmatprep.subr.bf16.mxu0 0
          %1355 = vmatpush1.bf16.msra.mxu0 %v1336
          %1356 = vmatprep.subr.bf16.mxu0 0
          %1357 = vmatpush1.bf16.msra.mxu0 %v1335
          %1358 = vmatprep.subr.bf16.mxu0 0
          %1359 = vmatpush1.bf16.msra.mxu0 %v1334
          %1360 = vmatprep.subr.bf16.mxu0 0
          %1361 = vmatpush1.bf16.msra.mxu0 %v1333
          %1362 = vmatprep.subr.bf16.mxu0 0
          %1363 = vmatpush1.bf16.msra.mxu0 %v1332
          %1364 = vmatprep.subr.bf16.mxu0 0
          %1365 = vmatpush2.bf16.msra.mxu0 0
          %1366 = vmatprep.subr.bf16.mxu0 0
          %1367 = vmatpush2.bf16.msra.mxu0 0
          %1368 = vmatprep.subr.bf16.mxu0 0
          %1369 = vmatpush2.bf16.msra.mxu0 0
          %1370 = vmatprep.subr.bf16.mxu0 0
          %1371 = vmatpush2.bf16.msra.mxu0 0
          %1372 = vmatprep.subr.bf16.mxu0 0
          %1373 = vmatpush2.bf16.msra.mxu0 0
          %1374 = vmatprep.subr.bf16.mxu0 0
          %1375 = vmatpush2.bf16.msra.mxu0 0
          %1376 = vmatprep.subr.bf16.mxu0 0
          %1377 = vmatpush2.bf16.msra.mxu0 0
          %1378 = vmatprep.subr.bf16.mxu0 0
          %1379 = vmatpush2.bf16.msra.mxu0 0
          %1380 = vmatprep.mubr.bf16.mxu0 0
          %1381 = vmatmul.mubr.bf16.gmra.mxu0 %v1292
          %v1382 = vpop.f32.mrf.mxu0
          %v1383 = vadd.f32 0.0, %v1382
          %v1384 = vpop.f32.mrf.mxu0
          %v1385 = vpop.f32.mrf.mxu0
          %v1386 = vadd.f32 0.0, %v1385
          %v1387 = vpop.f32.mrf.mxu0
          %1388 = vmatprep.mubr.bf16.mxu0 0
          %1389 = vmatmul.mubr.bf16.gmra.mxu0 %v1293
          %v1390 = vpop.f32.mrf.mxu0
          %v1391 = vadd.f32 0.0, %v1390
          %v1392 = vpop.f32.mrf.mxu0
          %v1393 = vpop.f32.mrf.mxu0
          %v1394 = vadd.f32 0.0, %v1393
          %v1395 = vpop.f32.mrf.mxu0
          %1396 = vmatprep.mubr.bf16.mxu0 0
          %1397 = vmatmul.mubr.bf16.gmra.mxu0 %v1294
          %v1398 = vpop.f32.mrf.mxu0
          %v1399 = vadd.f32 0.0, %v1398
          %v1400 = vpop.f32.mrf.mxu0
          %v1401 = vpop.f32.mrf.mxu0
          %v1402 = vadd.f32 0.0, %v1401
          %v1403 = vpop.f32.mrf.mxu0
          %1404 = vmatprep.mubr.bf16.mxu0 0
          %1405 = vmatmul.mubr.bf16.gmra.mxu0 %v1295
          %v1406 = vpop.f32.mrf.mxu0
          %v1407 = vadd.f32 0.0, %v1406
          %v1408 = vpop.f32.mrf.mxu0
          %v1409 = vpop.f32.mrf.mxu0
          %v1410 = vadd.f32 0.0, %v1409
          %v1411 = vpop.f32.mrf.mxu0
          %1412 = vdwg.mxu0
          %s1413 = smul.addr %s1257, 4
          %s1414 = scalar_lea.vmem %s6, %s1413
          %v1415 = vld [vmem:[%s1414] sm:$0xf]
          %v1416 = vld [vmem:[%s1414 + $0x4] sm:$0xf]
          %v1417 = vld [vmem:[%s1414 + $0x8] sm:$0xf]
          %v1418 = vld [vmem:[%s1414 + $0xc] sm:$0xf]
          %v1419 = vld [vmem:[%s1414 + $0x10] sm:$0xf]
          %v1420 = vld [vmem:[%s1414 + $0x14] sm:$0xf]
          %v1421 = vld [vmem:[%s1414 + $0x18] sm:$0xf]
          %v1422 = vld [vmem:[%s1414 + $0x1c] sm:$0xf]
          %v1423 = vld [vmem:[%s1414 + $0x20] sm:$0xf]
          %v1424 = vld [vmem:[%s1414 + $0x24] sm:$0xf]
          %v1425 = vld [vmem:[%s1414 + $0x28] sm:$0xf]
          %v1426 = vld [vmem:[%s1414 + $0x2c] sm:$0xf]
          %v1427 = vld [vmem:[%s1414 + $0x30] sm:$0xf]
          %v1428 = vld [vmem:[%s1414 + $0x34] sm:$0xf]
          %v1429 = vld [vmem:[%s1414 + $0x38] sm:$0xf]
          %v1430 = vld [vmem:[%s1414 + $0x3c] sm:$0xf]
          %v1447 = vunpack.c.l.b16 %v1415
          %v1448 = vunpack.c.l.b16 %v1416
          %v1449 = vunpack.c.l.b16 %v1417
          %v1450 = vunpack.c.l.b16 %v1418
          %v1451 = vunpack.c.l.b16 %v1419
          %v1452 = vunpack.c.l.b16 %v1420
          %v1453 = vunpack.c.l.b16 %v1421
          %v1454 = vunpack.c.l.b16 %v1422
          %v1455 = vunpack.c.l.b16 %v1423
          %v1456 = vunpack.c.l.b16 %v1424
          %v1457 = vunpack.c.l.b16 %v1425
          %v1458 = vunpack.c.l.b16 %v1426
          %v1459 = vunpack.c.l.b16 %v1427
          %v1460 = vunpack.c.l.b16 %v1428
          %v1461 = vunpack.c.l.b16 %v1429
          %v1462 = vunpack.c.l.b16 %v1430
          %v1463 = vpack.c.b16 %v1448, %v1447
          %v1464 = vpack.c.b16 %v1450, %v1449
          %v1465 = vpack.c.b16 %v1452, %v1451
          %v1466 = vpack.c.b16 %v1454, %v1453
          %v1467 = vpack.c.b16 %v1456, %v1455
          %v1468 = vpack.c.b16 %v1458, %v1457
          %v1469 = vpack.c.b16 %v1460, %v1459
          %v1470 = vpack.c.b16 %v1462, %v1461
          %1479 = vmatprep.subr.bf16.mxu0 0
          %1480 = vmatpush1.bf16.msra.mxu0 %v1470
          %1481 = vmatprep.subr.bf16.mxu0 0
          %1482 = vmatpush1.bf16.msra.mxu0 %v1469
          %1483 = vmatprep.subr.bf16.mxu0 0
          %1484 = vmatpush1.bf16.msra.mxu0 %v1468
          %1485 = vmatprep.subr.bf16.mxu0 0
          %1486 = vmatpush1.bf16.msra.mxu0 %v1467
          %1487 = vmatprep.subr.bf16.mxu0 0
          %1488 = vmatpush1.bf16.msra.mxu0 %v1466
          %1489 = vmatprep.subr.bf16.mxu0 0
          %1490 = vmatpush1.bf16.msra.mxu0 %v1465
          %1491 = vmatprep.subr.bf16.mxu0 0
          %1492 = vmatpush1.bf16.msra.mxu0 %v1464
          %1493 = vmatprep.subr.bf16.mxu0 0
          %1494 = vmatpush1.bf16.msra.mxu0 %v1463
          %1495 = vmatprep.subr.bf16.mxu0 0
          %1496 = vmatpush2.bf16.msra.mxu0 0
          %1497 = vmatprep.subr.bf16.mxu0 0
          %1498 = vmatpush2.bf16.msra.mxu0 0
          %1499 = vmatprep.subr.bf16.mxu0 0
          %1500 = vmatpush2.bf16.msra.mxu0 0
          %1501 = vmatprep.subr.bf16.mxu0 0
          %1502 = vmatpush2.bf16.msra.mxu0 0
          %1503 = vmatprep.subr.bf16.mxu0 0
          %1504 = vmatpush2.bf16.msra.mxu0 0
          %1505 = vmatprep.subr.bf16.mxu0 0
          %1506 = vmatpush2.bf16.msra.mxu0 0
          %1507 = vmatprep.subr.bf16.mxu0 0
          %1508 = vmatpush2.bf16.msra.mxu0 0
          %1509 = vmatprep.subr.bf16.mxu0 0
          %1510 = vmatpush2.bf16.msra.mxu0 0
          %1511 = vmatprep.mubr.bf16.mxu0 0
          %1512 = vmatmul.mubr.bf16.gmra.mxu0 %v1292
          %v1513 = vpop.f32.mrf.mxu0
          %v1514 = vadd.f32 0.0, %v1513
          %v1515 = vpop.f32.mrf.mxu0
          %v1516 = vpop.f32.mrf.mxu0
          %v1517 = vadd.f32 0.0, %v1516
          %v1518 = vpop.f32.mrf.mxu0
          %1519 = vmatprep.mubr.bf16.mxu0 0
          %1520 = vmatmul.mubr.bf16.gmra.mxu0 %v1293
          %v1521 = vpop.f32.mrf.mxu0
          %v1522 = vadd.f32 0.0, %v1521
          %v1523 = vpop.f32.mrf.mxu0
          %v1524 = vpop.f32.mrf.mxu0
          %v1525 = vadd.f32 0.0, %v1524
          %v1526 = vpop.f32.mrf.mxu0
          %1527 = vmatprep.mubr.bf16.mxu0 0
          %1528 = vmatmul.mubr.bf16.gmra.mxu0 %v1294
          %v1529 = vpop.f32.mrf.mxu0
          %v1530 = vadd.f32 0.0, %v1529
          %v1531 = vpop.f32.mrf.mxu0
          %v1532 = vpop.f32.mrf.mxu0
          %v1533 = vadd.f32 0.0, %v1532
          %v1534 = vpop.f32.mrf.mxu0
          %1535 = vmatprep.mubr.bf16.mxu0 0
          %1536 = vmatmul.mubr.bf16.gmra.mxu0 %v1295
          %v1537 = vpop.f32.mrf.mxu0
          %v1538 = vadd.f32 0.0, %v1537
          %v1539 = vpop.f32.mrf.mxu0
          %v1540 = vpop.f32.mrf.mxu0
          %v1541 = vadd.f32 0.0, %v1540
          %v1542 = vpop.f32.mrf.mxu0
          %1543 = vdwg.mxu0
          %v1544 = vpack.c.bf16 %v1386, %v1383
          %v1545 = vpack.c.bf16 %v1394, %v1391
          %v1546 = vpack.c.bf16 %v1402, %v1399
          %v1547 = vpack.c.bf16 %v1410, %v1407
          %v1552 = vunpack.c.l.b16 %v1544
          %v1553 = vunpack.c.h.b16 %v1544
          %v1554 = vunpack.c.l.b16 %v1545
          %v1555 = vunpack.c.h.b16 %v1545
          %v1556 = vunpack.c.l.b16 %v1546
          %v1557 = vunpack.c.h.b16 %v1546
          %v1558 = vunpack.c.l.b16 %v1547
          %v1559 = vunpack.c.h.b16 %v1547
          %v1560 = vpack.c.b16 %v1552, %v1552
          %v1561 = vpack.c.b16 %v1553, %v1553
          %v1562 = vpack.c.b16 %v1554, %v1554
          %v1563 = vpack.c.b16 %v1555, %v1555
          %v1564 = vpack.c.b16 %v1556, %v1556
          %v1565 = vpack.c.b16 %v1557, %v1557
          %v1566 = vpack.c.b16 %v1558, %v1558
          %v1567 = vpack.c.b16 %v1559, %v1559
          %s1576 = sshra.s32 %s643, 3
          %s1577 = sand.u32 %s643, 7
          %s1578 = smul.u32 %s40, 8
          %s1579 = sadd.s32 %s1576, %s1578
          %s1580 = smul.addr %s1579, 4
          %s1581 = scalar_lea.vmem [#allocation9], %s1580
          %vm1582 = vcmask 257024
          %1583 = vst.msk [vmem:[%s1581] sm:$0xf] %vm1582, %v1560
          %1584 = vst.msk [vmem:[%s1581 + $0x4] sm:$0xf] %vm1582, %v1561
          %1585 = vst.msk [vmem:[%s1581 + $0x8] sm:$0xf] %vm1582, %v1562
          %1586 = vst.msk [vmem:[%s1581 + $0xc] sm:$0xf] %vm1582, %v1563
          %1587 = vst.msk [vmem:[%s1581 + $0x10] sm:$0xf] %vm1582, %v1564
          %1588 = vst.msk [vmem:[%s1581 + $0x14] sm:$0xf] %vm1582, %v1565
          %1589 = vst.msk [vmem:[%s1581 + $0x18] sm:$0xf] %vm1582, %v1566
          %1590 = vst.msk [vmem:[%s1581 + $0x1c] sm:$0xf] %vm1582, %v1567
          %v1591 = vpack.c.bf16 %v1517, %v1514
          %v1592 = vpack.c.bf16 %v1525, %v1522
          %v1593 = vpack.c.bf16 %v1533, %v1530
          %v1594 = vpack.c.bf16 %v1541, %v1538
          %v1599 = vunpack.c.l.b16 %v1591
          %v1600 = vunpack.c.h.b16 %v1591
          %v1601 = vunpack.c.l.b16 %v1592
          %v1602 = vunpack.c.h.b16 %v1592
          %v1603 = vunpack.c.l.b16 %v1593
          %v1604 = vunpack.c.h.b16 %v1593
          %v1605 = vunpack.c.l.b16 %v1594
          %v1606 = vunpack.c.h.b16 %v1594
          %v1607 = vpack.c.b16 %v1599, %v1599
          %v1608 = vpack.c.b16 %v1600, %v1600
          %v1609 = vpack.c.b16 %v1601, %v1601
          %v1610 = vpack.c.b16 %v1602, %v1602
          %v1611 = vpack.c.b16 %v1603, %v1603
          %v1612 = vpack.c.b16 %v1604, %v1604
          %v1613 = vpack.c.b16 %v1605, %v1605
          %v1614 = vpack.c.b16 %v1606, %v1606
          %s1623 = smul.addr %s1579, 4
          %s1624 = scalar_lea.vmem [#allocation10], %s1623
          %1625 = vst.msk [vmem:[%s1624] sm:$0xf] %vm1582, %v1607
          %1626 = vst.msk [vmem:[%s1624 + $0x4] sm:$0xf] %vm1582, %v1608
          %1627 = vst.msk [vmem:[%s1624 + $0x8] sm:$0xf] %vm1582, %v1609
          %1628 = vst.msk [vmem:[%s1624 + $0xc] sm:$0xf] %vm1582, %v1610
          %1629 = vst.msk [vmem:[%s1624 + $0x10] sm:$0xf] %vm1582, %v1611
          %1630 = vst.msk [vmem:[%s1624 + $0x14] sm:$0xf] %vm1582, %v1612
          %1631 = vst.msk [vmem:[%s1624 + $0x18] sm:$0xf] %vm1582, %v1613
          %1632 = vst.msk [vmem:[%s1624 + $0x1c] sm:$0xf] %vm1582, %v1614
        $region104: #{multi_view_block_forward.3} parent=87 // pred_fallthru
          _
        %s1633 = sshra.s32 %s643, 3
        %s1634 = sand.u32 %s643, 7
        %s1635 = smul.u32 %s40, 8
        %s1636 = sadd.s32 %s1633, %s1635
        %s1637 = smul.addr %s1636, 4
        %s1638 = scalar_lea.vmem [#allocation9], %s1637
        %v1639 = vld [vmem:[%s1638] sm:$0xf]
        %v1640 = vld [vmem:[%s1638 + $0x4] sm:$0xf]
        %v1641 = vld [vmem:[%s1638 + $0x8] sm:$0xf]
        %v1642 = vld [vmem:[%s1638 + $0xc] sm:$0xf]
        %v1643 = vld [vmem:[%s1638 + $0x10] sm:$0xf]
        %v1644 = vld [vmem:[%s1638 + $0x14] sm:$0xf]
        %v1645 = vld [vmem:[%s1638 + $0x18] sm:$0xf]
        %v1646 = vld [vmem:[%s1638 + $0x1c] sm:$0xf]
        %s1647 = smul.addr %s1636, 4
        %s1648 = scalar_lea.vmem [#allocation10], %s1647
        %v1649 = vld [vmem:[%s1648] sm:$0xf]
        %v1650 = vld [vmem:[%s1648 + $0x4] sm:$0xf]
        %v1651 = vld [vmem:[%s1648 + $0x8] sm:$0xf]
        %v1652 = vld [vmem:[%s1648 + $0xc] sm:$0xf]
        %v1653 = vld [vmem:[%s1648 + $0x10] sm:$0xf]
        %v1654 = vld [vmem:[%s1648 + $0x14] sm:$0xf]
        %v1655 = vld [vmem:[%s1648 + $0x18] sm:$0xf]
        %v1656 = vld [vmem:[%s1648 + $0x1c] sm:$0xf]
        %s1657 = smul.addr %s1635, 4
        %s1658 = scalar_lea.vmem [#allocation4], %s1657
        %v1659 = vld [vmem:[%s1658] sm:$0xf]
        %v1660 = vld [vmem:[%s1658 + $0x4] sm:$0xf]
        %v1661 = vld [vmem:[%s1658 + $0x8] sm:$0xf]
        %v1662 = vld [vmem:[%s1658 + $0xc] sm:$0xf]
        %v1663 = vld [vmem:[%s1658 + $0x10] sm:$0xf]
        %v1664 = vld [vmem:[%s1658 + $0x14] sm:$0xf]
        %v1665 = vld [vmem:[%s1658 + $0x18] sm:$0xf]
        %v1666 = vld [vmem:[%s1658 + $0x1c] sm:$0xf]
        %v1675 = vunpack.c.l.b16 %v1659
        %v1676 = vunpack.c.l.b16 %v1660
        %v1677 = vunpack.c.l.b16 %v1661
        %v1678 = vunpack.c.l.b16 %v1662
        %v1679 = vunpack.c.l.b16 %v1663
        %v1680 = vunpack.c.l.b16 %v1664
        %v1681 = vunpack.c.l.b16 %v1665
        %v1682 = vunpack.c.l.b16 %v1666
        %v1683 = vpack.c.b16 %v1676, %v1675
        %v1684 = vpack.c.b16 %v1678, %v1677
        %v1685 = vpack.c.b16 %v1680, %v1679
        %v1686 = vpack.c.b16 %v1682, %v1681
        %v1695 = vunpack.c.l.b16 %v1639
        %v1696 = vunpack.c.l.b16 %v1640
        %v1697 = vunpack.c.l.b16 %v1641
        %v1698 = vunpack.c.l.b16 %v1642
        %v1699 = vunpack.c.l.b16 %v1643
        %v1700 = vunpack.c.l.b16 %v1644
        %v1701 = vunpack.c.l.b16 %v1645
        %v1702 = vunpack.c.l.b16 %v1646
        %v1703 = vpack.c.b16 %v1696, %v1695
        %v1704 = vpack.c.b16 %v1698, %v1697
        %v1705 = vpack.c.b16 %v1700, %v1699
        %v1706 = vpack.c.b16 %v1702, %v1701
        %vm1707 = vcmask 261120
        %v1709 = vsel %vm1707, %v1683, 0
        %v1712 = vsel %vm1707, %v1684, 0
        %v1715 = vsel %vm1707, %v1685, 0
        %v1718 = vsel %vm1707, %v1686, 0
        %v1721 = vsel %vm1707, %v1703, 0
        %v1724 = vsel %vm1707, %v1704, 0
        %v1727 = vsel %vm1707, %v1705, 0
        %v1730 = vsel %vm1707, %v1706, 0
        %1732 = vmatprep.subr.bf16.mxu0 0
        %1733 = vmatpush1.bf16.xpose.msra.mxu0 0
        %1734 = vmatprep.subr.bf16.mxu0 0
        %1735 = vmatpush1.bf16.xpose.msra.mxu0 0
        %1736 = vmatprep.subr.bf16.mxu0 0
        %1737 = vmatpush1.bf16.xpose.msra.mxu0 0
        %1738 = vmatprep.subr.bf16.mxu0 0
        %1739 = vmatpush1.bf16.xpose.msra.mxu0 0
        %1740 = vmatprep.subr.bf16.mxu0 0
        %1741 = vmatpush1.bf16.xpose.msra.mxu0 %v1730
        %1742 = vmatprep.subr.bf16.mxu0 0
        %1743 = vmatpush1.bf16.xpose.msra.mxu0 %v1727
        %1744 = vmatprep.subr.bf16.mxu0 0
        %1745 = vmatpush1.bf16.xpose.msra.mxu0 %v1724
        %1746 = vmatprep.subr.bf16.mxu0 0
        %1747 = vmatpush1.bf16.xpose.msra.mxu0 %v1721
        %1748 = vmatprep.subr.bf16.mxu0 0
        %1749 = vmatpush2.bf16.xpose.msra.mxu0 0
        %1750 = vmatprep.subr.bf16.mxu0 0
        %1751 = vmatpush2.bf16.xpose.msra.mxu0 0
        %1752 = vmatprep.subr.bf16.mxu0 0
        %1753 = vmatpush2.bf16.xpose.msra.mxu0 0
        %1754 = vmatprep.subr.bf16.mxu0 0
        %1755 = vmatpush2.bf16.xpose.msra.mxu0 0
        %1756 = vmatprep.subr.bf16.mxu0 0
        %1757 = vmatpush2.bf16.xpose.msra.mxu0 0
        %1758 = vmatprep.subr.bf16.mxu0 0
        %1759 = vmatpush2.bf16.xpose.msra.mxu0 0
        %1760 = vmatprep.subr.bf16.mxu0 0
        %1761 = vmatpush2.bf16.xpose.msra.mxu0 0
        %1762 = vmatprep.subr.bf16.mxu0 0
        %1763 = vmatpush2.bf16.xpose.msra.mxu0 0
        %1764 = vmatprep.mubr.bf16.mxu0 0
        %1765 = vmatmul.mubr.bf16.gmra.mxu0 %v1709
        %v1766 = vpop.f32.mrf.mxu0
        %v1767 = vadd.f32 0.0, %v1766
        %v1768 = vpop.f32.mrf.mxu0
        %v1769 = vpop.f32.mrf.mxu0
        %v1770 = vadd.f32 0.0, %v1769
        %v1771 = vpop.f32.mrf.mxu0
        %1772 = vmatprep.mubr.bf16.mxu0 0
        %1773 = vmatmul.mubr.bf16.gmra.mxu0 %v1712
        %v1774 = vpop.f32.mrf.mxu0
        %v1775 = vadd.f32 0.0, %v1774
        %v1776 = vpop.f32.mrf.mxu0
        %v1777 = vpop.f32.mrf.mxu0
        %v1778 = vadd.f32 0.0, %v1777
        %v1779 = vpop.f32.mrf.mxu0
        %1780 = vmatprep.mubr.bf16.mxu0 0
        %1781 = vmatmul.mubr.bf16.gmra.mxu0 %v1715
        %v1782 = vpop.f32.mrf.mxu0
        %v1783 = vadd.f32 0.0, %v1782
        %v1784 = vpop.f32.mrf.mxu0
        %v1785 = vpop.f32.mrf.mxu0
        %v1786 = vadd.f32 0.0, %v1785
        %v1787 = vpop.f32.mrf.mxu0
        %1788 = vmatprep.mubr.bf16.mxu0 0
        %1789 = vmatmul.mubr.bf16.gmra.mxu0 %v1718
        %v1790 = vpop.f32.mrf.mxu0
        %v1791 = vadd.f32 0.0, %v1790
        %v1792 = vpop.f32.mrf.mxu0
        %v1793 = vpop.f32.mrf.mxu0
        %v1794 = vadd.f32 0.0, %v1793
        %v1795 = vpop.f32.mrf.mxu0
        %1796 = vdwg.mxu0
        %s1797 = smul.u32 %s40, 64
        %s1798 = scalar_lea.vmem [#allocation5], %s1797
        %v1799 = vld [vmem:[%s1798] sm:$0xff]
        %v1800 = vld [vmem:[%s1798 + $0x8] sm:$0xff]
        %v1801 = vld [vmem:[%s1798 + $0x10] sm:$0xff]
        %v1802 = vld [vmem:[%s1798 + $0x18] sm:$0xff]
        %v1803 = vld [vmem:[%s1798 + $0x20] sm:$0xff]
        %v1804 = vld [vmem:[%s1798 + $0x28] sm:$0xff]
        %v1805 = vld [vmem:[%s1798 + $0x30] sm:$0xff]
        %v1806 = vld [vmem:[%s1798 + $0x38] sm:$0xff]
        %vm1807 = vcmask 523264
        %v1808 = vsel %vm1807, %v1767, -inf
        %1809 = vmax.xlane.f32.xlu0 %v1808
        %v1810 = vpop.xlane.xlu0 %1809
        %v1811 = vsel %vm1807, %v1770, -inf
        %1812 = vmax.xlane.f32.xlu0 %v1811
        %v1813 = vpop.xlane.xlu0 %1812
        %v1814 = vsel %vm1807, %v1775, -inf
        %1815 = vmax.xlane.f32.xlu0 %v1814
        %v1816 = vpop.xlane.xlu0 %1815
        %v1817 = vsel %vm1807, %v1778, -inf
        %1818 = vmax.xlane.f32.xlu0 %v1817
        %v1819 = vpop.xlane.xlu0 %1818
        %v1820 = vsel %vm1807, %v1783, -inf
        %1821 = vmax.xlane.f32.xlu0 %v1820
        %v1822 = vpop.xlane.xlu0 %1821
        %v1823 = vsel %vm1807, %v1786, -inf
        %1824 = vmax.xlane.f32.xlu0 %v1823
        %v1825 = vpop.xlane.xlu0 %1824
        %v1826 = vsel %vm1807, %v1791, -inf
        %1827 = vmax.xlane.f32.xlu0 %v1826
        %v1828 = vpop.xlane.xlu0 %1827
        %v1829 = vsel %vm1807, %v1794, -inf
        %1830 = vmax.xlane.f32.xlu0 %v1829
        %v1831 = vpop.xlane.xlu0 %1830
        %v1832 = vmax.f32 %v1799, %v1810
        %v1833 = vmax.f32 %v1800, %v1813
        %v1834 = vmax.f32 %v1801, %v1816
        %v1835 = vmax.f32 %v1802, %v1819
        %v1836 = vmax.f32 %v1803, %v1822
        %v1837 = vmax.f32 %v1804, %v1825
        %v1838 = vmax.f32 %v1805, %v1828
        %v1839 = vmax.f32 %v1806, %v1831
        %v1840 = vsub.f32 %v1799, %v1832
        %v1841 = vsub.f32 %v1800, %v1833
        %v1842 = vsub.f32 %v1801, %v1834
        %v1843 = vsub.f32 %v1802, %v1835
        %v1844 = vsub.f32 %v1803, %v1836
        %v1845 = vsub.f32 %v1804, %v1837
        %v1846 = vsub.f32 %v1805, %v1838
        %v1847 = vsub.f32 %v1806, %v1839
        %v1848 = vmul.f32 %v1840, 1.442695
        %v1849 = vpow.pop %v1848
        %v1850 = vmul.f32 %v1841, 1.442695
        %v1851 = vpow.pop %v1850
        %v1852 = vmul.f32 %v1842, 1.442695
        %v1853 = vpow.pop %v1852
        %v1854 = vmul.f32 %v1843, 1.442695
        %v1855 = vpow.pop %v1854
        %v1856 = vmul.f32 %v1844, 1.442695
        %v1857 = vpow.pop %v1856
        %v1858 = vmul.f32 %v1845, 1.442695
        %v1859 = vpow.pop %v1858
        %v1860 = vmul.f32 %v1846, 1.442695
        %v1861 = vpow.pop %v1860
        %v1862 = vmul.f32 %v1847, 1.442695
        %v1863 = vpow.pop %v1862
        %1865 = vset.pattern.permute.xlu0 0
        %1866 = vperm.xlu0 %1865, %v1832
        %v1867 = vpop.permute.xlu0 %1866
        %1870 = vset.pattern.permute.xlu0 0
        %1871 = vperm.xlu0 %1870, %v1833
        %v1872 = vpop.permute.xlu0 %1871
        %1875 = vset.pattern.permute.xlu0 0
        %1876 = vperm.xlu0 %1875, %v1834
        %v1877 = vpop.permute.xlu0 %1876
        %1880 = vset.pattern.permute.xlu0 0
        %1881 = vperm.xlu0 %1880, %v1835
        %v1882 = vpop.permute.xlu0 %1881
        %1885 = vset.pattern.permute.xlu0 0
        %1886 = vperm.xlu0 %1885, %v1836
        %v1887 = vpop.permute.xlu0 %1886
        %1890 = vset.pattern.permute.xlu0 0
        %1891 = vperm.xlu0 %1890, %v1837
        %v1892 = vpop.permute.xlu0 %1891
        %1895 = vset.pattern.permute.xlu0 0
        %1896 = vperm.xlu0 %1895, %v1838
        %v1897 = vpop.permute.xlu0 %1896
        %1900 = vset.pattern.permute.xlu0 0
        %1901 = vperm.xlu0 %1900, %v1839
        %v1902 = vpop.permute.xlu0 %1901
        %v1904 = vsub.f32 %v1767, %v1867
        %v1905 = vsub.f32 %v1770, %v1872
        %v1906 = vsub.f32 %v1775, %v1877
        %v1907 = vsub.f32 %v1778, %v1882
        %v1908 = vsub.f32 %v1783, %v1887
        %v1909 = vsub.f32 %v1786, %v1892
        %v1910 = vsub.f32 %v1791, %v1897
        %v1911 = vsub.f32 %v1794, %v1902
        %v1912 = vmul.f32 %v1904, 1.442695
        %v1913 = vpow.pop %v1912
        %v1914 = vmul.f32 %v1905, 1.442695
        %v1915 = vpow.pop %v1914
        %v1916 = vmul.f32 %v1906, 1.442695
        %v1917 = vpow.pop %v1916
        %v1918 = vmul.f32 %v1907, 1.442695
        %v1919 = vpow.pop %v1918
        %v1920 = vmul.f32 %v1908, 1.442695
        %v1921 = vpow.pop %v1920
        %v1922 = vmul.f32 %v1909, 1.442695
        %v1923 = vpow.pop %v1922
        %v1924 = vmul.f32 %v1910, 1.442695
        %v1925 = vpow.pop %v1924
        %v1926 = vmul.f32 %v1911, 1.442695
        %v1927 = vpow.pop %v1926
        %s1928 = scalar_lea.vmem [#allocation6], %s1797
        %v1929 = vld [vmem:[%s1928] sm:$0xff]
        %v1930 = vld [vmem:[%s1928 + $0x8] sm:$0xff]
        %v1931 = vld [vmem:[%s1928 + $0x10] sm:$0xff]
        %v1932 = vld [vmem:[%s1928 + $0x18] sm:$0xff]
        %v1933 = vld [vmem:[%s1928 + $0x20] sm:$0xff]
        %v1934 = vld [vmem:[%s1928 + $0x28] sm:$0xff]
        %v1935 = vld [vmem:[%s1928 + $0x30] sm:$0xff]
        %v1936 = vld [vmem:[%s1928 + $0x38] sm:$0xff]
        %v1937 = vmul.f32 %v1849, %v1929
        %v1938 = vmul.f32 %v1851, %v1930
        %v1939 = vmul.f32 %v1853, %v1931
        %v1940 = vmul.f32 %v1855, %v1932
        %v1941 = vmul.f32 %v1857, %v1933
        %v1942 = vmul.f32 %v1859, %v1934
        %v1943 = vmul.f32 %v1861, %v1935
        %v1944 = vmul.f32 %v1863, %v1936
        %v1945 = vsel %vm1807, %v1913, 0.0
        %1946 = vadd.xlane.f32.xlu0 %v1945
        %v1947 = vpop.xlane.xlu0 %1946
        %v1948 = vsel %vm1807, %v1915, 0.0
        %1949 = vadd.xlane.f32.xlu0 %v1948
        %v1950 = vpop.xlane.xlu0 %1949
        %v1951 = vsel %vm1807, %v1917, 0.0
        %1952 = vadd.xlane.f32.xlu0 %v1951
        %v1953 = vpop.xlane.xlu0 %1952
        %v1954 = vsel %vm1807, %v1919, 0.0
        %1955 = vadd.xlane.f32.xlu0 %v1954
        %v1956 = vpop.xlane.xlu0 %1955
        %v1957 = vsel %vm1807, %v1921, 0.0
        %1958 = vadd.xlane.f32.xlu0 %v1957
        %v1959 = vpop.xlane.xlu0 %1958
        %v1960 = vsel %vm1807, %v1923, 0.0
        %1961 = vadd.xlane.f32.xlu0 %v1960
        %v1962 = vpop.xlane.xlu0 %1961
        %v1963 = vsel %vm1807, %v1925, 0.0
        %1964 = vadd.xlane.f32.xlu0 %v1963
        %v1965 = vpop.xlane.xlu0 %1964
        %v1966 = vsel %vm1807, %v1927, 0.0
        %1967 = vadd.xlane.f32.xlu0 %v1966
        %v1968 = vpop.xlane.xlu0 %1967
        %v1969 = vadd.f32 %v1937, %v1947
        %v1970 = vadd.f32 %v1938, %v1950
        %v1971 = vadd.f32 %v1939, %v1953
        %v1972 = vadd.f32 %v1940, %v1956
        %v1973 = vadd.f32 %v1941, %v1959
        %v1974 = vadd.f32 %v1942, %v1962
        %v1975 = vadd.f32 %v1943, %v1965
        %v1976 = vadd.f32 %v1944, %v1968
        %vm1977 = vcmask 7168
        %1978 = vst.msk [vmem:[%s1928] sm:$0xff] %vm1977, %v1969
        %1979 = vst.msk [vmem:[%s1928 + $0x8] sm:$0xff] %vm1977, %v1970
        %1980 = vst.msk [vmem:[%s1928 + $0x10] sm:$0xff] %vm1977, %v1971
        %1981 = vst.msk [vmem:[%s1928 + $0x18] sm:$0xff] %vm1977, %v1972
        %1982 = vst.msk [vmem:[%s1928 + $0x20] sm:$0xff] %vm1977, %v1973
        %1983 = vst.msk [vmem:[%s1928 + $0x28] sm:$0xff] %vm1977, %v1974
        %1984 = vst.msk [vmem:[%s1928 + $0x30] sm:$0xff] %vm1977, %v1975
        %1985 = vst.msk [vmem:[%s1928 + $0x38] sm:$0xff] %vm1977, %v1976
        %s1986 = scalar_lea.vmem [#allocation7], %s1797
        %v1987 = vld [vmem:[%s1986] sm:$0xff]
        %v1988 = vld [vmem:[%s1986 + $0x8] sm:$0xff]
        %v1989 = vld [vmem:[%s1986 + $0x10] sm:$0xff]
        %v1990 = vld [vmem:[%s1986 + $0x18] sm:$0xff]
        %v1991 = vld [vmem:[%s1986 + $0x20] sm:$0xff]
        %v1992 = vld [vmem:[%s1986 + $0x28] sm:$0xff]
        %v1993 = vld [vmem:[%s1986 + $0x30] sm:$0xff]
        %v1994 = vld [vmem:[%s1986 + $0x38] sm:$0xff]
        %1996 = vset.pattern.permute.xlu0 0
        %1997 = vperm.xlu0 %1996, %v1849
        %v1998 = vpop.permute.xlu0 %1997
        %2001 = vset.pattern.permute.xlu0 0
        %2002 = vperm.xlu0 %2001, %v1851
        %v2003 = vpop.permute.xlu0 %2002
        %2006 = vset.pattern.permute.xlu0 0
        %2007 = vperm.xlu0 %2006, %v1853
        %v2008 = vpop.permute.xlu0 %2007
        %2011 = vset.pattern.permute.xlu0 0
        %2012 = vperm.xlu0 %2011, %v1855
        %v2013 = vpop.permute.xlu0 %2012
        %2016 = vset.pattern.permute.xlu0 0
        %2017 = vperm.xlu0 %2016, %v1857
        %v2018 = vpop.permute.xlu0 %2017
        %2021 = vset.pattern.permute.xlu0 0
        %2022 = vperm.xlu0 %2021, %v1859
        %v2023 = vpop.permute.xlu0 %2022
        %2026 = vset.pattern.permute.xlu0 0
        %2027 = vperm.xlu0 %2026, %v1861
        %v2028 = vpop.permute.xlu0 %2027
        %2031 = vset.pattern.permute.xlu0 0
        %2032 = vperm.xlu0 %2031, %v1863
        %v2033 = vpop.permute.xlu0 %2032
        %v2035 = vmul.f32 %v1998, %v1987
        %v2036 = vmul.f32 %v2003, %v1988
        %v2037 = vmul.f32 %v2008, %v1989
        %v2038 = vmul.f32 %v2013, %v1990
        %v2039 = vmul.f32 %v2018, %v1991
        %v2040 = vmul.f32 %v2023, %v1992
        %v2041 = vmul.f32 %v2028, %v1993
        %v2042 = vmul.f32 %v2033, %v1994
        %v2043 = vpack.c.bf16 %v1915, %v1913
        %v2044 = vpack.c.bf16 %v1919, %v1917
        %v2045 = vpack.c.bf16 %v1923, %v1921
        %v2046 = vpack.c.bf16 %v1927, %v1925
        %v2055 = vunpack.c.l.b16 %v1649
        %v2056 = vunpack.c.l.b16 %v1650
        %v2057 = vunpack.c.l.b16 %v1651
        %v2058 = vunpack.c.l.b16 %v1652
        %v2059 = vunpack.c.l.b16 %v1653
        %v2060 = vunpack.c.l.b16 %v1654
        %v2061 = vunpack.c.l.b16 %v1655
        %v2062 = vunpack.c.l.b16 %v1656
        %v2063 = vpack.c.b16 %v2056, %v2055
        %v2064 = vpack.c.b16 %v2058, %v2057
        %v2065 = vpack.c.b16 %v2060, %v2059
        %v2066 = vpack.c.b16 %v2062, %v2061
        %v2072 = vsel %vm1807, %v2043, 0
        %v2075 = vsel %vm1807, %v2044, 0
        %v2078 = vsel %vm1807, %v2045, 0
        %v2081 = vsel %vm1807, %v2046, 0
        %2083 = vmatprep.subr.bf16.mxu0 0
        %2084 = vmatpush1.bf16.msra.mxu0 0
        %2085 = vmatprep.subr.bf16.mxu0 0
        %2086 = vmatpush1.bf16.msra.mxu0 0
        %2087 = vmatprep.subr.bf16.mxu0 0
        %2088 = vmatpush1.bf16.msra.mxu0 0
        %2089 = vmatprep.subr.bf16.mxu0 0
        %2090 = vmatpush1.bf16.msra.mxu0 0
        %2091 = vmatprep.subr.bf16.mxu0 0
        %2092 = vmatpush1.bf16.msra.mxu0 %v2066
        %2093 = vmatprep.subr.bf16.mxu0 0
        %2094 = vmatpush1.bf16.msra.mxu0 %v2065
        %2095 = vmatprep.subr.bf16.mxu0 0
        %2096 = vmatpush1.bf16.msra.mxu0 %v2064
        %2097 = vmatprep.subr.bf16.mxu0 0
        %2098 = vmatpush1.bf16.msra.mxu0 %v2063
        %2099 = vmatprep.subr.bf16.mxu0 0
        %2100 = vmatpush2.bf16.msra.mxu0 0
        %2101 = vmatprep.subr.bf16.mxu0 0
        %2102 = vmatpush2.bf16.msra.mxu0 0
        %2103 = vmatprep.subr.bf16.mxu0 0
        %2104 = vmatpush2.bf16.msra.mxu0 0
        %2105 = vmatprep.subr.bf16.mxu0 0
        %2106 = vmatpush2.bf16.msra.mxu0 0
        %2107 = vmatprep.subr.bf16.mxu0 0
        %2108 = vmatpush2.bf16.msra.mxu0 0
        %2109 = vmatprep.subr.bf16.mxu0 0
        %2110 = vmatpush2.bf16.msra.mxu0 0
        %2111 = vmatprep.subr.bf16.mxu0 0
        %2112 = vmatpush2.bf16.msra.mxu0 0
        %2113 = vmatprep.subr.bf16.mxu0 0
        %2114 = vmatpush2.bf16.msra.mxu0 0
        %2115 = vmatprep.mubr.bf16.mxu0 0
        %2116 = vmatmul.mubr.bf16.gmra.mxu0 %v2072
        %v2117 = vpop.f32.mrf.mxu0
        %v2118 = vadd.f32 0.0, %v2117
        %v2119 = vpop.f32.mrf.mxu0
        %v2120 = vpop.f32.mrf.mxu0
        %v2121 = vadd.f32 0.0, %v2120
        %v2122 = vpop.f32.mrf.mxu0
        %2123 = vmatprep.mubr.bf16.mxu0 0
        %2124 = vmatmul.mubr.bf16.gmra.mxu0 %v2075
        %v2125 = vpop.f32.mrf.mxu0
        %v2126 = vadd.f32 0.0, %v2125
        %v2127 = vpop.f32.mrf.mxu0
        %v2128 = vpop.f32.mrf.mxu0
        %v2129 = vadd.f32 0.0, %v2128
        %v2130 = vpop.f32.mrf.mxu0
        %2131 = vmatprep.mubr.bf16.mxu0 0
        %2132 = vmatmul.mubr.bf16.gmra.mxu0 %v2078
        %v2133 = vpop.f32.mrf.mxu0
        %v2134 = vadd.f32 0.0, %v2133
        %v2135 = vpop.f32.mrf.mxu0
        %v2136 = vpop.f32.mrf.mxu0
        %v2137 = vadd.f32 0.0, %v2136
        %v2138 = vpop.f32.mrf.mxu0
        %2139 = vmatprep.mubr.bf16.mxu0 0
        %2140 = vmatmul.mubr.bf16.gmra.mxu0 %v2081
        %v2141 = vpop.f32.mrf.mxu0
        %v2142 = vadd.f32 0.0, %v2141
        %v2143 = vpop.f32.mrf.mxu0
        %v2144 = vpop.f32.mrf.mxu0
        %v2145 = vadd.f32 0.0, %v2144
        %v2146 = vpop.f32.mrf.mxu0
        %2147 = vdwg.mxu0
        %v2148 = vadd.f32 %v2035, %v2118
        %v2149 = vadd.f32 %v2036, %v2121
        %v2150 = vadd.f32 %v2037, %v2126
        %v2151 = vadd.f32 %v2038, %v2129
        %v2152 = vadd.f32 %v2039, %v2134
        %v2153 = vadd.f32 %v2040, %v2137
        %v2154 = vadd.f32 %v2041, %v2142
        %v2155 = vadd.f32 %v2042, %v2145
        %2156 = vst.msk [vmem:[%s1986] sm:$0xff] %vm1707, %v2148
        %2157 = vst.msk [vmem:[%s1986 + $0x8] sm:$0xff] %vm1707, %v2149
        %2158 = vst.msk [vmem:[%s1986 + $0x10] sm:$0xff] %vm1707, %v2150
        %2159 = vst.msk [vmem:[%s1986 + $0x18] sm:$0xff] %vm1707, %v2151
        %2160 = vst.msk [vmem:[%s1986 + $0x20] sm:$0xff] %vm1707, %v2152
        %2161 = vst.msk [vmem:[%s1986 + $0x28] sm:$0xff] %vm1707, %v2153
        %2162 = vst.msk [vmem:[%s1986 + $0x30] sm:$0xff] %vm1707, %v2154
        %2163 = vst.msk [vmem:[%s1986 + $0x38] sm:$0xff] %vm1707, %v2155
        %2164 = vst.msk [vmem:[%s1798] sm:$0xff] %vm1977, %v1832
        %2165 = vst.msk [vmem:[%s1798 + $0x8] sm:$0xff] %vm1977, %v1833
        %2166 = vst.msk [vmem:[%s1798 + $0x10] sm:$0xff] %vm1977, %v1834
        %2167 = vst.msk [vmem:[%s1798 + $0x18] sm:$0xff] %vm1977, %v1835
        %2168 = vst.msk [vmem:[%s1798 + $0x20] sm:$0xff] %vm1977, %v1836
        %2169 = vst.msk [vmem:[%s1798 + $0x28] sm:$0xff] %vm1977, %v1837
        %2170 = vst.msk [vmem:[%s1798 + $0x30] sm:$0xff] %vm1977, %v1838
        %2171 = vst.msk [vmem:[%s1798 + $0x38] sm:$0xff] %vm1977, %v1839
        // Predicated region
        $region105: #{multi_view_block_forward.3} parent=87 // pred_check
          %p2172 = pneg %p644
        $region106: #{multi_view_block_forward.3} parent=87 // pred_check_branch
          %2174 = sbr.rel (%p2172) target = $region108
        $region107: #{multi_view_block_forward.3} parent=87 // pred_region
          %v2175 = vld [vmem:[%s1986] sm:$0xff]
          %v2176 = vld [vmem:[%s1986 + $0x8] sm:$0xff]
          %v2177 = vld [vmem:[%s1986 + $0x10] sm:$0xff]
          %v2178 = vld [vmem:[%s1986 + $0x18] sm:$0xff]
          %v2179 = vld [vmem:[%s1986 + $0x20] sm:$0xff]
          %v2180 = vld [vmem:[%s1986 + $0x28] sm:$0xff]
          %v2181 = vld [vmem:[%s1986 + $0x30] sm:$0xff]
          %v2182 = vld [vmem:[%s1986 + $0x38] sm:$0xff]
          %v2183 = vld [vmem:[%s1928] sm:$0xff]
          %v2184 = vld [vmem:[%s1928 + $0x8] sm:$0xff]
          %v2185 = vld [vmem:[%s1928 + $0x10] sm:$0xff]
          %v2186 = vld [vmem:[%s1928 + $0x18] sm:$0xff]
          %v2187 = vld [vmem:[%s1928 + $0x20] sm:$0xff]
          %v2188 = vld [vmem:[%s1928 + $0x28] sm:$0xff]
          %v2189 = vld [vmem:[%s1928 + $0x30] sm:$0xff]
          %v2190 = vld [vmem:[%s1928 + $0x38] sm:$0xff]
          %v2191 = vrcp.pop %v2183
          %v2192 = vrcp.pop %v2184
          %v2193 = vrcp.pop %v2185
          %v2194 = vrcp.pop %v2186
          %v2195 = vrcp.pop %v2187
          %v2196 = vrcp.pop %v2188
          %v2197 = vrcp.pop %v2189
          %v2198 = vrcp.pop %v2190
          %2200 = vset.pattern.permute.xlu0 0
          %2201 = vperm.xlu0 %2200, %v2191
          %v2202 = vpop.permute.xlu0 %2201
          %2205 = vset.pattern.permute.xlu0 0
          %2206 = vperm.xlu0 %2205, %v2192
          %v2207 = vpop.permute.xlu0 %2206
          %2210 = vset.pattern.permute.xlu0 0
          %2211 = vperm.xlu0 %2210, %v2193
          %v2212 = vpop.permute.xlu0 %2211
          %2215 = vset.pattern.permute.xlu0 0
          %2216 = vperm.xlu0 %2215, %v2194
          %v2217 = vpop.permute.xlu0 %2216
          %2220 = vset.pattern.permute.xlu0 0
          %2221 = vperm.xlu0 %2220, %v2195
          %v2222 = vpop.permute.xlu0 %2221
          %2225 = vset.pattern.permute.xlu0 0
          %2226 = vperm.xlu0 %2225, %v2196
          %v2227 = vpop.permute.xlu0 %2226
          %2230 = vset.pattern.permute.xlu0 0
          %2231 = vperm.xlu0 %2230, %v2197
          %v2232 = vpop.permute.xlu0 %2231
          %2235 = vset.pattern.permute.xlu0 0
          %2236 = vperm.xlu0 %2235, %v2198
          %v2237 = vpop.permute.xlu0 %2236
          %v2239 = vmul.f32 %v2175, %v2202
          %v2240 = vmul.f32 %v2176, %v2207
          %v2241 = vmul.f32 %v2177, %v2212
          %v2242 = vmul.f32 %v2178, %v2217
          %v2243 = vmul.f32 %v2179, %v2222
          %v2244 = vmul.f32 %v2180, %v2227
          %v2245 = vmul.f32 %v2181, %v2232
          %v2246 = vmul.f32 %v2182, %v2237
          %v2247 = vld [vmem:[#allocation8] sm:$0xff]
          %v2248 = vld [vmem:[#allocation8 + $0x8] sm:$0xff]
          %v2249 = vld [vmem:[#allocation8 + $0x10] sm:$0xff]
          %v2250 = vld [vmem:[#allocation8 + $0x18] sm:$0xff]
          %v2251 = vld [vmem:[#allocation8 + $0x20] sm:$0xff]
          %v2252 = vld [vmem:[#allocation8 + $0x28] sm:$0xff]
          %v2253 = vld [vmem:[#allocation8 + $0x30] sm:$0xff]
          %v2254 = vld [vmem:[#allocation8 + $0x38] sm:$0xff]
          %v2255 = vpack.c.bf16 %v2240, %v2239
          %v2256 = vpack.c.bf16 %v2242, %v2241
          %v2257 = vpack.c.bf16 %v2244, %v2243
          %v2258 = vpack.c.bf16 %v2246, %v2245
          %s2259 = smul.u32 %s40, 4
          %s2260 = smul.addr %s2259, 4
          %s2261 = scalar_lea.vmem %s7, %s2260
          %v2262 = vld [vmem:[%s2261] sm:$0xf]
          %v2263 = vld [vmem:[%s2261 + $0x4] sm:$0xf]
          %v2264 = vld [vmem:[%s2261 + $0x8] sm:$0xf]
          %v2265 = vld [vmem:[%s2261 + $0xc] sm:$0xf]
          %v2270 = vunpack.c.l.b16 %v2262
          %v2271 = vunpack.c.l.b16 %v2263
          %v2272 = vunpack.c.l.b16 %v2264
          %v2273 = vunpack.c.l.b16 %v2265
          %v2274 = vpack.c.b16 %v2271, %v2270
          %v2275 = vpack.c.b16 %v2273, %v2272
          %v2279 = vsel %vm1707, %v2255, 0
          %v2282 = vsel %vm1707, %v2256, 0
          %v2285 = vsel %vm1707, %v2257, 0
          %v2288 = vsel %vm1707, %v2258, 0
          %2290 = vmatprep.subr.bf16.mxu0 0
          %2291 = vmatpush1.bf16.msra.mxu0 0
          %2292 = vmatprep.subr.bf16.mxu0 0
          %2293 = vmatpush1.bf16.msra.mxu0 0
          %2294 = vmatprep.subr.bf16.mxu0 0
          %2295 = vmatpush1.bf16.msra.mxu0 0
          %2296 = vmatprep.subr.bf16.mxu0 0
          %2297 = vmatpush1.bf16.msra.mxu0 0
          %2298 = vmatprep.subr.bf16.mxu0 0
          %2299 = vmatpush1.bf16.msra.mxu0 0
          %2300 = vmatprep.subr.bf16.mxu0 0
          %2301 = vmatpush1.bf16.msra.mxu0 0
          %2302 = vmatprep.subr.bf16.mxu0 0
          %2303 = vmatpush1.bf16.msra.mxu0 %v2275
          %2304 = vmatprep.subr.bf16.mxu0 0
          %2305 = vmatpush1.bf16.msra.mxu0 %v2274
          %2306 = vmatprep.subr.bf16.mxu0 0
          %2307 = vmatpush2.bf16.msra.mxu0 0
          %2308 = vmatprep.subr.bf16.mxu0 0
          %2309 = vmatpush2.bf16.msra.mxu0 0
          %2310 = vmatprep.subr.bf16.mxu0 0
          %2311 = vmatpush2.bf16.msra.mxu0 0
          %2312 = vmatprep.subr.bf16.mxu0 0
          %2313 = vmatpush2.bf16.msra.mxu0 0
          %2314 = vmatprep.subr.bf16.mxu0 0
          %2315 = vmatpush2.bf16.msra.mxu0 0
          %2316 = vmatprep.subr.bf16.mxu0 0
          %2317 = vmatpush2.bf16.msra.mxu0 0
          %2318 = vmatprep.subr.bf16.mxu0 0
          %2319 = vmatpush2.bf16.msra.mxu0 0
          %2320 = vmatprep.subr.bf16.mxu0 0
          %2321 = vmatpush2.bf16.msra.mxu0 0
          %2322 = vmatprep.mubr.bf16.mxu0 0
          %2323 = vmatmul.mubr.bf16.gmra.mxu0 %v2279
          %v2324 = vpop.f32.mrf.mxu0
          %v2325 = vadd.f32 0.0, %v2324
          %v2326 = vpop.f32.mrf.mxu0
          %v2327 = vpop.f32.mrf.mxu0
          %v2328 = vadd.f32 0.0, %v2327
          %v2329 = vpop.f32.mrf.mxu0
          %2330 = vmatprep.mubr.bf16.mxu0 0
          %2331 = vmatmul.mubr.bf16.gmra.mxu0 %v2282
          %v2332 = vpop.f32.mrf.mxu0
          %v2333 = vadd.f32 0.0, %v2332
          %v2334 = vpop.f32.mrf.mxu0
          %v2335 = vpop.f32.mrf.mxu0
          %v2336 = vadd.f32 0.0, %v2335
          %v2337 = vpop.f32.mrf.mxu0
          %2338 = vmatprep.mubr.bf16.mxu0 0
          %2339 = vmatmul.mubr.bf16.gmra.mxu0 %v2285
          %v2340 = vpop.f32.mrf.mxu0
          %v2341 = vadd.f32 0.0, %v2340
          %v2342 = vpop.f32.mrf.mxu0
          %v2343 = vpop.f32.mrf.mxu0
          %v2344 = vadd.f32 0.0, %v2343
          %v2345 = vpop.f32.mrf.mxu0
          %2346 = vmatprep.mubr.bf16.mxu0 0
          %2347 = vmatmul.mubr.bf16.gmra.mxu0 %v2288
          %v2348 = vpop.f32.mrf.mxu0
          %v2349 = vadd.f32 0.0, %v2348
          %v2350 = vpop.f32.mrf.mxu0
          %v2351 = vpop.f32.mrf.mxu0
          %v2352 = vadd.f32 0.0, %v2351
          %v2353 = vpop.f32.mrf.mxu0
          %2354 = vdwg.mxu0
          %v2355 = vadd.f32 %v2247, %v2325
          %v2356 = vadd.f32 %v2248, %v2328
          %v2357 = vadd.f32 %v2249, %v2333
          %v2358 = vadd.f32 %v2250, %v2336
          %v2359 = vadd.f32 %v2251, %v2341
          %v2360 = vadd.f32 %v2252, %v2344
          %v2361 = vadd.f32 %v2253, %v2349
          %v2362 = vadd.f32 %v2254, %v2352
          %2363 = vst [vmem:[#allocation8] sm:$0xff] %v2355
          %2364 = vst [vmem:[#allocation8 + $0x8] sm:$0xff] %v2356
          %2365 = vst [vmem:[#allocation8 + $0x10] sm:$0xff] %v2357
          %2366 = vst [vmem:[#allocation8 + $0x18] sm:$0xff] %v2358
          %2367 = vst [vmem:[#allocation8 + $0x20] sm:$0xff] %v2359
          %2368 = vst [vmem:[#allocation8 + $0x28] sm:$0xff] %v2360
          %2369 = vst [vmem:[#allocation8 + $0x30] sm:$0xff] %v2361
          %2370 = vst [vmem:[#allocation8 + $0x38] sm:$0xff] %v2362
        $region108: #{multi_view_block_forward.3} parent=87 // pred_fallthru
          _
        %p2371 = scmp.eq.s32.totalorder %s40, 3
        %p2372 = pnand %p644, %p2371
        %p2373 = pneg %p2372
        // Predicated region
        $region109: #{multi_view_block_forward.3} parent=87 // pred_check
          _
        $region110: #{multi_view_block_forward.3} parent=87 // pred_check_branch
          %2375 = sbr.rel (%p2372) target = $region112
        $region111: #{multi_view_block_forward.3} parent=87 // pred_region
          %v2376 = vld [vmem:[#allocation8] sm:$0xff]
          %v2377 = vld [vmem:[#allocation8 + $0x8] sm:$0xff]
          %v2378 = vld [vmem:[#allocation8 + $0x10] sm:$0xff]
          %v2379 = vld [vmem:[#allocation8 + $0x18] sm:$0xff]
          %v2380 = vld [vmem:[#allocation8 + $0x20] sm:$0xff]
          %v2381 = vld [vmem:[#allocation8 + $0x28] sm:$0xff]
          %v2382 = vld [vmem:[#allocation8 + $0x30] sm:$0xff]
          %v2383 = vld [vmem:[#allocation8 + $0x38] sm:$0xff]
          %v2384 = vld [vmem:[%s8] sm:$0x1]
          %v2386 = vlaneseq
          %v2387 = vshrl.u32 %v2386, 7
          %v2388 = vsub.s32 0, %v2387
          %v2389 = vrot.slane %v2384, %v2388
          %v2391 = vadd.f32 %v2376, %v2389
          %v2392 = vadd.f32 %v2377, %v2389
          %v2393 = vadd.f32 %v2378, %v2389
          %v2394 = vadd.f32 %v2379, %v2389
          %v2395 = vadd.f32 %v2380, %v2389
          %v2396 = vadd.f32 %v2381, %v2389
          %v2397 = vadd.f32 %v2382, %v2389
          %v2398 = vadd.f32 %v2383, %v2389
          %v2399 = vld [vmem:[%s625] sm:$0xff]
          %v2400 = vld [vmem:[%s625 + $0x8] sm:$0xff]
          %v2401 = vld [vmem:[%s625 + $0x10] sm:$0xff]
          %v2402 = vld [vmem:[%s625 + $0x18] sm:$0xff]
          %v2403 = vld [vmem:[%s625 + $0x20] sm:$0xff]
          %v2404 = vld [vmem:[%s625 + $0x28] sm:$0xff]
          %v2405 = vld [vmem:[%s625 + $0x30] sm:$0xff]
          %v2406 = vld [vmem:[%s625 + $0x38] sm:$0xff]
          %v2407 = vadd.f32 %v2391, %v2399
          %v2408 = vadd.f32 %v2392, %v2400
          %v2409 = vadd.f32 %v2393, %v2401
          %v2410 = vadd.f32 %v2394, %v2402
          %v2411 = vadd.f32 %v2395, %v2403
          %v2412 = vadd.f32 %v2396, %v2404
          %v2413 = vadd.f32 %v2397, %v2405
          %v2414 = vadd.f32 %v2398, %v2406
          %v2415 = vld [vmem:[%s9] sm:$0x1]
          %v2416 = vld [vmem:[%s10] sm:$0x1]
          %2417 = vadd.xlane.f32.xlu0 %v2407
          %v2418 = vpop.xlane.xlu0 %2417
          %2419 = vadd.xlane.f32.xlu0 %v2408
          %v2420 = vpop.xlane.xlu0 %2419
          %2421 = vadd.xlane.f32.xlu0 %v2409
          %v2422 = vpop.xlane.xlu0 %2421
          %2423 = vadd.xlane.f32.xlu0 %v2410
          %v2424 = vpop.xlane.xlu0 %2423
          %2425 = vadd.xlane.f32.xlu0 %v2411
          %v2426 = vpop.xlane.xlu0 %2425
          %2427 = vadd.xlane.f32.xlu0 %v2412
          %v2428 = vpop.xlane.xlu0 %2427
          %2429 = vadd.xlane.f32.xlu0 %v2413
          %v2430 = vpop.xlane.xlu0 %2429
          %2431 = vadd.xlane.f32.xlu0 %v2414
          %v2432 = vpop.xlane.xlu0 %2431
          %v2433 = vrcp.pop 128.0
          %v2434 = vmul.f32 %v2418, %v2433
          %v2435 = vmul.f32 %v2420, %v2433
          %v2436 = vmul.f32 %v2422, %v2433
          %v2437 = vmul.f32 %v2424, %v2433
          %v2438 = vmul.f32 %v2426, %v2433
          %v2439 = vmul.f32 %v2428, %v2433
          %v2440 = vmul.f32 %v2430, %v2433
          %v2441 = vmul.f32 %v2432, %v2433
          %v2442 = vsub.f32 %v2407, %v2434
          %v2443 = vsub.f32 %v2408, %v2435
          %v2444 = vsub.f32 %v2409, %v2436
          %v2445 = vsub.f32 %v2410, %v2437
          %v2446 = vsub.f32 %v2411, %v2438
          %v2447 = vsub.f32 %v2412, %v2439
          %v2448 = vsub.f32 %v2413, %v2440
          %v2449 = vsub.f32 %v2414, %v2441
          %v2450 = vmul.f32 %v2442, %v2442
          %v2451 = vmul.f32 %v2443, %v2443
          %v2452 = vmul.f32 %v2444, %v2444
          %v2453 = vmul.f32 %v2445, %v2445
          %v2454 = vmul.f32 %v2446, %v2446
          %v2455 = vmul.f32 %v2447, %v2447
          %v2456 = vmul.f32 %v2448, %v2448
          %v2457 = vmul.f32 %v2449, %v2449
          %2458 = vadd.xlane.f32.xlu0 %v2450
          %v2459 = vpop.xlane.xlu0 %2458
          %2460 = vadd.xlane.f32.xlu0 %v2451
          %v2461 = vpop.xlane.xlu0 %2460
          %2462 = vadd.xlane.f32.xlu0 %v2452
          %v2463 = vpop.xlane.xlu0 %2462
          %2464 = vadd.xlane.f32.xlu0 %v2453
          %v2465 = vpop.xlane.xlu0 %2464
          %2466 = vadd.xlane.f32.xlu0 %v2454
          %v2467 = vpop.xlane.xlu0 %2466
          %2468 = vadd.xlane.f32.xlu0 %v2455
          %v2469 = vpop.xlane.xlu0 %2468
          %2470 = vadd.xlane.f32.xlu0 %v2456
          %v2471 = vpop.xlane.xlu0 %2470
          %2472 = vadd.xlane.f32.xlu0 %v2457
          %v2473 = vpop.xlane.xlu0 %2472
          %v2474 = vmul.f32 %v2459, %v2433
          %v2475 = vmul.f32 %v2461, %v2433
          %v2476 = vmul.f32 %v2463, %v2433
          %v2477 = vmul.f32 %v2465, %v2433
          %v2478 = vmul.f32 %v2467, %v2433
          %v2479 = vmul.f32 %v2469, %v2433
          %v2480 = vmul.f32 %v2471, %v2433
          %v2481 = vmul.f32 %v2473, %v2433
          %v2482 = vadd.f32 %v2474, 1e-05
          %v2483 = vadd.f32 %v2475, 1e-05
          %v2484 = vadd.f32 %v2476, 1e-05
          %v2485 = vadd.f32 %v2477, 1e-05
          %v2486 = vadd.f32 %v2478, 1e-05
          %v2487 = vadd.f32 %v2479, 1e-05
          %v2488 = vadd.f32 %v2480, 1e-05
          %v2489 = vadd.f32 %v2481, 1e-05
          %v2490 = vrsqrt.pop %v2482
          %v2491 = vrsqrt.pop %v2483
          %v2492 = vrsqrt.pop %v2484
          %v2493 = vrsqrt.pop %v2485
          %v2494 = vrsqrt.pop %v2486
          %v2495 = vrsqrt.pop %v2487
          %v2496 = vrsqrt.pop %v2488
          %v2497 = vrsqrt.pop %v2489
          %v2498 = vmul.f32 %v2442, %v2490
          %v2499 = vmul.f32 %v2443, %v2491
          %v2500 = vmul.f32 %v2444, %v2492
          %v2501 = vmul.f32 %v2445, %v2493
          %v2502 = vmul.f32 %v2446, %v2494
          %v2503 = vmul.f32 %v2447, %v2495
          %v2504 = vmul.f32 %v2448, %v2496
          %v2505 = vmul.f32 %v2449, %v2497
          %v2507 = vlaneseq
          %v2508 = vshrl.u32 %v2507, 7
          %v2509 = vsub.s32 0, %v2508
          %v2510 = vrot.slane %v2415, %v2509
          %v2512 = vmul.f32 %v2498, %v2510
          %v2513 = vmul.f32 %v2499, %v2510
          %v2514 = vmul.f32 %v2500, %v2510
          %v2515 = vmul.f32 %v2501, %v2510
          %v2516 = vmul.f32 %v2502, %v2510
          %v2517 = vmul.f32 %v2503, %v2510
          %v2518 = vmul.f32 %v2504, %v2510
          %v2519 = vmul.f32 %v2505, %v2510
          %v2521 = vlaneseq
          %v2522 = vshrl.u32 %v2521, 7
          %v2523 = vsub.s32 0, %v2522
          %v2524 = vrot.slane %v2416, %v2523
          %v2526 = vadd.f32 %v2512, %v2524
          %v2527 = vadd.f32 %v2513, %v2524
          %v2528 = vadd.f32 %v2514, %v2524
          %v2529 = vadd.f32 %v2515, %v2524
          %v2530 = vadd.f32 %v2516, %v2524
          %v2531 = vadd.f32 %v2517, %v2524
          %v2532 = vadd.f32 %v2518, %v2524
          %v2533 = vadd.f32 %v2519, %v2524
          %v2534 = vpack.c.bf16 %v2527, %v2526
          %v2535 = vpack.c.bf16 %v2529, %v2528
          %v2536 = vpack.c.bf16 %v2531, %v2530
          %v2537 = vpack.c.bf16 %v2533, %v2532
          %v2538 = vld [vmem:[%s11] sm:$0xff]
          %v2539 = vld [vmem:[%s11 + $0x8] sm:$0xff]
          %v2540 = vld [vmem:[%s11 + $0x10] sm:$0xff]
          %v2541 = vld [vmem:[%s11 + $0x18] sm:$0xff]
          %v2542 = vld [vmem:[%s11 + $0x20] sm:$0xff]
          %v2543 = vld [vmem:[%s11 + $0x28] sm:$0xff]
          %v2544 = vld [vmem:[%s11 + $0x30] sm:$0xff]
          %v2545 = vld [vmem:[%s11 + $0x38] sm:$0xff]
          %v2546 = vld [vmem:[%s11 + $0x40] sm:$0xff]
          %v2547 = vld [vmem:[%s11 + $0x48] sm:$0xff]
          %v2548 = vld [vmem:[%s11 + $0x50] sm:$0xff]
          %v2549 = vld [vmem:[%s11 + $0x58] sm:$0xff]
          %v2550 = vld [vmem:[%s11 + $0x60] sm:$0xff]
          %v2551 = vld [vmem:[%s11 + $0x68] sm:$0xff]
          %v2552 = vld [vmem:[%s11 + $0x70] sm:$0xff]
          %v2553 = vld [vmem:[%s11 + $0x78] sm:$0xff]
          %v2554 = vld [vmem:[%s11 + $0x80] sm:$0xff]
          %v2555 = vld [vmem:[%s11 + $0x88] sm:$0xff]
          %v2556 = vld [vmem:[%s11 + $0x90] sm:$0xff]
          %v2557 = vld [vmem:[%s11 + $0x98] sm:$0xff]
          %v2558 = vld [vmem:[%s11 + $0xa0] sm:$0xff]
          %v2559 = vld [vmem:[%s11 + $0xa8] sm:$0xff]
          %v2560 = vld [vmem:[%s11 + $0xb0] sm:$0xff]
          %v2561 = vld [vmem:[%s11 + $0xb8] sm:$0xff]
          %v2562 = vld [vmem:[%s11 + $0xc0] sm:$0xff]
          %v2563 = vld [vmem:[%s11 + $0xc8] sm:$0xff]
          %v2564 = vld [vmem:[%s11 + $0xd0] sm:$0xff]
          %v2565 = vld [vmem:[%s11 + $0xd8] sm:$0xff]
          %v2566 = vld [vmem:[%s11 + $0xe0] sm:$0xff]
          %v2567 = vld [vmem:[%s11 + $0xe8] sm:$0xff]
          %v2568 = vld [vmem:[%s11 + $0xf0] sm:$0xff]
          %v2569 = vld [vmem:[%s11 + $0xf8] sm:$0xff]
          %v2570 = vld [vmem:[%s12] sm:$0xf]
          %v2572 = vlaneseq
          %v2573 = vshrl.u32 %v2572, 7
          %v2574 = vsub.s32 0, %v2573
          %v2575 = vrot.slane %v2570, %v2574
          %v2576 = vlaneseq
          %v2577 = vshrl.u32 %v2576, 7
          %v2578 = vsub.s32 1, %v2577
          %v2579 = vrot.slane %v2570, %v2578
          %v2580 = vlaneseq
          %v2581 = vshrl.u32 %v2580, 7
          %v2582 = vsub.s32 2, %v2581
          %v2583 = vrot.slane %v2570, %v2582
          %v2584 = vlaneseq
          %v2585 = vshrl.u32 %v2584, 7
          %v2586 = vsub.s32 3, %v2585
          %v2587 = vrot.slane %v2570, %v2586
          %v2624 = vunpack.c.l.b16 %v2538
          %v2625 = vunpack.c.h.b16 %v2538
          %v2626 = vunpack.c.l.b16 %v2539
          %v2627 = vunpack.c.h.b16 %v2539
          %v2628 = vunpack.c.l.b16 %v2540
          %v2629 = vunpack.c.h.b16 %v2540
          %v2630 = vunpack.c.l.b16 %v2541
          %v2631 = vunpack.c.h.b16 %v2541
          %v2632 = vunpack.c.l.b16 %v2542
          %v2633 = vunpack.c.h.b16 %v2542
          %v2634 = vunpack.c.l.b16 %v2543
          %v2635 = vunpack.c.h.b16 %v2543
          %v2636 = vunpack.c.l.b16 %v2544
          %v2637 = vunpack.c.h.b16 %v2544
          %v2638 = vunpack.c.l.b16 %v2545
          %v2639 = vunpack.c.h.b16 %v2545
          %v2640 = vunpack.c.l.b16 %v2546
          %v2641 = vunpack.c.h.b16 %v2546
          %v2642 = vunpack.c.l.b16 %v2547
          %v2643 = vunpack.c.h.b16 %v2547
          %v2644 = vunpack.c.l.b16 %v2548
          %v2645 = vunpack.c.h.b16 %v2548
          %v2646 = vunpack.c.l.b16 %v2549
          %v2647 = vunpack.c.h.b16 %v2549
          %v2648 = vunpack.c.l.b16 %v2550
          %v2649 = vunpack.c.h.b16 %v2550
          %v2650 = vunpack.c.l.b16 %v2551
          %v2651 = vunpack.c.h.b16 %v2551
          %v2652 = vunpack.c.l.b16 %v2552
          %v2653 = vunpack.c.h.b16 %v2552
          %v2654 = vunpack.c.l.b16 %v2553
          %v2655 = vunpack.c.h.b16 %v2553
          %v2656 = vunpack.c.l.b16 %v2554
          %v2657 = vunpack.c.h.b16 %v2554
          %v2658 = vunpack.c.l.b16 %v2555
          %v2659 = vunpack.c.h.b16 %v2555
          %v2660 = vunpack.c.l.b16 %v2556
          %v2661 = vunpack.c.h.b16 %v2556
          %v2662 = vunpack.c.l.b16 %v2557
          %v2663 = vunpack.c.h.b16 %v2557
          %v2664 = vunpack.c.l.b16 %v2558
          %v2665 = vunpack.c.h.b16 %v2558
          %v2666 = vunpack.c.l.b16 %v2559
          %v2667 = vunpack.c.h.b16 %v2559
          %v2668 = vunpack.c.l.b16 %v2560
          %v2669 = vunpack.c.h.b16 %v2560
          %v2670 = vunpack.c.l.b16 %v2561
          %v2671 = vunpack.c.h.b16 %v2561
          %v2672 = vunpack.c.l.b16 %v2562
          %v2673 = vunpack.c.h.b16 %v2562
          %v2674 = vunpack.c.l.b16 %v2563
          %v2675 = vunpack.c.h.b16 %v2563
          %v2676 = vunpack.c.l.b16 %v2564
          %v2677 = vunpack.c.h.b16 %v2564
          %v2678 = vunpack.c.l.b16 %v2565
          %v2679 = vunpack.c.h.b16 %v2565
          %v2680 = vunpack.c.l.b16 %v2566
          %v2681 = vunpack.c.h.b16 %v2566
          %v2682 = vunpack.c.l.b16 %v2567
          %v2683 = vunpack.c.h.b16 %v2567
          %v2684 = vunpack.c.l.b16 %v2568
          %v2685 = vunpack.c.h.b16 %v2568
          %v2686 = vunpack.c.l.b16 %v2569
          %v2687 = vunpack.c.h.b16 %v2569
          %v2688 = vpack.c.b16 %v2628, %v2624
          %v2689 = vpack.c.b16 %v2629, %v2625
          %v2690 = vpack.c.b16 %v2630, %v2626
          %v2691 = vpack.c.b16 %v2631, %v2627
          %v2692 = vpack.c.b16 %v2636, %v2632
          %v2693 = vpack.c.b16 %v2637, %v2633
          %v2694 = vpack.c.b16 %v2638, %v2634
          %v2695 = vpack.c.b16 %v2639, %v2635
          %v2696 = vpack.c.b16 %v2644, %v2640
          %v2697 = vpack.c.b16 %v2645, %v2641
          %v2698 = vpack.c.b16 %v2646, %v2642
          %v2699 = vpack.c.b16 %v2647, %v2643
          %v2700 = vpack.c.b16 %v2652, %v2648
          %v2701 = vpack.c.b16 %v2653, %v2649
          %v2702 = vpack.c.b16 %v2654, %v2650
          %v2703 = vpack.c.b16 %v2655, %v2651
          %v2704 = vpack.c.b16 %v2660, %v2656
          %v2705 = vpack.c.b16 %v2661, %v2657
          %v2706 = vpack.c.b16 %v2662, %v2658
          %v2707 = vpack.c.b16 %v2663, %v2659
          %v2708 = vpack.c.b16 %v2668, %v2664
          %v2709 = vpack.c.b16 %v2669, %v2665
          %v2710 = vpack.c.b16 %v2670, %v2666
          %v2711 = vpack.c.b16 %v2671, %v2667
          %v2712 = vpack.c.b16 %v2676, %v2672
          %v2713 = vpack.c.b16 %v2677, %v2673
          %v2714 = vpack.c.b16 %v2678, %v2674
          %v2715 = vpack.c.b16 %v2679, %v2675
          %v2716 = vpack.c.b16 %v2684, %v2680
          %v2717 = vpack.c.b16 %v2685, %v2681
          %v2718 = vpack.c.b16 %v2686, %v2682
          %v2719 = vpack.c.b16 %v2687, %v2683
          %2752 = vmatprep.subr.bf16.mxu0 %v2717
          %2753 = vmatpush1.bf16.msra.mxu0 %v2716
          %2754 = vmatprep.subr.bf16.mxu0 %v2713
          %2755 = vmatpush1.bf16.msra.mxu0 %v2712
          %2756 = vmatprep.subr.bf16.mxu0 %v2709
          %2757 = vmatpush1.bf16.msra.mxu0 %v2708
          %2758 = vmatprep.subr.bf16.mxu0 %v2705
          %2759 = vmatpush1.bf16.msra.mxu0 %v2704
          %2760 = vmatprep.subr.bf16.mxu0 %v2701
          %2761 = vmatpush1.bf16.msra.mxu0 %v2700
          %2762 = vmatprep.subr.bf16.mxu0 %v2697
          %2763 = vmatpush1.bf16.msra.mxu0 %v2696
          %2764 = vmatprep.subr.bf16.mxu0 %v2693
          %2765 = vmatpush1.bf16.msra.mxu0 %v2692
          %2766 = vmatprep.subr.bf16.mxu0 %v2689
          %2767 = vmatpush1.bf16.msra.mxu0 %v2688
          %2768 = vmatprep.subr.bf16.mxu0 0
          %2769 = vmatpush2.bf16.msra.mxu0 0
          %2770 = vmatprep.subr.bf16.mxu0 0
          %2771 = vmatpush2.bf16.msra.mxu0 0
          %2772 = vmatprep.subr.bf16.mxu0 0
          %2773 = vmatpush2.bf16.msra.mxu0 0
          %2774 = vmatprep.subr.bf16.mxu0 0
          %2775 = vmatpush2.bf16.msra.mxu0 0
          %2776 = vmatprep.subr.bf16.mxu0 0
          %2777 = vmatpush2.bf16.msra.mxu0 0
          %2778 = vmatprep.subr.bf16.mxu0 0
          %2779 = vmatpush2.bf16.msra.mxu0 0
          %2780 = vmatprep.subr.bf16.mxu0 0
          %2781 = vmatpush2.bf16.msra.mxu0 0
          %2782 = vmatprep.subr.bf16.mxu0 0
          %2783 = vmatpush2.bf16.msra.mxu0 0
          %2784 = vmatprep.mubr.bf16.mxu0 0
          %2785 = vmatmul.mubr.bf16.gmra.mxu0 %v2534
          %v2786 = vpop.f32.mrf.mxu0
          %v2787 = vadd.f32 %v2575, %v2786
          %v2788 = vpop.f32.mrf.mxu0
          %v2789 = vadd.f32 %v2579, %v2788
          %v2790 = vpop.f32.mrf.mxu0
          %v2791 = vadd.f32 %v2575, %v2790
          %v2792 = vpop.f32.mrf.mxu0
          %v2793 = vadd.f32 %v2579, %v2792
          %2794 = vmatprep.mubr.bf16.mxu0 0
          %2795 = vmatmul.mubr.bf16.gmra.mxu0 %v2535
          %v2796 = vpop.f32.mrf.mxu0
          %v2797 = vadd.f32 %v2575, %v2796
          %v2798 = vpop.f32.mrf.mxu0
          %v2799 = vadd.f32 %v2579, %v2798
          %v2800 = vpop.f32.mrf.mxu0
          %v2801 = vadd.f32 %v2575, %v2800
          %v2802 = vpop.f32.mrf.mxu0
          %v2803 = vadd.f32 %v2579, %v2802
          %2804 = vmatprep.mubr.bf16.mxu0 0
          %2805 = vmatmul.mubr.bf16.gmra.mxu0 %v2536
          %v2806 = vpop.f32.mrf.mxu0
          %v2807 = vadd.f32 %v2575, %v2806
          %v2808 = vpop.f32.mrf.mxu0
          %v2809 = vadd.f32 %v2579, %v2808
          %v2810 = vpop.f32.mrf.mxu0
          %v2811 = vadd.f32 %v2575, %v2810
          %v2812 = vpop.f32.mrf.mxu0
          %v2813 = vadd.f32 %v2579, %v2812
          %2814 = vmatprep.mubr.bf16.mxu0 0
          %2815 = vmatmul.mubr.bf16.gmra.mxu0 %v2537
          %v2816 = vpop.f32.mrf.mxu0
          %v2817 = vadd.f32 %v2575, %v2816
          %v2818 = vpop.f32.mrf.mxu0
          %v2819 = vadd.f32 %v2579, %v2818
          %v2820 = vpop.f32.mrf.mxu0
          %v2821 = vadd.f32 %v2575, %v2820
          %v2822 = vpop.f32.mrf.mxu0
          %v2823 = vadd.f32 %v2579, %v2822
          %2824 = vdwg.mxu0
          %2825 = vmatprep.subr.bf16.mxu0 %v2719
          %2826 = vmatpush1.bf16.msra.mxu0 %v2718
          %2827 = vmatprep.subr.bf16.mxu0 %v2715
          %2828 = vmatpush1.bf16.msra.mxu0 %v2714
          %2829 = vmatprep.subr.bf16.mxu0 %v2711
          %2830 = vmatpush1.bf16.msra.mxu0 %v2710
          %2831 = vmatprep.subr.bf16.mxu0 %v2707
          %2832 = vmatpush1.bf16.msra.mxu0 %v2706
          %2833 = vmatprep.subr.bf16.mxu0 %v2703
          %2834 = vmatpush1.bf16.msra.mxu0 %v2702
          %2835 = vmatprep.subr.bf16.mxu0 %v2699
          %2836 = vmatpush1.bf16.msra.mxu0 %v2698
          %2837 = vmatprep.subr.bf16.mxu0 %v2695
          %2838 = vmatpush1.bf16.msra.mxu0 %v2694
          %2839 = vmatprep.subr.bf16.mxu0 %v2691
          %2840 = vmatpush1.bf16.msra.mxu0 %v2690
          %2841 = vmatprep.subr.bf16.mxu0 0
          %2842 = vmatpush2.bf16.msra.mxu0 0
          %2843 = vmatprep.subr.bf16.mxu0 0
          %2844 = vmatpush2.bf16.msra.mxu0 0
          %2845 = vmatprep.subr.bf16.mxu0 0
          %2846 = vmatpush2.bf16.msra.mxu0 0
          %2847 = vmatprep.subr.bf16.mxu0 0
          %2848 = vmatpush2.bf16.msra.mxu0 0
          %2849 = vmatprep.subr.bf16.mxu0 0
          %2850 = vmatpush2.bf16.msra.mxu0 0
          %2851 = vmatprep.subr.bf16.mxu0 0
          %2852 = vmatpush2.bf16.msra.mxu0 0
          %2853 = vmatprep.subr.bf16.mxu0 0
          %2854 = vmatpush2.bf16.msra.mxu0 0
          %2855 = vmatprep.subr.bf16.mxu0 0
          %2856 = vmatpush2.bf16.msra.mxu0 0
          %2857 = vmatprep.mubr.bf16.mxu0 0
          %2858 = vmatmul.mubr.bf16.gmra.mxu0 %v2534
          %v2859 = vpop.f32.mrf.mxu0
          %v2860 = vadd.f32 %v2583, %v2859
          %v2861 = vpop.f32.mrf.mxu0
          %v2862 = vadd.f32 %v2587, %v2861
          %v2863 = vpop.f32.mrf.mxu0
          %v2864 = vadd.f32 %v2583, %v2863
          %v2865 = vpop.f32.mrf.mxu0
          %v2866 = vadd.f32 %v2587, %v2865
          %2867 = vmatprep.mubr.bf16.mxu0 0
          %2868 = vmatmul.mubr.bf16.gmra.mxu0 %v2535
          %v2869 = vpop.f32.mrf.mxu0
          %v2870 = vadd.f32 %v2583, %v2869
          %v2871 = vpop.f32.mrf.mxu0
          %v2872 = vadd.f32 %v2587, %v2871
          %v2873 = vpop.f32.mrf.mxu0
          %v2874 = vadd.f32 %v2583, %v2873
          %v2875 = vpop.f32.mrf.mxu0
          %v2876 = vadd.f32 %v2587, %v2875
          %2877 = vmatprep.mubr.bf16.mxu0 0
          %2878 = vmatmul.mubr.bf16.gmra.mxu0 %v2536
          %v2879 = vpop.f32.mrf.mxu0
          %v2880 = vadd.f32 %v2583, %v2879
          %v2881 = vpop.f32.mrf.mxu0
          %v2882 = vadd.f32 %v2587, %v2881
          %v2883 = vpop.f32.mrf.mxu0
          %v2884 = vadd.f32 %v2583, %v2883
          %v2885 = vpop.f32.mrf.mxu0
          %v2886 = vadd.f32 %v2587, %v2885
          %2887 = vmatprep.mubr.bf16.mxu0 0
          %2888 = vmatmul.mubr.bf16.gmra.mxu0 %v2537
          %v2889 = vpop.f32.mrf.mxu0
          %v2890 = vadd.f32 %v2583, %v2889
          %v2891 = vpop.f32.mrf.mxu0
          %v2892 = vadd.f32 %v2587, %v2891
          %v2893 = vpop.f32.mrf.mxu0
          %v2894 = vadd.f32 %v2583, %v2893
          %v2895 = vpop.f32.mrf.mxu0
          %v2896 = vadd.f32 %v2587, %v2895
          %2897 = vdwg.mxu0
          %v2898 = vld [vmem:[%s13] sm:$0xff]
          %v2899 = vld [vmem:[%s13 + $0x8] sm:$0xff]
          %v2900 = vld [vmem:[%s13 + $0x10] sm:$0xff]
          %v2901 = vld [vmem:[%s13 + $0x18] sm:$0xff]
          %v2902 = vld [vmem:[%s13 + $0x20] sm:$0xff]
          %v2903 = vld [vmem:[%s13 + $0x28] sm:$0xff]
          %v2904 = vld [vmem:[%s13 + $0x30] sm:$0xff]
          %v2905 = vld [vmem:[%s13 + $0x38] sm:$0xff]
          %v2906 = vld [vmem:[%s13 + $0x40] sm:$0xff]
          %v2907 = vld [vmem:[%s13 + $0x48] sm:$0xff]
          %v2908 = vld [vmem:[%s13 + $0x50] sm:$0xff]
          %v2909 = vld [vmem:[%s13 + $0x58] sm:$0xff]
          %v2910 = vld [vmem:[%s13 + $0x60] sm:$0xff]
          %v2911 = vld [vmem:[%s13 + $0x68] sm:$0xff]
          %v2912 = vld [vmem:[%s13 + $0x70] sm:$0xff]
          %v2913 = vld [vmem:[%s13 + $0x78] sm:$0xff]
          %v2914 = vld [vmem:[%s13 + $0x80] sm:$0xff]
          %v2915 = vld [vmem:[%s13 + $0x88] sm:$0xff]
          %v2916 = vld [vmem:[%s13 + $0x90] sm:$0xff]
          %v2917 = vld [vmem:[%s13 + $0x98] sm:$0xff]
          %v2918 = vld [vmem:[%s13 + $0xa0] sm:$0xff]
          %v2919 = vld [vmem:[%s13 + $0xa8] sm:$0xff]
          %v2920 = vld [vmem:[%s13 + $0xb0] sm:$0xff]
          %v2921 = vld [vmem:[%s13 + $0xb8] sm:$0xff]
          %v2922 = vld [vmem:[%s13 + $0xc0] sm:$0xff]
          %v2923 = vld [vmem:[%s13 + $0xc8] sm:$0xff]
          %v2924 = vld [vmem:[%s13 + $0xd0] sm:$0xff]
          %v2925 = vld [vmem:[%s13 + $0xd8] sm:$0xff]
          %v2926 = vld [vmem:[%s13 + $0xe0] sm:$0xff]
          %v2927 = vld [vmem:[%s13 + $0xe8] sm:$0xff]
          %v2928 = vld [vmem:[%s13 + $0xf0] sm:$0xff]
          %v2929 = vld [vmem:[%s13 + $0xf8] sm:$0xff]
          %v2930 = vld [vmem:[%s14] sm:$0xf]
          %v2932 = vlaneseq
          %v2933 = vshrl.u32 %v2932, 7
          %v2934 = vsub.s32 0, %v2933
          %v2935 = vrot.slane %v2930, %v2934
          %v2936 = vlaneseq
          %v2937 = vshrl.u32 %v2936, 7
          %v2938 = vsub.s32 1, %v2937
          %v2939 = vrot.slane %v2930, %v2938
          %v2940 = vlaneseq
          %v2941 = vshrl.u32 %v2940, 7
          %v2942 = vsub.s32 2, %v2941
          %v2943 = vrot.slane %v2930, %v2942
          %v2944 = vlaneseq
          %v2945 = vshrl.u32 %v2944, 7
          %v2946 = vsub.s32 3, %v2945
          %v2947 = vrot.slane %v2930, %v2946
          %v2984 = vunpack.c.l.b16 %v2898
          %v2985 = vunpack.c.h.b16 %v2898
          %v2986 = vunpack.c.l.b16 %v2899
          %v2987 = vunpack.c.h.b16 %v2899
          %v2988 = vunpack.c.l.b16 %v2900
          %v2989 = vunpack.c.h.b16 %v2900
          %v2990 = vunpack.c.l.b16 %v2901
          %v2991 = vunpack.c.h.b16 %v2901
          %v2992 = vunpack.c.l.b16 %v2902
          %v2993 = vunpack.c.h.b16 %v2902
          %v2994 = vunpack.c.l.b16 %v2903
          %v2995 = vunpack.c.h.b16 %v2903
          %v2996 = vunpack.c.l.b16 %v2904
          %v2997 = vunpack.c.h.b16 %v2904
          %v2998 = vunpack.c.l.b16 %v2905
          %v2999 = vunpack.c.h.b16 %v2905
          %v3000 = vunpack.c.l.b16 %v2906
          %v3001 = vunpack.c.h.b16 %v2906
          %v3002 = vunpack.c.l.b16 %v2907
          %v3003 = vunpack.c.h.b16 %v2907
          %v3004 = vunpack.c.l.b16 %v2908
          %v3005 = vunpack.c.h.b16 %v2908
          %v3006 = vunpack.c.l.b16 %v2909
          %v3007 = vunpack.c.h.b16 %v2909
          %v3008 = vunpack.c.l.b16 %v2910
          %v3009 = vunpack.c.h.b16 %v2910
          %v3010 = vunpack.c.l.b16 %v2911
          %v3011 = vunpack.c.h.b16 %v2911
          %v3012 = vunpack.c.l.b16 %v2912
          %v3013 = vunpack.c.h.b16 %v2912
          %v3014 = vunpack.c.l.b16 %v2913
          %v3015 = vunpack.c.h.b16 %v2913
          %v3016 = vunpack.c.l.b16 %v2914
          %v3017 = vunpack.c.h.b16 %v2914
          %v3018 = vunpack.c.l.b16 %v2915
          %v3019 = vunpack.c.h.b16 %v2915
          %v3020 = vunpack.c.l.b16 %v2916
          %v3021 = vunpack.c.h.b16 %v2916
          %v3022 = vunpack.c.l.b16 %v2917
          %v3023 = vunpack.c.h.b16 %v2917
          %v3024 = vunpack.c.l.b16 %v2918
          %v3025 = vunpack.c.h.b16 %v2918
          %v3026 = vunpack.c.l.b16 %v2919
          %v3027 = vunpack.c.h.b16 %v2919
          %v3028 = vunpack.c.l.b16 %v2920
          %v3029 = vunpack.c.h.b16 %v2920
          %v3030 = vunpack.c.l.b16 %v2921
          %v3031 = vunpack.c.h.b16 %v2921
          %v3032 = vunpack.c.l.b16 %v2922
          %v3033 = vunpack.c.h.b16 %v2922
          %v3034 = vunpack.c.l.b16 %v2923
          %v3035 = vunpack.c.h.b16 %v2923
          %v3036 = vunpack.c.l.b16 %v2924
          %v3037 = vunpack.c.h.b16 %v2924
          %v3038 = vunpack.c.l.b16 %v2925
          %v3039 = vunpack.c.h.b16 %v2925
          %v3040 = vunpack.c.l.b16 %v2926
          %v3041 = vunpack.c.h.b16 %v2926
          %v3042 = vunpack.c.l.b16 %v2927
          %v3043 = vunpack.c.h.b16 %v2927
          %v3044 = vunpack.c.l.b16 %v2928
          %v3045 = vunpack.c.h.b16 %v2928
          %v3046 = vunpack.c.l.b16 %v2929
          %v3047 = vunpack.c.h.b16 %v2929
          %v3048 = vpack.c.b16 %v2988, %v2984
          %v3049 = vpack.c.b16 %v2989, %v2985
          %v3050 = vpack.c.b16 %v2990, %v2986
          %v3051 = vpack.c.b16 %v2991, %v2987
          %v3052 = vpack.c.b16 %v2996, %v2992
          %v3053 = vpack.c.b16 %v2997, %v2993
          %v3054 = vpack.c.b16 %v2998, %v2994
          %v3055 = vpack.c.b16 %v2999, %v2995
          %v3056 = vpack.c.b16 %v3004, %v3000
          %v3057 = vpack.c.b16 %v3005, %v3001
          %v3058 = vpack.c.b16 %v3006, %v3002
          %v3059 = vpack.c.b16 %v3007, %v3003
          %v3060 = vpack.c.b16 %v3012, %v3008
          %v3061 = vpack.c.b16 %v3013, %v3009
          %v3062 = vpack.c.b16 %v3014, %v3010
          %v3063 = vpack.c.b16 %v3015, %v3011
          %v3064 = vpack.c.b16 %v3020, %v3016
          %v3065 = vpack.c.b16 %v3021, %v3017
          %v3066 = vpack.c.b16 %v3022, %v3018
          %v3067 = vpack.c.b16 %v3023, %v3019
          %v3068 = vpack.c.b16 %v3028, %v3024
          %v3069 = vpack.c.b16 %v3029, %v3025
          %v3070 = vpack.c.b16 %v3030, %v3026
          %v3071 = vpack.c.b16 %v3031, %v3027
          %v3072 = vpack.c.b16 %v3036, %v3032
          %v3073 = vpack.c.b16 %v3037, %v3033
          %v3074 = vpack.c.b16 %v3038, %v3034
          %v3075 = vpack.c.b16 %v3039, %v3035
          %v3076 = vpack.c.b16 %v3044, %v3040
          %v3077 = vpack.c.b16 %v3045, %v3041
          %v3078 = vpack.c.b16 %v3046, %v3042
          %v3079 = vpack.c.b16 %v3047, %v3043
          %3112 = vmatprep.subr.bf16.mxu0 %v3077
          %3113 = vmatpush1.bf16.msra.mxu0 %v3076
          %3114 = vmatprep.subr.bf16.mxu0 %v3073
          %3115 = vmatpush1.bf16.msra.mxu0 %v3072
          %3116 = vmatprep.subr.bf16.mxu0 %v3069
          %3117 = vmatpush1.bf16.msra.mxu0 %v3068
          %3118 = vmatprep.subr.bf16.mxu0 %v3065
          %3119 = vmatpush1.bf16.msra.mxu0 %v3064
          %3120 = vmatprep.subr.bf16.mxu0 %v3061
          %3121 = vmatpush1.bf16.msra.mxu0 %v3060
          %3122 = vmatprep.subr.bf16.mxu0 %v3057
          %3123 = vmatpush1.bf16.msra.mxu0 %v3056
          %3124 = vmatprep.subr.bf16.mxu0 %v3053
          %3125 = vmatpush1.bf16.msra.mxu0 %v3052
          %3126 = vmatprep.subr.bf16.mxu0 %v3049
          %3127 = vmatpush1.bf16.msra.mxu0 %v3048
          %3128 = vmatprep.subr.bf16.mxu0 0
          %3129 = vmatpush2.bf16.msra.mxu0 0
          %3130 = vmatprep.subr.bf16.mxu0 0
          %3131 = vmatpush2.bf16.msra.mxu0 0
          %3132 = vmatprep.subr.bf16.mxu0 0
          %3133 = vmatpush2.bf16.msra.mxu0 0
          %3134 = vmatprep.subr.bf16.mxu0 0
          %3135 = vmatpush2.bf16.msra.mxu0 0
          %3136 = vmatprep.subr.bf16.mxu0 0
          %3137 = vmatpush2.bf16.msra.mxu0 0
          %3138 = vmatprep.subr.bf16.mxu0 0
          %3139 = vmatpush2.bf16.msra.mxu0 0
          %3140 = vmatprep.subr.bf16.mxu0 0
          %3141 = vmatpush2.bf16.msra.mxu0 0
          %3142 = vmatprep.subr.bf16.mxu0 0
          %3143 = vmatpush2.bf16.msra.mxu0 0
          %3144 = vmatprep.mubr.bf16.mxu0 0
          %3145 = vmatmul.mubr.bf16.gmra.mxu0 %v2534
          %v3146 = vpop.f32.mrf.mxu0
          %v3147 = vadd.f32 %v2935, %v3146
          %v3148 = vpop.f32.mrf.mxu0
          %v3149 = vadd.f32 %v2939, %v3148
          %v3150 = vpop.f32.mrf.mxu0
          %v3151 = vadd.f32 %v2935, %v3150
          %v3152 = vpop.f32.mrf.mxu0
          %v3153 = vadd.f32 %v2939, %v3152
          %3154 = vmatprep.mubr.bf16.mxu0 0
          %3155 = vmatmul.mubr.bf16.gmra.mxu0 %v2535
          %v3156 = vpop.f32.mrf.mxu0
          %v3157 = vadd.f32 %v2935, %v3156
          %v3158 = vpop.f32.mrf.mxu0
          %v3159 = vadd.f32 %v2939, %v3158
          %v3160 = vpop.f32.mrf.mxu0
          %v3161 = vadd.f32 %v2935, %v3160
          %v3162 = vpop.f32.mrf.mxu0
          %v3163 = vadd.f32 %v2939, %v3162
          %3164 = vmatprep.mubr.bf16.mxu0 0
          %3165 = vmatmul.mubr.bf16.gmra.mxu0 %v2536
          %v3166 = vpop.f32.mrf.mxu0
          %v3167 = vadd.f32 %v2935, %v3166
          %v3168 = vpop.f32.mrf.mxu0
          %v3169 = vadd.f32 %v2939, %v3168
          %v3170 = vpop.f32.mrf.mxu0
          %v3171 = vadd.f32 %v2935, %v3170
          %v3172 = vpop.f32.mrf.mxu0
          %v3173 = vadd.f32 %v2939, %v3172
          %3174 = vmatprep.mubr.bf16.mxu0 0
          %3175 = vmatmul.mubr.bf16.gmra.mxu0 %v2537
          %v3176 = vpop.f32.mrf.mxu0
          %v3177 = vadd.f32 %v2935, %v3176
          %v3178 = vpop.f32.mrf.mxu0
          %v3179 = vadd.f32 %v2939, %v3178
          %v3180 = vpop.f32.mrf.mxu0
          %v3181 = vadd.f32 %v2935, %v3180
          %v3182 = vpop.f32.mrf.mxu0
          %v3183 = vadd.f32 %v2939, %v3182
          %3184 = vdwg.mxu0
          %3185 = vmatprep.subr.bf16.mxu0 %v3079
          %3186 = vmatpush1.bf16.msra.mxu0 %v3078
          %3187 = vmatprep.subr.bf16.mxu0 %v3075
          %3188 = vmatpush1.bf16.msra.mxu0 %v3074
          %3189 = vmatprep.subr.bf16.mxu0 %v3071
          %3190 = vmatpush1.bf16.msra.mxu0 %v3070
          %3191 = vmatprep.subr.bf16.mxu0 %v3067
          %3192 = vmatpush1.bf16.msra.mxu0 %v3066
          %3193 = vmatprep.subr.bf16.mxu0 %v3063
          %3194 = vmatpush1.bf16.msra.mxu0 %v3062
          %3195 = vmatprep.subr.bf16.mxu0 %v3059
          %3196 = vmatpush1.bf16.msra.mxu0 %v3058
          %3197 = vmatprep.subr.bf16.mxu0 %v3055
          %3198 = vmatpush1.bf16.msra.mxu0 %v3054
          %3199 = vmatprep.subr.bf16.mxu0 %v3051
          %3200 = vmatpush1.bf16.msra.mxu0 %v3050
          %3201 = vmatprep.subr.bf16.mxu0 0
          %3202 = vmatpush2.bf16.msra.mxu0 0
          %3203 = vmatprep.subr.bf16.mxu0 0
          %3204 = vmatpush2.bf16.msra.mxu0 0
          %3205 = vmatprep.subr.bf16.mxu0 0
          %3206 = vmatpush2.bf16.msra.mxu0 0
          %3207 = vmatprep.subr.bf16.mxu0 0
          %3208 = vmatpush2.bf16.msra.mxu0 0
          %3209 = vmatprep.subr.bf16.mxu0 0
          %3210 = vmatpush2.bf16.msra.mxu0 0
          %3211 = vmatprep.subr.bf16.mxu0 0
          %3212 = vmatpush2.bf16.msra.mxu0 0
          %3213 = vmatprep.subr.bf16.mxu0 0
          %3214 = vmatpush2.bf16.msra.mxu0 0
          %3215 = vmatprep.subr.bf16.mxu0 0
          %3216 = vmatpush2.bf16.msra.mxu0 0
          %3217 = vmatprep.mubr.bf16.mxu0 0
          %3218 = vmatmul.mubr.bf16.gmra.mxu0 %v2534
          %v3219 = vpop.f32.mrf.mxu0
          %v3220 = vadd.f32 %v2943, %v3219
          %v3221 = vpop.f32.mrf.mxu0
          %v3222 = vadd.f32 %v2947, %v3221
          %v3223 = vpop.f32.mrf.mxu0
          %v3224 = vadd.f32 %v2943, %v3223
          %v3225 = vpop.f32.mrf.mxu0
          %v3226 = vadd.f32 %v2947, %v3225
          %3227 = vmatprep.mubr.bf16.mxu0 0
          %3228 = vmatmul.mubr.bf16.gmra.mxu0 %v2535
          %v3229 = vpop.f32.mrf.mxu0
          %v3230 = vadd.f32 %v2943, %v3229
          %v3231 = vpop.f32.mrf.mxu0
          %v3232 = vadd.f32 %v2947, %v3231
          %v3233 = vpop.f32.mrf.mxu0
          %v3234 = vadd.f32 %v2943, %v3233
          %v3235 = vpop.f32.mrf.mxu0
          %v3236 = vadd.f32 %v2947, %v3235
          %3237 = vmatprep.mubr.bf16.mxu0 0
          %3238 = vmatmul.mubr.bf16.gmra.mxu0 %v2536
          %v3239 = vpop.f32.mrf.mxu0
          %v3240 = vadd.f32 %v2943, %v3239
          %v3241 = vpop.f32.mrf.mxu0
          %v3242 = vadd.f32 %v2947, %v3241
          %v3243 = vpop.f32.mrf.mxu0
          %v3244 = vadd.f32 %v2943, %v3243
          %v3245 = vpop.f32.mrf.mxu0
          %v3246 = vadd.f32 %v2947, %v3245
          %3247 = vmatprep.mubr.bf16.mxu0 0
          %3248 = vmatmul.mubr.bf16.gmra.mxu0 %v2537
          %v3249 = vpop.f32.mrf.mxu0
          %v3250 = vadd.f32 %v2943, %v3249
          %v3251 = vpop.f32.mrf.mxu0
          %v3252 = vadd.f32 %v2947, %v3251
          %v3253 = vpop.f32.mrf.mxu0
          %v3254 = vadd.f32 %v2943, %v3253
          %v3255 = vpop.f32.mrf.mxu0
          %v3256 = vadd.f32 %v2947, %v3255
          %3257 = vdwg.mxu0
          %v3258 = vmul.f32 %v3147, 0.5
          %v3259 = vmul.f32 %v3149, 0.5
          %v3260 = vmul.f32 %v3220, 0.5
          %v3261 = vmul.f32 %v3222, 0.5
          %v3262 = vmul.f32 %v3151, 0.5
          %v3263 = vmul.f32 %v3153, 0.5
          %v3264 = vmul.f32 %v3224, 0.5
          %v3265 = vmul.f32 %v3226, 0.5
          %v3266 = vmul.f32 %v3157, 0.5
          %v3267 = vmul.f32 %v3159, 0.5
          %v3268 = vmul.f32 %v3230, 0.5
          %v3269 = vmul.f32 %v3232, 0.5
          %v3270 = vmul.f32 %v3161, 0.5
          %v3271 = vmul.f32 %v3163, 0.5
          %v3272 = vmul.f32 %v3234, 0.5
          %v3273 = vmul.f32 %v3236, 0.5
          %v3274 = vmul.f32 %v3167, 0.5
          %v3275 = vmul.f32 %v3169, 0.5
          %v3276 = vmul.f32 %v3240, 0.5
          %v3277 = vmul.f32 %v3242, 0.5
          %v3278 = vmul.f32 %v3171, 0.5
          %v3279 = vmul.f32 %v3173, 0.5
          %v3280 = vmul.f32 %v3244, 0.5
          %v3281 = vmul.f32 %v3246, 0.5
          %v3282 = vmul.f32 %v3177, 0.5
          %v3283 = vmul.f32 %v3179, 0.5
          %v3284 = vmul.f32 %v3250, 0.5
          %v3285 = vmul.f32 %v3252, 0.5
          %v3286 = vmul.f32 %v3181, 0.5
          %v3287 = vmul.f32 %v3183, 0.5
          %v3288 = vmul.f32 %v3254, 0.5
          %v3289 = vmul.f32 %v3256, 0.5
          %v3290 = vmul.f32 %v3147, 0.70710677
          %v3291 = vmul.f32 %v3149, 0.70710677
          %v3292 = vmul.f32 %v3220, 0.70710677
          %v3293 = vmul.f32 %v3222, 0.70710677
          %v3294 = vmul.f32 %v3151, 0.70710677
          %v3295 = vmul.f32 %v3153, 0.70710677
          %v3296 = vmul.f32 %v3224, 0.70710677
          %v3297 = vmul.f32 %v3226, 0.70710677
          %v3298 = vmul.f32 %v3157, 0.70710677
          %v3299 = vmul.f32 %v3159, 0.70710677
          %v3300 = vmul.f32 %v3230, 0.70710677
          %v3301 = vmul.f32 %v3232, 0.70710677
          %v3302 = vmul.f32 %v3161, 0.70710677
          %v3303 = vmul.f32 %v3163, 0.70710677
          %v3304 = vmul.f32 %v3234, 0.70710677
          %v3305 = vmul.f32 %v3236, 0.70710677
          %v3306 = vmul.f32 %v3167, 0.70710677
          %v3307 = vmul.f32 %v3169, 0.70710677
          %v3308 = vmul.f32 %v3240, 0.70710677
          %v3309 = vmul.f32 %v3242, 0.70710677
          %v3310 = vmul.f32 %v3171, 0.70710677
          %v3311 = vmul.f32 %v3173, 0.70710677
          %v3312 = vmul.f32 %v3244, 0.70710677
          %v3313 = vmul.f32 %v3246, 0.70710677
          %v3314 = vmul.f32 %v3177, 0.70710677
          %v3315 = vmul.f32 %v3179, 0.70710677
          %v3316 = vmul.f32 %v3250, 0.70710677
          %v3317 = vmul.f32 %v3252, 0.70710677
          %v3318 = vmul.f32 %v3181, 0.70710677
          %v3319 = vmul.f32 %v3183, 0.70710677
          %v3320 = vmul.f32 %v3254, 0.70710677
          %v3321 = vmul.f32 %v3256, 0.70710677
          %v3322 = verf.f32.pop %v3290
          %v3323 = verf.f32.pop %v3291
          %v3324 = verf.f32.pop %v3292
          %v3325 = verf.f32.pop %v3293
          %v3326 = verf.f32.pop %v3294
          %v3327 = verf.f32.pop %v3295
          %v3328 = verf.f32.pop %v3296
          %v3329 = verf.f32.pop %v3297
          %v3330 = verf.f32.pop %v3298
          %v3331 = verf.f32.pop %v3299
          %v3332 = verf.f32.pop %v3300
          %v3333 = verf.f32.pop %v3301
          %v3334 = verf.f32.pop %v3302
          %v3335 = verf.f32.pop %v3303
          %v3336 = verf.f32.pop %v3304
          %v3337 = verf.f32.pop %v3305
          %v3338 = verf.f32.pop %v3306
          %v3339 = verf.f32.pop %v3307
          %v3340 = verf.f32.pop %v3308
          %v3341 = verf.f32.pop %v3309
          %v3342 = verf.f32.pop %v3310
          %v3343 = verf.f32.pop %v3311
          %v3344 = verf.f32.pop %v3312
          %v3345 = verf.f32.pop %v3313
          %v3346 = verf.f32.pop %v3314
          %v3347 = verf.f32.pop %v3315
          %v3348 = verf.f32.pop %v3316
          %v3349 = verf.f32.pop %v3317
          %v3350 = verf.f32.pop %v3318
          %v3351 = verf.f32.pop %v3319
          %v3352 = verf.f32.pop %v3320
          %v3353 = verf.f32.pop %v3321
          %v3354 = vadd.f32 %v3322, 1.0
          %v3355 = vadd.f32 %v3323, 1.0
          %v3356 = vadd.f32 %v3324, 1.0
          %v3357 = vadd.f32 %v3325, 1.0
          %v3358 = vadd.f32 %v3326, 1.0
          %v3359 = vadd.f32 %v3327, 1.0
          %v3360 = vadd.f32 %v3328, 1.0
          %v3361 = vadd.f32 %v3329, 1.0
          %v3362 = vadd.f32 %v3330, 1.0
          %v3363 = vadd.f32 %v3331, 1.0
          %v3364 = vadd.f32 %v3332, 1.0
          %v3365 = vadd.f32 %v3333, 1.0
          %v3366 = vadd.f32 %v3334, 1.0
          %v3367 = vadd.f32 %v3335, 1.0
          %v3368 = vadd.f32 %v3336, 1.0
          %v3369 = vadd.f32 %v3337, 1.0
          %v3370 = vadd.f32 %v3338, 1.0
          %v3371 = vadd.f32 %v3339, 1.0
          %v3372 = vadd.f32 %v3340, 1.0
          %v3373 = vadd.f32 %v3341, 1.0
          %v3374 = vadd.f32 %v3342, 1.0
          %v3375 = vadd.f32 %v3343, 1.0
          %v3376 = vadd.f32 %v3344, 1.0
          %v3377 = vadd.f32 %v3345, 1.0
          %v3378 = vadd.f32 %v3346, 1.0
          %v3379 = vadd.f32 %v3347, 1.0
          %v3380 = vadd.f32 %v3348, 1.0
          %v3381 = vadd.f32 %v3349, 1.0
          %v3382 = vadd.f32 %v3350, 1.0
          %v3383 = vadd.f32 %v3351, 1.0
          %v3384 = vadd.f32 %v3352, 1.0
          %v3385 = vadd.f32 %v3353, 1.0
          %v3386 = vmul.f32 %v3258, %v3354
          %v3387 = vmul.f32 %v3259, %v3355
          %v3388 = vmul.f32 %v3260, %v3356
          %v3389 = vmul.f32 %v3261, %v3357
          %v3390 = vmul.f32 %v3262, %v3358
          %v3391 = vmul.f32 %v3263, %v3359
          %v3392 = vmul.f32 %v3264, %v3360
          %v3393 = vmul.f32 %v3265, %v3361
          %v3394 = vmul.f32 %v3266, %v3362
          %v3395 = vmul.f32 %v3267, %v3363
          %v3396 = vmul.f32 %v3268, %v3364
          %v3397 = vmul.f32 %v3269, %v3365
          %v3398 = vmul.f32 %v3270, %v3366
          %v3399 = vmul.f32 %v3271, %v3367
          %v3400 = vmul.f32 %v3272, %v3368
          %v3401 = vmul.f32 %v3273, %v3369
          %v3402 = vmul.f32 %v3274, %v3370
          %v3403 = vmul.f32 %v3275, %v3371
          %v3404 = vmul.f32 %v3276, %v3372
          %v3405 = vmul.f32 %v3277, %v3373
          %v3406 = vmul.f32 %v3278, %v3374
          %v3407 = vmul.f32 %v3279, %v3375
          %v3408 = vmul.f32 %v3280, %v3376
          %v3409 = vmul.f32 %v3281, %v3377
          %v3410 = vmul.f32 %v3282, %v3378
          %v3411 = vmul.f32 %v3283, %v3379
          %v3412 = vmul.f32 %v3284, %v3380
          %v3413 = vmul.f32 %v3285, %v3381
          %v3414 = vmul.f32 %v3286, %v3382
          %v3415 = vmul.f32 %v3287, %v3383
          %v3416 = vmul.f32 %v3288, %v3384
          %v3417 = vmul.f32 %v3289, %v3385
          %v3418 = vmul.f32 %v2787, %v3386
          %v3419 = vmul.f32 %v2789, %v3387
          %v3420 = vmul.f32 %v2860, %v3388
          %v3421 = vmul.f32 %v2862, %v3389
          %v3422 = vmul.f32 %v2791, %v3390
          %v3423 = vmul.f32 %v2793, %v3391
          %v3424 = vmul.f32 %v2864, %v3392
          %v3425 = vmul.f32 %v2866, %v3393
          %v3426 = vmul.f32 %v2797, %v3394
          %v3427 = vmul.f32 %v2799, %v3395
          %v3428 = vmul.f32 %v2870, %v3396
          %v3429 = vmul.f32 %v2872, %v3397
          %v3430 = vmul.f32 %v2801, %v3398
          %v3431 = vmul.f32 %v2803, %v3399
          %v3432 = vmul.f32 %v2874, %v3400
          %v3433 = vmul.f32 %v2876, %v3401
          %v3434 = vmul.f32 %v2807, %v3402
          %v3435 = vmul.f32 %v2809, %v3403
          %v3436 = vmul.f32 %v2880, %v3404
          %v3437 = vmul.f32 %v2882, %v3405
          %v3438 = vmul.f32 %v2811, %v3406
          %v3439 = vmul.f32 %v2813, %v3407
          %v3440 = vmul.f32 %v2884, %v3408
          %v3441 = vmul.f32 %v2886, %v3409
          %v3442 = vmul.f32 %v2817, %v3410
          %v3443 = vmul.f32 %v2819, %v3411
          %v3444 = vmul.f32 %v2890, %v3412
          %v3445 = vmul.f32 %v2892, %v3413
          %v3446 = vmul.f32 %v2821, %v3414
          %v3447 = vmul.f32 %v2823, %v3415
          %v3448 = vmul.f32 %v2894, %v3416
          %v3449 = vmul.f32 %v2896, %v3417
          %v3450 = vpack.c.bf16 %v3422, %v3418
          %v3451 = vpack.c.bf16 %v3423, %v3419
          %v3452 = vpack.c.bf16 %v3424, %v3420
          %v3453 = vpack.c.bf16 %v3425, %v3421
          %v3454 = vpack.c.bf16 %v3430, %v3426
          %v3455 = vpack.c.bf16 %v3431, %v3427
          %v3456 = vpack.c.bf16 %v3432, %v3428
          %v3457 = vpack.c.bf16 %v3433, %v3429
          %v3458 = vpack.c.bf16 %v3438, %v3434
          %v3459 = vpack.c.bf16 %v3439, %v3435
          %v3460 = vpack.c.bf16 %v3440, %v3436
          %v3461 = vpack.c.bf16 %v3441, %v3437
          %v3462 = vpack.c.bf16 %v3446, %v3442
          %v3463 = vpack.c.bf16 %v3447, %v3443
          %v3464 = vpack.c.bf16 %v3448, %v3444
          %v3465 = vpack.c.bf16 %v3449, %v3445
          %v3466 = vld [vmem:[%s15] sm:$0xf]
          %v3467 = vld [vmem:[%s15 + $0x4] sm:$0xf]
          %v3468 = vld [vmem:[%s15 + $0x8] sm:$0xf]
          %v3469 = vld [vmem:[%s15 + $0xc] sm:$0xf]
          %v3470 = vld [vmem:[%s15 + $0x10] sm:$0xf]
          %v3471 = vld [vmem:[%s15 + $0x14] sm:$0xf]
          %v3472 = vld [vmem:[%s15 + $0x18] sm:$0xf]
          %v3473 = vld [vmem:[%s15 + $0x1c] sm:$0xf]
          %v3474 = vld [vmem:[%s15 + $0x20] sm:$0xf]
          %v3475 = vld [vmem:[%s15 + $0x24] sm:$0xf]
          %v3476 = vld [vmem:[%s15 + $0x28] sm:$0xf]
          %v3477 = vld [vmem:[%s15 + $0x2c] sm:$0xf]
          %v3478 = vld [vmem:[%s15 + $0x30] sm:$0xf]
          %v3479 = vld [vmem:[%s15 + $0x34] sm:$0xf]
          %v3480 = vld [vmem:[%s15 + $0x38] sm:$0xf]
          %v3481 = vld [vmem:[%s15 + $0x3c] sm:$0xf]
          %v3482 = vld [vmem:[%s15 + $0x40] sm:$0xf]
          %v3483 = vld [vmem:[%s15 + $0x44] sm:$0xf]
          %v3484 = vld [vmem:[%s15 + $0x48] sm:$0xf]
          %v3485 = vld [vmem:[%s15 + $0x4c] sm:$0xf]
          %v3486 = vld [vmem:[%s15 + $0x50] sm:$0xf]
          %v3487 = vld [vmem:[%s15 + $0x54] sm:$0xf]
          %v3488 = vld [vmem:[%s15 + $0x58] sm:$0xf]
          %v3489 = vld [vmem:[%s15 + $0x5c] sm:$0xf]
          %v3490 = vld [vmem:[%s15 + $0x60] sm:$0xf]
          %v3491 = vld [vmem:[%s15 + $0x64] sm:$0xf]
          %v3492 = vld [vmem:[%s15 + $0x68] sm:$0xf]
          %v3493 = vld [vmem:[%s15 + $0x6c] sm:$0xf]
          %v3494 = vld [vmem:[%s15 + $0x70] sm:$0xf]
          %v3495 = vld [vmem:[%s15 + $0x74] sm:$0xf]
          %v3496 = vld [vmem:[%s15 + $0x78] sm:$0xf]
          %v3497 = vld [vmem:[%s15 + $0x7c] sm:$0xf]
          %v3498 = vld [vmem:[%s15 + $0x80] sm:$0xf]
          %v3499 = vld [vmem:[%s15 + $0x84] sm:$0xf]
          %v3500 = vld [vmem:[%s15 + $0x88] sm:$0xf]
          %v3501 = vld [vmem:[%s15 + $0x8c] sm:$0xf]
          %v3502 = vld [vmem:[%s15 + $0x90] sm:$0xf]
          %v3503 = vld [vmem:[%s15 + $0x94] sm:$0xf]
          %v3504 = vld [vmem:[%s15 + $0x98] sm:$0xf]
          %v3505 = vld [vmem:[%s15 + $0x9c] sm:$0xf]
          %v3506 = vld [vmem:[%s15 + $0xa0] sm:$0xf]
          %v3507 = vld [vmem:[%s15 + $0xa4] sm:$0xf]
          %v3508 = vld [vmem:[%s15 + $0xa8] sm:$0xf]
          %v3509 = vld [vmem:[%s15 + $0xac] sm:$0xf]
          %v3510 = vld [vmem:[%s15 + $0xb0] sm:$0xf]
          %v3511 = vld [vmem:[%s15 + $0xb4] sm:$0xf]
          %v3512 = vld [vmem:[%s15 + $0xb8] sm:$0xf]
          %v3513 = vld [vmem:[%s15 + $0xbc] sm:$0xf]
          %v3514 = vld [vmem:[%s15 + $0xc0] sm:$0xf]
          %v3515 = vld [vmem:[%s15 + $0xc4] sm:$0xf]
          %v3516 = vld [vmem:[%s15 + $0xc8] sm:$0xf]
          %v3517 = vld [vmem:[%s15 + $0xcc] sm:$0xf]
          %v3518 = vld [vmem:[%s15 + $0xd0] sm:$0xf]
          %v3519 = vld [vmem:[%s15 + $0xd4] sm:$0xf]
          %v3520 = vld [vmem:[%s15 + $0xd8] sm:$0xf]
          %v3521 = vld [vmem:[%s15 + $0xdc] sm:$0xf]
          %v3522 = vld [vmem:[%s15 + $0xe0] sm:$0xf]
          %v3523 = vld [vmem:[%s15 + $0xe4] sm:$0xf]
          %v3524 = vld [vmem:[%s15 + $0xe8] sm:$0xf]
          %v3525 = vld [vmem:[%s15 + $0xec] sm:$0xf]
          %v3526 = vld [vmem:[%s15 + $0xf0] sm:$0xf]
          %v3527 = vld [vmem:[%s15 + $0xf4] sm:$0xf]
          %v3528 = vld [vmem:[%s15 + $0xf8] sm:$0xf]
          %v3529 = vld [vmem:[%s15 + $0xfc] sm:$0xf]
          %v3594 = vunpack.c.l.b16 %v3466
          %v3595 = vunpack.c.l.b16 %v3467
          %v3596 = vunpack.c.l.b16 %v3468
          %v3597 = vunpack.c.l.b16 %v3469
          %v3598 = vunpack.c.l.b16 %v3470
          %v3599 = vunpack.c.l.b16 %v3471
          %v3600 = vunpack.c.l.b16 %v3472
          %v3601 = vunpack.c.l.b16 %v3473
          %v3602 = vunpack.c.l.b16 %v3474
          %v3603 = vunpack.c.l.b16 %v3475
          %v3604 = vunpack.c.l.b16 %v3476
          %v3605 = vunpack.c.l.b16 %v3477
          %v3606 = vunpack.c.l.b16 %v3478
          %v3607 = vunpack.c.l.b16 %v3479
          %v3608 = vunpack.c.l.b16 %v3480
          %v3609 = vunpack.c.l.b16 %v3481
          %v3610 = vunpack.c.l.b16 %v3482
          %v3611 = vunpack.c.l.b16 %v3483
          %v3612 = vunpack.c.l.b16 %v3484
          %v3613 = vunpack.c.l.b16 %v3485
          %v3614 = vunpack.c.l.b16 %v3486
          %v3615 = vunpack.c.l.b16 %v3487
          %v3616 = vunpack.c.l.b16 %v3488
          %v3617 = vunpack.c.l.b16 %v3489
          %v3618 = vunpack.c.l.b16 %v3490
          %v3619 = vunpack.c.l.b16 %v3491
          %v3620 = vunpack.c.l.b16 %v3492
          %v3621 = vunpack.c.l.b16 %v3493
          %v3622 = vunpack.c.l.b16 %v3494
          %v3623 = vunpack.c.l.b16 %v3495
          %v3624 = vunpack.c.l.b16 %v3496
          %v3625 = vunpack.c.l.b16 %v3497
          %v3626 = vunpack.c.l.b16 %v3498
          %v3627 = vunpack.c.l.b16 %v3499
          %v3628 = vunpack.c.l.b16 %v3500
          %v3629 = vunpack.c.l.b16 %v3501
          %v3630 = vunpack.c.l.b16 %v3502
          %v3631 = vunpack.c.l.b16 %v3503
          %v3632 = vunpack.c.l.b16 %v3504
          %v3633 = vunpack.c.l.b16 %v3505
          %v3634 = vunpack.c.l.b16 %v3506
          %v3635 = vunpack.c.l.b16 %v3507
          %v3636 = vunpack.c.l.b16 %v3508
          %v3637 = vunpack.c.l.b16 %v3509
          %v3638 = vunpack.c.l.b16 %v3510
          %v3639 = vunpack.c.l.b16 %v3511
          %v3640 = vunpack.c.l.b16 %v3512
          %v3641 = vunpack.c.l.b16 %v3513
          %v3642 = vunpack.c.l.b16 %v3514
          %v3643 = vunpack.c.l.b16 %v3515
          %v3644 = vunpack.c.l.b16 %v3516
          %v3645 = vunpack.c.l.b16 %v3517
          %v3646 = vunpack.c.l.b16 %v3518
          %v3647 = vunpack.c.l.b16 %v3519
          %v3648 = vunpack.c.l.b16 %v3520
          %v3649 = vunpack.c.l.b16 %v3521
          %v3650 = vunpack.c.l.b16 %v3522
          %v3651 = vunpack.c.l.b16 %v3523
          %v3652 = vunpack.c.l.b16 %v3524
          %v3653 = vunpack.c.l.b16 %v3525
          %v3654 = vunpack.c.l.b16 %v3526
          %v3655 = vunpack.c.l.b16 %v3527
          %v3656 = vunpack.c.l.b16 %v3528
          %v3657 = vunpack.c.l.b16 %v3529
          %v3658 = vpack.c.b16 %v3595, %v3594
          %v3659 = vpack.c.b16 %v3597, %v3596
          %v3660 = vpack.c.b16 %v3599, %v3598
          %v3661 = vpack.c.b16 %v3601, %v3600
          %v3662 = vpack.c.b16 %v3603, %v3602
          %v3663 = vpack.c.b16 %v3605, %v3604
          %v3664 = vpack.c.b16 %v3607, %v3606
          %v3665 = vpack.c.b16 %v3609, %v3608
          %v3666 = vpack.c.b16 %v3611, %v3610
          %v3667 = vpack.c.b16 %v3613, %v3612
          %v3668 = vpack.c.b16 %v3615, %v3614
          %v3669 = vpack.c.b16 %v3617, %v3616
          %v3670 = vpack.c.b16 %v3619, %v3618
          %v3671 = vpack.c.b16 %v3621, %v3620
          %v3672 = vpack.c.b16 %v3623, %v3622
          %v3673 = vpack.c.b16 %v3625, %v3624
          %v3674 = vpack.c.b16 %v3627, %v3626
          %v3675 = vpack.c.b16 %v3629, %v3628
          %v3676 = vpack.c.b16 %v3631, %v3630
          %v3677 = vpack.c.b16 %v3633, %v3632
          %v3678 = vpack.c.b16 %v3635, %v3634
          %v3679 = vpack.c.b16 %v3637, %v3636
          %v3680 = vpack.c.b16 %v3639, %v3638
          %v3681 = vpack.c.b16 %v3641, %v3640
          %v3682 = vpack.c.b16 %v3643, %v3642
          %v3683 = vpack.c.b16 %v3645, %v3644
          %v3684 = vpack.c.b16 %v3647, %v3646
          %v3685 = vpack.c.b16 %v3649, %v3648
          %v3686 = vpack.c.b16 %v3651, %v3650
          %v3687 = vpack.c.b16 %v3653, %v3652
          %v3688 = vpack.c.b16 %v3655, %v3654
          %v3689 = vpack.c.b16 %v3657, %v3656
          %3722 = vmatprep.subr.bf16.mxu0 0
          %3723 = vmatpush1.bf16.msra.mxu0 %v3665
          %3724 = vmatprep.subr.bf16.mxu0 0
          %3725 = vmatpush1.bf16.msra.mxu0 %v3664
          %3726 = vmatprep.subr.bf16.mxu0 0
          %3727 = vmatpush1.bf16.msra.mxu0 %v3663
          %3728 = vmatprep.subr.bf16.mxu0 0
          %3729 = vmatpush1.bf16.msra.mxu0 %v3662
          %3730 = vmatprep.subr.bf16.mxu0 0
          %3731 = vmatpush1.bf16.msra.mxu0 %v3661
          %3732 = vmatprep.subr.bf16.mxu0 0
          %3733 = vmatpush1.bf16.msra.mxu0 %v3660
          %3734 = vmatprep.subr.bf16.mxu0 0
          %3735 = vmatpush1.bf16.msra.mxu0 %v3659
          %3736 = vmatprep.subr.bf16.mxu0 0
          %3737 = vmatpush1.bf16.msra.mxu0 %v3658
          %3738 = vmatprep.subr.bf16.mxu0 0
          %3739 = vmatpush2.bf16.msra.mxu0 %v3673
          %3740 = vmatprep.subr.bf16.mxu0 0
          %3741 = vmatpush2.bf16.msra.mxu0 %v3672
          %3742 = vmatprep.subr.bf16.mxu0 0
          %3743 = vmatpush2.bf16.msra.mxu0 %v3671
          %3744 = vmatprep.subr.bf16.mxu0 0
          %3745 = vmatpush2.bf16.msra.mxu0 %v3670
          %3746 = vmatprep.subr.bf16.mxu0 0
          %3747 = vmatpush2.bf16.msra.mxu0 %v3669
          %3748 = vmatprep.subr.bf16.mxu0 0
          %3749 = vmatpush2.bf16.msra.mxu0 %v3668
          %3750 = vmatprep.subr.bf16.mxu0 0
          %3751 = vmatpush2.bf16.msra.mxu0 %v3667
          %3752 = vmatprep.subr.bf16.mxu0 0
          %3753 = vmatpush2.bf16.msra.mxu0 %v3666
          %3754 = vmatprep.mubr.bf16.mxu0 %v3451
          %3755 = vmatmul.mubr.bf16.gmra.mxu0 %v3450
          %v3756 = vpop.f32.mrf.mxu0
          %v3757 = vadd.f32 0.0, %v3756
          %v3758 = vpop.f32.mrf.mxu0
          %v3759 = vpop.f32.mrf.mxu0
          %v3760 = vadd.f32 0.0, %v3759
          %v3761 = vpop.f32.mrf.mxu0
          %3762 = vmatprep.mubr.bf16.mxu0 %v3455
          %3763 = vmatmul.mubr.bf16.gmra.mxu0 %v3454
          %v3764 = vpop.f32.mrf.mxu0
          %v3765 = vadd.f32 0.0, %v3764
          %v3766 = vpop.f32.mrf.mxu0
          %v3767 = vpop.f32.mrf.mxu0
          %v3768 = vadd.f32 0.0, %v3767
          %v3769 = vpop.f32.mrf.mxu0
          %3770 = vmatprep.mubr.bf16.mxu0 %v3459
          %3771 = vmatmul.mubr.bf16.gmra.mxu0 %v3458
          %v3772 = vpop.f32.mrf.mxu0
          %v3773 = vadd.f32 0.0, %v3772
          %v3774 = vpop.f32.mrf.mxu0
          %v3775 = vpop.f32.mrf.mxu0
          %v3776 = vadd.f32 0.0, %v3775
          %v3777 = vpop.f32.mrf.mxu0
          %3778 = vmatprep.mubr.bf16.mxu0 %v3463
          %3779 = vmatmul.mubr.bf16.gmra.mxu0 %v3462
          %v3780 = vpop.f32.mrf.mxu0
          %v3781 = vadd.f32 0.0, %v3780
          %v3782 = vpop.f32.mrf.mxu0
          %v3783 = vpop.f32.mrf.mxu0
          %v3784 = vadd.f32 0.0, %v3783
          %v3785 = vpop.f32.mrf.mxu0
          %3786 = vdwg.mxu0
          %3787 = vmatprep.subr.bf16.mxu0 0
          %3788 = vmatpush1.bf16.msra.mxu0 %v3681
          %3789 = vmatprep.subr.bf16.mxu0 0
          %3790 = vmatpush1.bf16.msra.mxu0 %v3680
          %3791 = vmatprep.subr.bf16.mxu0 0
          %3792 = vmatpush1.bf16.msra.mxu0 %v3679
          %3793 = vmatprep.subr.bf16.mxu0 0
          %3794 = vmatpush1.bf16.msra.mxu0 %v3678
          %3795 = vmatprep.subr.bf16.mxu0 0
          %3796 = vmatpush1.bf16.msra.mxu0 %v3677
          %3797 = vmatprep.subr.bf16.mxu0 0
          %3798 = vmatpush1.bf16.msra.mxu0 %v3676
          %3799 = vmatprep.subr.bf16.mxu0 0
          %3800 = vmatpush1.bf16.msra.mxu0 %v3675
          %3801 = vmatprep.subr.bf16.mxu0 0
          %3802 = vmatpush1.bf16.msra.mxu0 %v3674
          %3803 = vmatprep.subr.bf16.mxu0 0
          %3804 = vmatpush2.bf16.msra.mxu0 %v3689
          %3805 = vmatprep.subr.bf16.mxu0 0
          %3806 = vmatpush2.bf16.msra.mxu0 %v3688
          %3807 = vmatprep.subr.bf16.mxu0 0
          %3808 = vmatpush2.bf16.msra.mxu0 %v3687
          %3809 = vmatprep.subr.bf16.mxu0 0
          %3810 = vmatpush2.bf16.msra.mxu0 %v3686
          %3811 = vmatprep.subr.bf16.mxu0 0
          %3812 = vmatpush2.bf16.msra.mxu0 %v3685
          %3813 = vmatprep.subr.bf16.mxu0 0
          %3814 = vmatpush2.bf16.msra.mxu0 %v3684
          %3815 = vmatprep.subr.bf16.mxu0 0
          %3816 = vmatpush2.bf16.msra.mxu0 %v3683
          %3817 = vmatprep.subr.bf16.mxu0 0
          %3818 = vmatpush2.bf16.msra.mxu0 %v3682
          %3819 = vmatprep.mubr.bf16.mxu0 %v3453
          %3820 = vmatmul.mubr.bf16.gmra.mxu0 %v3452
          %v3821 = vpop.f32.mrf.mxu0
          %v3822 = vadd.f32 %v3757, %v3821
          %v3823 = vpop.f32.mrf.mxu0
          %v3824 = vpop.f32.mrf.mxu0
          %v3825 = vadd.f32 %v3760, %v3824
          %v3826 = vpop.f32.mrf.mxu0
          %3827 = vmatprep.mubr.bf16.mxu0 %v3457
          %3828 = vmatmul.mubr.bf16.gmra.mxu0 %v3456
          %v3829 = vpop.f32.mrf.mxu0
          %v3830 = vadd.f32 %v3765, %v3829
          %v3831 = vpop.f32.mrf.mxu0
          %v3832 = vpop.f32.mrf.mxu0
          %v3833 = vadd.f32 %v3768, %v3832
          %v3834 = vpop.f32.mrf.mxu0
          %3835 = vmatprep.mubr.bf16.mxu0 %v3461
          %3836 = vmatmul.mubr.bf16.gmra.mxu0 %v3460
          %v3837 = vpop.f32.mrf.mxu0
          %v3838 = vadd.f32 %v3773, %v3837
          %v3839 = vpop.f32.mrf.mxu0
          %v3840 = vpop.f32.mrf.mxu0
          %v3841 = vadd.f32 %v3776, %v3840
          %v3842 = vpop.f32.mrf.mxu0
          %3843 = vmatprep.mubr.bf16.mxu0 %v3465
          %3844 = vmatmul.mubr.bf16.gmra.mxu0 %v3464
          %v3845 = vpop.f32.mrf.mxu0
          %v3846 = vadd.f32 %v3781, %v3845
          %v3847 = vpop.f32.mrf.mxu0
          %v3848 = vpop.f32.mrf.mxu0
          %v3849 = vadd.f32 %v3784, %v3848
          %v3850 = vpop.f32.mrf.mxu0
          %3851 = vdwg.mxu0
          %v3852 = vadd.f32 %v2407, %v3822
          %v3853 = vadd.f32 %v2408, %v3825
          %v3854 = vadd.f32 %v2409, %v3830
          %v3855 = vadd.f32 %v2410, %v3833
          %v3856 = vadd.f32 %v2411, %v3838
          %v3857 = vadd.f32 %v2412, %v3841
          %v3858 = vadd.f32 %v2413, %v3846
          %v3859 = vadd.f32 %v2414, %v3849
          %v3860 = vld [vmem:[%s16] sm:$0x1]
          %v3862 = vlaneseq
          %v3863 = vshrl.u32 %v3862, 7
          %v3864 = vsub.s32 0, %v3863
          %v3865 = vrot.slane %v3860, %v3864
          %v3867 = vadd.f32 %v3852, %v3865
          %v3868 = vadd.f32 %v3853, %v3865
          %v3869 = vadd.f32 %v3854, %v3865
          %v3870 = vadd.f32 %v3855, %v3865
          %v3871 = vadd.f32 %v3856, %v3865
          %v3872 = vadd.f32 %v3857, %v3865
          %v3873 = vadd.f32 %v3858, %v3865
          %v3874 = vadd.f32 %v3859, %v3865
          %3875 = vst [vmem:[%s616] sm:$0xff] %v3867
          %3876 = vst [vmem:[%s616 + $0x8] sm:$0xff] %v3868
          %3877 = vst [vmem:[%s616 + $0x10] sm:$0xff] %v3869
          %3878 = vst [vmem:[%s616 + $0x18] sm:$0xff] %v3870
          %3879 = vst [vmem:[%s616 + $0x20] sm:$0xff] %v3871
          %3880 = vst [vmem:[%s616 + $0x28] sm:$0xff] %v3872
          %3881 = vst [vmem:[%s616 + $0x30] sm:$0xff] %v3873
          %3882 = vst [vmem:[%s616 + $0x38] sm:$0xff] %v3874
        $region112: #{multi_view_block_forward.3} parent=87 // pred_fallthru
          _
        %s3883 = sand.u32 %s442, 1
        %s3884 = scalar_lea.sflag [#allocation12], %s3883
        %s3885 = sand.u32 %s442, 1
        %s3886 = smul.addr %s3885, 64
        %s3887 = scalar_lea.vmem [#allocation11], %s3886
        // Predicated region
        $region113: #{multi_view_block_forward.3} parent=87 // pred_check
          %p3888 = pneg %p452
        $region114: #{multi_view_block_forward.3} parent=87 // pred_check_branch
          %3890 = sbr.rel (%p3888) target = $region116
        $region115: #{multi_view_block_forward.3} parent=87 // pred_region
          %s3891 = smul.u32 8, %s38
          %s3893 = ssub.s32 1024, 1024
          %3894 = vsyncadd %s3884, %s3893
          %s3895 = smul.addr %s37, 8
          %s3896 = sadd.s32 %s3891, %s3895
          %s3897 = smul.addr %s3896, 128
          %s3898 = scalar_lea.hbm %s17, %s3897
          %s3899 = sshll.u32 %s3887, 4
          %s3900 = int_to_ptr.vmem [resolvable:$true] %s3899
          %3905 = dma.vmem_to_hbm [thread:$0]  %s3900, 1024, %s3898, %s3884, 128, 128, 8
        $region116: #{multi_view_block_forward.3} parent=87 // pred_fallthru
          _
      $region88: #{multi_view_block_forward.3} parent=5 // pred_fallthru
        _
      %p3906 = scmp.le.s32.totalorder 2, %s26
      // Predicated region
      $region117: #{multi_view_block_forward.3} parent=5 // pred_check
        %p3907 = pneg %p3906
      $region118: #{multi_view_block_forward.3} parent=5 // pred_check_branch
        %3909 = sbr.rel (%p3907) target = $region120
      $region119: #{multi_view_block_forward.3} parent=5 // pred_region
        %s3910 = ssub.s32 %s26, 2
        // Predicated region
        $region121: #{multi_view_block_forward.3} parent=119 // pred_check
          %p3911 = pneg %p458
        $region122: #{multi_view_block_forward.3} parent=119 // pred_check_branch
          %3913 = sbr.rel (%p3911) target = $region124
        $region123: #{multi_view_block_forward.3} parent=119 // pred_region
          %s3914 = sand.u32 %s443, 1
          %s3915 = scalar_lea.sflag [#allocation12], %s3914
          %s3916 = sand.u32 %s443, 1
          %s3917 = smul.addr %s3916, 64
          %s3918 = scalar_lea.vmem [#allocation11], %s3917
          %3919 = dma.done %s3915, 1024
        $region124: #{multi_view_block_forward.3} parent=119 // pred_fallthru
          _
      $region120: #{multi_view_block_forward.3} parent=5 // pred_fallthru
        _
    $region6: #{multi_view_block_forward.3} parent=1 // loop_footer
      %s30 = sadd.s32 1, %s26
    $region7: #{multi_view_block_forward.3} parent=1 // loop_footer_branch
      %25 = sbr.rel target = $region3
    $region8: #{multi_view_block_forward.3} parent=1 // loop_exit
      _
    %3920 = vsyncpa [#allocation12], 1
    %s3921 = scalar_lea.sflag [#allocation12], 1
    %3922 = vsyncpa %s3921, 1

</llo_original>
